<compile_context>
chip_gen: v7x
topology: tpu7x:2x2x1
jax: 0.10.0
libtpu: 0.0.40
codegen_flags: <defaults>
</compile_context>

<pallas_src>
import jax
import jax.numpy as jnp
from jax.experimental import pallas as pl
from jax.experimental.pallas import tpu as pltpu


def bert_grader_kernel(emb_ref, mask_ref,
                       wattn_ref, battn_ref,
                       w1_ref, b1_ref,
                       w2_ref, b2_ref,
                       w3_ref, b3_ref,
                       out_ref):
    """One batch tile: 4-head attention pooling + 3-layer regression head."""
    emb = emb_ref[...]                        # [TB, L, E] bf16 (streamed operand)
    mask = mask_ref[...]                      # [TB, L]    f32
    TB, L, E = emb.shape
    emb2d = emb.reshape(TB * L, E)            # leading-dim merge: layout-trivial

    neg = -10000.0
    w_list = []
    # Per-head projection keeps the live intermediate at <= [TB*L, E] f32
    # (instead of a [TB*L, 4E] f32 trans_all), bounding VMEM on v7x.
    for h in range(4):
        t_h = (jnp.dot(emb2d, wattn_ref[:, h * E:(h + 1) * E],
                       preferred_element_type=jnp.float32)
               + battn_ref[:, h * E:(h + 1) * E])                 # [TB*L, E] f32
        t_h = t_h.reshape(TB, L, E)                               # leading split
        # score_h = einsum('nle,nle->nl'); the bf16 emb is promoted to f32 in
        # the product (VPU filler under the MXU-bound projection).
        s_h = jnp.sum(emb.astype(jnp.float32) * t_h, axis=-1)     # [TB, L] f32
        # masked tanh-softmax over L (2-D ops, L stays on the lane axis)
        s_h = jnp.tanh(s_h) * mask + (1.0 - mask) * neg
        m_h = jnp.max(s_h, axis=-1, keepdims=True)
        e_h = jnp.exp(s_h - m_h)
        d_h = jnp.sum(e_h, axis=-1, keepdims=True)
        # approx reciprocal runs on the EUP slot; weights sum to 1 +- ~1e-4.
        w_list.append(e_h * pl.reciprocal(d_h, approx=True))      # [TB, L] f32

    # One head-interleave of the small post-softmax weights (bf16), feeding a
    # single batched MXU matmul for all 4 weighted sums (canonical 'bqk,bkd').
    w_t = jnp.stack(w_list, axis=1).astype(jnp.bfloat16)          # [TB, 4, L]
    x_attn = jnp.einsum('bhl,ble->bhe', w_t, emb,
                        preferred_element_type=jnp.float32)       # [TB, 4, E] f32

    # Regression head. layer1 is consumed per head (== concat(heads) @ W1):
    # 4 tiny bf16 MXU matmuls (negligible vs the projection) avoid a cross-lane
    # reshape of x_attn / a multi-contraction dot_general.
    H1p = w1_ref.shape[1]
    h1 = jnp.zeros((TB, H1p), jnp.float32)
    for h in range(4):
        h1 = h1 + jnp.dot(x_attn[:, h, :].astype(jnp.bfloat16),
                          w1_ref[h * E:(h + 1) * E, :],
                          preferred_element_type=jnp.float32)
    h1 = jnp.maximum(h1 + b1_ref[...], 0.0)                       # clamp(min=0)
    h2 = jnp.maximum(jnp.dot(h1.astype(jnp.bfloat16), w2_ref[...],
                             preferred_element_type=jnp.float32) + b2_ref[...], 0.0)
    y = (jnp.dot(h2.astype(jnp.bfloat16), w3_ref[...],
                 preferred_element_type=jnp.float32) + b3_ref[...])  # [TB, 1]
    out_ref[...] = y


def _round_up(x, m):
    return (x + m - 1) // m * m


def _vmem_limit_bytes():
    """Generation-aware VMEM budget: ~48 MiB on v7x (64 MiB physical), 96 MiB on v5e/v6e."""
    cap = 128 * 1024 * 1024
    try:
        cap = int(pltpu.get_tpu_info().vmem_capacity_bytes)
    except Exception:
        pass
    return min(cap * 3 // 4, 96 * 1024 * 1024)


def bert_grader_forward(word_embeddings, attention_mask, params, batch_tile=8):
    """Wrapper: pack/pad weights, pad & grid over batch, one pallas_call.

    batch_tile: pick so that (padded N) / batch_tile >= 2 grid steps per
    TensorCore on v7x (megacore); larger tiles (16-32) are better on v6e/v5e
    (128 MiB VMEM) to amortize per-step overhead.
    """
    N, L, E = word_embeddings.shape
    TB = max(8, (int(batch_tile) // 8) * 8)      # sublane-aligned batch tile
    n_pad = _round_up(N, TB)
    grid = (n_pad // TB,)

    # Streamed operands: embeddings in bf16 (halves HBM stream + VMEM block);
    # mask stays f32 (exact 0/1 arithmetic for the -10000 masking).
    emb = word_embeddings.astype(jnp.bfloat16)
    mask = attention_mask.astype(jnp.float32)
    if n_pad != N:
        emb = jnp.pad(emb, ((0, n_pad - N), (0, 0), (0, 0)))
        mask = jnp.pad(mask, ((0, n_pad - N), (0, 0)))   # all-zero rows, sliced off below

    # Pack the 4 attention heads into one [E, 4E] bf16 weight (head-major columns).
    wattn, battn = params["wattn"], params["battn"]              # [4,E,E], [4,E]
    w_all = jnp.concatenate([wattn[h] for h in range(4)], axis=1).astype(jnp.bfloat16)
    b_all = battn.reshape(1, 4 * E).astype(jnp.float32)

    # Zero-pad MLP hidden dims to lane multiples (padding is exact through ReLU).
    H1 = params["w1"].shape[1]
    H2 = params["w2"].shape[1]
    H1p, H2p = _round_up(H1, 128), _round_up(H2, 128)
    w1 = jnp.zeros((4 * E, H1p), jnp.float32).at[:, :H1].set(params["w1"]).astype(jnp.bfloat16)
    b1 = jnp.zeros((1, H1p), jnp.float32).at[:, :H1].set(params["b1"])
    w2 = jnp.zeros((H1p, H2p), jnp.float32).at[:H1, :H2].set(params["w2"]).astype(jnp.bfloat16)
    b2 = jnp.zeros((1, H2p), jnp.float32).at[:, :H2].set(params["b2"])
    w3 = jnp.zeros((H2p, 1), jnp.float32).at[:H2, :].set(params["w3"]).astype(jnp.bfloat16)
    b3 = params["b3"].astype(jnp.float32)

    weights = (w_all, b_all, w1, b1, w2, b2, w3, b3)

    flops = int(2 * n_pad * L * E * 4 * E              # 4 head projections (dominant)
                + 2 * n_pad * L * 4 * E                # per-head scores
                + 2 * n_pad * 4 * L * E                # fused weighted sums
                + 2 * n_pad * (4 * E * H1p + H1p * H2p + H2p))
    bytes_accessed = int(emb.size * 2 + mask.size * 4 + n_pad * 4
                         + sum(int(w.size) * w.dtype.itemsize for w in weights))
    cost = pl.CostEstimate(flops=flops,
                           transcendentals=int(8 * n_pad * L + 4 * n_pad),
                           bytes_accessed=bytes_accessed)

    def build(full_vmem_weights):
        if full_vmem_weights:
            # Single resident VMEM copy of each weight: no per-step double buffering.
            def wspec(a):
                return pl.BlockSpec(memory_space=pltpu.MemorySpace.VMEM)
        else:
            # Fallback: full-shape block with a constant index map (double-buffered,
            # but never re-fetched since the block index is constant).
            def wspec(a):
                return pl.BlockSpec(a.shape, lambda i, _n=a.ndim: (0,) * _n)
        in_specs = ([pl.BlockSpec((TB, L, E), lambda i: (i, 0, 0)),   # emb: batch-tiled
                     pl.BlockSpec((TB, L), lambda i: (i, 0))]         # mask: batch-tiled
                    + [wspec(w) for w in weights])
        return pl.pallas_call(
            bert_grader_kernel,
            out_shape=jax.ShapeDtypeStruct((n_pad, 1), jnp.float32),
            grid=grid,
            in_specs=in_specs,
            out_specs=pl.BlockSpec((TB, 1), lambda i: (i, 0)),
            compiler_params=pltpu.CompilerParams(
                dimension_semantics=("parallel",),
                vmem_limit_bytes=_vmem_limit_bytes()),
            cost_estimate=cost,
        )

    try:
        y = jax.block_until_ready(build(True)(emb, mask, *weights))
    except Exception:
        # Portability fallback (older jax without whole-array VMEM operands).
        y = jax.block_until_ready(build(False)(emb, mask, *weights))
    return y[:N, 0]   # .squeeze(dim=-1), padded rows dropped


def bert_grader_reference(word_embeddings, attention_mask, params):
    """Pure-JAX f32 reference mirroring the PyTorch forward (verification only)."""
    emb, mask = word_embeddings, attention_mask

    def apply_attn(Wt, b):
        trans = jnp.einsum('nle,ef->nlf', emb, Wt) + b
        score = jnp.einsum('ijk,ijk->ij', emb, trans)
        score_t = jnp.tanh(score) * mask
        scaled = score_t + (1.0 - mask) * (-10000.0)
        w = jax.nn.softmax(scaled, axis=1)
        return jnp.sum(emb * w[:, :, None], axis=1)

    heads = [apply_attn(params["wattn"][h], params["battn"][h]) for h in range(4)]
    all_heads = jnp.concatenate(heads, axis=1)
    h1 = jnp.maximum(all_heads @ params["w1"] + params["b1"], 0.0)
    h2 = jnp.maximum(h1 @ params["w2"] + params["b2"], 0.0)
    y = h2 @ params["w3"] + params["b3"]
    return y[:, 0]


def make_params(key, embedding_size, h1_dim, h2_dim):
    ks = jax.random.split(key, 7)
    s = 0.05
    return {
        # 4 attention heads, stored as W.T -> [4, E, E], biases [4, E]
        "wattn": s * jax.random.normal(ks[0], (4, embedding_size, embedding_size), jnp.float32),
        "battn": s * jax.random.normal(ks[1], (4, embedding_size), jnp.float32),
        # regression head (weights pre-transposed to [in, out], biases [1, out])
        "w1": s * jax.random.normal(ks[2], (4 * embedding_size, h1_dim), jnp.float32),
        "b1": s * jax.random.normal(ks[3], (1, h1_dim), jnp.float32),
        "w2": s * jax.random.normal(ks[4], (h1_dim, h2_dim), jnp.float32),
        "b2": s * jax.random.normal(ks[5], (1, h2_dim), jnp.float32),
        "w3": s * jax.random.normal(ks[6], (h2_dim, 1), jnp.float32),
        "b3": jnp.zeros((1, 1), jnp.float32),
    }


if __name__ == "__main__":
    # Small shapes consistent with the module (scaled-down bert-base sizes).
    # Real model: L=512, E=768, H1=600, H2=20; here E/L are shrunk for the test
    # (at real shapes E is already lane-aligned, so no E padding is done).
    N, L, E = 32, 8, 32          # batch, seq len, embedding_size
    H1, H2 = 64, 20              # h1_dim, h2_dim

    key = jax.random.PRNGKey(0)
    k_emb, k_par = jax.random.split(key)

    # Synthetic encoder output (stands in for BertModel(...).last_hidden_state).
    word_embeddings = jax.random.normal(k_emb, (N, L, E), jnp.float32)
    # Token-level mask with varied valid lengths per sequence.
    lengths = (jnp.arange(N) % L) + 1
    attention_mask = (jnp.arange(L)[None, :] < lengths[:, None]).astype(jnp.float32)

    params = make_params(k_par, E, H1, H2)

    # batch_tile=8, N=32 -> grid of 4 steps (>= 2 steps per TensorCore on v7x).
    y = bert_grader_forward(word_embeddings, attention_mask, params, batch_tile=8)
    y = jax.block_until_ready(y)

    y_ref = bert_grader_reference(word_embeddings, attention_mask, params)
    assert y.shape == (N,), y.shape
    # bf16 MXU operands + approx reciprocal -> relaxed (but still tight) tolerance.
    assert jnp.allclose(y, y_ref, atol=3e-2, rtol=3e-2), (y, y_ref)

    print("KERNEL_OK")
</pallas_src>

<mosaic_0001>
module attributes {stable_mosaic.version = 11 : i64} {
  func.func @bert_grader_kernel(%arg0: i32, %arg1: memref<8x8x32xbf16, #tpu.memory_space<vmem>>, %arg2: memref<8x8xf32, #tpu.memory_space<vmem>>, %arg3: memref<32x128xbf16, #tpu.memory_space<vmem>>, %arg4: memref<1x128xf32, #tpu.memory_space<vmem>>, %arg5: memref<128x128xbf16, #tpu.memory_space<vmem>>, %arg6: memref<1x128xf32, #tpu.memory_space<vmem>>, %arg7: memref<128x128xbf16, #tpu.memory_space<vmem>>, %arg8: memref<1x128xf32, #tpu.memory_space<vmem>>, %arg9: memref<128x1xbf16, #tpu.memory_space<vmem>>, %arg10: memref<1x1xf32, #tpu.memory_space<vmem>>, %arg11: memref<8x1xf32, #tpu.memory_space<vmem>>) attributes {dimension_semantics = [#tpu.dimension_semantics<parallel>], iteration_bounds = array<i64: 4>, scalar_prefetch = 0 : i64, scratch_operands = 0 : i64, tpu.core_type = #tpu.core_type<tc>, window_params = [{transform_indices = @transform_0, window_bounds = array<i64: 8, 8, 32>}, {transform_indices = @transform_1, window_bounds = array<i64: 8, 8>}, {pipeline_mode = #tpu.pipeline_mode<synchronous>, transform_indices = @transform_2, window_bounds = array<i64: 32, 128>}, {pipeline_mode = #tpu.pipeline_mode<synchronous>, transform_indices = @transform_3, window_bounds = array<i64: 1, 128>}, {pipeline_mode = #tpu.pipeline_mode<synchronous>, transform_indices = @transform_4, window_bounds = array<i64: 128, 128>}, {pipeline_mode = #tpu.pipeline_mode<synchronous>, transform_indices = @transform_5, window_bounds = array<i64: 1, 128>}, {pipeline_mode = #tpu.pipeline_mode<synchronous>, transform_indices = @transform_6, window_bounds = array<i64: 128, 128>}, {pipeline_mode = #tpu.pipeline_mode<synchronous>, transform_indices = @transform_7, window_bounds = array<i64: 1, 128>}, {pipeline_mode = #tpu.pipeline_mode<synchronous>, transform_indices = @transform_8, window_bounds = array<i64: 128, 1>}, {pipeline_mode = #tpu.pipeline_mode<synchronous>, transform_indices = @transform_9, window_bounds = array<i64: 1, 1>}, {transform_indices = @transform_10, window_bounds = array<i64: 8, 1>}]} {
    %c0 = arith.constant 0 : index
    %c0_0 = arith.constant 0 : index
    %c0_1 = arith.constant 0 : index
    %0 = vector.load %arg1[%c0, %c0_0, %c0_1] : memref<8x8x32xbf16, #tpu.memory_space<vmem>>, vector<8x8x32xbf16>
    %c0_2 = arith.constant 0 : index
    %c0_3 = arith.constant 0 : index
    %1 = vector.load %arg2[%c0_2, %c0_3] : memref<8x8xf32, #tpu.memory_space<vmem>>, vector<8x8xf32>
    %2 = vector.shape_cast %0 : vector<8x8x32xbf16> to vector<64x32xbf16>
    %c0_4 = arith.constant 0 : index
    %c0_5 = arith.constant 0 : index
    %3 = vector.load %arg3[%c0_4, %c0_5] : memref<32x128xbf16, #tpu.memory_space<vmem>>, vector<32x32xbf16>
    %cst = arith.constant dense<0.000000e+00> : vector<64x32xf32>
    %4 = tpu.matmul %2, %3, %cst {dimension_numbers = #tpu.dot_dimension_numbers<[1], [0], [0], [1], [0, 0, 1, 1], [], []>} : vector<64x32xbf16>, vector<32x32xbf16>, vector<64x32xf32> -> vector<64x32xf32>
    %c0_6 = arith.constant 0 : index
    %c0_7 = arith.constant 0 : index
    %5 = vector.load %arg4[%c0_6, %c0_7] : memref<1x128xf32, #tpu.memory_space<vmem>>, vector<1x32xf32>
    %6 = vector.broadcast %5 : vector<1x32xf32> to vector<64x32xf32>
    %7 = arith.addf %4, %6 : vector<64x32xf32>
    %8 = vector.shape_cast %7 : vector<64x32xf32> to vector<8x8x32xf32>
    %9 = arith.extf %0 : vector<8x8x32xbf16> to vector<8x8x32xf32>
    %10 = arith.mulf %9, %8 : vector<8x8x32xf32>
    %cst_8 = arith.constant dense<0.000000e+00> : vector<8x8xf32>
    %11 = vector.multi_reduction <add>, %10, %cst_8 [2] : vector<8x8x32xf32> to vector<8x8xf32>
    %12 = math.tanh %11 : vector<8x8xf32>
    %13 = arith.mulf %12, %1 : vector<8x8xf32>
    %cst_9 = arith.constant 1.000000e+00 : f32
    %14 = vector.broadcast %cst_9 : f32 to vector<8x8xf32>
    %15 = arith.subf %14, %1 : vector<8x8xf32>
    %cst_10 = arith.constant -1.000000e+04 : f32
    %16 = vector.broadcast %cst_10 : f32 to vector<8x8xf32>
    %17 = arith.mulf %15, %16 : vector<8x8xf32>
    %18 = arith.addf %13, %17 : vector<8x8xf32>
    %cst_11 = arith.constant dense<0xFF800000> : vector<8xf32>
    %19 = vector.multi_reduction <maximumf>, %18, %cst_11 [1] : vector<8x8xf32> to vector<8xf32>
    %20 = vector.shape_cast %19 : vector<8xf32> to vector<8x1xf32>
    %21 = vector.broadcast %20 : vector<8x1xf32> to vector<8x8xf32>
    %22 = arith.subf %18, %21 : vector<8x8xf32>
    %23 = math.exp %22 : vector<8x8xf32>
    %cst_12 = arith.constant dense<0.000000e+00> : vector<8xf32>
    %24 = vector.multi_reduction <add>, %23, %cst_12 [1] : vector<8x8xf32> to vector<8xf32>
    %25 = vector.shape_cast %24 : vector<8xf32> to vector<8x1xf32>
    %26 = tpu.reciprocal %25 {approx = true} : vector<8x1xf32> -> vector<8x1xf32>
    %27 = vector.broadcast %26 : vector<8x1xf32> to vector<8x8xf32>
    %28 = arith.mulf %23, %27 : vector<8x8xf32>
    %c0_13 = arith.constant 0 : index
    %c32 = arith.constant 32 : index
    %29 = vector.load %arg3[%c0_13, %c32] : memref<32x128xbf16, #tpu.memory_space<vmem>>, vector<32x32xbf16>
    %cst_14 = arith.constant dense<0.000000e+00> : vector<64x32xf32>
    %30 = tpu.matmul %2, %29, %cst_14 {dimension_numbers = #tpu.dot_dimension_numbers<[1], [0], [0], [1], [0, 0, 1, 1], [], []>} : vector<64x32xbf16>, vector<32x32xbf16>, vector<64x32xf32> -> vector<64x32xf32>
    %c0_15 = arith.constant 0 : index
    %c32_16 = arith.constant 32 : index
    %31 = vector.load %arg4[%c0_15, %c32_16] : memref<1x128xf32, #tpu.memory_space<vmem>>, vector<1x32xf32>
    %32 = vector.broadcast %31 : vector<1x32xf32> to vector<64x32xf32>
    %33 = arith.addf %30, %32 : vector<64x32xf32>
    %34 = vector.shape_cast %33 : vector<64x32xf32> to vector<8x8x32xf32>
    %35 = arith.extf %0 : vector<8x8x32xbf16> to vector<8x8x32xf32>
    %36 = arith.mulf %35, %34 : vector<8x8x32xf32>
    %cst_17 = arith.constant dense<0.000000e+00> : vector<8x8xf32>
    %37 = vector.multi_reduction <add>, %36, %cst_17 [2] : vector<8x8x32xf32> to vector<8x8xf32>
    %38 = math.tanh %37 : vector<8x8xf32>
    %39 = arith.mulf %38, %1 : vector<8x8xf32>
    %cst_18 = arith.constant 1.000000e+00 : f32
    %40 = vector.broadcast %cst_18 : f32 to vector<8x8xf32>
    %41 = arith.subf %40, %1 : vector<8x8xf32>
    %cst_19 = arith.constant -1.000000e+04 : f32
    %42 = vector.broadcast %cst_19 : f32 to vector<8x8xf32>
    %43 = arith.mulf %41, %42 : vector<8x8xf32>
    %44 = arith.addf %39, %43 : vector<8x8xf32>
    %cst_20 = arith.constant dense<0xFF800000> : vector<8xf32>
    %45 = vector.multi_reduction <maximumf>, %44, %cst_20 [1] : vector<8x8xf32> to vector<8xf32>
    %46 = vector.shape_cast %45 : vector<8xf32> to vector<8x1xf32>
    %47 = vector.broadcast %46 : vector<8x1xf32> to vector<8x8xf32>
    %48 = arith.subf %44, %47 : vector<8x8xf32>
    %49 = math.exp %48 : vector<8x8xf32>
    %cst_21 = arith.constant dense<0.000000e+00> : vector<8xf32>
    %50 = vector.multi_reduction <add>, %49, %cst_21 [1] : vector<8x8xf32> to vector<8xf32>
    %51 = vector.shape_cast %50 : vector<8xf32> to vector<8x1xf32>
    %52 = tpu.reciprocal %51 {approx = true} : vector<8x1xf32> -> vector<8x1xf32>
    %53 = vector.broadcast %52 : vector<8x1xf32> to vector<8x8xf32>
    %54 = arith.mulf %49, %53 : vector<8x8xf32>
    %c0_22 = arith.constant 0 : index
    %c64 = arith.constant 64 : index
    %55 = vector.load %arg3[%c0_22, %c64] : memref<32x128xbf16, #tpu.memory_space<vmem>>, vector<32x32xbf16>
    %cst_23 = arith.constant dense<0.000000e+00> : vector<64x32xf32>
    %56 = tpu.matmul %2, %55, %cst_23 {dimension_numbers = #tpu.dot_dimension_numbers<[1], [0], [0], [1], [0, 0, 1, 1], [], []>} : vector<64x32xbf16>, vector<32x32xbf16>, vector<64x32xf32> -> vector<64x32xf32>
    %c0_24 = arith.constant 0 : index
    %c64_25 = arith.constant 64 : index
    %57 = vector.load %arg4[%c0_24, %c64_25] : memref<1x128xf32, #tpu.memory_space<vmem>>, vector<1x32xf32>
    %58 = vector.broadcast %57 : vector<1x32xf32> to vector<64x32xf32>
    %59 = arith.addf %56, %58 : vector<64x32xf32>
    %60 = vector.shape_cast %59 : vector<64x32xf32> to vector<8x8x32xf32>
    %61 = arith.extf %0 : vector<8x8x32xbf16> to vector<8x8x32xf32>
    %62 = arith.mulf %61, %60 : vector<8x8x32xf32>
    %cst_26 = arith.constant dense<0.000000e+00> : vector<8x8xf32>
    %63 = vector.multi_reduction <add>, %62, %cst_26 [2] : vector<8x8x32xf32> to vector<8x8xf32>
    %64 = math.tanh %63 : vector<8x8xf32>
    %65 = arith.mulf %64, %1 : vector<8x8xf32>
    %cst_27 = arith.constant 1.000000e+00 : f32
    %66 = vector.broadcast %cst_27 : f32 to vector<8x8xf32>
    %67 = arith.subf %66, %1 : vector<8x8xf32>
    %cst_28 = arith.constant -1.000000e+04 : f32
    %68 = vector.broadcast %cst_28 : f32 to vector<8x8xf32>
    %69 = arith.mulf %67, %68 : vector<8x8xf32>
    %70 = arith.addf %65, %69 : vector<8x8xf32>
    %cst_29 = arith.constant dense<0xFF800000> : vector<8xf32>
    %71 = vector.multi_reduction <maximumf>, %70, %cst_29 [1] : vector<8x8xf32> to vector<8xf32>
    %72 = vector.shape_cast %71 : vector<8xf32> to vector<8x1xf32>
    %73 = vector.broadcast %72 : vector<8x1xf32> to vector<8x8xf32>
    %74 = arith.subf %70, %73 : vector<8x8xf32>
    %75 = math.exp %74 : vector<8x8xf32>
    %cst_30 = arith.constant dense<0.000000e+00> : vector<8xf32>
    %76 = vector.multi_reduction <add>, %75, %cst_30 [1] : vector<8x8xf32> to vector<8xf32>
    %77 = vector.shape_cast %76 : vector<8xf32> to vector<8x1xf32>
    %78 = tpu.reciprocal %77 {approx = true} : vector<8x1xf32> -> vector<8x1xf32>
    %79 = vector.broadcast %78 : vector<8x1xf32> to vector<8x8xf32>
    %80 = arith.mulf %75, %79 : vector<8x8xf32>
    %c0_31 = arith.constant 0 : index
    %c96 = arith.constant 96 : index
    %81 = vector.load %arg3[%c0_31, %c96] : memref<32x128xbf16, #tpu.memory_space<vmem>>, vector<32x32xbf16>
    %cst_32 = arith.constant dense<0.000000e+00> : vector<64x32xf32>
    %82 = tpu.matmul %2, %81, %cst_32 {dimension_numbers = #tpu.dot_dimension_numbers<[1], [0], [0], [1], [0, 0, 1, 1], [], []>} : vector<64x32xbf16>, vector<32x32xbf16>, vector<64x32xf32> -> vector<64x32xf32>
    %c0_33 = arith.constant 0 : index
    %c96_34 = arith.constant 96 : index
    %83 = vector.load %arg4[%c0_33, %c96_34] : memref<1x128xf32, #tpu.memory_space<vmem>>, vector<1x32xf32>
    %84 = vector.broadcast %83 : vector<1x32xf32> to vector<64x32xf32>
    %85 = arith.addf %82, %84 : vector<64x32xf32>
    %86 = vector.shape_cast %85 : vector<64x32xf32> to vector<8x8x32xf32>
    %87 = arith.extf %0 : vector<8x8x32xbf16> to vector<8x8x32xf32>
    %88 = arith.mulf %87, %86 : vector<8x8x32xf32>
    %cst_35 = arith.constant dense<0.000000e+00> : vector<8x8xf32>
    %89 = vector.multi_reduction <add>, %88, %cst_35 [2] : vector<8x8x32xf32> to vector<8x8xf32>
    %90 = math.tanh %89 : vector<8x8xf32>
    %91 = arith.mulf %90, %1 : vector<8x8xf32>
    %cst_36 = arith.constant 1.000000e+00 : f32
    %92 = vector.broadcast %cst_36 : f32 to vector<8x8xf32>
    %93 = arith.subf %92, %1 : vector<8x8xf32>
    %cst_37 = arith.constant -1.000000e+04 : f32
    %94 = vector.broadcast %cst_37 : f32 to vector<8x8xf32>
    %95 = arith.mulf %93, %94 : vector<8x8xf32>
    %96 = arith.addf %91, %95 : vector<8x8xf32>
    %cst_38 = arith.constant dense<0xFF800000> : vector<8xf32>
    %97 = vector.multi_reduction <maximumf>, %96, %cst_38 [1] : vector<8x8xf32> to vector<8xf32>
    %98 = vector.shape_cast %97 : vector<8xf32> to vector<8x1xf32>
    %99 = vector.broadcast %98 : vector<8x1xf32> to vector<8x8xf32>
    %100 = arith.subf %96, %99 : vector<8x8xf32>
    %101 = math.exp %100 : vector<8x8xf32>
    %cst_39 = arith.constant dense<0.000000e+00> : vector<8xf32>
    %102 = vector.multi_reduction <add>, %101, %cst_39 [1] : vector<8x8xf32> to vector<8xf32>
    %103 = vector.shape_cast %102 : vector<8xf32> to vector<8x1xf32>
    %104 = tpu.reciprocal %103 {approx = true} : vector<8x1xf32> -> vector<8x1xf32>
    %105 = vector.broadcast %104 : vector<8x1xf32> to vector<8x8xf32>
    %106 = arith.mulf %101, %105 : vector<8x8xf32>
    %107 = vector.shape_cast %28 : vector<8x8xf32> to vector<8x1x8xf32>
    %108 = vector.shape_cast %54 : vector<8x8xf32> to vector<8x1x8xf32>
    %109 = vector.shape_cast %80 : vector<8x8xf32> to vector<8x1x8xf32>
    %110 = vector.shape_cast %106 : vector<8x8xf32> to vector<8x1x8xf32>
    %111 = tpu.concatenate %107, %108, %109, %110 in 1 : vector<8x1x8xf32>, vector<8x1x8xf32>, vector<8x1x8xf32>, vector<8x1x8xf32> -> vector<8x4x8xf32>
    %112 = arith.truncf %111 : vector<8x4x8xf32> to vector<8x4x8xbf16>
    "tpu.trace_start"() <{level = 10 : i32, message = "bhl,ble->bhe"}> : () -> ()
    %cst_40 = arith.constant dense<0.000000e+00> : vector<8x4x32xf32>
    %113 = tpu.matmul %112, %0, %cst_40 {dimension_numbers = #tpu.dot_dimension_numbers<[2], [1], [1], [2], [0, 0, 0, 1, 1, 2], [0], [0]>} : vector<8x4x8xbf16>, vector<8x8x32xbf16>, vector<8x4x32xf32> -> vector<8x4x32xf32>
    %cst_41 = arith.constant 0.000000e+00 : f32
    "tpu.trace_stop"() : () -> ()
    %114 = vector.broadcast %cst_41 : f32 to vector<8x128xf32>
    %115 = vector.extract_strided_slice %113 {offsets = [0, 0, 0], sizes = [8, 1, 32], strides = [1, 1, 1]} : vector<8x4x32xf32> to vector<8x1x32xf32>
    %116 = vector.shape_cast %115 : vector<8x1x32xf32> to vector<8x32xf32>
    %117 = arith.truncf %116 : vector<8x32xf32> to vector<8x32xbf16>
    %c0_42 = arith.constant 0 : index
    %c0_43 = arith.constant 0 : index
    %118 = vector.load %arg5[%c0_42, %c0_43] : memref<128x128xbf16, #tpu.memory_space<vmem>>, vector<32x128xbf16>
    %cst_44 = arith.constant dense<0.000000e+00> : vector<8x128xf32>
    %119 = tpu.matmul %117, %118, %cst_44 {dimension_numbers = #tpu.dot_dimension_numbers<[1], [0], [0], [1], [0, 0, 1, 1], [], []>} : vector<8x32xbf16>, vector<32x128xbf16>, vector<8x128xf32> -> vector<8x128xf32>
    %120 = arith.addf %114, %119 : vector<8x128xf32>
    %121 = vector.extract_strided_slice %113 {offsets = [0, 1, 0], sizes = [8, 1, 32], strides = [1, 1, 1]} : vector<8x4x32xf32> to vector<8x1x32xf32>
    %122 = vector.shape_cast %121 : vector<8x1x32xf32> to vector<8x32xf32>
    %123 = arith.truncf %122 : vector<8x32xf32> to vector<8x32xbf16>
    %c32_45 = arith.constant 32 : index
    %c0_46 = arith.constant 0 : index
    %124 = vector.load %arg5[%c32_45, %c0_46] : memref<128x128xbf16, #tpu.memory_space<vmem>>, vector<32x128xbf16>
    %cst_47 = arith.constant dense<0.000000e+00> : vector<8x128xf32>
    %125 = tpu.matmul %123, %124, %cst_47 {dimension_numbers = #tpu.dot_dimension_numbers<[1], [0], [0], [1], [0, 0, 1, 1], [], []>} : vector<8x32xbf16>, vector<32x128xbf16>, vector<8x128xf32> -> vector<8x128xf32>
    %126 = arith.addf %120, %125 : vector<8x128xf32>
    %127 = vector.extract_strided_slice %113 {offsets = [0, 2, 0], sizes = [8, 1, 32], strides = [1, 1, 1]} : vector<8x4x32xf32> to vector<8x1x32xf32>
    %128 = vector.shape_cast %127 : vector<8x1x32xf32> to vector<8x32xf32>
    %129 = arith.truncf %128 : vector<8x32xf32> to vector<8x32xbf16>
    %c64_48 = arith.constant 64 : index
    %c0_49 = arith.constant 0 : index
    %130 = vector.load %arg5[%c64_48, %c0_49] : memref<128x128xbf16, #tpu.memory_space<vmem>>, vector<32x128xbf16>
    %cst_50 = arith.constant dense<0.000000e+00> : vector<8x128xf32>
    %131 = tpu.matmul %129, %130, %cst_50 {dimension_numbers = #tpu.dot_dimension_numbers<[1], [0], [0], [1], [0, 0, 1, 1], [], []>} : vector<8x32xbf16>, vector<32x128xbf16>, vector<8x128xf32> -> vector<8x128xf32>
    %132 = arith.addf %126, %131 : vector<8x128xf32>
    %133 = vector.extract_strided_slice %113 {offsets = [0, 3, 0], sizes = [8, 1, 32], strides = [1, 1, 1]} : vector<8x4x32xf32> to vector<8x1x32xf32>
    %134 = vector.shape_cast %133 : vector<8x1x32xf32> to vector<8x32xf32>
    %135 = arith.truncf %134 : vector<8x32xf32> to vector<8x32xbf16>
    %c96_51 = arith.constant 96 : index
    %c0_52 = arith.constant 0 : index
    %136 = vector.load %arg5[%c96_51, %c0_52] : memref<128x128xbf16, #tpu.memory_space<vmem>>, vector<32x128xbf16>
    %cst_53 = arith.constant dense<0.000000e+00> : vector<8x128xf32>
    %137 = tpu.matmul %135, %136, %cst_53 {dimension_numbers = #tpu.dot_dimension_numbers<[1], [0], [0], [1], [0, 0, 1, 1], [], []>} : vector<8x32xbf16>, vector<32x128xbf16>, vector<8x128xf32> -> vector<8x128xf32>
    %138 = arith.addf %132, %137 : vector<8x128xf32>
    %c0_54 = arith.constant 0 : index
    %c0_55 = arith.constant 0 : index
    %139 = vector.load %arg6[%c0_54, %c0_55] : memref<1x128xf32, #tpu.memory_space<vmem>>, vector<1x128xf32>
    %140 = vector.broadcast %139 : vector<1x128xf32> to vector<8x128xf32>
    %141 = arith.addf %138, %140 : vector<8x128xf32>
    %cst_56 = arith.constant 0.000000e+00 : f32
    %142 = vector.broadcast %cst_56 : f32 to vector<8x128xf32>
    %143 = arith.maximumf %141, %142 : vector<8x128xf32>
    %144 = arith.truncf %143 : vector<8x128xf32> to vector<8x128xbf16>
    %c0_57 = arith.constant 0 : index
    %c0_58 = arith.constant 0 : index
    %145 = vector.load %arg7[%c0_57, %c0_58] : memref<128x128xbf16, #tpu.memory_space<vmem>>, vector<128x128xbf16>
    %cst_59 = arith.constant dense<0.000000e+00> : vector<8x128xf32>
    %146 = tpu.matmul %144, %145, %cst_59 {dimension_numbers = #tpu.dot_dimension_numbers<[1], [0], [0], [1], [0, 0, 1, 1], [], []>} : vector<8x128xbf16>, vector<128x128xbf16>, vector<8x128xf32> -> vector<8x128xf32>
    %c0_60 = arith.constant 0 : index
    %c0_61 = arith.constant 0 : index
    %147 = vector.load %arg8[%c0_60, %c0_61] : memref<1x128xf32, #tpu.memory_space<vmem>>, vector<1x128xf32>
    %148 = vector.broadcast %147 : vector<1x128xf32> to vector<8x128xf32>
    %149 = arith.addf %146, %148 : vector<8x128xf32>
    %cst_62 = arith.constant 0.000000e+00 : f32
    %150 = vector.broadcast %cst_62 : f32 to vector<8x128xf32>
    %151 = arith.maximumf %149, %150 : vector<8x128xf32>
    %152 = arith.truncf %151 : vector<8x128xf32> to vector<8x128xbf16>
    %c0_63 = arith.constant 0 : index
    %c0_64 = arith.constant 0 : index
    %153 = vector.load %arg9[%c0_63, %c0_64] : memref<128x1xbf16, #tpu.memory_space<vmem>>, vector<128x1xbf16>
    %cst_65 = arith.constant dense<0.000000e+00> : vector<8x1xf32>
    %154 = tpu.matmul %152, %153, %cst_65 {dimension_numbers = #tpu.dot_dimension_numbers<[1], [0], [0], [1], [0, 0, 1, 1], [], []>} : vector<8x128xbf16>, vector<128x1xbf16>, vector<8x1xf32> -> vector<8x1xf32>
    %c0_66 = arith.constant 0 : index
    %c0_67 = arith.constant 0 : index
    %155 = vector.load %arg10[%c0_66, %c0_67] : memref<1x1xf32, #tpu.memory_space<vmem>>, vector<1x1xf32>
    %156 = vector.broadcast %155 : vector<1x1xf32> to vector<8x1xf32>
    %157 = arith.addf %154, %156 : vector<8x1xf32>
    %c0_68 = arith.constant 0 : index
    %c0_69 = arith.constant 0 : index
    %158 = vector.load %arg11[%c0_68, %c0_69] : memref<8x1xf32, #tpu.memory_space<vmem>>, vector<8x1xf32>
    tpu.vector_store %arg11[%c0_68, %c0_69], %157 {strides = array<i32>} : memref<8x1xf32, #tpu.memory_space<vmem>>, vector<8x1xf32>,
    return
  }
  func.func @transform_0(%arg0: i32) -> (i32, i32, i32) {
    %c0_i32 = arith.constant 0 : i32
    %c0_i32_0 = arith.constant 0 : i32
    %c0_i32_1 = arith.constant 0 : i32
    return %arg0, %c0_i32, %c0_i32_0 : i32, i32, i32
  }
  func.func @transform_1(%arg0: i32) -> (i32, i32) {
    %c0_i32 = arith.constant 0 : i32
    %c0_i32_0 = arith.constant 0 : i32
    return %arg0, %c0_i32 : i32, i32
  }
  func.func @transform_2(%arg0: i32) -> (i32, i32) {
    %c0_i32 = arith.constant 0 : i32
    %c0_i32_0 = arith.constant 0 : i32
    %c0_i32_1 = arith.constant 0 : i32
    return %c0_i32, %c0_i32_0 : i32, i32
  }
  func.func @transform_3(%arg0: i32) -> (i32, i32) {
    %c0_i32 = arith.constant 0 : i32
    %c0_i32_0 = arith.constant 0 : i32
    %c0_i32_1 = arith.constant 0 : i32
    return %c0_i32, %c0_i32_0 : i32, i32
  }
  func.func @transform_4(%arg0: i32) -> (i32, i32) {
    %c0_i32 = arith.constant 0 : i32
    %c0_i32_0 = arith.constant 0 : i32
    %c0_i32_1 = arith.constant 0 : i32
    return %c0_i32, %c0_i32_0 : i32, i32
  }
  func.func @transform_5(%arg0: i32) -> (i32, i32) {
    %c0_i32 = arith.constant 0 : i32
    %c0_i32_0 = arith.constant 0 : i32
    %c0_i32_1 = arith.constant 0 : i32
    return %c0_i32, %c0_i32_0 : i32, i32
  }
  func.func @transform_6(%arg0: i32) -> (i32, i32) {
    %c0_i32 = arith.constant 0 : i32
    %c0_i32_0 = arith.constant 0 : i32
    %c0_i32_1 = arith.constant 0 : i32
    return %c0_i32, %c0_i32_0 : i32, i32
  }
  func.func @transform_7(%arg0: i32) -> (i32, i32) {
    %c0_i32 = arith.constant 0 : i32
    %c0_i32_0 = arith.constant 0 : i32
    %c0_i32_1 = arith.constant 0 : i32
    return %c0_i32, %c0_i32_0 : i32, i32
  }
  func.func @transform_8(%arg0: i32) -> (i32, i32) {
    %c0_i32 = arith.constant 0 : i32
    %c0_i32_0 = arith.constant 0 : i32
    %c0_i32_1 = arith.constant 0 : i32
    return %c0_i32, %c0_i32_0 : i32, i32
  }
  func.func @transform_9(%arg0: i32) -> (i32, i32) {
    %c0_i32 = arith.constant 0 : i32
    %c0_i32_0 = arith.constant 0 : i32
    %c0_i32_1 = arith.constant 0 : i32
    return %c0_i32, %c0_i32_0 : i32, i32
  }
  func.func @transform_10(%arg0: i32) -> (i32, i32) {
    %c0_i32 = arith.constant 0 : i32
    %c0_i32_0 = arith.constant 0 : i32
    return %arg0, %c0_i32 : i32, i32
  }
}

module attributes {stable_mosaic.version = 11 : i64} {
  func.func @bert_grader_kernel(%arg0: i32, %arg1: memref<8x8x32xbf16, #tpu.memory_space<vmem>>, %arg2: memref<8x8xf32, #tpu.memory_space<vmem>>, %arg3: memref<32x128xbf16, #tpu.memory_space<vmem>>, %arg4: memref<1x128xf32, #tpu.memory_space<vmem>>, %arg5: memref<128x128xbf16, #tpu.memory_space<vmem>>, %arg6: memref<1x128xf32, #tpu.memory_space<vmem>>, %arg7: memref<128x128xbf16, #tpu.memory_space<vmem>>, %arg8: memref<1x128xf32, #tpu.memory_space<vmem>>, %arg9: memref<128x1xbf16, #tpu.memory_space<vmem>>, %arg10: memref<1x1xf32, #tpu.memory_space<vmem>>, %arg11: memref<8x1xf32, #tpu.memory_space<vmem>>) attributes {dimension_semantics = [#tpu.dimension_semantics<parallel>], iteration_bounds = array<i64: 4>, scalar_prefetch = 0 : i64, scratch_operands = 0 : i64, tpu.core_type = #tpu.core_type<tc>, window_params = [{transform_indices = @transform_0, window_bounds = array<i64: 8, 8, 32>}, {transform_indices = @transform_1, window_bounds = array<i64: 8, 8>}, {pipeline_mode = #tpu.pipeline_mode<synchronous>, transform_indices = @transform_2, window_bounds = array<i64: 32, 128>}, {pipeline_mode = #tpu.pipeline_mode<synchronous>, transform_indices = @transform_3, window_bounds = array<i64: 1, 128>}, {pipeline_mode = #tpu.pipeline_mode<synchronous>, transform_indices = @transform_4, window_bounds = array<i64: 128, 128>}, {pipeline_mode = #tpu.pipeline_mode<synchronous>, transform_indices = @transform_5, window_bounds = array<i64: 1, 128>}, {pipeline_mode = #tpu.pipeline_mode<synchronous>, transform_indices = @transform_6, window_bounds = array<i64: 128, 128>}, {pipeline_mode = #tpu.pipeline_mode<synchronous>, transform_indices = @transform_7, window_bounds = array<i64: 1, 128>}, {pipeline_mode = #tpu.pipeline_mode<synchronous>, transform_indices = @transform_8, window_bounds = array<i64: 128, 1>}, {pipeline_mode = #tpu.pipeline_mode<synchronous>, transform_indices = @transform_9, window_bounds = array<i64: 1, 1>}, {transform_indices = @transform_10, window_bounds = array<i64: 8, 1>}]} {
    %c0 = arith.constant 0 : index
    %c0_0 = arith.constant 0 : index
    %c0_1 = arith.constant 0 : index
    %0 = vector.load %arg1[%c0, %c0_0, %c0_1] : memref<8x8x32xbf16, #tpu.memory_space<vmem>>, vector<8x8x32xbf16>
    %c0_2 = arith.constant 0 : index
    %c0_3 = arith.constant 0 : index
    %1 = vector.load %arg2[%c0_2, %c0_3] : memref<8x8xf32, #tpu.memory_space<vmem>>, vector<8x8xf32>
    %2 = vector.shape_cast %0 : vector<8x8x32xbf16> to vector<64x32xbf16>
    %c0_4 = arith.constant 0 : index
    %c0_5 = arith.constant 0 : index
    %3 = vector.load %arg3[%c0_4, %c0_5] : memref<32x128xbf16, #tpu.memory_space<vmem>>, vector<32x32xbf16>
    %cst = arith.constant dense<0.000000e+00> : vector<64x32xf32>
    %4 = tpu.matmul %2, %3, %cst {dimension_numbers = #tpu.dot_dimension_numbers<[1], [0], [0], [1], [0, 0, 1, 1], [], []>} : vector<64x32xbf16>, vector<32x32xbf16>, vector<64x32xf32> -> vector<64x32xf32>
    %c0_6 = arith.constant 0 : index
    %c0_7 = arith.constant 0 : index
    %5 = vector.load %arg4[%c0_6, %c0_7] : memref<1x128xf32, #tpu.memory_space<vmem>>, vector<1x32xf32>
    %6 = vector.broadcast %5 : vector<1x32xf32> to vector<64x32xf32>
    %7 = arith.addf %4, %6 : vector<64x32xf32>
    %8 = vector.shape_cast %7 : vector<64x32xf32> to vector<8x8x32xf32>
    %9 = arith.extf %0 : vector<8x8x32xbf16> to vector<8x8x32xf32>
    %10 = arith.mulf %9, %8 : vector<8x8x32xf32>
    %cst_8 = arith.constant dense<0.000000e+00> : vector<8x8xf32>
    %11 = vector.multi_reduction <add>, %10, %cst_8 [2] : vector<8x8x32xf32> to vector<8x8xf32>
    %12 = math.tanh %11 : vector<8x8xf32>
    %13 = arith.mulf %12, %1 : vector<8x8xf32>
    %cst_9 = arith.constant 1.000000e+00 : f32
    %14 = vector.broadcast %cst_9 : f32 to vector<8x8xf32>
    %15 = arith.subf %14, %1 : vector<8x8xf32>
    %cst_10 = arith.constant -1.000000e+04 : f32
    %16 = vector.broadcast %cst_10 : f32 to vector<8x8xf32>
    %17 = arith.mulf %15, %16 : vector<8x8xf32>
    %18 = arith.addf %13, %17 : vector<8x8xf32>
    %cst_11 = arith.constant dense<0xFF800000> : vector<8xf32>
    %19 = vector.multi_reduction <maximumf>, %18, %cst_11 [1] : vector<8x8xf32> to vector<8xf32>
    %20 = vector.shape_cast %19 : vector<8xf32> to vector<8x1xf32>
    %21 = vector.broadcast %20 : vector<8x1xf32> to vector<8x8xf32>
    %22 = arith.subf %18, %21 : vector<8x8xf32>
    %23 = math.exp %22 : vector<8x8xf32>
    %cst_12 = arith.constant dense<0.000000e+00> : vector<8xf32>
    %24 = vector.multi_reduction <add>, %23, %cst_12 [1] : vector<8x8xf32> to vector<8xf32>
    %25 = vector.shape_cast %24 : vector<8xf32> to vector<8x1xf32>
    %26 = tpu.reciprocal %25 {approx = true} : vector<8x1xf32> -> vector<8x1xf32>
    %27 = vector.broadcast %26 : vector<8x1xf32> to vector<8x8xf32>
    %28 = arith.mulf %23, %27 : vector<8x8xf32>
    %c0_13 = arith.constant 0 : index
    %c32 = arith.constant 32 : index
    %29 = vector.load %arg3[%c0_13, %c32] : memref<32x128xbf16, #tpu.memory_space<vmem>>, vector<32x32xbf16>
    %cst_14 = arith.constant dense<0.000000e+00> : vector<64x32xf32>
    %30 = tpu.matmul %2, %29, %cst_14 {dimension_numbers = #tpu.dot_dimension_numbers<[1], [0], [0], [1], [0, 0, 1, 1], [], []>} : vector<64x32xbf16>, vector<32x32xbf16>, vector<64x32xf32> -> vector<64x32xf32>
    %c0_15 = arith.constant 0 : index
    %c32_16 = arith.constant 32 : index
    %31 = vector.load %arg4[%c0_15, %c32_16] : memref<1x128xf32, #tpu.memory_space<vmem>>, vector<1x32xf32>
    %32 = vector.broadcast %31 : vector<1x32xf32> to vector<64x32xf32>
    %33 = arith.addf %30, %32 : vector<64x32xf32>
    %34 = vector.shape_cast %33 : vector<64x32xf32> to vector<8x8x32xf32>
    %35 = arith.extf %0 : vector<8x8x32xbf16> to vector<8x8x32xf32>
    %36 = arith.mulf %35, %34 : vector<8x8x32xf32>
    %cst_17 = arith.constant dense<0.000000e+00> : vector<8x8xf32>
    %37 = vector.multi_reduction <add>, %36, %cst_17 [2] : vector<8x8x32xf32> to vector<8x8xf32>
    %38 = math.tanh %37 : vector<8x8xf32>
    %39 = arith.mulf %38, %1 : vector<8x8xf32>
    %cst_18 = arith.constant 1.000000e+00 : f32
    %40 = vector.broadcast %cst_18 : f32 to vector<8x8xf32>
    %41 = arith.subf %40, %1 : vector<8x8xf32>
    %cst_19 = arith.constant -1.000000e+04 : f32
    %42 = vector.broadcast %cst_19 : f32 to vector<8x8xf32>
    %43 = arith.mulf %41, %42 : vector<8x8xf32>
    %44 = arith.addf %39, %43 : vector<8x8xf32>
    %cst_20 = arith.constant dense<0xFF800000> : vector<8xf32>
    %45 = vector.multi_reduction <maximumf>, %44, %cst_20 [1] : vector<8x8xf32> to vector<8xf32>
    %46 = vector.shape_cast %45 : vector<8xf32> to vector<8x1xf32>
    %47 = vector.broadcast %46 : vector<8x1xf32> to vector<8x8xf32>
    %48 = arith.subf %44, %47 : vector<8x8xf32>
    %49 = math.exp %48 : vector<8x8xf32>
    %cst_21 = arith.constant dense<0.000000e+00> : vector<8xf32>
    %50 = vector.multi_reduction <add>, %49, %cst_21 [1] : vector<8x8xf32> to vector<8xf32>
    %51 = vector.shape_cast %50 : vector<8xf32> to vector<8x1xf32>
    %52 = tpu.reciprocal %51 {approx = true} : vector<8x1xf32> -> vector<8x1xf32>
    %53 = vector.broadcast %52 : vector<8x1xf32> to vector<8x8xf32>
    %54 = arith.mulf %49, %53 : vector<8x8xf32>
    %c0_22 = arith.constant 0 : index
    %c64 = arith.constant 64 : index
    %55 = vector.load %arg3[%c0_22, %c64] : memref<32x128xbf16, #tpu.memory_space<vmem>>, vector<32x32xbf16>
    %cst_23 = arith.constant dense<0.000000e+00> : vector<64x32xf32>
    %56 = tpu.matmul %2, %55, %cst_23 {dimension_numbers = #tpu.dot_dimension_numbers<[1], [0], [0], [1], [0, 0, 1, 1], [], []>} : vector<64x32xbf16>, vector<32x32xbf16>, vector<64x32xf32> -> vector<64x32xf32>
    %c0_24 = arith.constant 0 : index
    %c64_25 = arith.constant 64 : index
    %57 = vector.load %arg4[%c0_24, %c64_25] : memref<1x128xf32, #tpu.memory_space<vmem>>, vector<1x32xf32>
    %58 = vector.broadcast %57 : vector<1x32xf32> to vector<64x32xf32>
    %59 = arith.addf %56, %58 : vector<64x32xf32>
    %60 = vector.shape_cast %59 : vector<64x32xf32> to vector<8x8x32xf32>
    %61 = arith.extf %0 : vector<8x8x32xbf16> to vector<8x8x32xf32>
    %62 = arith.mulf %61, %60 : vector<8x8x32xf32>
    %cst_26 = arith.constant dense<0.000000e+00> : vector<8x8xf32>
    %63 = vector.multi_reduction <add>, %62, %cst_26 [2] : vector<8x8x32xf32> to vector<8x8xf32>
    %64 = math.tanh %63 : vector<8x8xf32>
    %65 = arith.mulf %64, %1 : vector<8x8xf32>
    %cst_27 = arith.constant 1.000000e+00 : f32
    %66 = vector.broadcast %cst_27 : f32 to vector<8x8xf32>
    %67 = arith.subf %66, %1 : vector<8x8xf32>
    %cst_28 = arith.constant -1.000000e+04 : f32
    %68 = vector.broadcast %cst_28 : f32 to vector<8x8xf32>
    %69 = arith.mulf %67, %68 : vector<8x8xf32>
    %70 = arith.addf %65, %69 : vector<8x8xf32>
    %cst_29 = arith.constant dense<0xFF800000> : vector<8xf32>
    %71 = vector.multi_reduction <maximumf>, %70, %cst_29 [1] : vector<8x8xf32> to vector<8xf32>
    %72 = vector.shape_cast %71 : vector<8xf32> to vector<8x1xf32>
    %73 = vector.broadcast %72 : vector<8x1xf32> to vector<8x8xf32>
    %74 = arith.subf %70, %73 : vector<8x8xf32>
    %75 = math.exp %74 : vector<8x8xf32>
    %cst_30 = arith.constant dense<0.000000e+00> : vector<8xf32>
    %76 = vector.multi_reduction <add>, %75, %cst_30 [1] : vector<8x8xf32> to vector<8xf32>
    %77 = vector.shape_cast %76 : vector<8xf32> to vector<8x1xf32>
    %78 = tpu.reciprocal %77 {approx = true} : vector<8x1xf32> -> vector<8x1xf32>
    %79 = vector.broadcast %78 : vector<8x1xf32> to vector<8x8xf32>
    %80 = arith.mulf %75, %79 : vector<8x8xf32>
    %c0_31 = arith.constant 0 : index
    %c96 = arith.constant 96 : index
    %81 = vector.load %arg3[%c0_31, %c96] : memref<32x128xbf16, #tpu.memory_space<vmem>>, vector<32x32xbf16>
    %cst_32 = arith.constant dense<0.000000e+00> : vector<64x32xf32>
    %82 = tpu.matmul %2, %81, %cst_32 {dimension_numbers = #tpu.dot_dimension_numbers<[1], [0], [0], [1], [0, 0, 1, 1], [], []>} : vector<64x32xbf16>, vector<32x32xbf16>, vector<64x32xf32> -> vector<64x32xf32>
    %c0_33 = arith.constant 0 : index
    %c96_34 = arith.constant 96 : index
    %83 = vector.load %arg4[%c0_33, %c96_34] : memref<1x128xf32, #tpu.memory_space<vmem>>, vector<1x32xf32>
    %84 = vector.broadcast %83 : vector<1x32xf32> to vector<64x32xf32>
    %85 = arith.addf %82, %84 : vector<64x32xf32>
    %86 = vector.shape_cast %85 : vector<64x32xf32> to vector<8x8x32xf32>
    %87 = arith.extf %0 : vector<8x8x32xbf16> to vector<8x8x32xf32>
    %88 = arith.mulf %87, %86 : vector<8x8x32xf32>
    %cst_35 = arith.constant dense<0.000000e+00> : vector<8x8xf32>
    %89 = vector.multi_reduction <add>, %88, %cst_35 [2] : vector<8x8x32xf32> to vector<8x8xf32>
    %90 = math.tanh %89 : vector<8x8xf32>
    %91 = arith.mulf %90, %1 : vector<8x8xf32>
    %cst_36 = arith.constant 1.000000e+00 : f32
    %92 = vector.broadcast %cst_36 : f32 to vector<8x8xf32>
    %93 = arith.subf %92, %1 : vector<8x8xf32>
    %cst_37 = arith.constant -1.000000e+04 : f32
    %94 = vector.broadcast %cst_37 : f32 to vector<8x8xf32>
    %95 = arith.mulf %93, %94 : vector<8x8xf32>
    %96 = arith.addf %91, %95 : vector<8x8xf32>
    %cst_38 = arith.constant dense<0xFF800000> : vector<8xf32>
    %97 = vector.multi_reduction <maximumf>, %96, %cst_38 [1] : vector<8x8xf32> to vector<8xf32>
    %98 = vector.shape_cast %97 : vector<8xf32> to vector<8x1xf32>
    %99 = vector.broadcast %98 : vector<8x1xf32> to vector<8x8xf32>
    %100 = arith.subf %96, %99 : vector<8x8xf32>
    %101 = math.exp %100 : vector<8x8xf32>
    %cst_39 = arith.constant dense<0.000000e+00> : vector<8xf32>
    %102 = vector.multi_reduction <add>, %101, %cst_39 [1] : vector<8x8xf32> to vector<8xf32>
    %103 = vector.shape_cast %102 : vector<8xf32> to vector<8x1xf32>
    %104 = tpu.reciprocal %103 {approx = true} : vector<8x1xf32> -> vector<8x1xf32>
    %105 = vector.broadcast %104 : vector<8x1xf32> to vector<8x8xf32>
    %106 = arith.mulf %101, %105 : vector<8x8xf32>
    %107 = vector.shape_cast %28 : vector<8x8xf32> to vector<8x1x8xf32>
    %108 = vector.shape_cast %54 : vector<8x8xf32> to vector<8x1x8xf32>
    %109 = vector.shape_cast %80 : vector<8x8xf32> to vector<8x1x8xf32>
    %110 = vector.shape_cast %106 : vector<8x8xf32> to vector<8x1x8xf32>
    %111 = tpu.concatenate %107, %108, %109, %110 in 1 : vector<8x1x8xf32>, vector<8x1x8xf32>, vector<8x1x8xf32>, vector<8x1x8xf32> -> vector<8x4x8xf32>
    %112 = arith.truncf %111 : vector<8x4x8xf32> to vector<8x4x8xbf16>
    "tpu.trace_start"() <{level = 10 : i32, message = "bhl,ble->bhe"}> : () -> ()
    %cst_40 = arith.constant dense<0.000000e+00> : vector<8x4x32xf32>
    %113 = tpu.matmul %112, %0, %cst_40 {dimension_numbers = #tpu.dot_dimension_numbers<[2], [1], [1], [2], [0, 0, 0, 1, 1, 2], [0], [0]>} : vector<8x4x8xbf16>, vector<8x8x32xbf16>, vector<8x4x32xf32> -> vector<8x4x32xf32>
    %cst_41 = arith.constant 0.000000e+00 : f32
    "tpu.trace_stop"() : () -> ()
    %114 = vector.broadcast %cst_41 : f32 to vector<8x128xf32>
    %115 = vector.extract_strided_slice %113 {offsets = [0, 0, 0], sizes = [8, 1, 32], strides = [1, 1, 1]} : vector<8x4x32xf32> to vector<8x1x32xf32>
    %116 = vector.shape_cast %115 : vector<8x1x32xf32> to vector<8x32xf32>
    %117 = arith.truncf %116 : vector<8x32xf32> to vector<8x32xbf16>
    %c0_42 = arith.constant 0 : index
    %c0_43 = arith.constant 0 : index
    %118 = vector.load %arg5[%c0_42, %c0_43] : memref<128x128xbf16, #tpu.memory_space<vmem>>, vector<32x128xbf16>
    %cst_44 = arith.constant dense<0.000000e+00> : vector<8x128xf32>
    %119 = tpu.matmul %117, %118, %cst_44 {dimension_numbers = #tpu.dot_dimension_numbers<[1], [0], [0], [1], [0, 0, 1, 1], [], []>} : vector<8x32xbf16>, vector<32x128xbf16>, vector<8x128xf32> -> vector<8x128xf32>
    %120 = arith.addf %114, %119 : vector<8x128xf32>
    %121 = vector.extract_strided_slice %113 {offsets = [0, 1, 0], sizes = [8, 1, 32], strides = [1, 1, 1]} : vector<8x4x32xf32> to vector<8x1x32xf32>
    %122 = vector.shape_cast %121 : vector<8x1x32xf32> to vector<8x32xf32>
    %123 = arith.truncf %122 : vector<8x32xf32> to vector<8x32xbf16>
    %c32_45 = arith.constant 32 : index
    %c0_46 = arith.constant 0 : index
    %124 = vector.load %arg5[%c32_45, %c0_46] : memref<128x128xbf16, #tpu.memory_space<vmem>>, vector<32x128xbf16>
    %cst_47 = arith.constant dense<0.000000e+00> : vector<8x128xf32>
    %125 = tpu.matmul %123, %124, %cst_47 {dimension_numbers = #tpu.dot_dimension_numbers<[1], [0], [0], [1], [0, 0, 1, 1], [], []>} : vector<8x32xbf16>, vector<32x128xbf16>, vector<8x128xf32> -> vector<8x128xf32>
    %126 = arith.addf %120, %125 : vector<8x128xf32>
    %127 = vector.extract_strided_slice %113 {offsets = [0, 2, 0], sizes = [8, 1, 32], strides = [1, 1, 1]} : vector<8x4x32xf32> to vector<8x1x32xf32>
    %128 = vector.shape_cast %127 : vector<8x1x32xf32> to vector<8x32xf32>
    %129 = arith.truncf %128 : vector<8x32xf32> to vector<8x32xbf16>
    %c64_48 = arith.constant 64 : index
    %c0_49 = arith.constant 0 : index
    %130 = vector.load %arg5[%c64_48, %c0_49] : memref<128x128xbf16, #tpu.memory_space<vmem>>, vector<32x128xbf16>
    %cst_50 = arith.constant dense<0.000000e+00> : vector<8x128xf32>
    %131 = tpu.matmul %129, %130, %cst_50 {dimension_numbers = #tpu.dot_dimension_numbers<[1], [0], [0], [1], [0, 0, 1, 1], [], []>} : vector<8x32xbf16>, vector<32x128xbf16>, vector<8x128xf32> -> vector<8x128xf32>
    %132 = arith.addf %126, %131 : vector<8x128xf32>
    %133 = vector.extract_strided_slice %113 {offsets = [0, 3, 0], sizes = [8, 1, 32], strides = [1, 1, 1]} : vector<8x4x32xf32> to vector<8x1x32xf32>
    %134 = vector.shape_cast %133 : vector<8x1x32xf32> to vector<8x32xf32>
    %135 = arith.truncf %134 : vector<8x32xf32> to vector<8x32xbf16>
    %c96_51 = arith.constant 96 : index
    %c0_52 = arith.constant 0 : index
    %136 = vector.load %arg5[%c96_51, %c0_52] : memref<128x128xbf16, #tpu.memory_space<vmem>>, vector<32x128xbf16>
    %cst_53 = arith.constant dense<0.000000e+00> : vector<8x128xf32>
    %137 = tpu.matmul %135, %136, %cst_53 {dimension_numbers = #tpu.dot_dimension_numbers<[1], [0], [0], [1], [0, 0, 1, 1], [], []>} : vector<8x32xbf16>, vector<32x128xbf16>, vector<8x128xf32> -> vector<8x128xf32>
    %138 = arith.addf %132, %137 : vector<8x128xf32>
    %c0_54 = arith.constant 0 : index
    %c0_55 = arith.constant 0 : index
    %139 = vector.load %arg6[%c0_54, %c0_55] : memref<1x128xf32, #tpu.memory_space<vmem>>, vector<1x128xf32>
    %140 = vector.broadcast %139 : vector<1x128xf32> to vector<8x128xf32>
    %141 = arith.addf %138, %140 : vector<8x128xf32>
    %cst_56 = arith.constant 0.000000e+00 : f32
    %142 = vector.broadcast %cst_56 : f32 to vector<8x128xf32>
    %143 = arith.maximumf %141, %142 : vector<8x128xf32>
    %144 = arith.truncf %143 : vector<8x128xf32> to vector<8x128xbf16>
    %c0_57 = arith.constant 0 : index
    %c0_58 = arith.constant 0 : index
    %145 = vector.load %arg7[%c0_57, %c0_58] : memref<128x128xbf16, #tpu.memory_space<vmem>>, vector<128x128xbf16>
    %cst_59 = arith.constant dense<0.000000e+00> : vector<8x128xf32>
    %146 = tpu.matmul %144, %145, %cst_59 {dimension_numbers = #tpu.dot_dimension_numbers<[1], [0], [0], [1], [0, 0, 1, 1], [], []>} : vector<8x128xbf16>, vector<128x128xbf16>, vector<8x128xf32> -> vector<8x128xf32>
    %c0_60 = arith.constant 0 : index
    %c0_61 = arith.constant 0 : index
    %147 = vector.load %arg8[%c0_60, %c0_61] : memref<1x128xf32, #tpu.memory_space<vmem>>, vector<1x128xf32>
    %148 = vector.broadcast %147 : vector<1x128xf32> to vector<8x128xf32>
    %149 = arith.addf %146, %148 : vector<8x128xf32>
    %cst_62 = arith.constant 0.000000e+00 : f32
    %150 = vector.broadcast %cst_62 : f32 to vector<8x128xf32>
    %151 = arith.maximumf %149, %150 : vector<8x128xf32>
    %152 = arith.truncf %151 : vector<8x128xf32> to vector<8x128xbf16>
    %c0_63 = arith.constant 0 : index
    %c0_64 = arith.constant 0 : index
    %153 = vector.load %arg9[%c0_63, %c0_64] : memref<128x1xbf16, #tpu.memory_space<vmem>>, vector<128x1xbf16>
    %cst_65 = arith.constant dense<0.000000e+00> : vector<8x1xf32>
    %154 = tpu.matmul %152, %153, %cst_65 {dimension_numbers = #tpu.dot_dimension_numbers<[1], [0], [0], [1], [0, 0, 1, 1], [], []>} : vector<8x128xbf16>, vector<128x1xbf16>, vector<8x1xf32> -> vector<8x1xf32>
    %c0_66 = arith.constant 0 : index
    %c0_67 = arith.constant 0 : index
    %155 = vector.load %arg10[%c0_66, %c0_67] : memref<1x1xf32, #tpu.memory_space<vmem>>, vector<1x1xf32>
    %156 = vector.broadcast %155 : vector<1x1xf32> to vector<8x1xf32>
    %157 = arith.addf %154, %156 : vector<8x1xf32>
    %c0_68 = arith.constant 0 : index
    %c0_69 = arith.constant 0 : index
    %158 = vector.load %arg11[%c0_68, %c0_69] : memref<8x1xf32, #tpu.memory_space<vmem>>, vector<8x1xf32>
    tpu.vector_store %arg11[%c0_68, %c0_69], %157 {strides = array<i32>} : memref<8x1xf32, #tpu.memory_space<vmem>>, vector<8x1xf32>,
    return
  }
  func.func @transform_0(%arg0: i32) -> (i32, i32, i32) {
    %c0_i32 = arith.constant 0 : i32
    %c0_i32_0 = arith.constant 0 : i32
    %c0_i32_1 = arith.constant 0 : i32
    return %arg0, %c0_i32, %c0_i32_0 : i32, i32, i32
  }
  func.func @transform_1(%arg0: i32) -> (i32, i32) {
    %c0_i32 = arith.constant 0 : i32
    %c0_i32_0 = arith.constant 0 : i32
    return %arg0, %c0_i32 : i32, i32
  }
  func.func @transform_2(%arg0: i32) -> (i32, i32) {
    %c0_i32 = arith.constant 0 : i32
    %c0_i32_0 = arith.constant 0 : i32
    %c0_i32_1 = arith.constant 0 : i32
    return %c0_i32, %c0_i32_0 : i32, i32
  }
  func.func @transform_3(%arg0: i32) -> (i32, i32) {
    %c0_i32 = arith.constant 0 : i32
    %c0_i32_0 = arith.constant 0 : i32
    %c0_i32_1 = arith.constant 0 : i32
    return %c0_i32, %c0_i32_0 : i32, i32
  }
  func.func @transform_4(%arg0: i32) -> (i32, i32) {
    %c0_i32 = arith.constant 0 : i32
    %c0_i32_0 = arith.constant 0 : i32
    %c0_i32_1 = arith.constant 0 : i32
    return %c0_i32, %c0_i32_0 : i32, i32
  }
  func.func @transform_5(%arg0: i32) -> (i32, i32) {
    %c0_i32 = arith.constant 0 : i32
    %c0_i32_0 = arith.constant 0 : i32
    %c0_i32_1 = arith.constant 0 : i32
    return %c0_i32, %c0_i32_0 : i32, i32
  }
  func.func @transform_6(%arg0: i32) -> (i32, i32) {
    %c0_i32 = arith.constant 0 : i32
    %c0_i32_0 = arith.constant 0 : i32
    %c0_i32_1 = arith.constant 0 : i32
    return %c0_i32, %c0_i32_0 : i32, i32
  }
  func.func @transform_7(%arg0: i32) -> (i32, i32) {
    %c0_i32 = arith.constant 0 : i32
    %c0_i32_0 = arith.constant 0 : i32
    %c0_i32_1 = arith.constant 0 : i32
    return %c0_i32, %c0_i32_0 : i32, i32
  }
  func.func @transform_8(%arg0: i32) -> (i32, i32) {
    %c0_i32 = arith.constant 0 : i32
    %c0_i32_0 = arith.constant 0 : i32
    %c0_i32_1 = arith.constant 0 : i32
    return %c0_i32, %c0_i32_0 : i32, i32
  }
  func.func @transform_9(%arg0: i32) -> (i32, i32) {
    %c0_i32 = arith.constant 0 : i32
    %c0_i32_0 = arith.constant 0 : i32
    %c0_i32_1 = arith.constant 0 : i32
    return %c0_i32, %c0_i32_0 : i32, i32
  }
  func.func @transform_10(%arg0: i32) -> (i32, i32) {
    %c0_i32 = arith.constant 0 : i32
    %c0_i32_0 = arith.constant 0 : i32
    return %arg0, %c0_i32 : i32, i32
  }
}

</mosaic_0001>

<llo_original>
// kernel: tpu_custom_call.1
$region0: #{tpu_custom_call.1}
  #allocation0 [shape = 'u32[]', space=smem, size = 0x4, offset = 0x4, fixed_abs, tag = 'smem constant byte address 0x4 - core index']
  #allocation1 [shape = 'u32[144,128]{1,0:T(1,128)}', space=vmem, size = 0x12000, scoped, tag = 'internal scratch']
  #allocation2 [shape = 'f32[1,1]{1,0:T(1,128)S(1)}', space=vmem, size = 0x200, scoped, tag = 'scoped memory for tpu_custom_call.1']
  %s0 = inlined_call_operand.hbm [shape: bf16[32,8,32], index: 0, kind: input, shape index: {}]
  %s1 = inlined_call_operand.hbm [shape: f32[32,8], index: 1, kind: input, shape index: {}]
  %s2 = inlined_call_operand.hbm [shape: bf16[32,128], index: 2, kind: input, shape index: {}]
  %s3 = inlined_call_operand.hbm [shape: f32[1,128], index: 3, kind: input, shape index: {}]
  %s4 = inlined_call_operand.hbm [shape: bf16[128,128], index: 4, kind: input, shape index: {}]
  %s5 = inlined_call_operand.hbm [shape: f32[1,128], index: 5, kind: input, shape index: {}]
  %s6 = inlined_call_operand.hbm [shape: bf16[128,128], index: 6, kind: input, shape index: {}]
  %s7 = inlined_call_operand.hbm [shape: f32[1,128], index: 7, kind: input, shape index: {}]
  %s8 = inlined_call_operand.hbm [shape: bf16[128,1], index: 8, kind: input, shape index: {}]
  %s9 = inlined_call_operand.<no memory space> [shape: f32[1,1], index: 9, kind: input, shape index: {}]
  %s10 = inlined_call_operand.hbm [shape: f32[32,1], index: 10, kind: output, shape index: {}]
  %s11 = sld [smem:[#allocation0]]
  $region109: #{tpu_custom_call.1} parent=0
    _
  %s13 = ssub.s32 1, %s11
  %s14 = scalar_select 0, %s13, %s11
  %v15 = vstv %s9
  %16 = vst [vmem:[#allocation2] sm:$0x1] %v15
  $region1: #{tpu_custom_call.1} parent=0
    #allocation3 [shape = 'u8[32768]{0}', space=vmem, size = 0x8000, scoped, tag = 'input window, operand 0']
    #allocation4 [shape = 's32[2]{0}', space=sflag, size = 0x8, scoped, tag = 'scoped memory for tpu_custom_call.1']
    #allocation5 [shape = 's32[2]{0}', space=sflag, size = 0x8, scoped, tag = 'scoped memory for tpu_custom_call.1']
    #allocation6 [shape = 'u8[8192]{0}', space=vmem, size = 0x2000, scoped, tag = 'input window, operand 1']
    #allocation7 [shape = 's32[2]{0}', space=sflag, size = 0x8, scoped, tag = 'scoped memory for tpu_custom_call.1']
    #allocation8 [shape = 'u8[8192]{0}', space=vmem, size = 0x2000, scoped, tag = 'input window, operand 2, single buffered']
    #allocation9 [shape = 'u8[512]{0}', space=vmem, size = 0x400, scoped, tag = 'input window, operand 3, single buffered']
    #allocation10 [shape = 's32[1]{0}', space=sflag, size = 0x4, scoped, tag = 'scoped memory for tpu_custom_call.1']
    #allocation11 [shape = 'u8[32768]{0}', space=vmem, size = 0x8000, scoped, tag = 'input window, operand 4, single buffered']
    #allocation12 [shape = 'u8[512]{0}', space=vmem, size = 0x400, scoped, tag = 'input window, operand 5, single buffered']
    #allocation13 [shape = 's32[1]{0}', space=sflag, size = 0x4, scoped, tag = 'scoped memory for tpu_custom_call.1']
    #allocation14 [shape = 'u8[32768]{0}', space=vmem, size = 0x8000, scoped, tag = 'input window, operand 6, single buffered']
    #allocation15 [shape = 'u8[512]{0}', space=vmem, size = 0x400, scoped, tag = 'input window, operand 7, single buffered']
    #allocation16 [shape = 's32[1]{0}', space=sflag, size = 0x4, scoped, tag = 'scoped memory for tpu_custom_call.1']
    #allocation17 [shape = 'u8[32768]{0}', space=vmem, size = 0x8000, scoped, tag = 'input window, operand 8, single buffered']
    #allocation18 [shape = 'u8[8192]{0}', space=vmem, size = 0x2000, scoped, tag = 'output window, operand 0']
    %17 = vsyncpa [#allocation4], 0
    %s18 = scalar_lea.sflag [#allocation4], 1
    %19 = vsyncpa %s18, 0
    %20 = vsyncpa [#allocation7], 0
    %s21 = scalar_lea.sflag [#allocation7], 1
    %22 = vsyncpa %s21, 0
    %23 = vsyncpa [#allocation10], 0
    %24 = vsyncpa [#allocation13], 0
    %25 = vsyncpa [#allocation16], 0
    %26 = vsyncpa [#allocation5], 0
    %s27 = scalar_lea.sflag [#allocation5], 1
    %28 = vsyncpa %s27, 0
    loop: start=0, step=1, limit=6
    $region2: #{tpu_custom_call.1} parent=1 // loop_pre_header
      _
    $region3: #{tpu_custom_call.1} parent=1 // loop_header
      %s30 = sphi 0, %s34
      %p31 = scmp.ge.s32.totalorder %s30, 6
      %s40 = sphi 0, %s42
      %s43 = sphi 0, %s40
      %s44 = sphi 0, %s43
      %s60 = sphi 0, %s44
      %s66 = sphi 0, %s68
      %s69 = sphi 0, %s66
      %s70 = sphi 0, %s69
      %s86 = sphi 0, %s70
      %s90 = sphi 0, %s90
      %s92 = sphi 0, %s90
      %s93 = sphi 0, %s92
      %s107 = sphi 0, %s93
      %s111 = sphi 0, %s111
      %s113 = sphi 0, %s111
      %s114 = sphi 0, %s113
      %s128 = sphi 0, %s114
      %s132 = sphi 0, %s132
      %s134 = sphi 0, %s132
      %s135 = sphi 0, %s134
      %s149 = sphi 0, %s135
      %s153 = sphi 0, %s153
      %s155 = sphi 0, %s153
      %s156 = sphi 0, %s155
      %s170 = sphi 0, %s156
      %s174 = sphi 0, %s174
      %s176 = sphi 0, %s174
      %s177 = sphi 0, %s176
      %s191 = sphi 0, %s177
      %s195 = sphi 0, %s195
      %s197 = sphi 0, %s195
      %s198 = sphi 0, %s197
      %s212 = sphi 0, %s198
      %s216 = sphi 0, %s216
      %s218 = sphi 0, %s216
      %s219 = sphi 0, %s218
      %s233 = sphi 0, %s219
      %s237 = sphi 0, %s237
      %s239 = sphi 0, %s237
      %s240 = sphi 0, %s239
      %s254 = sphi 0, %s240
      %s260 = sphi 0, %s262
      %s263 = sphi 0, %s260
      %s264 = sphi 0, %s263
      %s280 = sphi 0, %s264
    $region4: #{tpu_custom_call.1} parent=1 // loop_header_branch
      %33 = sbr.rel (%p31) target = $region8
    $region5: #{tpu_custom_call.1} parent=1 // loop_body
      %s35 = ssub.s32 %s30, 1
      %s36 = ssub.s32 %s30, 2
      %s37 = sadd.s32 %s30, 1
      %s38 = ssub.s32 %s30, %s37
      %p39 = scmp.eq.s32.totalorder %s38, 0
      %s41 = sadd.s32 %s40, 1
      %s42 = scalar_select %p39, %s40, %s41
      %p45 = pneg %p39
      %p46 = scmp.eq.s32.totalorder %s30, 3
      %p47 = por %p45, %p46
      %p48 = scmp.ne.s32.totalorder %s40, %s43
      %p49 = scmp.eq.s32.totalorder %s30, 0
      %p50 = por %p48, %p49
      %p51 = scmp.ne.s32.totalorder %s40, %s43
      %p52 = scmp.eq.s32.totalorder %s35, 3
      %p53 = por %p51, %p52
      %p54 = scmp.ne.s32.totalorder %s43, %s44
      %p55 = scmp.eq.s32.totalorder %s35, 0
      %p56 = por %p54, %p55
      %p57 = scmp.ne.s32.totalorder %s43, %s44
      %p58 = scmp.eq.s32.totalorder %s36, 3
      %p59 = por %p57, %p58
      %p61 = scmp.ne.s32.totalorder %s44, %s60
      %p62 = scmp.eq.s32.totalorder %s36, 0
      %p63 = por %p61, %p62
      %s64 = ssub.s32 %s30, %s37
      %p65 = scmp.eq.s32.totalorder %s64, 0
      %s67 = sadd.s32 %s66, 1
      %s68 = scalar_select %p65, %s66, %s67
      %p71 = pneg %p65
      %p72 = scmp.eq.s32.totalorder %s30, 3
      %p73 = por %p71, %p72
      %p74 = scmp.ne.s32.totalorder %s66, %s69
      %p75 = scmp.eq.s32.totalorder %s30, 0
      %p76 = por %p74, %p75
      %p77 = scmp.ne.s32.totalorder %s66, %s69
      %p78 = scmp.eq.s32.totalorder %s35, 3
      %p79 = por %p77, %p78
      %p80 = scmp.ne.s32.totalorder %s69, %s70
      %p81 = scmp.eq.s32.totalorder %s35, 0
      %p82 = por %p80, %p81
      %p83 = scmp.ne.s32.totalorder %s69, %s70
      %p84 = scmp.eq.s32.totalorder %s36, 3
      %p85 = por %p83, %p84
      %p87 = scmp.ne.s32.totalorder %s70, %s86
      %p88 = scmp.eq.s32.totalorder %s36, 0
      %p89 = por %p87, %p88
      %s91 = sadd.s32 %s90, 1
      %p94 = scmp.eq.s32.totalorder %s30, 3
      %p95 = scmp.ne.s32.totalorder %s90, %s92
      %p96 = scmp.eq.s32.totalorder %s30, 0
      %p97 = por %p95, %p96
      %p98 = scmp.ne.s32.totalorder %s90, %s92
      %p99 = scmp.eq.s32.totalorder %s35, 3
      %p100 = por %p98, %p99
      %p101 = scmp.ne.s32.totalorder %s92, %s93
      %p102 = scmp.eq.s32.totalorder %s35, 0
      %p103 = por %p101, %p102
      %p104 = scmp.ne.s32.totalorder %s92, %s93
      %p105 = scmp.eq.s32.totalorder %s36, 3
      %p106 = por %p104, %p105
      %p108 = scmp.ne.s32.totalorder %s93, %s107
      %p109 = scmp.eq.s32.totalorder %s36, 0
      %p110 = por %p108, %p109
      %s112 = sadd.s32 %s111, 1
      %p115 = scmp.eq.s32.totalorder %s30, 3
      %p116 = scmp.ne.s32.totalorder %s111, %s113
      %p117 = scmp.eq.s32.totalorder %s30, 0
      %p118 = por %p116, %p117
      %p119 = scmp.ne.s32.totalorder %s111, %s113
      %p120 = scmp.eq.s32.totalorder %s35, 3
      %p121 = por %p119, %p120
      %p122 = scmp.ne.s32.totalorder %s113, %s114
      %p123 = scmp.eq.s32.totalorder %s35, 0
      %p124 = por %p122, %p123
      %p125 = scmp.ne.s32.totalorder %s113, %s114
      %p126 = scmp.eq.s32.totalorder %s36, 3
      %p127 = por %p125, %p126
      %p129 = scmp.ne.s32.totalorder %s114, %s128
      %p130 = scmp.eq.s32.totalorder %s36, 0
      %p131 = por %p129, %p130
      %s133 = sadd.s32 %s132, 1
      %p136 = scmp.eq.s32.totalorder %s30, 3
      %p137 = scmp.ne.s32.totalorder %s132, %s134
      %p138 = scmp.eq.s32.totalorder %s30, 0
      %p139 = por %p137, %p138
      %p140 = scmp.ne.s32.totalorder %s132, %s134
      %p141 = scmp.eq.s32.totalorder %s35, 3
      %p142 = por %p140, %p141
      %p143 = scmp.ne.s32.totalorder %s134, %s135
      %p144 = scmp.eq.s32.totalorder %s35, 0
      %p145 = por %p143, %p144
      %p146 = scmp.ne.s32.totalorder %s134, %s135
      %p147 = scmp.eq.s32.totalorder %s36, 3
      %p148 = por %p146, %p147
      %p150 = scmp.ne.s32.totalorder %s135, %s149
      %p151 = scmp.eq.s32.totalorder %s36, 0
      %p152 = por %p150, %p151
      %s154 = sadd.s32 %s153, 1
      %p157 = scmp.eq.s32.totalorder %s30, 3
      %p158 = scmp.ne.s32.totalorder %s153, %s155
      %p159 = scmp.eq.s32.totalorder %s30, 0
      %p160 = por %p158, %p159
      %p161 = scmp.ne.s32.totalorder %s153, %s155
      %p162 = scmp.eq.s32.totalorder %s35, 3
      %p163 = por %p161, %p162
      %p164 = scmp.ne.s32.totalorder %s155, %s156
      %p165 = scmp.eq.s32.totalorder %s35, 0
      %p166 = por %p164, %p165
      %p167 = scmp.ne.s32.totalorder %s155, %s156
      %p168 = scmp.eq.s32.totalorder %s36, 3
      %p169 = por %p167, %p168
      %p171 = scmp.ne.s32.totalorder %s156, %s170
      %p172 = scmp.eq.s32.totalorder %s36, 0
      %p173 = por %p171, %p172
      %s175 = sadd.s32 %s174, 1
      %p178 = scmp.eq.s32.totalorder %s30, 3
      %p179 = scmp.ne.s32.totalorder %s174, %s176
      %p180 = scmp.eq.s32.totalorder %s30, 0
      %p181 = por %p179, %p180
      %p182 = scmp.ne.s32.totalorder %s174, %s176
      %p183 = scmp.eq.s32.totalorder %s35, 3
      %p184 = por %p182, %p183
      %p185 = scmp.ne.s32.totalorder %s176, %s177
      %p186 = scmp.eq.s32.totalorder %s35, 0
      %p187 = por %p185, %p186
      %p188 = scmp.ne.s32.totalorder %s176, %s177
      %p189 = scmp.eq.s32.totalorder %s36, 3
      %p190 = por %p188, %p189
      %p192 = scmp.ne.s32.totalorder %s177, %s191
      %p193 = scmp.eq.s32.totalorder %s36, 0
      %p194 = por %p192, %p193
      %s196 = sadd.s32 %s195, 1
      %p199 = scmp.eq.s32.totalorder %s30, 3
      %p200 = scmp.ne.s32.totalorder %s195, %s197
      %p201 = scmp.eq.s32.totalorder %s30, 0
      %p202 = por %p200, %p201
      %p203 = scmp.ne.s32.totalorder %s195, %s197
      %p204 = scmp.eq.s32.totalorder %s35, 3
      %p205 = por %p203, %p204
      %p206 = scmp.ne.s32.totalorder %s197, %s198
      %p207 = scmp.eq.s32.totalorder %s35, 0
      %p208 = por %p206, %p207
      %p209 = scmp.ne.s32.totalorder %s197, %s198
      %p210 = scmp.eq.s32.totalorder %s36, 3
      %p211 = por %p209, %p210
      %p213 = scmp.ne.s32.totalorder %s198, %s212
      %p214 = scmp.eq.s32.totalorder %s36, 0
      %p215 = por %p213, %p214
      %s217 = sadd.s32 %s216, 1
      %p220 = scmp.eq.s32.totalorder %s30, 3
      %p221 = scmp.ne.s32.totalorder %s216, %s218
      %p222 = scmp.eq.s32.totalorder %s30, 0
      %p223 = por %p221, %p222
      %p224 = scmp.ne.s32.totalorder %s216, %s218
      %p225 = scmp.eq.s32.totalorder %s35, 3
      %p226 = por %p224, %p225
      %p227 = scmp.ne.s32.totalorder %s218, %s219
      %p228 = scmp.eq.s32.totalorder %s35, 0
      %p229 = por %p227, %p228
      %p230 = scmp.ne.s32.totalorder %s218, %s219
      %p231 = scmp.eq.s32.totalorder %s36, 3
      %p232 = por %p230, %p231
      %p234 = scmp.ne.s32.totalorder %s219, %s233
      %p235 = scmp.eq.s32.totalorder %s36, 0
      %p236 = por %p234, %p235
      %s238 = sadd.s32 %s237, 1
      %p241 = scmp.eq.s32.totalorder %s30, 3
      %p242 = scmp.ne.s32.totalorder %s237, %s239
      %p243 = scmp.eq.s32.totalorder %s30, 0
      %p244 = por %p242, %p243
      %p245 = scmp.ne.s32.totalorder %s237, %s239
      %p246 = scmp.eq.s32.totalorder %s35, 3
      %p247 = por %p245, %p246
      %p248 = scmp.ne.s32.totalorder %s239, %s240
      %p249 = scmp.eq.s32.totalorder %s35, 0
      %p250 = por %p248, %p249
      %p251 = scmp.ne.s32.totalorder %s239, %s240
      %p252 = scmp.eq.s32.totalorder %s36, 3
      %p253 = por %p251, %p252
      %p255 = scmp.ne.s32.totalorder %s240, %s254
      %p256 = scmp.eq.s32.totalorder %s36, 0
      %p257 = por %p255, %p256
      %s258 = ssub.s32 %s30, %s37
      %p259 = scmp.eq.s32.totalorder %s258, 0
      %s261 = sadd.s32 %s260, 1
      %s262 = scalar_select %p259, %s260, %s261
      %p265 = pneg %p259
      %p266 = scmp.eq.s32.totalorder %s30, 3
      %p267 = por %p265, %p266
      %p268 = scmp.ne.s32.totalorder %s260, %s263
      %p269 = scmp.eq.s32.totalorder %s30, 0
      %p270 = por %p268, %p269
      %p271 = scmp.ne.s32.totalorder %s260, %s263
      %p272 = scmp.eq.s32.totalorder %s35, 3
      %p273 = por %p271, %p272
      %p274 = scmp.ne.s32.totalorder %s263, %s264
      %p275 = scmp.eq.s32.totalorder %s35, 0
      %p276 = por %p274, %p275
      %p277 = scmp.ne.s32.totalorder %s263, %s264
      %p278 = scmp.eq.s32.totalorder %s36, 3
      %p279 = por %p277, %p278
      %p281 = scmp.ne.s32.totalorder %s264, %s280
      %p282 = scmp.eq.s32.totalorder %s36, 0
      %p283 = por %p281, %p282
      %p284 = scmp.le.s32.totalorder 1, %s30
      %p285 = scmp.lt.s32.totalorder %s30, 5
      %p286 = pnand %p284, %p285
      %p287 = pneg %p286
      // Predicated region
      $region9: #{tpu_custom_call.1} parent=5 // pred_check
        _
      $region10: #{tpu_custom_call.1} parent=5 // pred_check_branch
        %289 = sbr.rel (%p286) target = $region12
      $region11: #{tpu_custom_call.1} parent=5 // pred_region
        %s290 = ssub.s32 %s30, 1
        // Predicated region
        $region13: #{tpu_custom_call.1} parent=11 // pred_check
          %p291 = pneg %p103
        $region14: #{tpu_custom_call.1} parent=11 // pred_check_branch
          %293 = sbr.rel (%p291) target = $region16
        $region15: #{tpu_custom_call.1} parent=11 // pred_region
          %s295 = ssub.s32 256, 256
          %296 = vsyncadd [#allocation7], %s295
          %s297 = sshll.u32 [#allocation8], 4
          %s298 = int_to_ptr.vmem [resolvable:$true] %s297
          %303 = dma.hbm_to_vmem [thread:$0]  %s2, 256, %s298, [#allocation7], 64, 64, 4
        $region16: #{tpu_custom_call.1} parent=11 // pred_fallthru
          _
        // Predicated region
        $region17: #{tpu_custom_call.1} parent=11 // pred_check
          %p304 = pneg %p124
        $region18: #{tpu_custom_call.1} parent=11 // pred_check_branch
          %306 = sbr.rel (%p304) target = $region20
        $region19: #{tpu_custom_call.1} parent=11 // pred_region
          %s308 = ssub.s32 16, 16
          %309 = vsyncadd [#allocation10], %s308
          %s311 = sshll.u32 [#allocation9], 4
          %s312 = int_to_ptr.vmem [resolvable:$true] %s311
          %314 = dma.hbm_to_vmem [thread:$0]  %s3, 16, %s312, [#allocation10]
        $region20: #{tpu_custom_call.1} parent=11 // pred_fallthru
          _
        // Predicated region
        $region21: #{tpu_custom_call.1} parent=11 // pred_check
          %p315 = pneg %p145
        $region22: #{tpu_custom_call.1} parent=11 // pred_check_branch
          %317 = sbr.rel (%p315) target = $region24
        $region23: #{tpu_custom_call.1} parent=11 // pred_region
          %s319 = ssub.s32 1024, 1024
          %320 = vsyncadd [#allocation10], %s319
          %s321 = sshll.u32 [#allocation11], 4
          %s322 = int_to_ptr.vmem [resolvable:$true] %s321
          %327 = dma.hbm_to_vmem [thread:$0]  %s4, 1024, %s322, [#allocation10], 64, 64, 4
        $region24: #{tpu_custom_call.1} parent=11 // pred_fallthru
          _
        // Predicated region
        $region25: #{tpu_custom_call.1} parent=11 // pred_check
          %p328 = pneg %p166
        $region26: #{tpu_custom_call.1} parent=11 // pred_check_branch
          %330 = sbr.rel (%p328) target = $region28
        $region27: #{tpu_custom_call.1} parent=11 // pred_region
          %s332 = ssub.s32 16, 16
          %333 = vsyncadd [#allocation13], %s332
          %s335 = sshll.u32 [#allocation12], 4
          %s336 = int_to_ptr.vmem [resolvable:$true] %s335
          %338 = dma.hbm_to_vmem [thread:$0]  %s5, 16, %s336, [#allocation13]
        $region28: #{tpu_custom_call.1} parent=11 // pred_fallthru
          _
        // Predicated region
        $region29: #{tpu_custom_call.1} parent=11 // pred_check
          %p339 = pneg %p187
        $region30: #{tpu_custom_call.1} parent=11 // pred_check_branch
          %341 = sbr.rel (%p339) target = $region32
        $region31: #{tpu_custom_call.1} parent=11 // pred_region
          %s343 = ssub.s32 1024, 1024
          %344 = vsyncadd [#allocation13], %s343
          %s345 = sshll.u32 [#allocation14], 4
          %s346 = int_to_ptr.vmem [resolvable:$true] %s345
          %351 = dma.hbm_to_vmem [thread:$0]  %s6, 1024, %s346, [#allocation13], 64, 64, 4
        $region32: #{tpu_custom_call.1} parent=11 // pred_fallthru
          _
        // Predicated region
        $region33: #{tpu_custom_call.1} parent=11 // pred_check
          %p352 = pneg %p208
        $region34: #{tpu_custom_call.1} parent=11 // pred_check_branch
          %354 = sbr.rel (%p352) target = $region36
        $region35: #{tpu_custom_call.1} parent=11 // pred_region
          %s356 = ssub.s32 16, 16
          %357 = vsyncadd [#allocation16], %s356
          %s359 = sshll.u32 [#allocation15], 4
          %s360 = int_to_ptr.vmem [resolvable:$true] %s359
          %362 = dma.hbm_to_vmem [thread:$0]  %s7, 16, %s360, [#allocation16]
        $region36: #{tpu_custom_call.1} parent=11 // pred_fallthru
          _
        // Predicated region
        $region37: #{tpu_custom_call.1} parent=11 // pred_check
          %p363 = pneg %p229
        $region38: #{tpu_custom_call.1} parent=11 // pred_check_branch
          %365 = sbr.rel (%p363) target = $region40
        $region39: #{tpu_custom_call.1} parent=11 // pred_region
          %s367 = ssub.s32 1024, 1024
          %368 = vsyncadd [#allocation16], %s367
          %s369 = sshll.u32 [#allocation17], 4
          %s370 = int_to_ptr.vmem [resolvable:$true] %s369
          %375 = dma.hbm_to_vmem [thread:$0]  %s8, 1024, %s370, [#allocation16], 64, 64, 4
        $region40: #{tpu_custom_call.1} parent=11 // pred_fallthru
          _
        // Predicated region
        $region41: #{tpu_custom_call.1} parent=11 // pred_check
          %p376 = pneg %p250
        $region42: #{tpu_custom_call.1} parent=11 // pred_check_branch
          %378 = sbr.rel (%p376) target = $region44
        $region43: #{tpu_custom_call.1} parent=11 // pred_region
          _
        $region44: #{tpu_custom_call.1} parent=11 // pred_fallthru
          _
      $region12: #{tpu_custom_call.1} parent=5 // pred_fallthru
        _
      %p379 = scmp.lt.s32.totalorder %s30, 4
      // Predicated region
      $region45: #{tpu_custom_call.1} parent=5 // pred_check
        %p380 = pneg %p379
      $region46: #{tpu_custom_call.1} parent=5 // pred_check_branch
        %382 = sbr.rel (%p380) target = $region48
      $region47: #{tpu_custom_call.1} parent=5 // pred_region
        // Predicated region
        $region49: #{tpu_custom_call.1} parent=47 // pred_check
          %p383 = pneg %p50
        $region50: #{tpu_custom_call.1} parent=47 // pred_check_branch
          %385 = sbr.rel (%p383) target = $region52
        $region51: #{tpu_custom_call.1} parent=47 // pred_region
          %s386 = sand.u32 %s40, 1
          %s387 = scalar_lea.sflag [#allocation4], %s386
          %s388 = sand.u32 %s40, 1
          %s389 = smul.addr %s388, 32
          %s390 = scalar_lea.vmem [#allocation3], %s389
          %s391 = smul.u32 8, %s30
          %s393 = ssub.s32 512, 512
          %394 = vsyncadd %s387, %s393
          %s395 = smul.addr %s391, 64
          %s396 = scalar_lea.hbm %s0, %s395
          %s397 = sshll.u32 %s390, 4
          %s398 = int_to_ptr.vmem [resolvable:$true] %s397
          %403 = dma.hbm_to_vmem [thread:$0]  %s396, 512, %s398, %s387, 64, 64, 4
        $region52: #{tpu_custom_call.1} parent=47 // pred_fallthru
          _
        // Predicated region
        $region53: #{tpu_custom_call.1} parent=47 // pred_check
          %p404 = pneg %p76
        $region54: #{tpu_custom_call.1} parent=47 // pred_check_branch
          %406 = sbr.rel (%p404) target = $region56
        $region55: #{tpu_custom_call.1} parent=47 // pred_region
          %s407 = sand.u32 %s30, 1
          %s408 = scalar_lea.sflag [#allocation7], %s407
          %s409 = sand.u32 %s66, 1
          %s410 = smul.addr %s409, 8
          %s411 = scalar_lea.vmem [#allocation6], %s410
          %s413 = ssub.s32 128, 128
          %414 = vsyncadd %s408, %s413
          %s415 = smul.addr %s30, 128
          %s416 = scalar_lea.hbm %s1, %s415
          %s418 = sshll.u32 %s411, 4
          %s419 = int_to_ptr.vmem [resolvable:$true] %s418
          %421 = dma.hbm_to_vmem [thread:$0]  %s416, 128, %s419, %s408
        $region56: #{tpu_custom_call.1} parent=47 // pred_fallthru
          _
      $region48: #{tpu_custom_call.1} parent=5 // pred_fallthru
        _
      %p422 = scmp.le.s32.totalorder 1, %s30
      %p423 = scmp.lt.s32.totalorder %s30, 5
      %p424 = pnand %p422, %p423
      %p425 = pneg %p424
      // Predicated region
      $region57: #{tpu_custom_call.1} parent=5 // pred_check
        _
      $region58: #{tpu_custom_call.1} parent=5 // pred_check_branch
        %427 = sbr.rel (%p424) target = $region60
      $region59: #{tpu_custom_call.1} parent=5 // pred_region
        %s428 = ssub.s32 %s30, 1
        %s429 = sand.u32 %s43, 1
        %s430 = scalar_lea.sflag [#allocation4], %s429
        %s431 = sand.u32 %s43, 1
        %s432 = smul.addr %s431, 32
        %s433 = scalar_lea.vmem [#allocation3], %s432
        // Predicated region
        $region61: #{tpu_custom_call.1} parent=59 // pred_check
          %p434 = pneg %p56
        $region62: #{tpu_custom_call.1} parent=59 // pred_check_branch
          %436 = sbr.rel (%p434) target = $region64
        $region63: #{tpu_custom_call.1} parent=59 // pred_region
          %437 = dma.done %s430, 512
        $region64: #{tpu_custom_call.1} parent=59 // pred_fallthru
          _
        %s438 = sand.u32 %s35, 1
        %s439 = scalar_lea.sflag [#allocation7], %s438
        %s440 = sand.u32 %s69, 1
        %s441 = smul.addr %s440, 8
        %s442 = scalar_lea.vmem [#allocation6], %s441
        // Predicated region
        $region65: #{tpu_custom_call.1} parent=59 // pred_check
          %p443 = pneg %p82
        $region66: #{tpu_custom_call.1} parent=59 // pred_check_branch
          %445 = sbr.rel (%p443) target = $region68
        $region67: #{tpu_custom_call.1} parent=59 // pred_region
          %446 = dma.done %s439, 128
        $region68: #{tpu_custom_call.1} parent=59 // pred_fallthru
          _
        // Predicated region
        $region69: #{tpu_custom_call.1} parent=59 // pred_check
          %p447 = pneg %p103
        $region70: #{tpu_custom_call.1} parent=59 // pred_check_branch
          %449 = sbr.rel (%p447) target = $region72
        $region71: #{tpu_custom_call.1} parent=59 // pred_region
          %450 = dma.done [#allocation7], 256
        $region72: #{tpu_custom_call.1} parent=59 // pred_fallthru
          _
        // Predicated region
        $region73: #{tpu_custom_call.1} parent=59 // pred_check
          %p451 = pneg %p124
        $region74: #{tpu_custom_call.1} parent=59 // pred_check_branch
          %453 = sbr.rel (%p451) target = $region76
        $region75: #{tpu_custom_call.1} parent=59 // pred_region
          %454 = dma.done [#allocation10], 16
        $region76: #{tpu_custom_call.1} parent=59 // pred_fallthru
          _
        // Predicated region
        $region77: #{tpu_custom_call.1} parent=59 // pred_check
          %p455 = pneg %p145
        $region78: #{tpu_custom_call.1} parent=59 // pred_check_branch
          %457 = sbr.rel (%p455) target = $region80
        $region79: #{tpu_custom_call.1} parent=59 // pred_region
          %458 = dma.done [#allocation10], 1024
        $region80: #{tpu_custom_call.1} parent=59 // pred_fallthru
          _
        // Predicated region
        $region81: #{tpu_custom_call.1} parent=59 // pred_check
          %p459 = pneg %p166
        $region82: #{tpu_custom_call.1} parent=59 // pred_check_branch
          %461 = sbr.rel (%p459) target = $region84
        $region83: #{tpu_custom_call.1} parent=59 // pred_region
          %462 = dma.done [#allocation13], 16
        $region84: #{tpu_custom_call.1} parent=59 // pred_fallthru
          _
        // Predicated region
        $region85: #{tpu_custom_call.1} parent=59 // pred_check
          %p463 = pneg %p187
        $region86: #{tpu_custom_call.1} parent=59 // pred_check_branch
          %465 = sbr.rel (%p463) target = $region88
        $region87: #{tpu_custom_call.1} parent=59 // pred_region
          %466 = dma.done [#allocation13], 1024
        $region88: #{tpu_custom_call.1} parent=59 // pred_fallthru
          _
        // Predicated region
        $region89: #{tpu_custom_call.1} parent=59 // pred_check
          %p467 = pneg %p208
        $region90: #{tpu_custom_call.1} parent=59 // pred_check_branch
          %469 = sbr.rel (%p467) target = $region92
        $region91: #{tpu_custom_call.1} parent=59 // pred_region
          %470 = dma.done [#allocation16], 16
        $region92: #{tpu_custom_call.1} parent=59 // pred_fallthru
          _
        // Predicated region
        $region93: #{tpu_custom_call.1} parent=59 // pred_check
          %p471 = pneg %p229
        $region94: #{tpu_custom_call.1} parent=59 // pred_check_branch
          %473 = sbr.rel (%p471) target = $region96
        $region95: #{tpu_custom_call.1} parent=59 // pred_region
          %474 = dma.done [#allocation16], 1024
        $region96: #{tpu_custom_call.1} parent=59 // pred_fallthru
          _
        %s475 = sand.u32 %s43, 1
        %s476 = scalar_lea.sflag [#allocation4], %s475
        %s477 = sand.u32 %s43, 1
        %s478 = smul.addr %s477, 32
        %s479 = scalar_lea.vmem [#allocation3], %s478
        %p480 = pneg %p56
        %p481 = pneg %p53
        %s482 = sand.u32 %s35, 1
        %s483 = scalar_lea.sflag [#allocation7], %s482
        %s484 = sand.u32 %s69, 1
        %s485 = smul.addr %s484, 8
        %s486 = scalar_lea.vmem [#allocation6], %s485
        %p487 = pneg %p82
        %p488 = pneg %p79
        %p489 = pneg %p103
        %p490 = pneg %p100
        %p491 = pneg %p124
        %p492 = pneg %p121
        %p493 = pneg %p145
        %p494 = pneg %p142
        %p495 = pneg %p166
        %p496 = pneg %p163
        %p497 = pneg %p187
        %p498 = pneg %p184
        %p499 = pneg %p208
        %p500 = pneg %p205
        %p501 = pneg %p229
        %p502 = pneg %p226
        %p503 = pneg %p250
        %p504 = pneg %p247
        %p505 = pneg %p276
        %p506 = pneg %p273
        %s507 = sand.u32 %s263, 1
        %s508 = scalar_lea.sflag [#allocation5], %s507
        %s509 = sand.u32 %s263, 1
        %s510 = smul.addr %s509, 8
        %s511 = scalar_lea.vmem [#allocation18], %s510
        %s512 = smul.u32 8, %s35
        %v514 = vld [vmem:[%s433] sm:$0xf]
        %v515 = vld [vmem:[%s433 + $0x4] sm:$0xf]
        %v516 = vld [vmem:[%s433 + $0x8] sm:$0xf]
        %v517 = vld [vmem:[%s433 + $0xc] sm:$0xf]
        %v518 = vld [vmem:[%s433 + $0x10] sm:$0xf]
        %v519 = vld [vmem:[%s433 + $0x14] sm:$0xf]
        %v520 = vld [vmem:[%s433 + $0x18] sm:$0xf]
        %v521 = vld [vmem:[%s433 + $0x1c] sm:$0xf]
        %v522 = vld [vmem:[%s442] sm:$0xff]
        %v523 = vld [vmem:[#allocation8] sm:$0xf]
        %v524 = vld [vmem:[#allocation8 + $0x4] sm:$0xf]
        %v525 = vld [vmem:[#allocation8 + $0x8] sm:$0xf]
        %v526 = vld [vmem:[#allocation8 + $0xc] sm:$0xf]
        %v527 = vld [vmem:[#allocation9] sm:$0x1]
        %v529 = vlaneseq
        %v530 = vshrl.u32 %v529, 7
        %v531 = vsub.s32 0, %v530
        %v532 = vrot.slane %v527, %v531
        %v542 = vunpack.c.l.b16 %v514
        %v543 = vunpack.c.l.b16 %v515
        %v544 = vunpack.c.l.b16 %v516
        %v545 = vunpack.c.l.b16 %v517
        %v546 = vunpack.c.l.b16 %v518
        %v547 = vunpack.c.l.b16 %v519
        %v548 = vunpack.c.l.b16 %v520
        %v549 = vunpack.c.l.b16 %v521
        %v550 = vpack.c.b16 %v543, %v542
        %v551 = vpack.c.b16 %v545, %v544
        %v552 = vpack.c.b16 %v547, %v546
        %v553 = vpack.c.b16 %v549, %v548
        %v558 = vunpack.c.l.b16 %v523
        %v559 = vunpack.c.l.b16 %v524
        %v560 = vunpack.c.l.b16 %v525
        %v561 = vunpack.c.l.b16 %v526
        %v562 = vpack.c.b16 %v559, %v558
        %v563 = vpack.c.b16 %v561, %v560
        %vm566 = vcmask 261120
        %v568 = vsel %vm566, %v550, 0
        %v571 = vsel %vm566, %v551, 0
        %v574 = vsel %vm566, %v552, 0
        %v577 = vsel %vm566, %v553, 0
        %579 = vmatprep.subr.bf16.mxu0 0
        %580 = vmatpush1.bf16.msra.mxu0 %v562
        %581 = vmatprep.subr.bf16.mxu0 0
        %582 = vmatpush1.bf16.msra.mxu0 %v563
        %583 = vmatprep.subr.bf16.mxu0 0
        %584 = vmatpush1.bf16.msra.mxu0 0
        %585 = vmatprep.subr.bf16.mxu0 0
        %586 = vmatpush1.bf16.msra.mxu0 0
        %587 = vmatprep.subr.bf16.mxu0 0
        %588 = vmatpush1.bf16.msra.mxu0 0
        %589 = vmatprep.subr.bf16.mxu0 0
        %590 = vmatpush1.bf16.msra.mxu0 0
        %591 = vmatprep.subr.bf16.mxu0 0
        %592 = vmatpush1.bf16.msra.mxu0 0
        %593 = vmatprep.subr.bf16.mxu0 0
        %594 = vmatpush1.bf16.msra.mxu0 0
        %595 = vmatprep.subr.bf16.mxu0 0
        %596 = vmatpush1.bf16.msra.mxu0 0
        %597 = vmatprep.subr.bf16.mxu0 0
        %598 = vmatpush1.bf16.msra.mxu0 0
        %599 = vmatprep.subr.bf16.mxu0 0
        %600 = vmatpush1.bf16.msra.mxu0 0
        %601 = vmatprep.subr.bf16.mxu0 0
        %602 = vmatpush1.bf16.msra.mxu0 0
        %603 = vmatprep.subr.bf16.mxu0 0
        %604 = vmatpush1.bf16.msra.mxu0 0
        %605 = vmatprep.subr.bf16.mxu0 0
        %606 = vmatpush1.bf16.msra.mxu0 0
        %607 = vmatprep.subr.bf16.mxu0 0
        %608 = vmatpush1.bf16.msra.mxu0 0
        %609 = vmatprep.subr.bf16.mxu0 0
        %610 = vmatpush1.bf16.msra.mxu0 0
        %611 = vmatprep.mubr.bf16.mxu0 0
        %612 = vmatmul.mubr.bf16.gmra.mrb[0].mxu0 %v568
        %v613 = vpop.f32.mrb[0].mxu0
        %v614 = vadd.f32 %v532, %v613
        %v615 = vpop.f32.mrb[0].mxu0
        %v616 = vpop.f32.mrb[0].mxu0
        %v617 = vadd.f32 %v532, %v616
        %v618 = vpop.f32.mrb[0].mxu0
        %619 = vmatprep.mubr.bf16.mxu0 0
        %620 = vmatmul.mubr.bf16.gmra.mrb[0].mxu0 %v571
        %v621 = vpop.f32.mrb[0].mxu0
        %v622 = vadd.f32 %v532, %v621
        %v623 = vpop.f32.mrb[0].mxu0
        %v624 = vpop.f32.mrb[0].mxu0
        %v625 = vadd.f32 %v532, %v624
        %v626 = vpop.f32.mrb[0].mxu0
        %627 = vmatprep.mubr.bf16.mxu0 0
        %628 = vmatmul.mubr.bf16.gmra.mrb[0].mxu0 %v574
        %v629 = vpop.f32.mrb[0].mxu0
        %v630 = vadd.f32 %v532, %v629
        %v631 = vpop.f32.mrb[0].mxu0
        %v632 = vpop.f32.mrb[0].mxu0
        %v633 = vadd.f32 %v532, %v632
        %v634 = vpop.f32.mrb[0].mxu0
        %635 = vmatprep.mubr.bf16.mxu0 0
        %636 = vmatmul.mubr.bf16.gmra.mrb[0].mxu0 %v577
        %v637 = vpop.f32.mrb[0].mxu0
        %v638 = vadd.f32 %v532, %v637
        %v639 = vpop.f32.mrb[0].mxu0
        %v640 = vpop.f32.mrb[0].mxu0
        %v641 = vadd.f32 %v532, %v640
        %v642 = vpop.f32.mrb[0].mxu0
        %643 = vdwg.mxu0
        %v644 = vunpack.c.l.bf16 %v514
        %v645 = vunpack.c.l.bf16 %v515
        %v646 = vunpack.c.l.bf16 %v516
        %v647 = vunpack.c.l.bf16 %v517
        %v648 = vunpack.c.l.bf16 %v518
        %v649 = vunpack.c.l.bf16 %v519
        %v650 = vunpack.c.l.bf16 %v520
        %v651 = vunpack.c.l.bf16 %v521
        %v652 = vmul.f32 %v644, %v614
        %v653 = vmul.f32 %v645, %v617
        %v654 = vmul.f32 %v646, %v622
        %v655 = vmul.f32 %v647, %v625
        %v656 = vmul.f32 %v648, %v630
        %v657 = vmul.f32 %v649, %v633
        %v658 = vmul.f32 %v650, %v638
        %v659 = vmul.f32 %v651, %v641
        %v660 = vsel %vm566, %v652, 0.0
        %661 = vadd.xlane.f32.xlu0 %v660
        %v662 = vpop.xlane.xlu0 %661
        %v663 = vsel %vm566, %v653, 0.0
        %664 = vadd.xlane.f32.xlu0 %v663
        %v665 = vpop.xlane.xlu0 %664
        %v666 = vsel %vm566, %v654, 0.0
        %667 = vadd.xlane.f32.xlu0 %v666
        %v668 = vpop.xlane.xlu0 %667
        %v669 = vsel %vm566, %v655, 0.0
        %670 = vadd.xlane.f32.xlu0 %v669
        %v671 = vpop.xlane.xlu0 %670
        %v672 = vsel %vm566, %v656, 0.0
        %673 = vadd.xlane.f32.xlu0 %v672
        %v674 = vpop.xlane.xlu0 %673
        %v675 = vsel %vm566, %v657, 0.0
        %676 = vadd.xlane.f32.xlu0 %v675
        %v677 = vpop.xlane.xlu0 %676
        %v678 = vsel %vm566, %v658, 0.0
        %679 = vadd.xlane.f32.xlu0 %v678
        %v680 = vpop.xlane.xlu0 %679
        %v681 = vsel %vm566, %v659, 0.0
        %682 = vadd.xlane.f32.xlu0 %v681
        %v683 = vpop.xlane.xlu0 %682
        %v684 = vtanh.pop %v662
        %v685 = vtanh.pop %v665
        %v686 = vtanh.pop %v668
        %v687 = vtanh.pop %v671
        %v688 = vtanh.pop %v674
        %v689 = vtanh.pop %v677
        %v690 = vtanh.pop %v680
        %v691 = vtanh.pop %v683
        %v693 = vlaneseq
        %v694 = vshrl.u32 %v693, 7
        %v695 = vsub.s32 0, %v694
        %v696 = vrot.slane %v522, %v695
        %698 = vbcast.lane.b32.xlu0 %v696, 256
        %v699 = vpop.permute.xlu0 %698
        %v700 = vlaneseq
        %v701 = vshrl.u32 %v700, 7
        %v702 = vsub.s32 1, %v701
        %v703 = vrot.slane %v522, %v702
        %705 = vbcast.lane.b32.xlu0 %v703, 256
        %v706 = vpop.permute.xlu0 %705
        %v707 = vlaneseq
        %v708 = vshrl.u32 %v707, 7
        %v709 = vsub.s32 2, %v708
        %v710 = vrot.slane %v522, %v709
        %712 = vbcast.lane.b32.xlu0 %v710, 256
        %v713 = vpop.permute.xlu0 %712
        %v714 = vlaneseq
        %v715 = vshrl.u32 %v714, 7
        %v716 = vsub.s32 3, %v715
        %v717 = vrot.slane %v522, %v716
        %719 = vbcast.lane.b32.xlu0 %v717, 256
        %v720 = vpop.permute.xlu0 %719
        %v721 = vlaneseq
        %v722 = vshrl.u32 %v721, 7
        %v723 = vsub.s32 4, %v722
        %v724 = vrot.slane %v522, %v723
        %726 = vbcast.lane.b32.xlu0 %v724, 256
        %v727 = vpop.permute.xlu0 %726
        %v728 = vlaneseq
        %v729 = vshrl.u32 %v728, 7
        %v730 = vsub.s32 5, %v729
        %v731 = vrot.slane %v522, %v730
        %733 = vbcast.lane.b32.xlu0 %v731, 256
        %v734 = vpop.permute.xlu0 %733
        %v735 = vlaneseq
        %v736 = vshrl.u32 %v735, 7
        %v737 = vsub.s32 6, %v736
        %v738 = vrot.slane %v522, %v737
        %740 = vbcast.lane.b32.xlu0 %v738, 256
        %v741 = vpop.permute.xlu0 %740
        %v742 = vlaneseq
        %v743 = vshrl.u32 %v742, 7
        %v744 = vsub.s32 7, %v743
        %v745 = vrot.slane %v522, %v744
        %747 = vbcast.lane.b32.xlu0 %v745, 256
        %v748 = vpop.permute.xlu0 %747
        %v757 = vmul.f32 %v684, %v699
        %v758 = vmul.f32 %v685, %v706
        %v759 = vmul.f32 %v686, %v713
        %v760 = vmul.f32 %v687, %v720
        %v761 = vmul.f32 %v688, %v727
        %v762 = vmul.f32 %v689, %v734
        %v763 = vmul.f32 %v690, %v741
        %v764 = vmul.f32 %v691, %v748
        %v765 = vsub.f32 1.0, %v522
        %v766 = vmul.f32 %v765, -10000.0
        %v768 = vlaneseq
        %v769 = vshrl.u32 %v768, 7
        %v770 = vsub.s32 0, %v769
        %v771 = vrot.slane %v766, %v770
        %773 = vbcast.lane.b32.xlu0 %v771, 256
        %v774 = vpop.permute.xlu0 %773
        %v775 = vlaneseq
        %v776 = vshrl.u32 %v775, 7
        %v777 = vsub.s32 1, %v776
        %v778 = vrot.slane %v766, %v777
        %780 = vbcast.lane.b32.xlu0 %v778, 256
        %v781 = vpop.permute.xlu0 %780
        %v782 = vlaneseq
        %v783 = vshrl.u32 %v782, 7
        %v784 = vsub.s32 2, %v783
        %v785 = vrot.slane %v766, %v784
        %787 = vbcast.lane.b32.xlu0 %v785, 256
        %v788 = vpop.permute.xlu0 %787
        %v789 = vlaneseq
        %v790 = vshrl.u32 %v789, 7
        %v791 = vsub.s32 3, %v790
        %v792 = vrot.slane %v766, %v791
        %794 = vbcast.lane.b32.xlu0 %v792, 256
        %v795 = vpop.permute.xlu0 %794
        %v796 = vlaneseq
        %v797 = vshrl.u32 %v796, 7
        %v798 = vsub.s32 4, %v797
        %v799 = vrot.slane %v766, %v798
        %801 = vbcast.lane.b32.xlu0 %v799, 256
        %v802 = vpop.permute.xlu0 %801
        %v803 = vlaneseq
        %v804 = vshrl.u32 %v803, 7
        %v805 = vsub.s32 5, %v804
        %v806 = vrot.slane %v766, %v805
        %808 = vbcast.lane.b32.xlu0 %v806, 256
        %v809 = vpop.permute.xlu0 %808
        %v810 = vlaneseq
        %v811 = vshrl.u32 %v810, 7
        %v812 = vsub.s32 6, %v811
        %v813 = vrot.slane %v766, %v812
        %815 = vbcast.lane.b32.xlu0 %v813, 256
        %v816 = vpop.permute.xlu0 %815
        %v817 = vlaneseq
        %v818 = vshrl.u32 %v817, 7
        %v819 = vsub.s32 7, %v818
        %v820 = vrot.slane %v766, %v819
        %822 = vbcast.lane.b32.xlu0 %v820, 256
        %v823 = vpop.permute.xlu0 %822
        %v832 = vadd.f32 %v757, %v774
        %v833 = vadd.f32 %v758, %v781
        %v834 = vadd.f32 %v759, %v788
        %v835 = vadd.f32 %v760, %v795
        %v836 = vadd.f32 %v761, %v802
        %v837 = vadd.f32 %v762, %v809
        %v838 = vadd.f32 %v763, %v816
        %v839 = vadd.f32 %v764, %v823
        %848 = vset.pattern.permute.xlu0 0
        %849 = vperm.xlu0 %848, %v832
        %v850 = vpop.permute.xlu0 %849
        %851 = vset.pattern.permute.xlu0 0
        %852 = vperm.xlu0 %851, %v833
        %v853 = vpop.permute.xlu0 %852
        %854 = vset.pattern.permute.xlu0 0
        %855 = vperm.xlu0 %854, %v834
        %v856 = vpop.permute.xlu0 %855
        %857 = vset.pattern.permute.xlu0 0
        %858 = vperm.xlu0 %857, %v835
        %v859 = vpop.permute.xlu0 %858
        %860 = vset.pattern.permute.xlu0 0
        %861 = vperm.xlu0 %860, %v836
        %v862 = vpop.permute.xlu0 %861
        %863 = vset.pattern.permute.xlu0 0
        %864 = vperm.xlu0 %863, %v837
        %v865 = vpop.permute.xlu0 %864
        %866 = vset.pattern.permute.xlu0 0
        %867 = vperm.xlu0 %866, %v838
        %v868 = vpop.permute.xlu0 %867
        %869 = vset.pattern.permute.xlu0 0
        %870 = vperm.xlu0 %869, %v839
        %v871 = vpop.permute.xlu0 %870
        %v872 = vlaneseq
        %v873 = vand.u32 %v872, 127
        %v874 = vlaneseq
        %v875 = vshrl.u32 %v874, 7
        %v876 = vsub.s32 %v873, %v875
        %v877 = vrot.slane %v850, %v876
        %v878 = vlaneseq
        %v879 = vshrl.u32 %v878, 7
        %v880 = vsub.s32 %v873, %v879
        %v881 = vrot.slane %v853, %v880
        %v882 = vlaneseq
        %v883 = vshrl.u32 %v882, 7
        %v884 = vsub.s32 %v873, %v883
        %v885 = vrot.slane %v856, %v884
        %v886 = vlaneseq
        %v887 = vshrl.u32 %v886, 7
        %v888 = vsub.s32 %v873, %v887
        %v889 = vrot.slane %v859, %v888
        %v890 = vlaneseq
        %v891 = vshrl.u32 %v890, 7
        %v892 = vsub.s32 %v873, %v891
        %v893 = vrot.slane %v862, %v892
        %v894 = vlaneseq
        %v895 = vshrl.u32 %v894, 7
        %v896 = vsub.s32 %v873, %v895
        %v897 = vrot.slane %v865, %v896
        %v898 = vlaneseq
        %v899 = vshrl.u32 %v898, 7
        %v900 = vsub.s32 %v873, %v899
        %v901 = vrot.slane %v868, %v900
        %v902 = vlaneseq
        %v903 = vshrl.u32 %v902, 7
        %v904 = vsub.s32 %v873, %v903
        %v905 = vrot.slane %v871, %v904
        %vm906 = vcmask 1041409
        %v907 = vsel %vm906, %v881, %v877
        %vm908 = vcmask 1042434
        %v909 = vsel %vm908, %v885, %v907
        %vm910 = vcmask 1043459
        %v911 = vsel %vm910, %v889, %v909
        %vm912 = vcmask 1044484
        %v913 = vsel %vm912, %v893, %v911
        %vm914 = vcmask 1045509
        %v915 = vsel %vm914, %v897, %v913
        %vm916 = vcmask 1046534
        %v917 = vsel %vm916, %v901, %v915
        %vm918 = vcmask 1047559
        %v919 = vsel %vm918, %v905, %v917
        %vm921 = vcmask 64512
        %v922 = vsel %vm921, %v919, -inf
        %923 = vmax.xlane.f32.xlu0 %v922
        %v924 = vpop.xlane.xlu0 %923
        %v926 = vlaneseq
        %v927 = vshrl.u32 %v926, 7
        %v928 = vsub.s32 0, %v927
        %v929 = vrot.slane %v924, %v928
        %v930 = vlaneseq
        %v931 = vshrl.u32 %v930, 7
        %v932 = vsub.s32 1, %v931
        %v933 = vrot.slane %v924, %v932
        %v934 = vlaneseq
        %v935 = vshrl.u32 %v934, 7
        %v936 = vsub.s32 2, %v935
        %v937 = vrot.slane %v924, %v936
        %v938 = vlaneseq
        %v939 = vshrl.u32 %v938, 7
        %v940 = vsub.s32 3, %v939
        %v941 = vrot.slane %v924, %v940
        %v942 = vlaneseq
        %v943 = vshrl.u32 %v942, 7
        %v944 = vsub.s32 4, %v943
        %v945 = vrot.slane %v924, %v944
        %v946 = vlaneseq
        %v947 = vshrl.u32 %v946, 7
        %v948 = vsub.s32 5, %v947
        %v949 = vrot.slane %v924, %v948
        %v950 = vlaneseq
        %v951 = vshrl.u32 %v950, 7
        %v952 = vsub.s32 6, %v951
        %v953 = vrot.slane %v924, %v952
        %v954 = vlaneseq
        %v955 = vshrl.u32 %v954, 7
        %v956 = vsub.s32 7, %v955
        %v957 = vrot.slane %v924, %v956
        %v966 = vsub.f32 %v832, %v929
        %v967 = vsub.f32 %v833, %v933
        %v968 = vsub.f32 %v834, %v937
        %v969 = vsub.f32 %v835, %v941
        %v970 = vsub.f32 %v836, %v945
        %v971 = vsub.f32 %v837, %v949
        %v972 = vsub.f32 %v838, %v953
        %v973 = vsub.f32 %v839, %v957
        %v974 = vmul.f32 %v966, 1.442695
        %v975 = vpow.pop %v974
        %v976 = vmul.f32 %v967, 1.442695
        %v977 = vpow.pop %v976
        %v978 = vmul.f32 %v968, 1.442695
        %v979 = vpow.pop %v978
        %v980 = vmul.f32 %v969, 1.442695
        %v981 = vpow.pop %v980
        %v982 = vmul.f32 %v970, 1.442695
        %v983 = vpow.pop %v982
        %v984 = vmul.f32 %v971, 1.442695
        %v985 = vpow.pop %v984
        %v986 = vmul.f32 %v972, 1.442695
        %v987 = vpow.pop %v986
        %v988 = vmul.f32 %v973, 1.442695
        %v989 = vpow.pop %v988
        %998 = vset.pattern.permute.xlu0 0
        %999 = vperm.xlu0 %998, %v975
        %v1000 = vpop.permute.xlu0 %999
        %1001 = vset.pattern.permute.xlu0 0
        %1002 = vperm.xlu0 %1001, %v977
        %v1003 = vpop.permute.xlu0 %1002
        %1004 = vset.pattern.permute.xlu0 0
        %1005 = vperm.xlu0 %1004, %v979
        %v1006 = vpop.permute.xlu0 %1005
        %1007 = vset.pattern.permute.xlu0 0
        %1008 = vperm.xlu0 %1007, %v981
        %v1009 = vpop.permute.xlu0 %1008
        %1010 = vset.pattern.permute.xlu0 0
        %1011 = vperm.xlu0 %1010, %v983
        %v1012 = vpop.permute.xlu0 %1011
        %1013 = vset.pattern.permute.xlu0 0
        %1014 = vperm.xlu0 %1013, %v985
        %v1015 = vpop.permute.xlu0 %1014
        %1016 = vset.pattern.permute.xlu0 0
        %1017 = vperm.xlu0 %1016, %v987
        %v1018 = vpop.permute.xlu0 %1017
        %1019 = vset.pattern.permute.xlu0 0
        %1020 = vperm.xlu0 %1019, %v989
        %v1021 = vpop.permute.xlu0 %1020
        %v1022 = vlaneseq
        %v1023 = vshrl.u32 %v1022, 7
        %v1024 = vsub.s32 %v873, %v1023
        %v1025 = vrot.slane %v1000, %v1024
        %v1026 = vlaneseq
        %v1027 = vshrl.u32 %v1026, 7
        %v1028 = vsub.s32 %v873, %v1027
        %v1029 = vrot.slane %v1003, %v1028
        %v1030 = vlaneseq
        %v1031 = vshrl.u32 %v1030, 7
        %v1032 = vsub.s32 %v873, %v1031
        %v1033 = vrot.slane %v1006, %v1032
        %v1034 = vlaneseq
        %v1035 = vshrl.u32 %v1034, 7
        %v1036 = vsub.s32 %v873, %v1035
        %v1037 = vrot.slane %v1009, %v1036
        %v1038 = vlaneseq
        %v1039 = vshrl.u32 %v1038, 7
        %v1040 = vsub.s32 %v873, %v1039
        %v1041 = vrot.slane %v1012, %v1040
        %v1042 = vlaneseq
        %v1043 = vshrl.u32 %v1042, 7
        %v1044 = vsub.s32 %v873, %v1043
        %v1045 = vrot.slane %v1015, %v1044
        %v1046 = vlaneseq
        %v1047 = vshrl.u32 %v1046, 7
        %v1048 = vsub.s32 %v873, %v1047
        %v1049 = vrot.slane %v1018, %v1048
        %v1050 = vlaneseq
        %v1051 = vshrl.u32 %v1050, 7
        %v1052 = vsub.s32 %v873, %v1051
        %v1053 = vrot.slane %v1021, %v1052
        %v1054 = vsel %vm906, %v1029, %v1025
        %v1055 = vsel %vm908, %v1033, %v1054
        %v1056 = vsel %vm910, %v1037, %v1055
        %v1057 = vsel %vm912, %v1041, %v1056
        %v1058 = vsel %vm914, %v1045, %v1057
        %v1059 = vsel %vm916, %v1049, %v1058
        %v1060 = vsel %vm918, %v1053, %v1059
        %v1062 = vsel %vm921, %v1060, 0.0
        %1063 = vadd.xlane.f32.xlu0 %v1062
        %v1064 = vpop.xlane.xlu0 %1063
        %v1065 = vrcp.pop %v1064
        %v1067 = vlaneseq
        %v1068 = vshrl.u32 %v1067, 7
        %v1069 = vsub.s32 0, %v1068
        %v1070 = vrot.slane %v1065, %v1069
        %v1071 = vlaneseq
        %v1072 = vshrl.u32 %v1071, 7
        %v1073 = vsub.s32 1, %v1072
        %v1074 = vrot.slane %v1065, %v1073
        %v1075 = vlaneseq
        %v1076 = vshrl.u32 %v1075, 7
        %v1077 = vsub.s32 2, %v1076
        %v1078 = vrot.slane %v1065, %v1077
        %v1079 = vlaneseq
        %v1080 = vshrl.u32 %v1079, 7
        %v1081 = vsub.s32 3, %v1080
        %v1082 = vrot.slane %v1065, %v1081
        %v1083 = vlaneseq
        %v1084 = vshrl.u32 %v1083, 7
        %v1085 = vsub.s32 4, %v1084
        %v1086 = vrot.slane %v1065, %v1085
        %v1087 = vlaneseq
        %v1088 = vshrl.u32 %v1087, 7
        %v1089 = vsub.s32 5, %v1088
        %v1090 = vrot.slane %v1065, %v1089
        %v1091 = vlaneseq
        %v1092 = vshrl.u32 %v1091, 7
        %v1093 = vsub.s32 6, %v1092
        %v1094 = vrot.slane %v1065, %v1093
        %v1095 = vlaneseq
        %v1096 = vshrl.u32 %v1095, 7
        %v1097 = vsub.s32 7, %v1096
        %v1098 = vrot.slane %v1065, %v1097
        %v1107 = vmul.f32 %v975, %v1070
        %v1108 = vmul.f32 %v977, %v1074
        %v1109 = vmul.f32 %v979, %v1078
        %v1110 = vmul.f32 %v981, %v1082
        %v1111 = vmul.f32 %v983, %v1086
        %v1112 = vmul.f32 %v985, %v1090
        %v1113 = vmul.f32 %v987, %v1094
        %v1114 = vmul.f32 %v989, %v1098
        %1115 = vrot.lane.b32.xlu0 %v562, 96
        %v1116 = vpop.permute.xlu0 %1115
        %1117 = vrot.lane.b32.xlu0 %v563, 96
        %v1118 = vpop.permute.xlu0 %1117
        %1121 = vrot.lane.b32.xlu0 %v532, 96
        %v1122 = vpop.permute.xlu0 %1121
        %1124 = vmatprep.subr.bf16.mxu0 0
        %1125 = vmatpush1.bf16.msra.mxu0 %v1116
        %1126 = vmatprep.subr.bf16.mxu0 0
        %1127 = vmatpush1.bf16.msra.mxu0 %v1118
        %1128 = vmatprep.subr.bf16.mxu0 0
        %1129 = vmatpush1.bf16.msra.mxu0 0
        %1130 = vmatprep.subr.bf16.mxu0 0
        %1131 = vmatpush1.bf16.msra.mxu0 0
        %1132 = vmatprep.subr.bf16.mxu0 0
        %1133 = vmatpush1.bf16.msra.mxu0 0
        %1134 = vmatprep.subr.bf16.mxu0 0
        %1135 = vmatpush1.bf16.msra.mxu0 0
        %1136 = vmatprep.subr.bf16.mxu0 0
        %1137 = vmatpush1.bf16.msra.mxu0 0
        %1138 = vmatprep.subr.bf16.mxu0 0
        %1139 = vmatpush1.bf16.msra.mxu0 0
        %1140 = vmatprep.subr.bf16.mxu0 0
        %1141 = vmatpush1.bf16.msra.mxu0 0
        %1142 = vmatprep.subr.bf16.mxu0 0
        %1143 = vmatpush1.bf16.msra.mxu0 0
        %1144 = vmatprep.subr.bf16.mxu0 0
        %1145 = vmatpush1.bf16.msra.mxu0 0
        %1146 = vmatprep.subr.bf16.mxu0 0
        %1147 = vmatpush1.bf16.msra.mxu0 0
        %1148 = vmatprep.subr.bf16.mxu0 0
        %1149 = vmatpush1.bf16.msra.mxu0 0
        %1150 = vmatprep.subr.bf16.mxu0 0
        %1151 = vmatpush1.bf16.msra.mxu0 0
        %1152 = vmatprep.subr.bf16.mxu0 0
        %1153 = vmatpush1.bf16.msra.mxu0 0
        %1154 = vmatprep.subr.bf16.mxu0 0
        %1155 = vmatpush1.bf16.msra.mxu0 0
        %1156 = vmatprep.mubr.bf16.mxu0 0
        %1157 = vmatmul.mubr.bf16.gmra.mrb[0].mxu0 %v568
        %v1158 = vpop.f32.mrb[0].mxu0
        %v1159 = vadd.f32 %v1122, %v1158
        %v1160 = vpop.f32.mrb[0].mxu0
        %v1161 = vpop.f32.mrb[0].mxu0
        %v1162 = vadd.f32 %v1122, %v1161
        %v1163 = vpop.f32.mrb[0].mxu0
        %1164 = vmatprep.mubr.bf16.mxu0 0
        %1165 = vmatmul.mubr.bf16.gmra.mrb[0].mxu0 %v571
        %v1166 = vpop.f32.mrb[0].mxu0
        %v1167 = vadd.f32 %v1122, %v1166
        %v1168 = vpop.f32.mrb[0].mxu0
        %v1169 = vpop.f32.mrb[0].mxu0
        %v1170 = vadd.f32 %v1122, %v1169
        %v1171 = vpop.f32.mrb[0].mxu0
        %1172 = vmatprep.mubr.bf16.mxu0 0
        %1173 = vmatmul.mubr.bf16.gmra.mrb[0].mxu0 %v574
        %v1174 = vpop.f32.mrb[0].mxu0
        %v1175 = vadd.f32 %v1122, %v1174
        %v1176 = vpop.f32.mrb[0].mxu0
        %v1177 = vpop.f32.mrb[0].mxu0
        %v1178 = vadd.f32 %v1122, %v1177
        %v1179 = vpop.f32.mrb[0].mxu0
        %1180 = vmatprep.mubr.bf16.mxu0 0
        %1181 = vmatmul.mubr.bf16.gmra.mrb[0].mxu0 %v577
        %v1182 = vpop.f32.mrb[0].mxu0
        %v1183 = vadd.f32 %v1122, %v1182
        %v1184 = vpop.f32.mrb[0].mxu0
        %v1185 = vpop.f32.mrb[0].mxu0
        %v1186 = vadd.f32 %v1122, %v1185
        %v1187 = vpop.f32.mrb[0].mxu0
        %1188 = vdwg.mxu0
        %v1189 = vmul.f32 %v644, %v1159
        %v1190 = vmul.f32 %v645, %v1162
        %v1191 = vmul.f32 %v646, %v1167
        %v1192 = vmul.f32 %v647, %v1170
        %v1193 = vmul.f32 %v648, %v1175
        %v1194 = vmul.f32 %v649, %v1178
        %v1195 = vmul.f32 %v650, %v1183
        %v1196 = vmul.f32 %v651, %v1186
        %v1197 = vsel %vm566, %v1189, 0.0
        %1198 = vadd.xlane.f32.xlu0 %v1197
        %v1199 = vpop.xlane.xlu0 %1198
        %v1200 = vsel %vm566, %v1190, 0.0
        %1201 = vadd.xlane.f32.xlu0 %v1200
        %v1202 = vpop.xlane.xlu0 %1201
        %v1203 = vsel %vm566, %v1191, 0.0
        %1204 = vadd.xlane.f32.xlu0 %v1203
        %v1205 = vpop.xlane.xlu0 %1204
        %v1206 = vsel %vm566, %v1192, 0.0
        %1207 = vadd.xlane.f32.xlu0 %v1206
        %v1208 = vpop.xlane.xlu0 %1207
        %v1209 = vsel %vm566, %v1193, 0.0
        %1210 = vadd.xlane.f32.xlu0 %v1209
        %v1211 = vpop.xlane.xlu0 %1210
        %v1212 = vsel %vm566, %v1194, 0.0
        %1213 = vadd.xlane.f32.xlu0 %v1212
        %v1214 = vpop.xlane.xlu0 %1213
        %v1215 = vsel %vm566, %v1195, 0.0
        %1216 = vadd.xlane.f32.xlu0 %v1215
        %v1217 = vpop.xlane.xlu0 %1216
        %v1218 = vsel %vm566, %v1196, 0.0
        %1219 = vadd.xlane.f32.xlu0 %v1218
        %v1220 = vpop.xlane.xlu0 %1219
        %v1221 = vtanh.pop %v1199
        %v1222 = vtanh.pop %v1202
        %v1223 = vtanh.pop %v1205
        %v1224 = vtanh.pop %v1208
        %v1225 = vtanh.pop %v1211
        %v1226 = vtanh.pop %v1214
        %v1227 = vtanh.pop %v1217
        %v1228 = vtanh.pop %v1220
        %v1229 = vmul.f32 %v1221, %v699
        %v1230 = vmul.f32 %v1222, %v706
        %v1231 = vmul.f32 %v1223, %v713
        %v1232 = vmul.f32 %v1224, %v720
        %v1233 = vmul.f32 %v1225, %v727
        %v1234 = vmul.f32 %v1226, %v734
        %v1235 = vmul.f32 %v1227, %v741
        %v1236 = vmul.f32 %v1228, %v748
        %v1237 = vadd.f32 %v1229, %v774
        %v1238 = vadd.f32 %v1230, %v781
        %v1239 = vadd.f32 %v1231, %v788
        %v1240 = vadd.f32 %v1232, %v795
        %v1241 = vadd.f32 %v1233, %v802
        %v1242 = vadd.f32 %v1234, %v809
        %v1243 = vadd.f32 %v1235, %v816
        %v1244 = vadd.f32 %v1236, %v823
        %1253 = vset.pattern.permute.xlu0 0
        %1254 = vperm.xlu0 %1253, %v1237
        %v1255 = vpop.permute.xlu0 %1254
        %1256 = vset.pattern.permute.xlu0 0
        %1257 = vperm.xlu0 %1256, %v1238
        %v1258 = vpop.permute.xlu0 %1257
        %1259 = vset.pattern.permute.xlu0 0
        %1260 = vperm.xlu0 %1259, %v1239
        %v1261 = vpop.permute.xlu0 %1260
        %1262 = vset.pattern.permute.xlu0 0
        %1263 = vperm.xlu0 %1262, %v1240
        %v1264 = vpop.permute.xlu0 %1263
        %1265 = vset.pattern.permute.xlu0 0
        %1266 = vperm.xlu0 %1265, %v1241
        %v1267 = vpop.permute.xlu0 %1266
        %1268 = vset.pattern.permute.xlu0 0
        %1269 = vperm.xlu0 %1268, %v1242
        %v1270 = vpop.permute.xlu0 %1269
        %1271 = vset.pattern.permute.xlu0 0
        %1272 = vperm.xlu0 %1271, %v1243
        %v1273 = vpop.permute.xlu0 %1272
        %1274 = vset.pattern.permute.xlu0 0
        %1275 = vperm.xlu0 %1274, %v1244
        %v1276 = vpop.permute.xlu0 %1275
        %v1277 = vlaneseq
        %v1278 = vshrl.u32 %v1277, 7
        %v1279 = vsub.s32 %v873, %v1278
        %v1280 = vrot.slane %v1255, %v1279
        %v1281 = vlaneseq
        %v1282 = vshrl.u32 %v1281, 7
        %v1283 = vsub.s32 %v873, %v1282
        %v1284 = vrot.slane %v1258, %v1283
        %v1285 = vlaneseq
        %v1286 = vshrl.u32 %v1285, 7
        %v1287 = vsub.s32 %v873, %v1286
        %v1288 = vrot.slane %v1261, %v1287
        %v1289 = vlaneseq
        %v1290 = vshrl.u32 %v1289, 7
        %v1291 = vsub.s32 %v873, %v1290
        %v1292 = vrot.slane %v1264, %v1291
        %v1293 = vlaneseq
        %v1294 = vshrl.u32 %v1293, 7
        %v1295 = vsub.s32 %v873, %v1294
        %v1296 = vrot.slane %v1267, %v1295
        %v1297 = vlaneseq
        %v1298 = vshrl.u32 %v1297, 7
        %v1299 = vsub.s32 %v873, %v1298
        %v1300 = vrot.slane %v1270, %v1299
        %v1301 = vlaneseq
        %v1302 = vshrl.u32 %v1301, 7
        %v1303 = vsub.s32 %v873, %v1302
        %v1304 = vrot.slane %v1273, %v1303
        %v1305 = vlaneseq
        %v1306 = vshrl.u32 %v1305, 7
        %v1307 = vsub.s32 %v873, %v1306
        %v1308 = vrot.slane %v1276, %v1307
        %v1309 = vsel %vm906, %v1284, %v1280
        %v1310 = vsel %vm908, %v1288, %v1309
        %v1311 = vsel %vm910, %v1292, %v1310
        %v1312 = vsel %vm912, %v1296, %v1311
        %v1313 = vsel %vm914, %v1300, %v1312
        %v1314 = vsel %vm916, %v1304, %v1313
        %v1315 = vsel %vm918, %v1308, %v1314
        %v1317 = vsel %vm921, %v1315, -inf
        %1318 = vmax.xlane.f32.xlu0 %v1317
        %v1319 = vpop.xlane.xlu0 %1318
        %v1321 = vlaneseq
        %v1322 = vshrl.u32 %v1321, 7
        %v1323 = vsub.s32 0, %v1322
        %v1324 = vrot.slane %v1319, %v1323
        %v1325 = vlaneseq
        %v1326 = vshrl.u32 %v1325, 7
        %v1327 = vsub.s32 1, %v1326
        %v1328 = vrot.slane %v1319, %v1327
        %v1329 = vlaneseq
        %v1330 = vshrl.u32 %v1329, 7
        %v1331 = vsub.s32 2, %v1330
        %v1332 = vrot.slane %v1319, %v1331
        %v1333 = vlaneseq
        %v1334 = vshrl.u32 %v1333, 7
        %v1335 = vsub.s32 3, %v1334
        %v1336 = vrot.slane %v1319, %v1335
        %v1337 = vlaneseq
        %v1338 = vshrl.u32 %v1337, 7
        %v1339 = vsub.s32 4, %v1338
        %v1340 = vrot.slane %v1319, %v1339
        %v1341 = vlaneseq
        %v1342 = vshrl.u32 %v1341, 7
        %v1343 = vsub.s32 5, %v1342
        %v1344 = vrot.slane %v1319, %v1343
        %v1345 = vlaneseq
        %v1346 = vshrl.u32 %v1345, 7
        %v1347 = vsub.s32 6, %v1346
        %v1348 = vrot.slane %v1319, %v1347
        %v1349 = vlaneseq
        %v1350 = vshrl.u32 %v1349, 7
        %v1351 = vsub.s32 7, %v1350
        %v1352 = vrot.slane %v1319, %v1351
        %v1361 = vsub.f32 %v1237, %v1324
        %v1362 = vsub.f32 %v1238, %v1328
        %v1363 = vsub.f32 %v1239, %v1332
        %v1364 = vsub.f32 %v1240, %v1336
        %v1365 = vsub.f32 %v1241, %v1340
        %v1366 = vsub.f32 %v1242, %v1344
        %v1367 = vsub.f32 %v1243, %v1348
        %v1368 = vsub.f32 %v1244, %v1352
        %v1369 = vmul.f32 %v1361, 1.442695
        %v1370 = vpow.pop %v1369
        %v1371 = vmul.f32 %v1362, 1.442695
        %v1372 = vpow.pop %v1371
        %v1373 = vmul.f32 %v1363, 1.442695
        %v1374 = vpow.pop %v1373
        %v1375 = vmul.f32 %v1364, 1.442695
        %v1376 = vpow.pop %v1375
        %v1377 = vmul.f32 %v1365, 1.442695
        %v1378 = vpow.pop %v1377
        %v1379 = vmul.f32 %v1366, 1.442695
        %v1380 = vpow.pop %v1379
        %v1381 = vmul.f32 %v1367, 1.442695
        %v1382 = vpow.pop %v1381
        %v1383 = vmul.f32 %v1368, 1.442695
        %v1384 = vpow.pop %v1383
        %1393 = vset.pattern.permute.xlu0 0
        %1394 = vperm.xlu0 %1393, %v1370
        %v1395 = vpop.permute.xlu0 %1394
        %1396 = vset.pattern.permute.xlu0 0
        %1397 = vperm.xlu0 %1396, %v1372
        %v1398 = vpop.permute.xlu0 %1397
        %1399 = vset.pattern.permute.xlu0 0
        %1400 = vperm.xlu0 %1399, %v1374
        %v1401 = vpop.permute.xlu0 %1400
        %1402 = vset.pattern.permute.xlu0 0
        %1403 = vperm.xlu0 %1402, %v1376
        %v1404 = vpop.permute.xlu0 %1403
        %1405 = vset.pattern.permute.xlu0 0
        %1406 = vperm.xlu0 %1405, %v1378
        %v1407 = vpop.permute.xlu0 %1406
        %1408 = vset.pattern.permute.xlu0 0
        %1409 = vperm.xlu0 %1408, %v1380
        %v1410 = vpop.permute.xlu0 %1409
        %1411 = vset.pattern.permute.xlu0 0
        %1412 = vperm.xlu0 %1411, %v1382
        %v1413 = vpop.permute.xlu0 %1412
        %1414 = vset.pattern.permute.xlu0 0
        %1415 = vperm.xlu0 %1414, %v1384
        %v1416 = vpop.permute.xlu0 %1415
        %v1417 = vlaneseq
        %v1418 = vshrl.u32 %v1417, 7
        %v1419 = vsub.s32 %v873, %v1418
        %v1420 = vrot.slane %v1395, %v1419
        %v1421 = vlaneseq
        %v1422 = vshrl.u32 %v1421, 7
        %v1423 = vsub.s32 %v873, %v1422
        %v1424 = vrot.slane %v1398, %v1423
        %v1425 = vlaneseq
        %v1426 = vshrl.u32 %v1425, 7
        %v1427 = vsub.s32 %v873, %v1426
        %v1428 = vrot.slane %v1401, %v1427
        %v1429 = vlaneseq
        %v1430 = vshrl.u32 %v1429, 7
        %v1431 = vsub.s32 %v873, %v1430
        %v1432 = vrot.slane %v1404, %v1431
        %v1433 = vlaneseq
        %v1434 = vshrl.u32 %v1433, 7
        %v1435 = vsub.s32 %v873, %v1434
        %v1436 = vrot.slane %v1407, %v1435
        %v1437 = vlaneseq
        %v1438 = vshrl.u32 %v1437, 7
        %v1439 = vsub.s32 %v873, %v1438
        %v1440 = vrot.slane %v1410, %v1439
        %v1441 = vlaneseq
        %v1442 = vshrl.u32 %v1441, 7
        %v1443 = vsub.s32 %v873, %v1442
        %v1444 = vrot.slane %v1413, %v1443
        %v1445 = vlaneseq
        %v1446 = vshrl.u32 %v1445, 7
        %v1447 = vsub.s32 %v873, %v1446
        %v1448 = vrot.slane %v1416, %v1447
        %v1449 = vsel %vm906, %v1424, %v1420
        %v1450 = vsel %vm908, %v1428, %v1449
        %v1451 = vsel %vm910, %v1432, %v1450
        %v1452 = vsel %vm912, %v1436, %v1451
        %v1453 = vsel %vm914, %v1440, %v1452
        %v1454 = vsel %vm916, %v1444, %v1453
        %v1455 = vsel %vm918, %v1448, %v1454
        %v1457 = vsel %vm921, %v1455, 0.0
        %1458 = vadd.xlane.f32.xlu0 %v1457
        %v1459 = vpop.xlane.xlu0 %1458
        %v1460 = vrcp.pop %v1459
        %v1462 = vlaneseq
        %v1463 = vshrl.u32 %v1462, 7
        %v1464 = vsub.s32 0, %v1463
        %v1465 = vrot.slane %v1460, %v1464
        %v1466 = vlaneseq
        %v1467 = vshrl.u32 %v1466, 7
        %v1468 = vsub.s32 1, %v1467
        %v1469 = vrot.slane %v1460, %v1468
        %v1470 = vlaneseq
        %v1471 = vshrl.u32 %v1470, 7
        %v1472 = vsub.s32 2, %v1471
        %v1473 = vrot.slane %v1460, %v1472
        %v1474 = vlaneseq
        %v1475 = vshrl.u32 %v1474, 7
        %v1476 = vsub.s32 3, %v1475
        %v1477 = vrot.slane %v1460, %v1476
        %v1478 = vlaneseq
        %v1479 = vshrl.u32 %v1478, 7
        %v1480 = vsub.s32 4, %v1479
        %v1481 = vrot.slane %v1460, %v1480
        %v1482 = vlaneseq
        %v1483 = vshrl.u32 %v1482, 7
        %v1484 = vsub.s32 5, %v1483
        %v1485 = vrot.slane %v1460, %v1484
        %v1486 = vlaneseq
        %v1487 = vshrl.u32 %v1486, 7
        %v1488 = vsub.s32 6, %v1487
        %v1489 = vrot.slane %v1460, %v1488
        %v1490 = vlaneseq
        %v1491 = vshrl.u32 %v1490, 7
        %v1492 = vsub.s32 7, %v1491
        %v1493 = vrot.slane %v1460, %v1492
        %v1502 = vmul.f32 %v1370, %v1465
        %v1503 = vmul.f32 %v1372, %v1469
        %v1504 = vmul.f32 %v1374, %v1473
        %v1505 = vmul.f32 %v1376, %v1477
        %v1506 = vmul.f32 %v1378, %v1481
        %v1507 = vmul.f32 %v1380, %v1485
        %v1508 = vmul.f32 %v1382, %v1489
        %v1509 = vmul.f32 %v1384, %v1493
        %1510 = vrot.lane.b32.xlu0 %v562, 64
        %v1511 = vpop.permute.xlu0 %1510
        %1512 = vrot.lane.b32.xlu0 %v563, 64
        %v1513 = vpop.permute.xlu0 %1512
        %1516 = vrot.lane.b32.xlu0 %v532, 64
        %v1517 = vpop.permute.xlu0 %1516
        %1519 = vmatprep.subr.bf16.mxu0 0
        %1520 = vmatpush1.bf16.msra.mxu0 %v1511
        %1521 = vmatprep.subr.bf16.mxu0 0
        %1522 = vmatpush1.bf16.msra.mxu0 %v1513
        %1523 = vmatprep.subr.bf16.mxu0 0
        %1524 = vmatpush1.bf16.msra.mxu0 0
        %1525 = vmatprep.subr.bf16.mxu0 0
        %1526 = vmatpush1.bf16.msra.mxu0 0
        %1527 = vmatprep.subr.bf16.mxu0 0
        %1528 = vmatpush1.bf16.msra.mxu0 0
        %1529 = vmatprep.subr.bf16.mxu0 0
        %1530 = vmatpush1.bf16.msra.mxu0 0
        %1531 = vmatprep.subr.bf16.mxu0 0
        %1532 = vmatpush1.bf16.msra.mxu0 0
        %1533 = vmatprep.subr.bf16.mxu0 0
        %1534 = vmatpush1.bf16.msra.mxu0 0
        %1535 = vmatprep.subr.bf16.mxu0 0
        %1536 = vmatpush1.bf16.msra.mxu0 0
        %1537 = vmatprep.subr.bf16.mxu0 0
        %1538 = vmatpush1.bf16.msra.mxu0 0
        %1539 = vmatprep.subr.bf16.mxu0 0
        %1540 = vmatpush1.bf16.msra.mxu0 0
        %1541 = vmatprep.subr.bf16.mxu0 0
        %1542 = vmatpush1.bf16.msra.mxu0 0
        %1543 = vmatprep.subr.bf16.mxu0 0
        %1544 = vmatpush1.bf16.msra.mxu0 0
        %1545 = vmatprep.subr.bf16.mxu0 0
        %1546 = vmatpush1.bf16.msra.mxu0 0
        %1547 = vmatprep.subr.bf16.mxu0 0
        %1548 = vmatpush1.bf16.msra.mxu0 0
        %1549 = vmatprep.subr.bf16.mxu0 0
        %1550 = vmatpush1.bf16.msra.mxu0 0
        %1551 = vmatprep.mubr.bf16.mxu0 0
        %1552 = vmatmul.mubr.bf16.gmra.mrb[0].mxu0 %v568
        %v1553 = vpop.f32.mrb[0].mxu0
        %v1554 = vadd.f32 %v1517, %v1553
        %v1555 = vpop.f32.mrb[0].mxu0
        %v1556 = vpop.f32.mrb[0].mxu0
        %v1557 = vadd.f32 %v1517, %v1556
        %v1558 = vpop.f32.mrb[0].mxu0
        %1559 = vmatprep.mubr.bf16.mxu0 0
        %1560 = vmatmul.mubr.bf16.gmra.mrb[0].mxu0 %v571
        %v1561 = vpop.f32.mrb[0].mxu0
        %v1562 = vadd.f32 %v1517, %v1561
        %v1563 = vpop.f32.mrb[0].mxu0
        %v1564 = vpop.f32.mrb[0].mxu0
        %v1565 = vadd.f32 %v1517, %v1564
        %v1566 = vpop.f32.mrb[0].mxu0
        %1567 = vmatprep.mubr.bf16.mxu0 0
        %1568 = vmatmul.mubr.bf16.gmra.mrb[0].mxu0 %v574
        %v1569 = vpop.f32.mrb[0].mxu0
        %v1570 = vadd.f32 %v1517, %v1569
        %v1571 = vpop.f32.mrb[0].mxu0
        %v1572 = vpop.f32.mrb[0].mxu0
        %v1573 = vadd.f32 %v1517, %v1572
        %v1574 = vpop.f32.mrb[0].mxu0
        %1575 = vmatprep.mubr.bf16.mxu0 0
        %1576 = vmatmul.mubr.bf16.gmra.mrb[0].mxu0 %v577
        %v1577 = vpop.f32.mrb[0].mxu0
        %v1578 = vadd.f32 %v1517, %v1577
        %v1579 = vpop.f32.mrb[0].mxu0
        %v1580 = vpop.f32.mrb[0].mxu0
        %v1581 = vadd.f32 %v1517, %v1580
        %v1582 = vpop.f32.mrb[0].mxu0
        %1583 = vdwg.mxu0
        %v1584 = vmul.f32 %v644, %v1554
        %v1585 = vmul.f32 %v645, %v1557
        %v1586 = vmul.f32 %v646, %v1562
        %v1587 = vmul.f32 %v647, %v1565
        %v1588 = vmul.f32 %v648, %v1570
        %v1589 = vmul.f32 %v649, %v1573
        %v1590 = vmul.f32 %v650, %v1578
        %v1591 = vmul.f32 %v651, %v1581
        %v1592 = vsel %vm566, %v1584, 0.0
        %1593 = vadd.xlane.f32.xlu0 %v1592
        %v1594 = vpop.xlane.xlu0 %1593
        %v1595 = vsel %vm566, %v1585, 0.0
        %1596 = vadd.xlane.f32.xlu0 %v1595
        %v1597 = vpop.xlane.xlu0 %1596
        %v1598 = vsel %vm566, %v1586, 0.0
        %1599 = vadd.xlane.f32.xlu0 %v1598
        %v1600 = vpop.xlane.xlu0 %1599
        %v1601 = vsel %vm566, %v1587, 0.0
        %1602 = vadd.xlane.f32.xlu0 %v1601
        %v1603 = vpop.xlane.xlu0 %1602
        %v1604 = vsel %vm566, %v1588, 0.0
        %1605 = vadd.xlane.f32.xlu0 %v1604
        %v1606 = vpop.xlane.xlu0 %1605
        %v1607 = vsel %vm566, %v1589, 0.0
        %1608 = vadd.xlane.f32.xlu0 %v1607
        %v1609 = vpop.xlane.xlu0 %1608
        %v1610 = vsel %vm566, %v1590, 0.0
        %1611 = vadd.xlane.f32.xlu0 %v1610
        %v1612 = vpop.xlane.xlu0 %1611
        %v1613 = vsel %vm566, %v1591, 0.0
        %1614 = vadd.xlane.f32.xlu0 %v1613
        %v1615 = vpop.xlane.xlu0 %1614
        %v1616 = vtanh.pop %v1594
        %v1617 = vtanh.pop %v1597
        %v1618 = vtanh.pop %v1600
        %v1619 = vtanh.pop %v1603
        %v1620 = vtanh.pop %v1606
        %v1621 = vtanh.pop %v1609
        %v1622 = vtanh.pop %v1612
        %v1623 = vtanh.pop %v1615
        %v1624 = vmul.f32 %v1616, %v699
        %v1625 = vmul.f32 %v1617, %v706
        %v1626 = vmul.f32 %v1618, %v713
        %v1627 = vmul.f32 %v1619, %v720
        %v1628 = vmul.f32 %v1620, %v727
        %v1629 = vmul.f32 %v1621, %v734
        %v1630 = vmul.f32 %v1622, %v741
        %v1631 = vmul.f32 %v1623, %v748
        %v1632 = vadd.f32 %v1624, %v774
        %v1633 = vadd.f32 %v1625, %v781
        %v1634 = vadd.f32 %v1626, %v788
        %v1635 = vadd.f32 %v1627, %v795
        %v1636 = vadd.f32 %v1628, %v802
        %v1637 = vadd.f32 %v1629, %v809
        %v1638 = vadd.f32 %v1630, %v816
        %v1639 = vadd.f32 %v1631, %v823
        %1648 = vset.pattern.permute.xlu0 0
        %1649 = vperm.xlu0 %1648, %v1632
        %v1650 = vpop.permute.xlu0 %1649
        %1651 = vset.pattern.permute.xlu0 0
        %1652 = vperm.xlu0 %1651, %v1633
        %v1653 = vpop.permute.xlu0 %1652
        %1654 = vset.pattern.permute.xlu0 0
        %1655 = vperm.xlu0 %1654, %v1634
        %v1656 = vpop.permute.xlu0 %1655
        %1657 = vset.pattern.permute.xlu0 0
        %1658 = vperm.xlu0 %1657, %v1635
        %v1659 = vpop.permute.xlu0 %1658
        %1660 = vset.pattern.permute.xlu0 0
        %1661 = vperm.xlu0 %1660, %v1636
        %v1662 = vpop.permute.xlu0 %1661
        %1663 = vset.pattern.permute.xlu0 0
        %1664 = vperm.xlu0 %1663, %v1637
        %v1665 = vpop.permute.xlu0 %1664
        %1666 = vset.pattern.permute.xlu0 0
        %1667 = vperm.xlu0 %1666, %v1638
        %v1668 = vpop.permute.xlu0 %1667
        %1669 = vset.pattern.permute.xlu0 0
        %1670 = vperm.xlu0 %1669, %v1639
        %v1671 = vpop.permute.xlu0 %1670
        %v1672 = vlaneseq
        %v1673 = vshrl.u32 %v1672, 7
        %v1674 = vsub.s32 %v873, %v1673
        %v1675 = vrot.slane %v1650, %v1674
        %v1676 = vlaneseq
        %v1677 = vshrl.u32 %v1676, 7
        %v1678 = vsub.s32 %v873, %v1677
        %v1679 = vrot.slane %v1653, %v1678
        %v1680 = vlaneseq
        %v1681 = vshrl.u32 %v1680, 7
        %v1682 = vsub.s32 %v873, %v1681
        %v1683 = vrot.slane %v1656, %v1682
        %v1684 = vlaneseq
        %v1685 = vshrl.u32 %v1684, 7
        %v1686 = vsub.s32 %v873, %v1685
        %v1687 = vrot.slane %v1659, %v1686
        %v1688 = vlaneseq
        %v1689 = vshrl.u32 %v1688, 7
        %v1690 = vsub.s32 %v873, %v1689
        %v1691 = vrot.slane %v1662, %v1690
        %v1692 = vlaneseq
        %v1693 = vshrl.u32 %v1692, 7
        %v1694 = vsub.s32 %v873, %v1693
        %v1695 = vrot.slane %v1665, %v1694
        %v1696 = vlaneseq
        %v1697 = vshrl.u32 %v1696, 7
        %v1698 = vsub.s32 %v873, %v1697
        %v1699 = vrot.slane %v1668, %v1698
        %v1700 = vlaneseq
        %v1701 = vshrl.u32 %v1700, 7
        %v1702 = vsub.s32 %v873, %v1701
        %v1703 = vrot.slane %v1671, %v1702
        %v1704 = vsel %vm906, %v1679, %v1675
        %v1705 = vsel %vm908, %v1683, %v1704
        %v1706 = vsel %vm910, %v1687, %v1705
        %v1707 = vsel %vm912, %v1691, %v1706
        %v1708 = vsel %vm914, %v1695, %v1707
        %v1709 = vsel %vm916, %v1699, %v1708
        %v1710 = vsel %vm918, %v1703, %v1709
        %v1712 = vsel %vm921, %v1710, -inf
        %1713 = vmax.xlane.f32.xlu0 %v1712
        %v1714 = vpop.xlane.xlu0 %1713
        %v1716 = vlaneseq
        %v1717 = vshrl.u32 %v1716, 7
        %v1718 = vsub.s32 0, %v1717
        %v1719 = vrot.slane %v1714, %v1718
        %v1720 = vlaneseq
        %v1721 = vshrl.u32 %v1720, 7
        %v1722 = vsub.s32 1, %v1721
        %v1723 = vrot.slane %v1714, %v1722
        %v1724 = vlaneseq
        %v1725 = vshrl.u32 %v1724, 7
        %v1726 = vsub.s32 2, %v1725
        %v1727 = vrot.slane %v1714, %v1726
        %v1728 = vlaneseq
        %v1729 = vshrl.u32 %v1728, 7
        %v1730 = vsub.s32 3, %v1729
        %v1731 = vrot.slane %v1714, %v1730
        %v1732 = vlaneseq
        %v1733 = vshrl.u32 %v1732, 7
        %v1734 = vsub.s32 4, %v1733
        %v1735 = vrot.slane %v1714, %v1734
        %v1736 = vlaneseq
        %v1737 = vshrl.u32 %v1736, 7
        %v1738 = vsub.s32 5, %v1737
        %v1739 = vrot.slane %v1714, %v1738
        %v1740 = vlaneseq
        %v1741 = vshrl.u32 %v1740, 7
        %v1742 = vsub.s32 6, %v1741
        %v1743 = vrot.slane %v1714, %v1742
        %v1744 = vlaneseq
        %v1745 = vshrl.u32 %v1744, 7
        %v1746 = vsub.s32 7, %v1745
        %v1747 = vrot.slane %v1714, %v1746
        %v1756 = vsub.f32 %v1632, %v1719
        %v1757 = vsub.f32 %v1633, %v1723
        %v1758 = vsub.f32 %v1634, %v1727
        %v1759 = vsub.f32 %v1635, %v1731
        %v1760 = vsub.f32 %v1636, %v1735
        %v1761 = vsub.f32 %v1637, %v1739
        %v1762 = vsub.f32 %v1638, %v1743
        %v1763 = vsub.f32 %v1639, %v1747
        %v1764 = vmul.f32 %v1756, 1.442695
        %v1765 = vpow.pop %v1764
        %v1766 = vmul.f32 %v1757, 1.442695
        %v1767 = vpow.pop %v1766
        %v1768 = vmul.f32 %v1758, 1.442695
        %v1769 = vpow.pop %v1768
        %v1770 = vmul.f32 %v1759, 1.442695
        %v1771 = vpow.pop %v1770
        %v1772 = vmul.f32 %v1760, 1.442695
        %v1773 = vpow.pop %v1772
        %v1774 = vmul.f32 %v1761, 1.442695
        %v1775 = vpow.pop %v1774
        %v1776 = vmul.f32 %v1762, 1.442695
        %v1777 = vpow.pop %v1776
        %v1778 = vmul.f32 %v1763, 1.442695
        %v1779 = vpow.pop %v1778
        %1788 = vset.pattern.permute.xlu0 0
        %1789 = vperm.xlu0 %1788, %v1765
        %v1790 = vpop.permute.xlu0 %1789
        %1791 = vset.pattern.permute.xlu0 0
        %1792 = vperm.xlu0 %1791, %v1767
        %v1793 = vpop.permute.xlu0 %1792
        %1794 = vset.pattern.permute.xlu0 0
        %1795 = vperm.xlu0 %1794, %v1769
        %v1796 = vpop.permute.xlu0 %1795
        %1797 = vset.pattern.permute.xlu0 0
        %1798 = vperm.xlu0 %1797, %v1771
        %v1799 = vpop.permute.xlu0 %1798
        %1800 = vset.pattern.permute.xlu0 0
        %1801 = vperm.xlu0 %1800, %v1773
        %v1802 = vpop.permute.xlu0 %1801
        %1803 = vset.pattern.permute.xlu0 0
        %1804 = vperm.xlu0 %1803, %v1775
        %v1805 = vpop.permute.xlu0 %1804
        %1806 = vset.pattern.permute.xlu0 0
        %1807 = vperm.xlu0 %1806, %v1777
        %v1808 = vpop.permute.xlu0 %1807
        %1809 = vset.pattern.permute.xlu0 0
        %1810 = vperm.xlu0 %1809, %v1779
        %v1811 = vpop.permute.xlu0 %1810
        %v1812 = vlaneseq
        %v1813 = vshrl.u32 %v1812, 7
        %v1814 = vsub.s32 %v873, %v1813
        %v1815 = vrot.slane %v1790, %v1814
        %v1816 = vlaneseq
        %v1817 = vshrl.u32 %v1816, 7
        %v1818 = vsub.s32 %v873, %v1817
        %v1819 = vrot.slane %v1793, %v1818
        %v1820 = vlaneseq
        %v1821 = vshrl.u32 %v1820, 7
        %v1822 = vsub.s32 %v873, %v1821
        %v1823 = vrot.slane %v1796, %v1822
        %v1824 = vlaneseq
        %v1825 = vshrl.u32 %v1824, 7
        %v1826 = vsub.s32 %v873, %v1825
        %v1827 = vrot.slane %v1799, %v1826
        %v1828 = vlaneseq
        %v1829 = vshrl.u32 %v1828, 7
        %v1830 = vsub.s32 %v873, %v1829
        %v1831 = vrot.slane %v1802, %v1830
        %v1832 = vlaneseq
        %v1833 = vshrl.u32 %v1832, 7
        %v1834 = vsub.s32 %v873, %v1833
        %v1835 = vrot.slane %v1805, %v1834
        %v1836 = vlaneseq
        %v1837 = vshrl.u32 %v1836, 7
        %v1838 = vsub.s32 %v873, %v1837
        %v1839 = vrot.slane %v1808, %v1838
        %v1840 = vlaneseq
        %v1841 = vshrl.u32 %v1840, 7
        %v1842 = vsub.s32 %v873, %v1841
        %v1843 = vrot.slane %v1811, %v1842
        %v1844 = vsel %vm906, %v1819, %v1815
        %v1845 = vsel %vm908, %v1823, %v1844
        %v1846 = vsel %vm910, %v1827, %v1845
        %v1847 = vsel %vm912, %v1831, %v1846
        %v1848 = vsel %vm914, %v1835, %v1847
        %v1849 = vsel %vm916, %v1839, %v1848
        %v1850 = vsel %vm918, %v1843, %v1849
        %v1852 = vsel %vm921, %v1850, 0.0
        %1853 = vadd.xlane.f32.xlu0 %v1852
        %v1854 = vpop.xlane.xlu0 %1853
        %v1855 = vrcp.pop %v1854
        %v1857 = vlaneseq
        %v1858 = vshrl.u32 %v1857, 7
        %v1859 = vsub.s32 0, %v1858
        %v1860 = vrot.slane %v1855, %v1859
        %v1861 = vlaneseq
        %v1862 = vshrl.u32 %v1861, 7
        %v1863 = vsub.s32 1, %v1862
        %v1864 = vrot.slane %v1855, %v1863
        %v1865 = vlaneseq
        %v1866 = vshrl.u32 %v1865, 7
        %v1867 = vsub.s32 2, %v1866
        %v1868 = vrot.slane %v1855, %v1867
        %v1869 = vlaneseq
        %v1870 = vshrl.u32 %v1869, 7
        %v1871 = vsub.s32 3, %v1870
        %v1872 = vrot.slane %v1855, %v1871
        %v1873 = vlaneseq
        %v1874 = vshrl.u32 %v1873, 7
        %v1875 = vsub.s32 4, %v1874
        %v1876 = vrot.slane %v1855, %v1875
        %v1877 = vlaneseq
        %v1878 = vshrl.u32 %v1877, 7
        %v1879 = vsub.s32 5, %v1878
        %v1880 = vrot.slane %v1855, %v1879
        %v1881 = vlaneseq
        %v1882 = vshrl.u32 %v1881, 7
        %v1883 = vsub.s32 6, %v1882
        %v1884 = vrot.slane %v1855, %v1883
        %v1885 = vlaneseq
        %v1886 = vshrl.u32 %v1885, 7
        %v1887 = vsub.s32 7, %v1886
        %v1888 = vrot.slane %v1855, %v1887
        %v1897 = vmul.f32 %v1765, %v1860
        %v1898 = vmul.f32 %v1767, %v1864
        %v1899 = vmul.f32 %v1769, %v1868
        %v1900 = vmul.f32 %v1771, %v1872
        %v1901 = vmul.f32 %v1773, %v1876
        %v1902 = vmul.f32 %v1775, %v1880
        %v1903 = vmul.f32 %v1777, %v1884
        %v1904 = vmul.f32 %v1779, %v1888
        %1905 = vrot.lane.b32.xlu0 %v562, 32
        %v1906 = vpop.permute.xlu0 %1905
        %1907 = vrot.lane.b32.xlu0 %v563, 32
        %v1908 = vpop.permute.xlu0 %1907
        %1911 = vrot.lane.b32.xlu0 %v532, 32
        %v1912 = vpop.permute.xlu0 %1911
        %1914 = vmatprep.subr.bf16.mxu0 0
        %1915 = vmatpush1.bf16.msra.mxu0 %v1906
        %1916 = vmatprep.subr.bf16.mxu0 0
        %1917 = vmatpush1.bf16.msra.mxu0 %v1908
        %1918 = vmatprep.subr.bf16.mxu0 0
        %1919 = vmatpush1.bf16.msra.mxu0 0
        %1920 = vmatprep.subr.bf16.mxu0 0
        %1921 = vmatpush1.bf16.msra.mxu0 0
        %1922 = vmatprep.subr.bf16.mxu0 0
        %1923 = vmatpush1.bf16.msra.mxu0 0
        %1924 = vmatprep.subr.bf16.mxu0 0
        %1925 = vmatpush1.bf16.msra.mxu0 0
        %1926 = vmatprep.subr.bf16.mxu0 0
        %1927 = vmatpush1.bf16.msra.mxu0 0
        %1928 = vmatprep.subr.bf16.mxu0 0
        %1929 = vmatpush1.bf16.msra.mxu0 0
        %1930 = vmatprep.subr.bf16.mxu0 0
        %1931 = vmatpush1.bf16.msra.mxu0 0
        %1932 = vmatprep.subr.bf16.mxu0 0
        %1933 = vmatpush1.bf16.msra.mxu0 0
        %1934 = vmatprep.subr.bf16.mxu0 0
        %1935 = vmatpush1.bf16.msra.mxu0 0
        %1936 = vmatprep.subr.bf16.mxu0 0
        %1937 = vmatpush1.bf16.msra.mxu0 0
        %1938 = vmatprep.subr.bf16.mxu0 0
        %1939 = vmatpush1.bf16.msra.mxu0 0
        %1940 = vmatprep.subr.bf16.mxu0 0
        %1941 = vmatpush1.bf16.msra.mxu0 0
        %1942 = vmatprep.subr.bf16.mxu0 0
        %1943 = vmatpush1.bf16.msra.mxu0 0
        %1944 = vmatprep.subr.bf16.mxu0 0
        %1945 = vmatpush1.bf16.msra.mxu0 0
        %1946 = vmatprep.mubr.bf16.mxu0 0
        %1947 = vmatmul.mubr.bf16.gmra.mrb[0].mxu0 %v568
        %v1948 = vpop.f32.mrb[0].mxu0
        %v1949 = vadd.f32 %v1912, %v1948
        %v1950 = vpop.f32.mrb[0].mxu0
        %v1951 = vpop.f32.mrb[0].mxu0
        %v1952 = vadd.f32 %v1912, %v1951
        %v1953 = vpop.f32.mrb[0].mxu0
        %1954 = vmatprep.mubr.bf16.mxu0 0
        %1955 = vmatmul.mubr.bf16.gmra.mrb[0].mxu0 %v571
        %v1956 = vpop.f32.mrb[0].mxu0
        %v1957 = vadd.f32 %v1912, %v1956
        %v1958 = vpop.f32.mrb[0].mxu0
        %v1959 = vpop.f32.mrb[0].mxu0
        %v1960 = vadd.f32 %v1912, %v1959
        %v1961 = vpop.f32.mrb[0].mxu0
        %1962 = vmatprep.mubr.bf16.mxu0 0
        %1963 = vmatmul.mubr.bf16.gmra.mrb[0].mxu0 %v574
        %v1964 = vpop.f32.mrb[0].mxu0
        %v1965 = vadd.f32 %v1912, %v1964
        %v1966 = vpop.f32.mrb[0].mxu0
        %v1967 = vpop.f32.mrb[0].mxu0
        %v1968 = vadd.f32 %v1912, %v1967
        %v1969 = vpop.f32.mrb[0].mxu0
        %1970 = vmatprep.mubr.bf16.mxu0 0
        %1971 = vmatmul.mubr.bf16.gmra.mrb[0].mxu0 %v577
        %v1972 = vpop.f32.mrb[0].mxu0
        %v1973 = vadd.f32 %v1912, %v1972
        %v1974 = vpop.f32.mrb[0].mxu0
        %v1975 = vpop.f32.mrb[0].mxu0
        %v1976 = vadd.f32 %v1912, %v1975
        %v1977 = vpop.f32.mrb[0].mxu0
        %1978 = vdwg.mxu0
        %v1979 = vmul.f32 %v644, %v1949
        %v1980 = vmul.f32 %v645, %v1952
        %v1981 = vmul.f32 %v646, %v1957
        %v1982 = vmul.f32 %v647, %v1960
        %v1983 = vmul.f32 %v648, %v1965
        %v1984 = vmul.f32 %v649, %v1968
        %v1985 = vmul.f32 %v650, %v1973
        %v1986 = vmul.f32 %v651, %v1976
        %v1987 = vsel %vm566, %v1979, 0.0
        %1988 = vadd.xlane.f32.xlu0 %v1987
        %v1989 = vpop.xlane.xlu0 %1988
        %v1990 = vsel %vm566, %v1980, 0.0
        %1991 = vadd.xlane.f32.xlu0 %v1990
        %v1992 = vpop.xlane.xlu0 %1991
        %v1993 = vsel %vm566, %v1981, 0.0
        %1994 = vadd.xlane.f32.xlu0 %v1993
        %v1995 = vpop.xlane.xlu0 %1994
        %v1996 = vsel %vm566, %v1982, 0.0
        %1997 = vadd.xlane.f32.xlu0 %v1996
        %v1998 = vpop.xlane.xlu0 %1997
        %v1999 = vsel %vm566, %v1983, 0.0
        %2000 = vadd.xlane.f32.xlu0 %v1999
        %v2001 = vpop.xlane.xlu0 %2000
        %v2002 = vsel %vm566, %v1984, 0.0
        %2003 = vadd.xlane.f32.xlu0 %v2002
        %v2004 = vpop.xlane.xlu0 %2003
        %v2005 = vsel %vm566, %v1985, 0.0
        %2006 = vadd.xlane.f32.xlu0 %v2005
        %v2007 = vpop.xlane.xlu0 %2006
        %v2008 = vsel %vm566, %v1986, 0.0
        %2009 = vadd.xlane.f32.xlu0 %v2008
        %v2010 = vpop.xlane.xlu0 %2009
        %v2011 = vtanh.pop %v1989
        %v2012 = vtanh.pop %v1992
        %v2013 = vtanh.pop %v1995
        %v2014 = vtanh.pop %v1998
        %v2015 = vtanh.pop %v2001
        %v2016 = vtanh.pop %v2004
        %v2017 = vtanh.pop %v2007
        %v2018 = vtanh.pop %v2010
        %v2019 = vmul.f32 %v2011, %v699
        %v2020 = vmul.f32 %v2012, %v706
        %v2021 = vmul.f32 %v2013, %v713
        %v2022 = vmul.f32 %v2014, %v720
        %v2023 = vmul.f32 %v2015, %v727
        %v2024 = vmul.f32 %v2016, %v734
        %v2025 = vmul.f32 %v2017, %v741
        %v2026 = vmul.f32 %v2018, %v748
        %v2027 = vadd.f32 %v2019, %v774
        %v2028 = vadd.f32 %v2020, %v781
        %v2029 = vadd.f32 %v2021, %v788
        %v2030 = vadd.f32 %v2022, %v795
        %v2031 = vadd.f32 %v2023, %v802
        %v2032 = vadd.f32 %v2024, %v809
        %v2033 = vadd.f32 %v2025, %v816
        %v2034 = vadd.f32 %v2026, %v823
        %2043 = vset.pattern.permute.xlu0 0
        %2044 = vperm.xlu0 %2043, %v2027
        %v2045 = vpop.permute.xlu0 %2044
        %2046 = vset.pattern.permute.xlu0 0
        %2047 = vperm.xlu0 %2046, %v2028
        %v2048 = vpop.permute.xlu0 %2047
        %2049 = vset.pattern.permute.xlu0 0
        %2050 = vperm.xlu0 %2049, %v2029
        %v2051 = vpop.permute.xlu0 %2050
        %2052 = vset.pattern.permute.xlu0 0
        %2053 = vperm.xlu0 %2052, %v2030
        %v2054 = vpop.permute.xlu0 %2053
        %2055 = vset.pattern.permute.xlu0 0
        %2056 = vperm.xlu0 %2055, %v2031
        %v2057 = vpop.permute.xlu0 %2056
        %2058 = vset.pattern.permute.xlu0 0
        %2059 = vperm.xlu0 %2058, %v2032
        %v2060 = vpop.permute.xlu0 %2059
        %2061 = vset.pattern.permute.xlu0 0
        %2062 = vperm.xlu0 %2061, %v2033
        %v2063 = vpop.permute.xlu0 %2062
        %2064 = vset.pattern.permute.xlu0 0
        %2065 = vperm.xlu0 %2064, %v2034
        %v2066 = vpop.permute.xlu0 %2065
        %v2067 = vlaneseq
        %v2068 = vshrl.u32 %v2067, 7
        %v2069 = vsub.s32 %v873, %v2068
        %v2070 = vrot.slane %v2045, %v2069
        %v2071 = vlaneseq
        %v2072 = vshrl.u32 %v2071, 7
        %v2073 = vsub.s32 %v873, %v2072
        %v2074 = vrot.slane %v2048, %v2073
        %v2075 = vlaneseq
        %v2076 = vshrl.u32 %v2075, 7
        %v2077 = vsub.s32 %v873, %v2076
        %v2078 = vrot.slane %v2051, %v2077
        %v2079 = vlaneseq
        %v2080 = vshrl.u32 %v2079, 7
        %v2081 = vsub.s32 %v873, %v2080
        %v2082 = vrot.slane %v2054, %v2081
        %v2083 = vlaneseq
        %v2084 = vshrl.u32 %v2083, 7
        %v2085 = vsub.s32 %v873, %v2084
        %v2086 = vrot.slane %v2057, %v2085
        %v2087 = vlaneseq
        %v2088 = vshrl.u32 %v2087, 7
        %v2089 = vsub.s32 %v873, %v2088
        %v2090 = vrot.slane %v2060, %v2089
        %v2091 = vlaneseq
        %v2092 = vshrl.u32 %v2091, 7
        %v2093 = vsub.s32 %v873, %v2092
        %v2094 = vrot.slane %v2063, %v2093
        %v2095 = vlaneseq
        %v2096 = vshrl.u32 %v2095, 7
        %v2097 = vsub.s32 %v873, %v2096
        %v2098 = vrot.slane %v2066, %v2097
        %v2099 = vsel %vm906, %v2074, %v2070
        %v2100 = vsel %vm908, %v2078, %v2099
        %v2101 = vsel %vm910, %v2082, %v2100
        %v2102 = vsel %vm912, %v2086, %v2101
        %v2103 = vsel %vm914, %v2090, %v2102
        %v2104 = vsel %vm916, %v2094, %v2103
        %v2105 = vsel %vm918, %v2098, %v2104
        %v2107 = vsel %vm921, %v2105, -inf
        %2108 = vmax.xlane.f32.xlu0 %v2107
        %v2109 = vpop.xlane.xlu0 %2108
        %v2111 = vlaneseq
        %v2112 = vshrl.u32 %v2111, 7
        %v2113 = vsub.s32 0, %v2112
        %v2114 = vrot.slane %v2109, %v2113
        %v2115 = vlaneseq
        %v2116 = vshrl.u32 %v2115, 7
        %v2117 = vsub.s32 1, %v2116
        %v2118 = vrot.slane %v2109, %v2117
        %v2119 = vlaneseq
        %v2120 = vshrl.u32 %v2119, 7
        %v2121 = vsub.s32 2, %v2120
        %v2122 = vrot.slane %v2109, %v2121
        %v2123 = vlaneseq
        %v2124 = vshrl.u32 %v2123, 7
        %v2125 = vsub.s32 3, %v2124
        %v2126 = vrot.slane %v2109, %v2125
        %v2127 = vlaneseq
        %v2128 = vshrl.u32 %v2127, 7
        %v2129 = vsub.s32 4, %v2128
        %v2130 = vrot.slane %v2109, %v2129
        %v2131 = vlaneseq
        %v2132 = vshrl.u32 %v2131, 7
        %v2133 = vsub.s32 5, %v2132
        %v2134 = vrot.slane %v2109, %v2133
        %v2135 = vlaneseq
        %v2136 = vshrl.u32 %v2135, 7
        %v2137 = vsub.s32 6, %v2136
        %v2138 = vrot.slane %v2109, %v2137
        %v2139 = vlaneseq
        %v2140 = vshrl.u32 %v2139, 7
        %v2141 = vsub.s32 7, %v2140
        %v2142 = vrot.slane %v2109, %v2141
        %v2151 = vsub.f32 %v2027, %v2114
        %v2152 = vsub.f32 %v2028, %v2118
        %v2153 = vsub.f32 %v2029, %v2122
        %v2154 = vsub.f32 %v2030, %v2126
        %v2155 = vsub.f32 %v2031, %v2130
        %v2156 = vsub.f32 %v2032, %v2134
        %v2157 = vsub.f32 %v2033, %v2138
        %v2158 = vsub.f32 %v2034, %v2142
        %v2159 = vmul.f32 %v2151, 1.442695
        %v2160 = vpow.pop %v2159
        %v2161 = vmul.f32 %v2152, 1.442695
        %v2162 = vpow.pop %v2161
        %v2163 = vmul.f32 %v2153, 1.442695
        %v2164 = vpow.pop %v2163
        %v2165 = vmul.f32 %v2154, 1.442695
        %v2166 = vpow.pop %v2165
        %v2167 = vmul.f32 %v2155, 1.442695
        %v2168 = vpow.pop %v2167
        %v2169 = vmul.f32 %v2156, 1.442695
        %v2170 = vpow.pop %v2169
        %v2171 = vmul.f32 %v2157, 1.442695
        %v2172 = vpow.pop %v2171
        %v2173 = vmul.f32 %v2158, 1.442695
        %v2174 = vpow.pop %v2173
        %2183 = vset.pattern.permute.xlu0 0
        %2184 = vperm.xlu0 %2183, %v2160
        %v2185 = vpop.permute.xlu0 %2184
        %2186 = vset.pattern.permute.xlu0 0
        %2187 = vperm.xlu0 %2186, %v2162
        %v2188 = vpop.permute.xlu0 %2187
        %2189 = vset.pattern.permute.xlu0 0
        %2190 = vperm.xlu0 %2189, %v2164
        %v2191 = vpop.permute.xlu0 %2190
        %2192 = vset.pattern.permute.xlu0 0
        %2193 = vperm.xlu0 %2192, %v2166
        %v2194 = vpop.permute.xlu0 %2193
        %2195 = vset.pattern.permute.xlu0 0
        %2196 = vperm.xlu0 %2195, %v2168
        %v2197 = vpop.permute.xlu0 %2196
        %2198 = vset.pattern.permute.xlu0 0
        %2199 = vperm.xlu0 %2198, %v2170
        %v2200 = vpop.permute.xlu0 %2199
        %2201 = vset.pattern.permute.xlu0 0
        %2202 = vperm.xlu0 %2201, %v2172
        %v2203 = vpop.permute.xlu0 %2202
        %2204 = vset.pattern.permute.xlu0 0
        %2205 = vperm.xlu0 %2204, %v2174
        %v2206 = vpop.permute.xlu0 %2205
        %v2207 = vlaneseq
        %v2208 = vshrl.u32 %v2207, 7
        %v2209 = vsub.s32 %v873, %v2208
        %v2210 = vrot.slane %v2185, %v2209
        %v2211 = vlaneseq
        %v2212 = vshrl.u32 %v2211, 7
        %v2213 = vsub.s32 %v873, %v2212
        %v2214 = vrot.slane %v2188, %v2213
        %v2215 = vlaneseq
        %v2216 = vshrl.u32 %v2215, 7
        %v2217 = vsub.s32 %v873, %v2216
        %v2218 = vrot.slane %v2191, %v2217
        %v2219 = vlaneseq
        %v2220 = vshrl.u32 %v2219, 7
        %v2221 = vsub.s32 %v873, %v2220
        %v2222 = vrot.slane %v2194, %v2221
        %v2223 = vlaneseq
        %v2224 = vshrl.u32 %v2223, 7
        %v2225 = vsub.s32 %v873, %v2224
        %v2226 = vrot.slane %v2197, %v2225
        %v2227 = vlaneseq
        %v2228 = vshrl.u32 %v2227, 7
        %v2229 = vsub.s32 %v873, %v2228
        %v2230 = vrot.slane %v2200, %v2229
        %v2231 = vlaneseq
        %v2232 = vshrl.u32 %v2231, 7
        %v2233 = vsub.s32 %v873, %v2232
        %v2234 = vrot.slane %v2203, %v2233
        %v2235 = vlaneseq
        %v2236 = vshrl.u32 %v2235, 7
        %v2237 = vsub.s32 %v873, %v2236
        %v2238 = vrot.slane %v2206, %v2237
        %v2239 = vsel %vm906, %v2214, %v2210
        %v2240 = vsel %vm908, %v2218, %v2239
        %v2241 = vsel %vm910, %v2222, %v2240
        %v2242 = vsel %vm912, %v2226, %v2241
        %v2243 = vsel %vm914, %v2230, %v2242
        %v2244 = vsel %vm916, %v2234, %v2243
        %v2245 = vsel %vm918, %v2238, %v2244
        %v2247 = vsel %vm921, %v2245, 0.0
        %2248 = vadd.xlane.f32.xlu0 %v2247
        %v2249 = vpop.xlane.xlu0 %2248
        %v2250 = vrcp.pop %v2249
        %v2252 = vlaneseq
        %v2253 = vshrl.u32 %v2252, 7
        %v2254 = vsub.s32 0, %v2253
        %v2255 = vrot.slane %v2250, %v2254
        %v2256 = vlaneseq
        %v2257 = vshrl.u32 %v2256, 7
        %v2258 = vsub.s32 1, %v2257
        %v2259 = vrot.slane %v2250, %v2258
        %v2260 = vlaneseq
        %v2261 = vshrl.u32 %v2260, 7
        %v2262 = vsub.s32 2, %v2261
        %v2263 = vrot.slane %v2250, %v2262
        %v2264 = vlaneseq
        %v2265 = vshrl.u32 %v2264, 7
        %v2266 = vsub.s32 3, %v2265
        %v2267 = vrot.slane %v2250, %v2266
        %v2268 = vlaneseq
        %v2269 = vshrl.u32 %v2268, 7
        %v2270 = vsub.s32 4, %v2269
        %v2271 = vrot.slane %v2250, %v2270
        %v2272 = vlaneseq
        %v2273 = vshrl.u32 %v2272, 7
        %v2274 = vsub.s32 5, %v2273
        %v2275 = vrot.slane %v2250, %v2274
        %v2276 = vlaneseq
        %v2277 = vshrl.u32 %v2276, 7
        %v2278 = vsub.s32 6, %v2277
        %v2279 = vrot.slane %v2250, %v2278
        %v2280 = vlaneseq
        %v2281 = vshrl.u32 %v2280, 7
        %v2282 = vsub.s32 7, %v2281
        %v2283 = vrot.slane %v2250, %v2282
        %v2292 = vmul.f32 %v2160, %v2255
        %v2293 = vmul.f32 %v2162, %v2259
        %v2294 = vmul.f32 %v2164, %v2263
        %v2295 = vmul.f32 %v2166, %v2267
        %v2296 = vmul.f32 %v2168, %v2271
        %v2297 = vmul.f32 %v2170, %v2275
        %v2298 = vmul.f32 %v2172, %v2279
        %v2299 = vmul.f32 %v2174, %v2283
        %2308 = vset.pattern.permute.xlu0 0
        %2309 = vperm.xlu0 %2308, %v1107
        %v2310 = vpop.permute.xlu0 %2309
        %2311 = vset.pattern.permute.xlu0 0
        %2312 = vperm.xlu0 %2311, %v1108
        %v2313 = vpop.permute.xlu0 %2312
        %2314 = vset.pattern.permute.xlu0 0
        %2315 = vperm.xlu0 %2314, %v1109
        %v2316 = vpop.permute.xlu0 %2315
        %2317 = vset.pattern.permute.xlu0 0
        %2318 = vperm.xlu0 %2317, %v1110
        %v2319 = vpop.permute.xlu0 %2318
        %2320 = vset.pattern.permute.xlu0 0
        %2321 = vperm.xlu0 %2320, %v1111
        %v2322 = vpop.permute.xlu0 %2321
        %2323 = vset.pattern.permute.xlu0 0
        %2324 = vperm.xlu0 %2323, %v1112
        %v2325 = vpop.permute.xlu0 %2324
        %2326 = vset.pattern.permute.xlu0 0
        %2327 = vperm.xlu0 %2326, %v1113
        %v2328 = vpop.permute.xlu0 %2327
        %2329 = vset.pattern.permute.xlu0 0
        %2330 = vperm.xlu0 %2329, %v1114
        %v2331 = vpop.permute.xlu0 %2330
        %v2332 = vlaneseq
        %v2333 = vshrl.u32 %v2332, 7
        %v2334 = vsub.s32 %v873, %v2333
        %v2335 = vrot.slane %v2310, %v2334
        %v2336 = vlaneseq
        %v2337 = vshrl.u32 %v2336, 7
        %v2338 = vsub.s32 %v873, %v2337
        %v2339 = vrot.slane %v2313, %v2338
        %v2340 = vlaneseq
        %v2341 = vshrl.u32 %v2340, 7
        %v2342 = vsub.s32 %v873, %v2341
        %v2343 = vrot.slane %v2316, %v2342
        %v2344 = vlaneseq
        %v2345 = vshrl.u32 %v2344, 7
        %v2346 = vsub.s32 %v873, %v2345
        %v2347 = vrot.slane %v2319, %v2346
        %v2348 = vlaneseq
        %v2349 = vshrl.u32 %v2348, 7
        %v2350 = vsub.s32 %v873, %v2349
        %v2351 = vrot.slane %v2322, %v2350
        %v2352 = vlaneseq
        %v2353 = vshrl.u32 %v2352, 7
        %v2354 = vsub.s32 %v873, %v2353
        %v2355 = vrot.slane %v2325, %v2354
        %v2356 = vlaneseq
        %v2357 = vshrl.u32 %v2356, 7
        %v2358 = vsub.s32 %v873, %v2357
        %v2359 = vrot.slane %v2328, %v2358
        %v2360 = vlaneseq
        %v2361 = vshrl.u32 %v2360, 7
        %v2362 = vsub.s32 %v873, %v2361
        %v2363 = vrot.slane %v2331, %v2362
        %2380 = vset.pattern.permute.xlu0 0
        %2381 = vperm.xlu0 %2380, %v1502
        %v2382 = vpop.permute.xlu0 %2381
        %2383 = vset.pattern.permute.xlu0 0
        %2384 = vperm.xlu0 %2383, %v1503
        %v2385 = vpop.permute.xlu0 %2384
        %2386 = vset.pattern.permute.xlu0 0
        %2387 = vperm.xlu0 %2386, %v1504
        %v2388 = vpop.permute.xlu0 %2387
        %2389 = vset.pattern.permute.xlu0 0
        %2390 = vperm.xlu0 %2389, %v1505
        %v2391 = vpop.permute.xlu0 %2390
        %2392 = vset.pattern.permute.xlu0 0
        %2393 = vperm.xlu0 %2392, %v1506
        %v2394 = vpop.permute.xlu0 %2393
        %2395 = vset.pattern.permute.xlu0 0
        %2396 = vperm.xlu0 %2395, %v1507
        %v2397 = vpop.permute.xlu0 %2396
        %2398 = vset.pattern.permute.xlu0 0
        %2399 = vperm.xlu0 %2398, %v1508
        %v2400 = vpop.permute.xlu0 %2399
        %2401 = vset.pattern.permute.xlu0 0
        %2402 = vperm.xlu0 %2401, %v1509
        %v2403 = vpop.permute.xlu0 %2402
        %v2404 = vlaneseq
        %v2405 = vshrl.u32 %v2404, 7
        %v2406 = vsub.s32 %v873, %v2405
        %v2407 = vrot.slane %v2382, %v2406
        %v2408 = vlaneseq
        %v2409 = vshrl.u32 %v2408, 7
        %v2410 = vsub.s32 %v873, %v2409
        %v2411 = vrot.slane %v2385, %v2410
        %v2412 = vlaneseq
        %v2413 = vshrl.u32 %v2412, 7
        %v2414 = vsub.s32 %v873, %v2413
        %v2415 = vrot.slane %v2388, %v2414
        %v2416 = vlaneseq
        %v2417 = vshrl.u32 %v2416, 7
        %v2418 = vsub.s32 %v873, %v2417
        %v2419 = vrot.slane %v2391, %v2418
        %v2420 = vlaneseq
        %v2421 = vshrl.u32 %v2420, 7
        %v2422 = vsub.s32 %v873, %v2421
        %v2423 = vrot.slane %v2394, %v2422
        %v2424 = vlaneseq
        %v2425 = vshrl.u32 %v2424, 7
        %v2426 = vsub.s32 %v873, %v2425
        %v2427 = vrot.slane %v2397, %v2426
        %v2428 = vlaneseq
        %v2429 = vshrl.u32 %v2428, 7
        %v2430 = vsub.s32 %v873, %v2429
        %v2431 = vrot.slane %v2400, %v2430
        %v2432 = vlaneseq
        %v2433 = vshrl.u32 %v2432, 7
        %v2434 = vsub.s32 %v873, %v2433
        %v2435 = vrot.slane %v2403, %v2434
        %2452 = vset.pattern.permute.xlu0 0
        %2453 = vperm.xlu0 %2452, %v1897
        %v2454 = vpop.permute.xlu0 %2453
        %2455 = vset.pattern.permute.xlu0 0
        %2456 = vperm.xlu0 %2455, %v1898
        %v2457 = vpop.permute.xlu0 %2456
        %2458 = vset.pattern.permute.xlu0 0
        %2459 = vperm.xlu0 %2458, %v1899
        %v2460 = vpop.permute.xlu0 %2459
        %2461 = vset.pattern.permute.xlu0 0
        %2462 = vperm.xlu0 %2461, %v1900
        %v2463 = vpop.permute.xlu0 %2462
        %2464 = vset.pattern.permute.xlu0 0
        %2465 = vperm.xlu0 %2464, %v1901
        %v2466 = vpop.permute.xlu0 %2465
        %2467 = vset.pattern.permute.xlu0 0
        %2468 = vperm.xlu0 %2467, %v1902
        %v2469 = vpop.permute.xlu0 %2468
        %2470 = vset.pattern.permute.xlu0 0
        %2471 = vperm.xlu0 %2470, %v1903
        %v2472 = vpop.permute.xlu0 %2471
        %2473 = vset.pattern.permute.xlu0 0
        %2474 = vperm.xlu0 %2473, %v1904
        %v2475 = vpop.permute.xlu0 %2474
        %v2476 = vlaneseq
        %v2477 = vshrl.u32 %v2476, 7
        %v2478 = vsub.s32 %v873, %v2477
        %v2479 = vrot.slane %v2454, %v2478
        %v2480 = vlaneseq
        %v2481 = vshrl.u32 %v2480, 7
        %v2482 = vsub.s32 %v873, %v2481
        %v2483 = vrot.slane %v2457, %v2482
        %v2484 = vlaneseq
        %v2485 = vshrl.u32 %v2484, 7
        %v2486 = vsub.s32 %v873, %v2485
        %v2487 = vrot.slane %v2460, %v2486
        %v2488 = vlaneseq
        %v2489 = vshrl.u32 %v2488, 7
        %v2490 = vsub.s32 %v873, %v2489
        %v2491 = vrot.slane %v2463, %v2490
        %v2492 = vlaneseq
        %v2493 = vshrl.u32 %v2492, 7
        %v2494 = vsub.s32 %v873, %v2493
        %v2495 = vrot.slane %v2466, %v2494
        %v2496 = vlaneseq
        %v2497 = vshrl.u32 %v2496, 7
        %v2498 = vsub.s32 %v873, %v2497
        %v2499 = vrot.slane %v2469, %v2498
        %v2500 = vlaneseq
        %v2501 = vshrl.u32 %v2500, 7
        %v2502 = vsub.s32 %v873, %v2501
        %v2503 = vrot.slane %v2472, %v2502
        %v2504 = vlaneseq
        %v2505 = vshrl.u32 %v2504, 7
        %v2506 = vsub.s32 %v873, %v2505
        %v2507 = vrot.slane %v2475, %v2506
        %2524 = vset.pattern.permute.xlu0 0
        %2525 = vperm.xlu0 %2524, %v2292
        %v2526 = vpop.permute.xlu0 %2525
        %2527 = vset.pattern.permute.xlu0 0
        %2528 = vperm.xlu0 %2527, %v2293
        %v2529 = vpop.permute.xlu0 %2528
        %2530 = vset.pattern.permute.xlu0 0
        %2531 = vperm.xlu0 %2530, %v2294
        %v2532 = vpop.permute.xlu0 %2531
        %2533 = vset.pattern.permute.xlu0 0
        %2534 = vperm.xlu0 %2533, %v2295
        %v2535 = vpop.permute.xlu0 %2534
        %2536 = vset.pattern.permute.xlu0 0
        %2537 = vperm.xlu0 %2536, %v2296
        %v2538 = vpop.permute.xlu0 %2537
        %2539 = vset.pattern.permute.xlu0 0
        %2540 = vperm.xlu0 %2539, %v2297
        %v2541 = vpop.permute.xlu0 %2540
        %2542 = vset.pattern.permute.xlu0 0
        %2543 = vperm.xlu0 %2542, %v2298
        %v2544 = vpop.permute.xlu0 %2543
        %2545 = vset.pattern.permute.xlu0 0
        %2546 = vperm.xlu0 %2545, %v2299
        %v2547 = vpop.permute.xlu0 %2546
        %v2548 = vlaneseq
        %v2549 = vshrl.u32 %v2548, 7
        %v2550 = vsub.s32 %v873, %v2549
        %v2551 = vrot.slane %v2526, %v2550
        %v2552 = vlaneseq
        %v2553 = vshrl.u32 %v2552, 7
        %v2554 = vsub.s32 %v873, %v2553
        %v2555 = vrot.slane %v2529, %v2554
        %v2556 = vlaneseq
        %v2557 = vshrl.u32 %v2556, 7
        %v2558 = vsub.s32 %v873, %v2557
        %v2559 = vrot.slane %v2532, %v2558
        %v2560 = vlaneseq
        %v2561 = vshrl.u32 %v2560, 7
        %v2562 = vsub.s32 %v873, %v2561
        %v2563 = vrot.slane %v2535, %v2562
        %v2564 = vlaneseq
        %v2565 = vshrl.u32 %v2564, 7
        %v2566 = vsub.s32 %v873, %v2565
        %v2567 = vrot.slane %v2538, %v2566
        %v2568 = vlaneseq
        %v2569 = vshrl.u32 %v2568, 7
        %v2570 = vsub.s32 %v873, %v2569
        %v2571 = vrot.slane %v2541, %v2570
        %v2572 = vlaneseq
        %v2573 = vshrl.u32 %v2572, 7
        %v2574 = vsub.s32 %v873, %v2573
        %v2575 = vrot.slane %v2544, %v2574
        %v2576 = vlaneseq
        %v2577 = vshrl.u32 %v2576, 7
        %v2578 = vsub.s32 %v873, %v2577
        %v2579 = vrot.slane %v2547, %v2578
        %vm2588 = vcmask 1040384
        %v2589 = vsel %vm2588, %v2335, %v2407
        %v2590 = vsel %vm2588, %v2339, %v2411
        %v2591 = vsel %vm2588, %v2343, %v2415
        %v2592 = vsel %vm2588, %v2347, %v2419
        %v2593 = vsel %vm2588, %v2351, %v2423
        %v2594 = vsel %vm2588, %v2355, %v2427
        %v2595 = vsel %vm2588, %v2359, %v2431
        %v2596 = vsel %vm2588, %v2363, %v2435
        %vm2597 = vcmask 1041408
        %v2598 = vsel %vm2597, %v2589, %v2479
        %v2599 = vsel %vm2597, %v2590, %v2483
        %v2600 = vsel %vm2597, %v2591, %v2487
        %v2601 = vsel %vm2597, %v2592, %v2491
        %v2602 = vsel %vm2597, %v2593, %v2495
        %v2603 = vsel %vm2597, %v2594, %v2499
        %v2604 = vsel %vm2597, %v2595, %v2503
        %v2605 = vsel %vm2597, %v2596, %v2507
        %vm2606 = vcmask 1042432
        %v2607 = vsel %vm2606, %v2598, %v2551
        %v2608 = vsel %vm2606, %v2599, %v2555
        %v2609 = vsel %vm2606, %v2600, %v2559
        %v2610 = vsel %vm2606, %v2601, %v2563
        %v2611 = vsel %vm2606, %v2602, %v2567
        %v2612 = vsel %vm2606, %v2603, %v2571
        %v2613 = vsel %vm2606, %v2604, %v2575
        %v2614 = vsel %vm2606, %v2605, %v2579
        %v2615 = vpack.c.bf16 %v2607, %v2607
        %v2616 = vpack.c.bf16 %v2608, %v2608
        %v2617 = vpack.c.bf16 %v2609, %v2609
        %v2618 = vpack.c.bf16 %v2610, %v2610
        %v2619 = vpack.c.bf16 %v2611, %v2611
        %v2620 = vpack.c.bf16 %v2612, %v2612
        %v2621 = vpack.c.bf16 %v2613, %v2613
        %v2622 = vpack.c.bf16 %v2614, %v2614
        %v2624 = vsel %vm921, %v2615, 0
        %vm2626 = vcmask 1043456
        %v2628 = vsel %vm2626, %v514, 0
        %2630 = vmatprep.subr.bf16.mxu0 0
        %2631 = vmatpush1.bf16.msra.mxu0 %v2628
        %2632 = vmatprep.subr.bf16.mxu0 0
        %2633 = vmatpush1.bf16.msra.mxu0 0
        %2634 = vmatprep.subr.bf16.mxu0 0
        %2635 = vmatpush1.bf16.msra.mxu0 0
        %2636 = vmatprep.subr.bf16.mxu0 0
        %2637 = vmatpush1.bf16.msra.mxu0 0
        %2638 = vmatprep.subr.bf16.mxu0 0
        %2639 = vmatpush1.bf16.msra.mxu0 0
        %2640 = vmatprep.subr.bf16.mxu0 0
        %2641 = vmatpush1.bf16.msra.mxu0 0
        %2642 = vmatprep.subr.bf16.mxu0 0
        %2643 = vmatpush1.bf16.msra.mxu0 0
        %2644 = vmatprep.subr.bf16.mxu0 0
        %2645 = vmatpush1.bf16.msra.mxu0 0
        %2646 = vmatprep.subr.bf16.mxu0 0
        %2647 = vmatpush1.bf16.msra.mxu0 0
        %2648 = vmatprep.subr.bf16.mxu0 0
        %2649 = vmatpush1.bf16.msra.mxu0 0
        %2650 = vmatprep.subr.bf16.mxu0 0
        %2651 = vmatpush1.bf16.msra.mxu0 0
        %2652 = vmatprep.subr.bf16.mxu0 0
        %2653 = vmatpush1.bf16.msra.mxu0 0
        %2654 = vmatprep.subr.bf16.mxu0 0
        %2655 = vmatpush1.bf16.msra.mxu0 0
        %2656 = vmatprep.subr.bf16.mxu0 0
        %2657 = vmatpush1.bf16.msra.mxu0 0
        %2658 = vmatprep.subr.bf16.mxu0 0
        %2659 = vmatpush1.bf16.msra.mxu0 0
        %2660 = vmatprep.subr.bf16.mxu0 0
        %2661 = vmatpush1.bf16.msra.mxu0 0
        %2662 = vmatprep.mubr.bf16.mxu0 0
        %2663 = vmatmul.mubr.bf16.gmra.mrb[0].mxu0 %v2624
        %v2664 = vpop.f32.mrb[0].mxu0
        %v2665 = vadd.f32 0.0, %v2664
        %v2666 = vpop.f32.mrb[0].mxu0
        %v2667 = vpop.f32.mrb[0].mxu0
        %v2668 = vpop.f32.mrb[0].mxu0
        %2669 = vdwg.mxu0
        %v2671 = vsel %vm921, %v2616, 0
        %v2674 = vsel %vm2626, %v515, 0
        %2676 = vmatprep.subr.bf16.mxu0 0
        %2677 = vmatpush1.bf16.msra.mxu0 %v2674
        %2678 = vmatprep.subr.bf16.mxu0 0
        %2679 = vmatpush1.bf16.msra.mxu0 0
        %2680 = vmatprep.subr.bf16.mxu0 0
        %2681 = vmatpush1.bf16.msra.mxu0 0
        %2682 = vmatprep.subr.bf16.mxu0 0
        %2683 = vmatpush1.bf16.msra.mxu0 0
        %2684 = vmatprep.subr.bf16.mxu0 0
        %2685 = vmatpush1.bf16.msra.mxu0 0
        %2686 = vmatprep.subr.bf16.mxu0 0
        %2687 = vmatpush1.bf16.msra.mxu0 0
        %2688 = vmatprep.subr.bf16.mxu0 0
        %2689 = vmatpush1.bf16.msra.mxu0 0
        %2690 = vmatprep.subr.bf16.mxu0 0
        %2691 = vmatpush1.bf16.msra.mxu0 0
        %2692 = vmatprep.subr.bf16.mxu0 0
        %2693 = vmatpush1.bf16.msra.mxu0 0
        %2694 = vmatprep.subr.bf16.mxu0 0
        %2695 = vmatpush1.bf16.msra.mxu0 0
        %2696 = vmatprep.subr.bf16.mxu0 0
        %2697 = vmatpush1.bf16.msra.mxu0 0
        %2698 = vmatprep.subr.bf16.mxu0 0
        %2699 = vmatpush1.bf16.msra.mxu0 0
        %2700 = vmatprep.subr.bf16.mxu0 0
        %2701 = vmatpush1.bf16.msra.mxu0 0
        %2702 = vmatprep.subr.bf16.mxu0 0
        %2703 = vmatpush1.bf16.msra.mxu0 0
        %2704 = vmatprep.subr.bf16.mxu0 0
        %2705 = vmatpush1.bf16.msra.mxu0 0
        %2706 = vmatprep.subr.bf16.mxu0 0
        %2707 = vmatpush1.bf16.msra.mxu0 0
        %2708 = vmatprep.mubr.bf16.mxu0 0
        %2709 = vmatmul.mubr.bf16.gmra.mrb[0].mxu0 %v2671
        %v2710 = vpop.f32.mrb[0].mxu0
        %v2711 = vadd.f32 0.0, %v2710
        %v2712 = vpop.f32.mrb[0].mxu0
        %v2713 = vpop.f32.mrb[0].mxu0
        %v2714 = vpop.f32.mrb[0].mxu0
        %2715 = vdwg.mxu0
        %v2717 = vsel %vm921, %v2617, 0
        %v2720 = vsel %vm2626, %v516, 0
        %2722 = vmatprep.subr.bf16.mxu0 0
        %2723 = vmatpush1.bf16.msra.mxu0 %v2720
        %2724 = vmatprep.subr.bf16.mxu0 0
        %2725 = vmatpush1.bf16.msra.mxu0 0
        %2726 = vmatprep.subr.bf16.mxu0 0
        %2727 = vmatpush1.bf16.msra.mxu0 0
        %2728 = vmatprep.subr.bf16.mxu0 0
        %2729 = vmatpush1.bf16.msra.mxu0 0
        %2730 = vmatprep.subr.bf16.mxu0 0
        %2731 = vmatpush1.bf16.msra.mxu0 0
        %2732 = vmatprep.subr.bf16.mxu0 0
        %2733 = vmatpush1.bf16.msra.mxu0 0
        %2734 = vmatprep.subr.bf16.mxu0 0
        %2735 = vmatpush1.bf16.msra.mxu0 0
        %2736 = vmatprep.subr.bf16.mxu0 0
        %2737 = vmatpush1.bf16.msra.mxu0 0
        %2738 = vmatprep.subr.bf16.mxu0 0
        %2739 = vmatpush1.bf16.msra.mxu0 0
        %2740 = vmatprep.subr.bf16.mxu0 0
        %2741 = vmatpush1.bf16.msra.mxu0 0
        %2742 = vmatprep.subr.bf16.mxu0 0
        %2743 = vmatpush1.bf16.msra.mxu0 0
        %2744 = vmatprep.subr.bf16.mxu0 0
        %2745 = vmatpush1.bf16.msra.mxu0 0
        %2746 = vmatprep.subr.bf16.mxu0 0
        %2747 = vmatpush1.bf16.msra.mxu0 0
        %2748 = vmatprep.subr.bf16.mxu0 0
        %2749 = vmatpush1.bf16.msra.mxu0 0
        %2750 = vmatprep.subr.bf16.mxu0 0
        %2751 = vmatpush1.bf16.msra.mxu0 0
        %2752 = vmatprep.subr.bf16.mxu0 0
        %2753 = vmatpush1.bf16.msra.mxu0 0
        %2754 = vmatprep.mubr.bf16.mxu0 0
        %2755 = vmatmul.mubr.bf16.gmra.mrb[0].mxu0 %v2717
        %v2756 = vpop.f32.mrb[0].mxu0
        %v2757 = vadd.f32 0.0, %v2756
        %v2758 = vpop.f32.mrb[0].mxu0
        %v2759 = vpop.f32.mrb[0].mxu0
        %v2760 = vpop.f32.mrb[0].mxu0
        %2761 = vdwg.mxu0
        %v2763 = vsel %vm921, %v2618, 0
        %v2766 = vsel %vm2626, %v517, 0
        %2768 = vmatprep.subr.bf16.mxu0 0
        %2769 = vmatpush1.bf16.msra.mxu0 %v2766
        %2770 = vmatprep.subr.bf16.mxu0 0
        %2771 = vmatpush1.bf16.msra.mxu0 0
        %2772 = vmatprep.subr.bf16.mxu0 0
        %2773 = vmatpush1.bf16.msra.mxu0 0
        %2774 = vmatprep.subr.bf16.mxu0 0
        %2775 = vmatpush1.bf16.msra.mxu0 0
        %2776 = vmatprep.subr.bf16.mxu0 0
        %2777 = vmatpush1.bf16.msra.mxu0 0
        %2778 = vmatprep.subr.bf16.mxu0 0
        %2779 = vmatpush1.bf16.msra.mxu0 0
        %2780 = vmatprep.subr.bf16.mxu0 0
        %2781 = vmatpush1.bf16.msra.mxu0 0
        %2782 = vmatprep.subr.bf16.mxu0 0
        %2783 = vmatpush1.bf16.msra.mxu0 0
        %2784 = vmatprep.subr.bf16.mxu0 0
        %2785 = vmatpush1.bf16.msra.mxu0 0
        %2786 = vmatprep.subr.bf16.mxu0 0
        %2787 = vmatpush1.bf16.msra.mxu0 0
        %2788 = vmatprep.subr.bf16.mxu0 0
        %2789 = vmatpush1.bf16.msra.mxu0 0
        %2790 = vmatprep.subr.bf16.mxu0 0
        %2791 = vmatpush1.bf16.msra.mxu0 0
        %2792 = vmatprep.subr.bf16.mxu0 0
        %2793 = vmatpush1.bf16.msra.mxu0 0
        %2794 = vmatprep.subr.bf16.mxu0 0
        %2795 = vmatpush1.bf16.msra.mxu0 0
        %2796 = vmatprep.subr.bf16.mxu0 0
        %2797 = vmatpush1.bf16.msra.mxu0 0
        %2798 = vmatprep.subr.bf16.mxu0 0
        %2799 = vmatpush1.bf16.msra.mxu0 0
        %2800 = vmatprep.mubr.bf16.mxu0 0
        %2801 = vmatmul.mubr.bf16.gmra.mrb[0].mxu0 %v2763
        %v2802 = vpop.f32.mrb[0].mxu0
        %v2803 = vadd.f32 0.0, %v2802
        %v2804 = vpop.f32.mrb[0].mxu0
        %v2805 = vpop.f32.mrb[0].mxu0
        %v2806 = vpop.f32.mrb[0].mxu0
        %2807 = vdwg.mxu0
        %v2809 = vsel %vm921, %v2619, 0
        %v2812 = vsel %vm2626, %v518, 0
        %2814 = vmatprep.subr.bf16.mxu0 0
        %2815 = vmatpush1.bf16.msra.mxu0 %v2812
        %2816 = vmatprep.subr.bf16.mxu0 0
        %2817 = vmatpush1.bf16.msra.mxu0 0
        %2818 = vmatprep.subr.bf16.mxu0 0
        %2819 = vmatpush1.bf16.msra.mxu0 0
        %2820 = vmatprep.subr.bf16.mxu0 0
        %2821 = vmatpush1.bf16.msra.mxu0 0
        %2822 = vmatprep.subr.bf16.mxu0 0
        %2823 = vmatpush1.bf16.msra.mxu0 0
        %2824 = vmatprep.subr.bf16.mxu0 0
        %2825 = vmatpush1.bf16.msra.mxu0 0
        %2826 = vmatprep.subr.bf16.mxu0 0
        %2827 = vmatpush1.bf16.msra.mxu0 0
        %2828 = vmatprep.subr.bf16.mxu0 0
        %2829 = vmatpush1.bf16.msra.mxu0 0
        %2830 = vmatprep.subr.bf16.mxu0 0
        %2831 = vmatpush1.bf16.msra.mxu0 0
        %2832 = vmatprep.subr.bf16.mxu0 0
        %2833 = vmatpush1.bf16.msra.mxu0 0
        %2834 = vmatprep.subr.bf16.mxu0 0
        %2835 = vmatpush1.bf16.msra.mxu0 0
        %2836 = vmatprep.subr.bf16.mxu0 0
        %2837 = vmatpush1.bf16.msra.mxu0 0
        %2838 = vmatprep.subr.bf16.mxu0 0
        %2839 = vmatpush1.bf16.msra.mxu0 0
        %2840 = vmatprep.subr.bf16.mxu0 0
        %2841 = vmatpush1.bf16.msra.mxu0 0
        %2842 = vmatprep.subr.bf16.mxu0 0
        %2843 = vmatpush1.bf16.msra.mxu0 0
        %2844 = vmatprep.subr.bf16.mxu0 0
        %2845 = vmatpush1.bf16.msra.mxu0 0
        %2846 = vmatprep.mubr.bf16.mxu0 0
        %2847 = vmatmul.mubr.bf16.gmra.mrb[0].mxu0 %v2809
        %v2848 = vpop.f32.mrb[0].mxu0
        %v2849 = vadd.f32 0.0, %v2848
        %v2850 = vpop.f32.mrb[0].mxu0
        %v2851 = vpop.f32.mrb[0].mxu0
        %v2852 = vpop.f32.mrb[0].mxu0
        %2853 = vdwg.mxu0
        %v2855 = vsel %vm921, %v2620, 0
        %v2858 = vsel %vm2626, %v519, 0
        %2860 = vmatprep.subr.bf16.mxu0 0
        %2861 = vmatpush1.bf16.msra.mxu0 %v2858
        %2862 = vmatprep.subr.bf16.mxu0 0
        %2863 = vmatpush1.bf16.msra.mxu0 0
        %2864 = vmatprep.subr.bf16.mxu0 0
        %2865 = vmatpush1.bf16.msra.mxu0 0
        %2866 = vmatprep.subr.bf16.mxu0 0
        %2867 = vmatpush1.bf16.msra.mxu0 0
        %2868 = vmatprep.subr.bf16.mxu0 0
        %2869 = vmatpush1.bf16.msra.mxu0 0
        %2870 = vmatprep.subr.bf16.mxu0 0
        %2871 = vmatpush1.bf16.msra.mxu0 0
        %2872 = vmatprep.subr.bf16.mxu0 0
        %2873 = vmatpush1.bf16.msra.mxu0 0
        %2874 = vmatprep.subr.bf16.mxu0 0
        %2875 = vmatpush1.bf16.msra.mxu0 0
        %2876 = vmatprep.subr.bf16.mxu0 0
        %2877 = vmatpush1.bf16.msra.mxu0 0
        %2878 = vmatprep.subr.bf16.mxu0 0
        %2879 = vmatpush1.bf16.msra.mxu0 0
        %2880 = vmatprep.subr.bf16.mxu0 0
        %2881 = vmatpush1.bf16.msra.mxu0 0
        %2882 = vmatprep.subr.bf16.mxu0 0
        %2883 = vmatpush1.bf16.msra.mxu0 0
        %2884 = vmatprep.subr.bf16.mxu0 0
        %2885 = vmatpush1.bf16.msra.mxu0 0
        %2886 = vmatprep.subr.bf16.mxu0 0
        %2887 = vmatpush1.bf16.msra.mxu0 0
        %2888 = vmatprep.subr.bf16.mxu0 0
        %2889 = vmatpush1.bf16.msra.mxu0 0
        %2890 = vmatprep.subr.bf16.mxu0 0
        %2891 = vmatpush1.bf16.msra.mxu0 0
        %2892 = vmatprep.mubr.bf16.mxu0 0
        %2893 = vmatmul.mubr.bf16.gmra.mrb[0].mxu0 %v2855
        %v2894 = vpop.f32.mrb[0].mxu0
        %v2895 = vadd.f32 0.0, %v2894
        %v2896 = vpop.f32.mrb[0].mxu0
        %v2897 = vpop.f32.mrb[0].mxu0
        %v2898 = vpop.f32.mrb[0].mxu0
        %2899 = vdwg.mxu0
        %v2901 = vsel %vm921, %v2621, 0
        %v2904 = vsel %vm2626, %v520, 0
        %2906 = vmatprep.subr.bf16.mxu0 0
        %2907 = vmatpush1.bf16.msra.mxu0 %v2904
        %2908 = vmatprep.subr.bf16.mxu0 0
        %2909 = vmatpush1.bf16.msra.mxu0 0
        %2910 = vmatprep.subr.bf16.mxu0 0
        %2911 = vmatpush1.bf16.msra.mxu0 0
        %2912 = vmatprep.subr.bf16.mxu0 0
        %2913 = vmatpush1.bf16.msra.mxu0 0
        %2914 = vmatprep.subr.bf16.mxu0 0
        %2915 = vmatpush1.bf16.msra.mxu0 0
        %2916 = vmatprep.subr.bf16.mxu0 0
        %2917 = vmatpush1.bf16.msra.mxu0 0
        %2918 = vmatprep.subr.bf16.mxu0 0
        %2919 = vmatpush1.bf16.msra.mxu0 0
        %2920 = vmatprep.subr.bf16.mxu0 0
        %2921 = vmatpush1.bf16.msra.mxu0 0
        %2922 = vmatprep.subr.bf16.mxu0 0
        %2923 = vmatpush1.bf16.msra.mxu0 0
        %2924 = vmatprep.subr.bf16.mxu0 0
        %2925 = vmatpush1.bf16.msra.mxu0 0
        %2926 = vmatprep.subr.bf16.mxu0 0
        %2927 = vmatpush1.bf16.msra.mxu0 0
        %2928 = vmatprep.subr.bf16.mxu0 0
        %2929 = vmatpush1.bf16.msra.mxu0 0
        %2930 = vmatprep.subr.bf16.mxu0 0
        %2931 = vmatpush1.bf16.msra.mxu0 0
        %2932 = vmatprep.subr.bf16.mxu0 0
        %2933 = vmatpush1.bf16.msra.mxu0 0
        %2934 = vmatprep.subr.bf16.mxu0 0
        %2935 = vmatpush1.bf16.msra.mxu0 0
        %2936 = vmatprep.subr.bf16.mxu0 0
        %2937 = vmatpush1.bf16.msra.mxu0 0
        %2938 = vmatprep.mubr.bf16.mxu0 0
        %2939 = vmatmul.mubr.bf16.gmra.mrb[0].mxu0 %v2901
        %v2940 = vpop.f32.mrb[0].mxu0
        %v2941 = vadd.f32 0.0, %v2940
        %v2942 = vpop.f32.mrb[0].mxu0
        %v2943 = vpop.f32.mrb[0].mxu0
        %v2944 = vpop.f32.mrb[0].mxu0
        %2945 = vdwg.mxu0
        %v2947 = vsel %vm921, %v2622, 0
        %v2950 = vsel %vm2626, %v521, 0
        %2952 = vmatprep.subr.bf16.mxu0 0
        %2953 = vmatpush1.bf16.msra.mxu0 %v2950
        %2954 = vmatprep.subr.bf16.mxu0 0
        %2955 = vmatpush1.bf16.msra.mxu0 0
        %2956 = vmatprep.subr.bf16.mxu0 0
        %2957 = vmatpush1.bf16.msra.mxu0 0
        %2958 = vmatprep.subr.bf16.mxu0 0
        %2959 = vmatpush1.bf16.msra.mxu0 0
        %2960 = vmatprep.subr.bf16.mxu0 0
        %2961 = vmatpush1.bf16.msra.mxu0 0
        %2962 = vmatprep.subr.bf16.mxu0 0
        %2963 = vmatpush1.bf16.msra.mxu0 0
        %2964 = vmatprep.subr.bf16.mxu0 0
        %2965 = vmatpush1.bf16.msra.mxu0 0
        %2966 = vmatprep.subr.bf16.mxu0 0
        %2967 = vmatpush1.bf16.msra.mxu0 0
        %2968 = vmatprep.subr.bf16.mxu0 0
        %2969 = vmatpush1.bf16.msra.mxu0 0
        %2970 = vmatprep.subr.bf16.mxu0 0
        %2971 = vmatpush1.bf16.msra.mxu0 0
        %2972 = vmatprep.subr.bf16.mxu0 0
        %2973 = vmatpush1.bf16.msra.mxu0 0
        %2974 = vmatprep.subr.bf16.mxu0 0
        %2975 = vmatpush1.bf16.msra.mxu0 0
        %2976 = vmatprep.subr.bf16.mxu0 0
        %2977 = vmatpush1.bf16.msra.mxu0 0
        %2978 = vmatprep.subr.bf16.mxu0 0
        %2979 = vmatpush1.bf16.msra.mxu0 0
        %2980 = vmatprep.subr.bf16.mxu0 0
        %2981 = vmatpush1.bf16.msra.mxu0 0
        %2982 = vmatprep.subr.bf16.mxu0 0
        %2983 = vmatpush1.bf16.msra.mxu0 0
        %2984 = vmatprep.mubr.bf16.mxu0 0
        %2985 = vmatmul.mubr.bf16.gmra.mrb[0].mxu0 %v2947
        %v2986 = vpop.f32.mrb[0].mxu0
        %v2987 = vadd.f32 0.0, %v2986
        %v2988 = vpop.f32.mrb[0].mxu0
        %v2989 = vpop.f32.mrb[0].mxu0
        %v2990 = vpop.f32.mrb[0].mxu0
        %2991 = vdwg.mxu0
        %v2992 = vpack.c.bf16 %v2665, %v2665
        %v2993 = vpack.c.bf16 %v2711, %v2711
        %v2994 = vpack.c.bf16 %v2757, %v2757
        %v2995 = vpack.c.bf16 %v2803, %v2803
        %v2996 = vpack.c.bf16 %v2849, %v2849
        %v2997 = vpack.c.bf16 %v2895, %v2895
        %v2998 = vpack.c.bf16 %v2941, %v2941
        %v2999 = vpack.c.bf16 %v2987, %v2987
        %v3000 = vld [vmem:[#allocation11] sm:$0xf]
        %v3001 = vld [vmem:[#allocation11 + $0x4] sm:$0xf]
        %v3002 = vld [vmem:[#allocation11 + $0x8] sm:$0xf]
        %v3003 = vld [vmem:[#allocation11 + $0xc] sm:$0xf]
        %v3004 = vld [vmem:[#allocation11 + $0x10] sm:$0xf]
        %v3005 = vld [vmem:[#allocation11 + $0x14] sm:$0xf]
        %v3006 = vld [vmem:[#allocation11 + $0x18] sm:$0xf]
        %v3007 = vld [vmem:[#allocation11 + $0x1c] sm:$0xf]
        %v3016 = vunpack.c.l.b16 %v2992
        %v3017 = vunpack.c.l.b16 %v2993
        %v3018 = vunpack.c.l.b16 %v2994
        %v3019 = vunpack.c.l.b16 %v2995
        %v3020 = vunpack.c.l.b16 %v2996
        %v3021 = vunpack.c.l.b16 %v2997
        %v3022 = vunpack.c.l.b16 %v2998
        %v3023 = vunpack.c.l.b16 %v2999
        %v3024 = vrot.slane %v3016, 1
        %v3025 = vsel %vm906, %v3017, %v3024
        %v3026 = vrot.slane %v3018, 7
        %v3027 = vsel %vm908, %v3026, %v3025
        %v3028 = vrot.slane %v3019, 6
        %v3029 = vsel %vm910, %v3028, %v3027
        %v3030 = vrot.slane %v3020, 5
        %v3031 = vsel %vm912, %v3030, %v3029
        %v3032 = vrot.slane %v3021, 4
        %v3033 = vsel %vm914, %v3032, %v3031
        %v3034 = vrot.slane %v3022, 3
        %v3035 = vsel %vm916, %v3034, %v3033
        %v3036 = vrot.slane %v3023, 2
        %v3037 = vsel %vm918, %v3036, %v3035
        %v3038 = vpack.c.b16 %v3037, %v3037
        %v3043 = vunpack.c.l.b16 %v3004
        %v3044 = vunpack.c.l.b16 %v3005
        %v3045 = vunpack.c.l.b16 %v3006
        %v3046 = vunpack.c.l.b16 %v3007
        %v3047 = vpack.c.b16 %v3044, %v3043
        %v3048 = vpack.c.b16 %v3046, %v3045
        %v3052 = vsel %vm566, %v3038, 0
        %3054 = vmatprep.subr.bf16.mxu0 0
        %3055 = vmatpush1.bf16.msra.mxu0 %v3047
        %3056 = vmatprep.subr.bf16.mxu0 0
        %3057 = vmatpush1.bf16.msra.mxu0 %v3048
        %3058 = vmatprep.subr.bf16.mxu0 0
        %3059 = vmatpush1.bf16.msra.mxu0 0
        %3060 = vmatprep.subr.bf16.mxu0 0
        %3061 = vmatpush1.bf16.msra.mxu0 0
        %3062 = vmatprep.subr.bf16.mxu0 0
        %3063 = vmatpush1.bf16.msra.mxu0 0
        %3064 = vmatprep.subr.bf16.mxu0 0
        %3065 = vmatpush1.bf16.msra.mxu0 0
        %3066 = vmatprep.subr.bf16.mxu0 0
        %3067 = vmatpush1.bf16.msra.mxu0 0
        %3068 = vmatprep.subr.bf16.mxu0 0
        %3069 = vmatpush1.bf16.msra.mxu0 0
        %3070 = vmatprep.subr.bf16.mxu0 0
        %3071 = vmatpush1.bf16.msra.mxu0 0
        %3072 = vmatprep.subr.bf16.mxu0 0
        %3073 = vmatpush1.bf16.msra.mxu0 0
        %3074 = vmatprep.subr.bf16.mxu0 0
        %3075 = vmatpush1.bf16.msra.mxu0 0
        %3076 = vmatprep.subr.bf16.mxu0 0
        %3077 = vmatpush1.bf16.msra.mxu0 0
        %3078 = vmatprep.subr.bf16.mxu0 0
        %3079 = vmatpush1.bf16.msra.mxu0 0
        %3080 = vmatprep.subr.bf16.mxu0 0
        %3081 = vmatpush1.bf16.msra.mxu0 0
        %3082 = vmatprep.subr.bf16.mxu0 0
        %3083 = vmatpush1.bf16.msra.mxu0 0
        %3084 = vmatprep.subr.bf16.mxu0 0
        %3085 = vmatpush1.bf16.msra.mxu0 0
        %3086 = vmatprep.mubr.bf16.mxu0 0
        %3087 = vmatmul.mubr.bf16.gmra.mrb[0].mxu0 %v3052
        %v3088 = vpop.f32.mrb[0].mxu0
        %v3089 = vadd.f32 0.0, %v3088
        %v3090 = vpop.f32.mrb[0].mxu0
        %v3091 = vpop.f32.mrb[0].mxu0
        %v3092 = vpop.f32.mrb[0].mxu0
        %3093 = vdwg.mxu0
        %v3094 = vrot.slane %v3017, 7
        %v3095 = vsel %vm906, %v3094, %v3016
        %v3096 = vrot.slane %v3018, 6
        %v3097 = vsel %vm908, %v3096, %v3095
        %v3098 = vrot.slane %v3019, 5
        %v3099 = vsel %vm910, %v3098, %v3097
        %v3100 = vrot.slane %v3020, 4
        %v3101 = vsel %vm912, %v3100, %v3099
        %v3102 = vrot.slane %v3021, 3
        %v3103 = vsel %vm914, %v3102, %v3101
        %v3104 = vrot.slane %v3022, 2
        %v3105 = vsel %vm916, %v3104, %v3103
        %v3106 = vrot.slane %v3023, 1
        %v3107 = vsel %vm918, %v3106, %v3105
        %v3108 = vpack.c.b16 %v3107, %v3107
        %v3113 = vunpack.c.l.b16 %v3000
        %v3114 = vunpack.c.l.b16 %v3001
        %v3115 = vunpack.c.l.b16 %v3002
        %v3116 = vunpack.c.l.b16 %v3003
        %v3117 = vpack.c.b16 %v3114, %v3113
        %v3118 = vpack.c.b16 %v3116, %v3115
        %v3122 = vsel %vm566, %v3108, 0
        %3124 = vmatprep.subr.bf16.mxu0 0
        %3125 = vmatpush1.bf16.msra.mxu0 %v3117
        %3126 = vmatprep.subr.bf16.mxu0 0
        %3127 = vmatpush1.bf16.msra.mxu0 %v3118
        %3128 = vmatprep.subr.bf16.mxu0 0
        %3129 = vmatpush1.bf16.msra.mxu0 0
        %3130 = vmatprep.subr.bf16.mxu0 0
        %3131 = vmatpush1.bf16.msra.mxu0 0
        %3132 = vmatprep.subr.bf16.mxu0 0
        %3133 = vmatpush1.bf16.msra.mxu0 0
        %3134 = vmatprep.subr.bf16.mxu0 0
        %3135 = vmatpush1.bf16.msra.mxu0 0
        %3136 = vmatprep.subr.bf16.mxu0 0
        %3137 = vmatpush1.bf16.msra.mxu0 0
        %3138 = vmatprep.subr.bf16.mxu0 0
        %3139 = vmatpush1.bf16.msra.mxu0 0
        %3140 = vmatprep.subr.bf16.mxu0 0
        %3141 = vmatpush1.bf16.msra.mxu0 0
        %3142 = vmatprep.subr.bf16.mxu0 0
        %3143 = vmatpush1.bf16.msra.mxu0 0
        %3144 = vmatprep.subr.bf16.mxu0 0
        %3145 = vmatpush1.bf16.msra.mxu0 0
        %3146 = vmatprep.subr.bf16.mxu0 0
        %3147 = vmatpush1.bf16.msra.mxu0 0
        %3148 = vmatprep.subr.bf16.mxu0 0
        %3149 = vmatpush1.bf16.msra.mxu0 0
        %3150 = vmatprep.subr.bf16.mxu0 0
        %3151 = vmatpush1.bf16.msra.mxu0 0
        %3152 = vmatprep.subr.bf16.mxu0 0
        %3153 = vmatpush1.bf16.msra.mxu0 0
        %3154 = vmatprep.subr.bf16.mxu0 0
        %3155 = vmatpush1.bf16.msra.mxu0 0
        %3156 = vmatprep.mubr.bf16.mxu0 0
        %3157 = vmatmul.mubr.bf16.gmra.mrb[0].mxu0 %v3122
        %v3158 = vpop.f32.mrb[0].mxu0
        %v3159 = vadd.f32 %v3089, %v3158
        %v3160 = vpop.f32.mrb[0].mxu0
        %v3161 = vpop.f32.mrb[0].mxu0
        %v3162 = vpop.f32.mrb[0].mxu0
        %3163 = vdwg.mxu0
        %v3164 = vld [vmem:[#allocation11 + $0x20] sm:$0xf]
        %v3165 = vld [vmem:[#allocation11 + $0x24] sm:$0xf]
        %v3166 = vld [vmem:[#allocation11 + $0x28] sm:$0xf]
        %v3167 = vld [vmem:[#allocation11 + $0x2c] sm:$0xf]
        %v3168 = vrot.slane %v3016, 2
        %v3169 = vrot.slane %v3017, 1
        %v3170 = vsel %vm906, %v3169, %v3168
        %v3171 = vsel %vm908, %v3018, %v3170
        %v3172 = vrot.slane %v3019, 7
        %v3173 = vsel %vm910, %v3172, %v3171
        %v3174 = vrot.slane %v3020, 6
        %v3175 = vsel %vm912, %v3174, %v3173
        %v3176 = vrot.slane %v3021, 5
        %v3177 = vsel %vm914, %v3176, %v3175
        %v3178 = vrot.slane %v3022, 4
        %v3179 = vsel %vm916, %v3178, %v3177
        %v3180 = vrot.slane %v3023, 3
        %v3181 = vsel %vm918, %v3180, %v3179
        %v3182 = vpack.c.b16 %v3181, %v3181
        %v3187 = vunpack.c.l.b16 %v3164
        %v3188 = vunpack.c.l.b16 %v3165
        %v3189 = vunpack.c.l.b16 %v3166
        %v3190 = vunpack.c.l.b16 %v3167
        %v3191 = vpack.c.b16 %v3188, %v3187
        %v3192 = vpack.c.b16 %v3190, %v3189
        %v3196 = vsel %vm566, %v3182, 0
        %3198 = vmatprep.subr.bf16.mxu0 0
        %3199 = vmatpush1.bf16.msra.mxu0 %v3191
        %3200 = vmatprep.subr.bf16.mxu0 0
        %3201 = vmatpush1.bf16.msra.mxu0 %v3192
        %3202 = vmatprep.subr.bf16.mxu0 0
        %3203 = vmatpush1.bf16.msra.mxu0 0
        %3204 = vmatprep.subr.bf16.mxu0 0
        %3205 = vmatpush1.bf16.msra.mxu0 0
        %3206 = vmatprep.subr.bf16.mxu0 0
        %3207 = vmatpush1.bf16.msra.mxu0 0
        %3208 = vmatprep.subr.bf16.mxu0 0
        %3209 = vmatpush1.bf16.msra.mxu0 0
        %3210 = vmatprep.subr.bf16.mxu0 0
        %3211 = vmatpush1.bf16.msra.mxu0 0
        %3212 = vmatprep.subr.bf16.mxu0 0
        %3213 = vmatpush1.bf16.msra.mxu0 0
        %3214 = vmatprep.subr.bf16.mxu0 0
        %3215 = vmatpush1.bf16.msra.mxu0 0
        %3216 = vmatprep.subr.bf16.mxu0 0
        %3217 = vmatpush1.bf16.msra.mxu0 0
        %3218 = vmatprep.subr.bf16.mxu0 0
        %3219 = vmatpush1.bf16.msra.mxu0 0
        %3220 = vmatprep.subr.bf16.mxu0 0
        %3221 = vmatpush1.bf16.msra.mxu0 0
        %3222 = vmatprep.subr.bf16.mxu0 0
        %3223 = vmatpush1.bf16.msra.mxu0 0
        %3224 = vmatprep.subr.bf16.mxu0 0
        %3225 = vmatpush1.bf16.msra.mxu0 0
        %3226 = vmatprep.subr.bf16.mxu0 0
        %3227 = vmatpush1.bf16.msra.mxu0 0
        %3228 = vmatprep.subr.bf16.mxu0 0
        %3229 = vmatpush1.bf16.msra.mxu0 0
        %3230 = vmatprep.mubr.bf16.mxu0 0
        %3231 = vmatmul.mubr.bf16.gmra.mrb[0].mxu0 %v3196
        %v3232 = vpop.f32.mrb[0].mxu0
        %v3233 = vadd.f32 0.0, %v3232
        %v3234 = vpop.f32.mrb[0].mxu0
        %v3235 = vpop.f32.mrb[0].mxu0
        %v3236 = vpop.f32.mrb[0].mxu0
        %3237 = vdwg.mxu0
        %v3238 = vadd.f32 %v3159, %v3233
        %v3239 = vld [vmem:[#allocation11 + $0x30] sm:$0xf]
        %v3240 = vld [vmem:[#allocation11 + $0x34] sm:$0xf]
        %v3241 = vld [vmem:[#allocation11 + $0x38] sm:$0xf]
        %v3242 = vld [vmem:[#allocation11 + $0x3c] sm:$0xf]
        %v3243 = vrot.slane %v3016, 3
        %v3244 = vrot.slane %v3017, 2
        %v3245 = vsel %vm906, %v3244, %v3243
        %v3246 = vrot.slane %v3018, 1
        %v3247 = vsel %vm908, %v3246, %v3245
        %v3248 = vsel %vm910, %v3019, %v3247
        %v3249 = vrot.slane %v3020, 7
        %v3250 = vsel %vm912, %v3249, %v3248
        %v3251 = vrot.slane %v3021, 6
        %v3252 = vsel %vm914, %v3251, %v3250
        %v3253 = vrot.slane %v3022, 5
        %v3254 = vsel %vm916, %v3253, %v3252
        %v3255 = vrot.slane %v3023, 4
        %v3256 = vsel %vm918, %v3255, %v3254
        %v3257 = vpack.c.b16 %v3256, %v3256
        %v3262 = vunpack.c.l.b16 %v3239
        %v3263 = vunpack.c.l.b16 %v3240
        %v3264 = vunpack.c.l.b16 %v3241
        %v3265 = vunpack.c.l.b16 %v3242
        %v3266 = vpack.c.b16 %v3263, %v3262
        %v3267 = vpack.c.b16 %v3265, %v3264
        %v3271 = vsel %vm566, %v3257, 0
        %3273 = vmatprep.subr.bf16.mxu0 0
        %3274 = vmatpush1.bf16.msra.mxu0 %v3266
        %3275 = vmatprep.subr.bf16.mxu0 0
        %3276 = vmatpush1.bf16.msra.mxu0 %v3267
        %3277 = vmatprep.subr.bf16.mxu0 0
        %3278 = vmatpush1.bf16.msra.mxu0 0
        %3279 = vmatprep.subr.bf16.mxu0 0
        %3280 = vmatpush1.bf16.msra.mxu0 0
        %3281 = vmatprep.subr.bf16.mxu0 0
        %3282 = vmatpush1.bf16.msra.mxu0 0
        %3283 = vmatprep.subr.bf16.mxu0 0
        %3284 = vmatpush1.bf16.msra.mxu0 0
        %3285 = vmatprep.subr.bf16.mxu0 0
        %3286 = vmatpush1.bf16.msra.mxu0 0
        %3287 = vmatprep.subr.bf16.mxu0 0
        %3288 = vmatpush1.bf16.msra.mxu0 0
        %3289 = vmatprep.subr.bf16.mxu0 0
        %3290 = vmatpush1.bf16.msra.mxu0 0
        %3291 = vmatprep.subr.bf16.mxu0 0
        %3292 = vmatpush1.bf16.msra.mxu0 0
        %3293 = vmatprep.subr.bf16.mxu0 0
        %3294 = vmatpush1.bf16.msra.mxu0 0
        %3295 = vmatprep.subr.bf16.mxu0 0
        %3296 = vmatpush1.bf16.msra.mxu0 0
        %3297 = vmatprep.subr.bf16.mxu0 0
        %3298 = vmatpush1.bf16.msra.mxu0 0
        %3299 = vmatprep.subr.bf16.mxu0 0
        %3300 = vmatpush1.bf16.msra.mxu0 0
        %3301 = vmatprep.subr.bf16.mxu0 0
        %3302 = vmatpush1.bf16.msra.mxu0 0
        %3303 = vmatprep.subr.bf16.mxu0 0
        %3304 = vmatpush1.bf16.msra.mxu0 0
        %3305 = vmatprep.mubr.bf16.mxu0 0
        %3306 = vmatmul.mubr.bf16.gmra.mrb[0].mxu0 %v3271
        %v3307 = vpop.f32.mrb[0].mxu0
        %v3308 = vadd.f32 0.0, %v3307
        %v3309 = vpop.f32.mrb[0].mxu0
        %v3310 = vpop.f32.mrb[0].mxu0
        %v3311 = vpop.f32.mrb[0].mxu0
        %3312 = vdwg.mxu0
        %v3313 = vadd.f32 %v3238, %v3308
        %v3314 = vld [vmem:[#allocation12] sm:$0x1]
        %v3316 = vlaneseq
        %v3317 = vshrl.u32 %v3316, 7
        %v3318 = vsub.s32 0, %v3317
        %v3319 = vrot.slane %v3314, %v3318
        %v3321 = vadd.f32 %v3313, %v3319
        %v3322 = vmax.f32 %v3321, 0.0
        %v3323 = vpack.c.bf16 %v3322, %v3322
        %v3324 = vld [vmem:[#allocation14] sm:$0xf]
        %v3325 = vld [vmem:[#allocation14 + $0x4] sm:$0xf]
        %v3326 = vld [vmem:[#allocation14 + $0x8] sm:$0xf]
        %v3327 = vld [vmem:[#allocation14 + $0xc] sm:$0xf]
        %v3328 = vld [vmem:[#allocation14 + $0x10] sm:$0xf]
        %v3329 = vld [vmem:[#allocation14 + $0x14] sm:$0xf]
        %v3330 = vld [vmem:[#allocation14 + $0x18] sm:$0xf]
        %v3331 = vld [vmem:[#allocation14 + $0x1c] sm:$0xf]
        %v3332 = vld [vmem:[#allocation14 + $0x20] sm:$0xf]
        %v3333 = vld [vmem:[#allocation14 + $0x24] sm:$0xf]
        %v3334 = vld [vmem:[#allocation14 + $0x28] sm:$0xf]
        %v3335 = vld [vmem:[#allocation14 + $0x2c] sm:$0xf]
        %v3336 = vld [vmem:[#allocation14 + $0x30] sm:$0xf]
        %v3337 = vld [vmem:[#allocation14 + $0x34] sm:$0xf]
        %v3338 = vld [vmem:[#allocation14 + $0x38] sm:$0xf]
        %v3339 = vld [vmem:[#allocation14 + $0x3c] sm:$0xf]
        %v3340 = vld [vmem:[#allocation15] sm:$0x1]
        %v3342 = vlaneseq
        %v3343 = vshrl.u32 %v3342, 7
        %v3344 = vsub.s32 0, %v3343
        %v3345 = vrot.slane %v3340, %v3344
        %v3363 = vunpack.c.l.b16 %v3324
        %v3364 = vunpack.c.l.b16 %v3325
        %v3365 = vunpack.c.l.b16 %v3326
        %v3366 = vunpack.c.l.b16 %v3327
        %v3367 = vunpack.c.l.b16 %v3328
        %v3368 = vunpack.c.l.b16 %v3329
        %v3369 = vunpack.c.l.b16 %v3330
        %v3370 = vunpack.c.l.b16 %v3331
        %v3371 = vunpack.c.l.b16 %v3332
        %v3372 = vunpack.c.l.b16 %v3333
        %v3373 = vunpack.c.l.b16 %v3334
        %v3374 = vunpack.c.l.b16 %v3335
        %v3375 = vunpack.c.l.b16 %v3336
        %v3376 = vunpack.c.l.b16 %v3337
        %v3377 = vunpack.c.l.b16 %v3338
        %v3378 = vunpack.c.l.b16 %v3339
        %v3379 = vpack.c.b16 %v3364, %v3363
        %v3380 = vpack.c.b16 %v3366, %v3365
        %v3381 = vpack.c.b16 %v3368, %v3367
        %v3382 = vpack.c.b16 %v3370, %v3369
        %v3383 = vpack.c.b16 %v3372, %v3371
        %v3384 = vpack.c.b16 %v3374, %v3373
        %v3385 = vpack.c.b16 %v3376, %v3375
        %v3386 = vpack.c.b16 %v3378, %v3377
        %3395 = vmatprep.subr.bf16.mxu0 0
        %3396 = vmatpush1.bf16.msra.mxu0 %v3379
        %3397 = vmatprep.subr.bf16.mxu0 0
        %3398 = vmatpush1.bf16.msra.mxu0 %v3380
        %3399 = vmatprep.subr.bf16.mxu0 0
        %3400 = vmatpush1.bf16.msra.mxu0 %v3381
        %3401 = vmatprep.subr.bf16.mxu0 0
        %3402 = vmatpush1.bf16.msra.mxu0 %v3382
        %3403 = vmatprep.subr.bf16.mxu0 0
        %3404 = vmatpush1.bf16.msra.mxu0 %v3383
        %3405 = vmatprep.subr.bf16.mxu0 0
        %3406 = vmatpush1.bf16.msra.mxu0 %v3384
        %3407 = vmatprep.subr.bf16.mxu0 0
        %3408 = vmatpush1.bf16.msra.mxu0 %v3385
        %3409 = vmatprep.subr.bf16.mxu0 0
        %3410 = vmatpush1.bf16.msra.mxu0 %v3386
        %3411 = vmatprep.subr.bf16.mxu0 0
        %3412 = vmatpush1.bf16.msra.mxu0 0
        %3413 = vmatprep.subr.bf16.mxu0 0
        %3414 = vmatpush1.bf16.msra.mxu0 0
        %3415 = vmatprep.subr.bf16.mxu0 0
        %3416 = vmatpush1.bf16.msra.mxu0 0
        %3417 = vmatprep.subr.bf16.mxu0 0
        %3418 = vmatpush1.bf16.msra.mxu0 0
        %3419 = vmatprep.subr.bf16.mxu0 0
        %3420 = vmatpush1.bf16.msra.mxu0 0
        %3421 = vmatprep.subr.bf16.mxu0 0
        %3422 = vmatpush1.bf16.msra.mxu0 0
        %3423 = vmatprep.subr.bf16.mxu0 0
        %3424 = vmatpush1.bf16.msra.mxu0 0
        %3425 = vmatprep.subr.bf16.mxu0 0
        %3426 = vmatpush1.bf16.msra.mxu0 0
        %3427 = vmatprep.mubr.bf16.mxu0 0
        %3428 = vmatmul.mubr.bf16.gmra.mrb[0].mxu0 %v3323
        %v3429 = vpop.f32.mrb[0].mxu0
        %v3430 = vadd.f32 %v3345, %v3429
        %v3431 = vpop.f32.mrb[0].mxu0
        %v3432 = vpop.f32.mrb[0].mxu0
        %v3433 = vpop.f32.mrb[0].mxu0
        %3434 = vdwg.mxu0
        %v3435 = vmax.f32 %v3430, 0.0
        %v3436 = vpack.c.bf16 %v3435, %v3435
        %v3437 = vld [vmem:[#allocation17] sm:$0xf]
        %v3438 = vld [vmem:[#allocation17 + $0x4] sm:$0xf]
        %v3439 = vld [vmem:[#allocation17 + $0x8] sm:$0xf]
        %v3440 = vld [vmem:[#allocation17 + $0xc] sm:$0xf]
        %v3441 = vld [vmem:[#allocation17 + $0x10] sm:$0xf]
        %v3442 = vld [vmem:[#allocation17 + $0x14] sm:$0xf]
        %v3443 = vld [vmem:[#allocation17 + $0x18] sm:$0xf]
        %v3444 = vld [vmem:[#allocation17 + $0x1c] sm:$0xf]
        %v3445 = vld [vmem:[#allocation17 + $0x20] sm:$0xf]
        %v3446 = vld [vmem:[#allocation17 + $0x24] sm:$0xf]
        %v3447 = vld [vmem:[#allocation17 + $0x28] sm:$0xf]
        %v3448 = vld [vmem:[#allocation17 + $0x2c] sm:$0xf]
        %v3449 = vld [vmem:[#allocation17 + $0x30] sm:$0xf]
        %v3450 = vld [vmem:[#allocation17 + $0x34] sm:$0xf]
        %v3451 = vld [vmem:[#allocation17 + $0x38] sm:$0xf]
        %v3452 = vld [vmem:[#allocation17 + $0x3c] sm:$0xf]
        %v3453 = vld [vmem:[#allocation2] sm:$0x1]
        %v3455 = vlaneseq
        %v3456 = vshrl.u32 %v3455, 7
        %v3457 = vsub.s32 0, %v3456
        %v3458 = vrot.slane %v3453, %v3457
        %v3476 = vunpack.c.l.b16 %v3437
        %v3477 = vunpack.c.l.b16 %v3438
        %v3478 = vunpack.c.l.b16 %v3439
        %v3479 = vunpack.c.l.b16 %v3440
        %v3480 = vunpack.c.l.b16 %v3441
        %v3481 = vunpack.c.l.b16 %v3442
        %v3482 = vunpack.c.l.b16 %v3443
        %v3483 = vunpack.c.l.b16 %v3444
        %v3484 = vunpack.c.l.b16 %v3445
        %v3485 = vunpack.c.l.b16 %v3446
        %v3486 = vunpack.c.l.b16 %v3447
        %v3487 = vunpack.c.l.b16 %v3448
        %v3488 = vunpack.c.l.b16 %v3449
        %v3489 = vunpack.c.l.b16 %v3450
        %v3490 = vunpack.c.l.b16 %v3451
        %v3491 = vunpack.c.l.b16 %v3452
        %v3492 = vpack.c.b16 %v3477, %v3476
        %v3493 = vpack.c.b16 %v3479, %v3478
        %v3494 = vpack.c.b16 %v3481, %v3480
        %v3495 = vpack.c.b16 %v3483, %v3482
        %v3496 = vpack.c.b16 %v3485, %v3484
        %v3497 = vpack.c.b16 %v3487, %v3486
        %v3498 = vpack.c.b16 %v3489, %v3488
        %v3499 = vpack.c.b16 %v3491, %v3490
        %3508 = vmatprep.subr.bf16.mxu0 0
        %3509 = vmatpush1.bf16.msra.mxu0 %v3492
        %3510 = vmatprep.subr.bf16.mxu0 0
        %3511 = vmatpush1.bf16.msra.mxu0 %v3493
        %3512 = vmatprep.subr.bf16.mxu0 0
        %3513 = vmatpush1.bf16.msra.mxu0 %v3494
        %3514 = vmatprep.subr.bf16.mxu0 0
        %3515 = vmatpush1.bf16.msra.mxu0 %v3495
        %3516 = vmatprep.subr.bf16.mxu0 0
        %3517 = vmatpush1.bf16.msra.mxu0 %v3496
        %3518 = vmatprep.subr.bf16.mxu0 0
        %3519 = vmatpush1.bf16.msra.mxu0 %v3497
        %3520 = vmatprep.subr.bf16.mxu0 0
        %3521 = vmatpush1.bf16.msra.mxu0 %v3498
        %3522 = vmatprep.subr.bf16.mxu0 0
        %3523 = vmatpush1.bf16.msra.mxu0 %v3499
        %3524 = vmatprep.subr.bf16.mxu0 0
        %3525 = vmatpush1.bf16.msra.mxu0 0
        %3526 = vmatprep.subr.bf16.mxu0 0
        %3527 = vmatpush1.bf16.msra.mxu0 0
        %3528 = vmatprep.subr.bf16.mxu0 0
        %3529 = vmatpush1.bf16.msra.mxu0 0
        %3530 = vmatprep.subr.bf16.mxu0 0
        %3531 = vmatpush1.bf16.msra.mxu0 0
        %3532 = vmatprep.subr.bf16.mxu0 0
        %3533 = vmatpush1.bf16.msra.mxu0 0
        %3534 = vmatprep.subr.bf16.mxu0 0
        %3535 = vmatpush1.bf16.msra.mxu0 0
        %3536 = vmatprep.subr.bf16.mxu0 0
        %3537 = vmatpush1.bf16.msra.mxu0 0
        %3538 = vmatprep.subr.bf16.mxu0 0
        %3539 = vmatpush1.bf16.msra.mxu0 0
        %3540 = vmatprep.mubr.bf16.mxu0 0
        %3541 = vmatmul.mubr.bf16.gmra.mrb[0].mxu0 %v3436
        %v3542 = vpop.f32.mrb[0].mxu0
        %v3543 = vadd.f32 %v3458, %v3542
        %v3544 = vpop.f32.mrb[0].mxu0
        %v3545 = vpop.f32.mrb[0].mxu0
        %v3546 = vpop.f32.mrb[0].mxu0
        %3547 = vdwg.mxu0
        %vm3548 = vcmask 7168
        %3549 = vst.msk [vmem:[%s511] sm:$0xff] %vm3548, %v3543
        %s3550 = sand.u32 %s263, 1
        %s3551 = scalar_lea.sflag [#allocation5], %s3550
        %s3552 = sand.u32 %s263, 1
        %s3553 = smul.addr %s3552, 8
        %s3554 = scalar_lea.vmem [#allocation18], %s3553
        // Predicated region
        $region97: #{tpu_custom_call.1} parent=59 // pred_check
          %p3555 = pneg %p273
        $region98: #{tpu_custom_call.1} parent=59 // pred_check_branch
          %3557 = sbr.rel (%p3555) target = $region100
        $region99: #{tpu_custom_call.1} parent=59 // pred_region
          %s3559 = ssub.s32 128, 128
          %3560 = vsyncadd %s3551, %s3559
          %s3561 = smul.addr %s35, 128
          %s3562 = scalar_lea.hbm %s10, %s3561
          %s3564 = sshll.u32 %s3554, 4
          %s3565 = int_to_ptr.vmem [resolvable:$true] %s3564
          %3567 = dma.vmem_to_hbm [thread:$0]  %s3565, 128, %s3562, %s3551
        $region100: #{tpu_custom_call.1} parent=59 // pred_fallthru
          _
      $region60: #{tpu_custom_call.1} parent=5 // pred_fallthru
        _
      %p3568 = scmp.le.s32.totalorder 2, %s30
      // Predicated region
      $region101: #{tpu_custom_call.1} parent=5 // pred_check
        %p3569 = pneg %p3568
      $region102: #{tpu_custom_call.1} parent=5 // pred_check_branch
        %3571 = sbr.rel (%p3569) target = $region104
      $region103: #{tpu_custom_call.1} parent=5 // pred_region
        %s3572 = ssub.s32 %s30, 2
        // Predicated region
        $region105: #{tpu_custom_call.1} parent=103 // pred_check
          %p3573 = pneg %p279
        $region106: #{tpu_custom_call.1} parent=103 // pred_check_branch
          %3575 = sbr.rel (%p3573) target = $region108
        $region107: #{tpu_custom_call.1} parent=103 // pred_region
          %s3576 = sand.u32 %s264, 1
          %s3577 = scalar_lea.sflag [#allocation5], %s3576
          %s3578 = sand.u32 %s264, 1
          %s3579 = smul.addr %s3578, 8
          %s3580 = scalar_lea.vmem [#allocation18], %s3579
          %3581 = dma.done %s3577, 128
        $region108: #{tpu_custom_call.1} parent=103 // pred_fallthru
          _
      $region104: #{tpu_custom_call.1} parent=5 // pred_fallthru
        _
    $region6: #{tpu_custom_call.1} parent=1 // loop_footer
      %s34 = sadd.s32 1, %s30
    $region7: #{tpu_custom_call.1} parent=1 // loop_footer_branch
      %29 = sbr.rel target = $region3
    $region8: #{tpu_custom_call.1} parent=1 // loop_exit
      _
    %3582 = vsyncpa [#allocation4], 1
    %s3583 = scalar_lea.sflag [#allocation4], 1
    %3584 = vsyncpa %s3583, 1
    %3585 = vsyncpa [#allocation7], 1
    %s3586 = scalar_lea.sflag [#allocation7], 1
    %3587 = vsyncpa %s3586, 1
    %3588 = vsyncpa [#allocation10], 1
    %3589 = vsyncpa [#allocation13], 1
    %3590 = vsyncpa [#allocation16], 1
    %3591 = vsyncpa [#allocation5], 1
    %s3592 = scalar_lea.sflag [#allocation5], 1
    %3593 = vsyncpa %s3592, 1

// kernel: tpu_custom_call.1
$region0: #{tpu_custom_call.1}
  #allocation0 [shape = 'u32[]', space=smem, size = 0x4, offset = 0x4, fixed_abs, tag = 'smem constant byte address 0x4 - core index']
  #allocation1 [shape = 'u32[144,128]{1,0:T(1,128)}', space=vmem, size = 0x12000, scoped, tag = 'internal scratch']
  #allocation2 [shape = 'f32[1,1]{1,0:T(1,128)S(1)}', space=vmem, size = 0x200, scoped, tag = 'scoped memory for tpu_custom_call.1']
  %s0 = inlined_call_operand.hbm [shape: bf16[32,8,32], index: 0, kind: input, shape index: {}]
  %s1 = inlined_call_operand.hbm [shape: f32[32,8], index: 1, kind: input, shape index: {}]
  %s2 = inlined_call_operand.hbm [shape: bf16[32,128], index: 2, kind: input, shape index: {}]
  %s3 = inlined_call_operand.hbm [shape: f32[1,128], index: 3, kind: input, shape index: {}]
  %s4 = inlined_call_operand.hbm [shape: bf16[128,128], index: 4, kind: input, shape index: {}]
  %s5 = inlined_call_operand.hbm [shape: f32[1,128], index: 5, kind: input, shape index: {}]
  %s6 = inlined_call_operand.hbm [shape: bf16[128,128], index: 6, kind: input, shape index: {}]
  %s7 = inlined_call_operand.hbm [shape: f32[1,128], index: 7, kind: input, shape index: {}]
  %s8 = inlined_call_operand.hbm [shape: bf16[128,1], index: 8, kind: input, shape index: {}]
  %s9 = inlined_call_operand.<no memory space> [shape: f32[1,1], index: 9, kind: input, shape index: {}]
  %s10 = inlined_call_operand.hbm [shape: f32[32,1], index: 10, kind: output, shape index: {}]
  %s11 = sld [smem:[#allocation0]]
  $region109: #{tpu_custom_call.1} parent=0
    _
  %s13 = ssub.s32 1, %s11
  %s14 = scalar_select 0, %s13, %s11
  %v15 = vstv %s9
  %16 = vst [vmem:[#allocation2] sm:$0x1] %v15
  $region1: #{tpu_custom_call.1} parent=0
    #allocation3 [shape = 'u8[32768]{0}', space=vmem, size = 0x8000, scoped, tag = 'input window, operand 0']
    #allocation4 [shape = 's32[2]{0}', space=sflag, size = 0x8, scoped, tag = 'scoped memory for tpu_custom_call.1']
    #allocation5 [shape = 's32[2]{0}', space=sflag, size = 0x8, scoped, tag = 'scoped memory for tpu_custom_call.1']
    #allocation6 [shape = 'u8[8192]{0}', space=vmem, size = 0x2000, scoped, tag = 'input window, operand 1']
    #allocation7 [shape = 's32[2]{0}', space=sflag, size = 0x8, scoped, tag = 'scoped memory for tpu_custom_call.1']
    #allocation8 [shape = 'u8[8192]{0}', space=vmem, size = 0x2000, scoped, tag = 'input window, operand 2, single buffered']
    #allocation9 [shape = 'u8[512]{0}', space=vmem, size = 0x400, scoped, tag = 'input window, operand 3, single buffered']
    #allocation10 [shape = 's32[1]{0}', space=sflag, size = 0x4, scoped, tag = 'scoped memory for tpu_custom_call.1']
    #allocation11 [shape = 'u8[32768]{0}', space=vmem, size = 0x8000, scoped, tag = 'input window, operand 4, single buffered']
    #allocation12 [shape = 'u8[512]{0}', space=vmem, size = 0x400, scoped, tag = 'input window, operand 5, single buffered']
    #allocation13 [shape = 's32[1]{0}', space=sflag, size = 0x4, scoped, tag = 'scoped memory for tpu_custom_call.1']
    #allocation14 [shape = 'u8[32768]{0}', space=vmem, size = 0x8000, scoped, tag = 'input window, operand 6, single buffered']
    #allocation15 [shape = 'u8[512]{0}', space=vmem, size = 0x400, scoped, tag = 'input window, operand 7, single buffered']
    #allocation16 [shape = 's32[1]{0}', space=sflag, size = 0x4, scoped, tag = 'scoped memory for tpu_custom_call.1']
    #allocation17 [shape = 'u8[32768]{0}', space=vmem, size = 0x8000, scoped, tag = 'input window, operand 8, single buffered']
    #allocation18 [shape = 'u8[8192]{0}', space=vmem, size = 0x2000, scoped, tag = 'output window, operand 0']
    %17 = vsyncpa [#allocation4], 0
    %s18 = scalar_lea.sflag [#allocation4], 1
    %19 = vsyncpa %s18, 0
    %20 = vsyncpa [#allocation7], 0
    %s21 = scalar_lea.sflag [#allocation7], 1
    %22 = vsyncpa %s21, 0
    %23 = vsyncpa [#allocation10], 0
    %24 = vsyncpa [#allocation13], 0
    %25 = vsyncpa [#allocation16], 0
    %26 = vsyncpa [#allocation5], 0
    %s27 = scalar_lea.sflag [#allocation5], 1
    %28 = vsyncpa %s27, 0
    loop: start=0, step=1, limit=6
    $region2: #{tpu_custom_call.1} parent=1 // loop_pre_header
      _
    $region3: #{tpu_custom_call.1} parent=1 // loop_header
      %s30 = sphi 0, %s34
      %p31 = scmp.ge.s32.totalorder %s30, 6
      %s40 = sphi 0, %s42
      %s43 = sphi 0, %s40
      %s44 = sphi 0, %s43
      %s60 = sphi 0, %s44
      %s66 = sphi 0, %s68
      %s69 = sphi 0, %s66
      %s70 = sphi 0, %s69
      %s86 = sphi 0, %s70
      %s90 = sphi 0, %s90
      %s92 = sphi 0, %s90
      %s93 = sphi 0, %s92
      %s107 = sphi 0, %s93
      %s111 = sphi 0, %s111
      %s113 = sphi 0, %s111
      %s114 = sphi 0, %s113
      %s128 = sphi 0, %s114
      %s132 = sphi 0, %s132
      %s134 = sphi 0, %s132
      %s135 = sphi 0, %s134
      %s149 = sphi 0, %s135
      %s153 = sphi 0, %s153
      %s155 = sphi 0, %s153
      %s156 = sphi 0, %s155
      %s170 = sphi 0, %s156
      %s174 = sphi 0, %s174
      %s176 = sphi 0, %s174
      %s177 = sphi 0, %s176
      %s191 = sphi 0, %s177
      %s195 = sphi 0, %s195
      %s197 = sphi 0, %s195
      %s198 = sphi 0, %s197
      %s212 = sphi 0, %s198
      %s216 = sphi 0, %s216
      %s218 = sphi 0, %s216
      %s219 = sphi 0, %s218
      %s233 = sphi 0, %s219
      %s237 = sphi 0, %s237
      %s239 = sphi 0, %s237
      %s240 = sphi 0, %s239
      %s254 = sphi 0, %s240
      %s260 = sphi 0, %s262
      %s263 = sphi 0, %s260
      %s264 = sphi 0, %s263
      %s280 = sphi 0, %s264
    $region4: #{tpu_custom_call.1} parent=1 // loop_header_branch
      %33 = sbr.rel (%p31) target = $region8
    $region5: #{tpu_custom_call.1} parent=1 // loop_body
      %s35 = ssub.s32 %s30, 1
      %s36 = ssub.s32 %s30, 2
      %s37 = sadd.s32 %s30, 1
      %s38 = ssub.s32 %s30, %s37
      %p39 = scmp.eq.s32.totalorder %s38, 0
      %s41 = sadd.s32 %s40, 1
      %s42 = scalar_select %p39, %s40, %s41
      %p45 = pneg %p39
      %p46 = scmp.eq.s32.totalorder %s30, 3
      %p47 = por %p45, %p46
      %p48 = scmp.ne.s32.totalorder %s40, %s43
      %p49 = scmp.eq.s32.totalorder %s30, 0
      %p50 = por %p48, %p49
      %p51 = scmp.ne.s32.totalorder %s40, %s43
      %p52 = scmp.eq.s32.totalorder %s35, 3
      %p53 = por %p51, %p52
      %p54 = scmp.ne.s32.totalorder %s43, %s44
      %p55 = scmp.eq.s32.totalorder %s35, 0
      %p56 = por %p54, %p55
      %p57 = scmp.ne.s32.totalorder %s43, %s44
      %p58 = scmp.eq.s32.totalorder %s36, 3
      %p59 = por %p57, %p58
      %p61 = scmp.ne.s32.totalorder %s44, %s60
      %p62 = scmp.eq.s32.totalorder %s36, 0
      %p63 = por %p61, %p62
      %s64 = ssub.s32 %s30, %s37
      %p65 = scmp.eq.s32.totalorder %s64, 0
      %s67 = sadd.s32 %s66, 1
      %s68 = scalar_select %p65, %s66, %s67
      %p71 = pneg %p65
      %p72 = scmp.eq.s32.totalorder %s30, 3
      %p73 = por %p71, %p72
      %p74 = scmp.ne.s32.totalorder %s66, %s69
      %p75 = scmp.eq.s32.totalorder %s30, 0
      %p76 = por %p74, %p75
      %p77 = scmp.ne.s32.totalorder %s66, %s69
      %p78 = scmp.eq.s32.totalorder %s35, 3
      %p79 = por %p77, %p78
      %p80 = scmp.ne.s32.totalorder %s69, %s70
      %p81 = scmp.eq.s32.totalorder %s35, 0
      %p82 = por %p80, %p81
      %p83 = scmp.ne.s32.totalorder %s69, %s70
      %p84 = scmp.eq.s32.totalorder %s36, 3
      %p85 = por %p83, %p84
      %p87 = scmp.ne.s32.totalorder %s70, %s86
      %p88 = scmp.eq.s32.totalorder %s36, 0
      %p89 = por %p87, %p88
      %s91 = sadd.s32 %s90, 1
      %p94 = scmp.eq.s32.totalorder %s30, 3
      %p95 = scmp.ne.s32.totalorder %s90, %s92
      %p96 = scmp.eq.s32.totalorder %s30, 0
      %p97 = por %p95, %p96
      %p98 = scmp.ne.s32.totalorder %s90, %s92
      %p99 = scmp.eq.s32.totalorder %s35, 3
      %p100 = por %p98, %p99
      %p101 = scmp.ne.s32.totalorder %s92, %s93
      %p102 = scmp.eq.s32.totalorder %s35, 0
      %p103 = por %p101, %p102
      %p104 = scmp.ne.s32.totalorder %s92, %s93
      %p105 = scmp.eq.s32.totalorder %s36, 3
      %p106 = por %p104, %p105
      %p108 = scmp.ne.s32.totalorder %s93, %s107
      %p109 = scmp.eq.s32.totalorder %s36, 0
      %p110 = por %p108, %p109
      %s112 = sadd.s32 %s111, 1
      %p115 = scmp.eq.s32.totalorder %s30, 3
      %p116 = scmp.ne.s32.totalorder %s111, %s113
      %p117 = scmp.eq.s32.totalorder %s30, 0
      %p118 = por %p116, %p117
      %p119 = scmp.ne.s32.totalorder %s111, %s113
      %p120 = scmp.eq.s32.totalorder %s35, 3
      %p121 = por %p119, %p120
      %p122 = scmp.ne.s32.totalorder %s113, %s114
      %p123 = scmp.eq.s32.totalorder %s35, 0
      %p124 = por %p122, %p123
      %p125 = scmp.ne.s32.totalorder %s113, %s114
      %p126 = scmp.eq.s32.totalorder %s36, 3
      %p127 = por %p125, %p126
      %p129 = scmp.ne.s32.totalorder %s114, %s128
      %p130 = scmp.eq.s32.totalorder %s36, 0
      %p131 = por %p129, %p130
      %s133 = sadd.s32 %s132, 1
      %p136 = scmp.eq.s32.totalorder %s30, 3
      %p137 = scmp.ne.s32.totalorder %s132, %s134
      %p138 = scmp.eq.s32.totalorder %s30, 0
      %p139 = por %p137, %p138
      %p140 = scmp.ne.s32.totalorder %s132, %s134
      %p141 = scmp.eq.s32.totalorder %s35, 3
      %p142 = por %p140, %p141
      %p143 = scmp.ne.s32.totalorder %s134, %s135
      %p144 = scmp.eq.s32.totalorder %s35, 0
      %p145 = por %p143, %p144
      %p146 = scmp.ne.s32.totalorder %s134, %s135
      %p147 = scmp.eq.s32.totalorder %s36, 3
      %p148 = por %p146, %p147
      %p150 = scmp.ne.s32.totalorder %s135, %s149
      %p151 = scmp.eq.s32.totalorder %s36, 0
      %p152 = por %p150, %p151
      %s154 = sadd.s32 %s153, 1
      %p157 = scmp.eq.s32.totalorder %s30, 3
      %p158 = scmp.ne.s32.totalorder %s153, %s155
      %p159 = scmp.eq.s32.totalorder %s30, 0
      %p160 = por %p158, %p159
      %p161 = scmp.ne.s32.totalorder %s153, %s155
      %p162 = scmp.eq.s32.totalorder %s35, 3
      %p163 = por %p161, %p162
      %p164 = scmp.ne.s32.totalorder %s155, %s156
      %p165 = scmp.eq.s32.totalorder %s35, 0
      %p166 = por %p164, %p165
      %p167 = scmp.ne.s32.totalorder %s155, %s156
      %p168 = scmp.eq.s32.totalorder %s36, 3
      %p169 = por %p167, %p168
      %p171 = scmp.ne.s32.totalorder %s156, %s170
      %p172 = scmp.eq.s32.totalorder %s36, 0
      %p173 = por %p171, %p172
      %s175 = sadd.s32 %s174, 1
      %p178 = scmp.eq.s32.totalorder %s30, 3
      %p179 = scmp.ne.s32.totalorder %s174, %s176
      %p180 = scmp.eq.s32.totalorder %s30, 0
      %p181 = por %p179, %p180
      %p182 = scmp.ne.s32.totalorder %s174, %s176
      %p183 = scmp.eq.s32.totalorder %s35, 3
      %p184 = por %p182, %p183
      %p185 = scmp.ne.s32.totalorder %s176, %s177
      %p186 = scmp.eq.s32.totalorder %s35, 0
      %p187 = por %p185, %p186
      %p188 = scmp.ne.s32.totalorder %s176, %s177
      %p189 = scmp.eq.s32.totalorder %s36, 3
      %p190 = por %p188, %p189
      %p192 = scmp.ne.s32.totalorder %s177, %s191
      %p193 = scmp.eq.s32.totalorder %s36, 0
      %p194 = por %p192, %p193
      %s196 = sadd.s32 %s195, 1
      %p199 = scmp.eq.s32.totalorder %s30, 3
      %p200 = scmp.ne.s32.totalorder %s195, %s197
      %p201 = scmp.eq.s32.totalorder %s30, 0
      %p202 = por %p200, %p201
      %p203 = scmp.ne.s32.totalorder %s195, %s197
      %p204 = scmp.eq.s32.totalorder %s35, 3
      %p205 = por %p203, %p204
      %p206 = scmp.ne.s32.totalorder %s197, %s198
      %p207 = scmp.eq.s32.totalorder %s35, 0
      %p208 = por %p206, %p207
      %p209 = scmp.ne.s32.totalorder %s197, %s198
      %p210 = scmp.eq.s32.totalorder %s36, 3
      %p211 = por %p209, %p210
      %p213 = scmp.ne.s32.totalorder %s198, %s212
      %p214 = scmp.eq.s32.totalorder %s36, 0
      %p215 = por %p213, %p214
      %s217 = sadd.s32 %s216, 1
      %p220 = scmp.eq.s32.totalorder %s30, 3
      %p221 = scmp.ne.s32.totalorder %s216, %s218
      %p222 = scmp.eq.s32.totalorder %s30, 0
      %p223 = por %p221, %p222
      %p224 = scmp.ne.s32.totalorder %s216, %s218
      %p225 = scmp.eq.s32.totalorder %s35, 3
      %p226 = por %p224, %p225
      %p227 = scmp.ne.s32.totalorder %s218, %s219
      %p228 = scmp.eq.s32.totalorder %s35, 0
      %p229 = por %p227, %p228
      %p230 = scmp.ne.s32.totalorder %s218, %s219
      %p231 = scmp.eq.s32.totalorder %s36, 3
      %p232 = por %p230, %p231
      %p234 = scmp.ne.s32.totalorder %s219, %s233
      %p235 = scmp.eq.s32.totalorder %s36, 0
      %p236 = por %p234, %p235
      %s238 = sadd.s32 %s237, 1
      %p241 = scmp.eq.s32.totalorder %s30, 3
      %p242 = scmp.ne.s32.totalorder %s237, %s239
      %p243 = scmp.eq.s32.totalorder %s30, 0
      %p244 = por %p242, %p243
      %p245 = scmp.ne.s32.totalorder %s237, %s239
      %p246 = scmp.eq.s32.totalorder %s35, 3
      %p247 = por %p245, %p246
      %p248 = scmp.ne.s32.totalorder %s239, %s240
      %p249 = scmp.eq.s32.totalorder %s35, 0
      %p250 = por %p248, %p249
      %p251 = scmp.ne.s32.totalorder %s239, %s240
      %p252 = scmp.eq.s32.totalorder %s36, 3
      %p253 = por %p251, %p252
      %p255 = scmp.ne.s32.totalorder %s240, %s254
      %p256 = scmp.eq.s32.totalorder %s36, 0
      %p257 = por %p255, %p256
      %s258 = ssub.s32 %s30, %s37
      %p259 = scmp.eq.s32.totalorder %s258, 0
      %s261 = sadd.s32 %s260, 1
      %s262 = scalar_select %p259, %s260, %s261
      %p265 = pneg %p259
      %p266 = scmp.eq.s32.totalorder %s30, 3
      %p267 = por %p265, %p266
      %p268 = scmp.ne.s32.totalorder %s260, %s263
      %p269 = scmp.eq.s32.totalorder %s30, 0
      %p270 = por %p268, %p269
      %p271 = scmp.ne.s32.totalorder %s260, %s263
      %p272 = scmp.eq.s32.totalorder %s35, 3
      %p273 = por %p271, %p272
      %p274 = scmp.ne.s32.totalorder %s263, %s264
      %p275 = scmp.eq.s32.totalorder %s35, 0
      %p276 = por %p274, %p275
      %p277 = scmp.ne.s32.totalorder %s263, %s264
      %p278 = scmp.eq.s32.totalorder %s36, 3
      %p279 = por %p277, %p278
      %p281 = scmp.ne.s32.totalorder %s264, %s280
      %p282 = scmp.eq.s32.totalorder %s36, 0
      %p283 = por %p281, %p282
      %p284 = scmp.le.s32.totalorder 1, %s30
      %p285 = scmp.lt.s32.totalorder %s30, 5
      %p286 = pnand %p284, %p285
      %p287 = pneg %p286
      // Predicated region
      $region9: #{tpu_custom_call.1} parent=5 // pred_check
        _
      $region10: #{tpu_custom_call.1} parent=5 // pred_check_branch
        %289 = sbr.rel (%p286) target = $region12
      $region11: #{tpu_custom_call.1} parent=5 // pred_region
        %s290 = ssub.s32 %s30, 1
        // Predicated region
        $region13: #{tpu_custom_call.1} parent=11 // pred_check
          %p291 = pneg %p103
        $region14: #{tpu_custom_call.1} parent=11 // pred_check_branch
          %293 = sbr.rel (%p291) target = $region16
        $region15: #{tpu_custom_call.1} parent=11 // pred_region
          %s295 = ssub.s32 256, 256
          %296 = vsyncadd [#allocation7], %s295
          %s297 = sshll.u32 [#allocation8], 4
          %s298 = int_to_ptr.vmem [resolvable:$true] %s297
          %303 = dma.hbm_to_vmem [thread:$0]  %s2, 256, %s298, [#allocation7], 64, 64, 4
        $region16: #{tpu_custom_call.1} parent=11 // pred_fallthru
          _
        // Predicated region
        $region17: #{tpu_custom_call.1} parent=11 // pred_check
          %p304 = pneg %p124
        $region18: #{tpu_custom_call.1} parent=11 // pred_check_branch
          %306 = sbr.rel (%p304) target = $region20
        $region19: #{tpu_custom_call.1} parent=11 // pred_region
          %s308 = ssub.s32 16, 16
          %309 = vsyncadd [#allocation10], %s308
          %s311 = sshll.u32 [#allocation9], 4
          %s312 = int_to_ptr.vmem [resolvable:$true] %s311
          %314 = dma.hbm_to_vmem [thread:$0]  %s3, 16, %s312, [#allocation10]
        $region20: #{tpu_custom_call.1} parent=11 // pred_fallthru
          _
        // Predicated region
        $region21: #{tpu_custom_call.1} parent=11 // pred_check
          %p315 = pneg %p145
        $region22: #{tpu_custom_call.1} parent=11 // pred_check_branch
          %317 = sbr.rel (%p315) target = $region24
        $region23: #{tpu_custom_call.1} parent=11 // pred_region
          %s319 = ssub.s32 1024, 1024
          %320 = vsyncadd [#allocation10], %s319
          %s321 = sshll.u32 [#allocation11], 4
          %s322 = int_to_ptr.vmem [resolvable:$true] %s321
          %327 = dma.hbm_to_vmem [thread:$0]  %s4, 1024, %s322, [#allocation10], 64, 64, 4
        $region24: #{tpu_custom_call.1} parent=11 // pred_fallthru
          _
        // Predicated region
        $region25: #{tpu_custom_call.1} parent=11 // pred_check
          %p328 = pneg %p166
        $region26: #{tpu_custom_call.1} parent=11 // pred_check_branch
          %330 = sbr.rel (%p328) target = $region28
        $region27: #{tpu_custom_call.1} parent=11 // pred_region
          %s332 = ssub.s32 16, 16
          %333 = vsyncadd [#allocation13], %s332
          %s335 = sshll.u32 [#allocation12], 4
          %s336 = int_to_ptr.vmem [resolvable:$true] %s335
          %338 = dma.hbm_to_vmem [thread:$0]  %s5, 16, %s336, [#allocation13]
        $region28: #{tpu_custom_call.1} parent=11 // pred_fallthru
          _
        // Predicated region
        $region29: #{tpu_custom_call.1} parent=11 // pred_check
          %p339 = pneg %p187
        $region30: #{tpu_custom_call.1} parent=11 // pred_check_branch
          %341 = sbr.rel (%p339) target = $region32
        $region31: #{tpu_custom_call.1} parent=11 // pred_region
          %s343 = ssub.s32 1024, 1024
          %344 = vsyncadd [#allocation13], %s343
          %s345 = sshll.u32 [#allocation14], 4
          %s346 = int_to_ptr.vmem [resolvable:$true] %s345
          %351 = dma.hbm_to_vmem [thread:$0]  %s6, 1024, %s346, [#allocation13], 64, 64, 4
        $region32: #{tpu_custom_call.1} parent=11 // pred_fallthru
          _
        // Predicated region
        $region33: #{tpu_custom_call.1} parent=11 // pred_check
          %p352 = pneg %p208
        $region34: #{tpu_custom_call.1} parent=11 // pred_check_branch
          %354 = sbr.rel (%p352) target = $region36
        $region35: #{tpu_custom_call.1} parent=11 // pred_region
          %s356 = ssub.s32 16, 16
          %357 = vsyncadd [#allocation16], %s356
          %s359 = sshll.u32 [#allocation15], 4
          %s360 = int_to_ptr.vmem [resolvable:$true] %s359
          %362 = dma.hbm_to_vmem [thread:$0]  %s7, 16, %s360, [#allocation16]
        $region36: #{tpu_custom_call.1} parent=11 // pred_fallthru
          _
        // Predicated region
        $region37: #{tpu_custom_call.1} parent=11 // pred_check
          %p363 = pneg %p229
        $region38: #{tpu_custom_call.1} parent=11 // pred_check_branch
          %365 = sbr.rel (%p363) target = $region40
        $region39: #{tpu_custom_call.1} parent=11 // pred_region
          %s367 = ssub.s32 1024, 1024
          %368 = vsyncadd [#allocation16], %s367
          %s369 = sshll.u32 [#allocation17], 4
          %s370 = int_to_ptr.vmem [resolvable:$true] %s369
          %375 = dma.hbm_to_vmem [thread:$0]  %s8, 1024, %s370, [#allocation16], 64, 64, 4
        $region40: #{tpu_custom_call.1} parent=11 // pred_fallthru
          _
        // Predicated region
        $region41: #{tpu_custom_call.1} parent=11 // pred_check
          %p376 = pneg %p250
        $region42: #{tpu_custom_call.1} parent=11 // pred_check_branch
          %378 = sbr.rel (%p376) target = $region44
        $region43: #{tpu_custom_call.1} parent=11 // pred_region
          _
        $region44: #{tpu_custom_call.1} parent=11 // pred_fallthru
          _
      $region12: #{tpu_custom_call.1} parent=5 // pred_fallthru
        _
      %p379 = scmp.lt.s32.totalorder %s30, 4
      // Predicated region
      $region45: #{tpu_custom_call.1} parent=5 // pred_check
        %p380 = pneg %p379
      $region46: #{tpu_custom_call.1} parent=5 // pred_check_branch
        %382 = sbr.rel (%p380) target = $region48
      $region47: #{tpu_custom_call.1} parent=5 // pred_region
        // Predicated region
        $region49: #{tpu_custom_call.1} parent=47 // pred_check
          %p383 = pneg %p50
        $region50: #{tpu_custom_call.1} parent=47 // pred_check_branch
          %385 = sbr.rel (%p383) target = $region52
        $region51: #{tpu_custom_call.1} parent=47 // pred_region
          %s386 = sand.u32 %s40, 1
          %s387 = scalar_lea.sflag [#allocation4], %s386
          %s388 = sand.u32 %s40, 1
          %s389 = smul.addr %s388, 32
          %s390 = scalar_lea.vmem [#allocation3], %s389
          %s391 = smul.u32 8, %s30
          %s393 = ssub.s32 512, 512
          %394 = vsyncadd %s387, %s393
          %s395 = smul.addr %s391, 64
          %s396 = scalar_lea.hbm %s0, %s395
          %s397 = sshll.u32 %s390, 4
          %s398 = int_to_ptr.vmem [resolvable:$true] %s397
          %403 = dma.hbm_to_vmem [thread:$0]  %s396, 512, %s398, %s387, 64, 64, 4
        $region52: #{tpu_custom_call.1} parent=47 // pred_fallthru
          _
        // Predicated region
        $region53: #{tpu_custom_call.1} parent=47 // pred_check
          %p404 = pneg %p76
        $region54: #{tpu_custom_call.1} parent=47 // pred_check_branch
          %406 = sbr.rel (%p404) target = $region56
        $region55: #{tpu_custom_call.1} parent=47 // pred_region
          %s407 = sand.u32 %s30, 1
          %s408 = scalar_lea.sflag [#allocation7], %s407
          %s409 = sand.u32 %s66, 1
          %s410 = smul.addr %s409, 8
          %s411 = scalar_lea.vmem [#allocation6], %s410
          %s413 = ssub.s32 128, 128
          %414 = vsyncadd %s408, %s413
          %s415 = smul.addr %s30, 128
          %s416 = scalar_lea.hbm %s1, %s415
          %s418 = sshll.u32 %s411, 4
          %s419 = int_to_ptr.vmem [resolvable:$true] %s418
          %421 = dma.hbm_to_vmem [thread:$0]  %s416, 128, %s419, %s408
        $region56: #{tpu_custom_call.1} parent=47 // pred_fallthru
          _
      $region48: #{tpu_custom_call.1} parent=5 // pred_fallthru
        _
      %p422 = scmp.le.s32.totalorder 1, %s30
      %p423 = scmp.lt.s32.totalorder %s30, 5
      %p424 = pnand %p422, %p423
      %p425 = pneg %p424
      // Predicated region
      $region57: #{tpu_custom_call.1} parent=5 // pred_check
        _
      $region58: #{tpu_custom_call.1} parent=5 // pred_check_branch
        %427 = sbr.rel (%p424) target = $region60
      $region59: #{tpu_custom_call.1} parent=5 // pred_region
        %s428 = ssub.s32 %s30, 1
        %s429 = sand.u32 %s43, 1
        %s430 = scalar_lea.sflag [#allocation4], %s429
        %s431 = sand.u32 %s43, 1
        %s432 = smul.addr %s431, 32
        %s433 = scalar_lea.vmem [#allocation3], %s432
        // Predicated region
        $region61: #{tpu_custom_call.1} parent=59 // pred_check
          %p434 = pneg %p56
        $region62: #{tpu_custom_call.1} parent=59 // pred_check_branch
          %436 = sbr.rel (%p434) target = $region64
        $region63: #{tpu_custom_call.1} parent=59 // pred_region
          %437 = dma.done %s430, 512
        $region64: #{tpu_custom_call.1} parent=59 // pred_fallthru
          _
        %s438 = sand.u32 %s35, 1
        %s439 = scalar_lea.sflag [#allocation7], %s438
        %s440 = sand.u32 %s69, 1
        %s441 = smul.addr %s440, 8
        %s442 = scalar_lea.vmem [#allocation6], %s441
        // Predicated region
        $region65: #{tpu_custom_call.1} parent=59 // pred_check
          %p443 = pneg %p82
        $region66: #{tpu_custom_call.1} parent=59 // pred_check_branch
          %445 = sbr.rel (%p443) target = $region68
        $region67: #{tpu_custom_call.1} parent=59 // pred_region
          %446 = dma.done %s439, 128
        $region68: #{tpu_custom_call.1} parent=59 // pred_fallthru
          _
        // Predicated region
        $region69: #{tpu_custom_call.1} parent=59 // pred_check
          %p447 = pneg %p103
        $region70: #{tpu_custom_call.1} parent=59 // pred_check_branch
          %449 = sbr.rel (%p447) target = $region72
        $region71: #{tpu_custom_call.1} parent=59 // pred_region
          %450 = dma.done [#allocation7], 256
        $region72: #{tpu_custom_call.1} parent=59 // pred_fallthru
          _
        // Predicated region
        $region73: #{tpu_custom_call.1} parent=59 // pred_check
          %p451 = pneg %p124
        $region74: #{tpu_custom_call.1} parent=59 // pred_check_branch
          %453 = sbr.rel (%p451) target = $region76
        $region75: #{tpu_custom_call.1} parent=59 // pred_region
          %454 = dma.done [#allocation10], 16
        $region76: #{tpu_custom_call.1} parent=59 // pred_fallthru
          _
        // Predicated region
        $region77: #{tpu_custom_call.1} parent=59 // pred_check
          %p455 = pneg %p145
        $region78: #{tpu_custom_call.1} parent=59 // pred_check_branch
          %457 = sbr.rel (%p455) target = $region80
        $region79: #{tpu_custom_call.1} parent=59 // pred_region
          %458 = dma.done [#allocation10], 1024
        $region80: #{tpu_custom_call.1} parent=59 // pred_fallthru
          _
        // Predicated region
        $region81: #{tpu_custom_call.1} parent=59 // pred_check
          %p459 = pneg %p166
        $region82: #{tpu_custom_call.1} parent=59 // pred_check_branch
          %461 = sbr.rel (%p459) target = $region84
        $region83: #{tpu_custom_call.1} parent=59 // pred_region
          %462 = dma.done [#allocation13], 16
        $region84: #{tpu_custom_call.1} parent=59 // pred_fallthru
          _
        // Predicated region
        $region85: #{tpu_custom_call.1} parent=59 // pred_check
          %p463 = pneg %p187
        $region86: #{tpu_custom_call.1} parent=59 // pred_check_branch
          %465 = sbr.rel (%p463) target = $region88
        $region87: #{tpu_custom_call.1} parent=59 // pred_region
          %466 = dma.done [#allocation13], 1024
        $region88: #{tpu_custom_call.1} parent=59 // pred_fallthru
          _
        // Predicated region
        $region89: #{tpu_custom_call.1} parent=59 // pred_check
          %p467 = pneg %p208
        $region90: #{tpu_custom_call.1} parent=59 // pred_check_branch
          %469 = sbr.rel (%p467) target = $region92
        $region91: #{tpu_custom_call.1} parent=59 // pred_region
          %470 = dma.done [#allocation16], 16
        $region92: #{tpu_custom_call.1} parent=59 // pred_fallthru
          _
        // Predicated region
        $region93: #{tpu_custom_call.1} parent=59 // pred_check
          %p471 = pneg %p229
        $region94: #{tpu_custom_call.1} parent=59 // pred_check_branch
          %473 = sbr.rel (%p471) target = $region96
        $region95: #{tpu_custom_call.1} parent=59 // pred_region
          %474 = dma.done [#allocation16], 1024
        $region96: #{tpu_custom_call.1} parent=59 // pred_fallthru
          _
        %s475 = sand.u32 %s43, 1
        %s476 = scalar_lea.sflag [#allocation4], %s475
        %s477 = sand.u32 %s43, 1
        %s478 = smul.addr %s477, 32
        %s479 = scalar_lea.vmem [#allocation3], %s478
        %p480 = pneg %p56
        %p481 = pneg %p53
        %s482 = sand.u32 %s35, 1
        %s483 = scalar_lea.sflag [#allocation7], %s482
        %s484 = sand.u32 %s69, 1
        %s485 = smul.addr %s484, 8
        %s486 = scalar_lea.vmem [#allocation6], %s485
        %p487 = pneg %p82
        %p488 = pneg %p79
        %p489 = pneg %p103
        %p490 = pneg %p100
        %p491 = pneg %p124
        %p492 = pneg %p121
        %p493 = pneg %p145
        %p494 = pneg %p142
        %p495 = pneg %p166
        %p496 = pneg %p163
        %p497 = pneg %p187
        %p498 = pneg %p184
        %p499 = pneg %p208
        %p500 = pneg %p205
        %p501 = pneg %p229
        %p502 = pneg %p226
        %p503 = pneg %p250
        %p504 = pneg %p247
        %p505 = pneg %p276
        %p506 = pneg %p273
        %s507 = sand.u32 %s263, 1
        %s508 = scalar_lea.sflag [#allocation5], %s507
        %s509 = sand.u32 %s263, 1
        %s510 = smul.addr %s509, 8
        %s511 = scalar_lea.vmem [#allocation18], %s510
        %s512 = smul.u32 8, %s35
        %v514 = vld [vmem:[%s433] sm:$0xf]
        %v515 = vld [vmem:[%s433 + $0x4] sm:$0xf]
        %v516 = vld [vmem:[%s433 + $0x8] sm:$0xf]
        %v517 = vld [vmem:[%s433 + $0xc] sm:$0xf]
        %v518 = vld [vmem:[%s433 + $0x10] sm:$0xf]
        %v519 = vld [vmem:[%s433 + $0x14] sm:$0xf]
        %v520 = vld [vmem:[%s433 + $0x18] sm:$0xf]
        %v521 = vld [vmem:[%s433 + $0x1c] sm:$0xf]
        %v522 = vld [vmem:[%s442] sm:$0xff]
        %v523 = vld [vmem:[#allocation8] sm:$0xf]
        %v524 = vld [vmem:[#allocation8 + $0x4] sm:$0xf]
        %v525 = vld [vmem:[#allocation8 + $0x8] sm:$0xf]
        %v526 = vld [vmem:[#allocation8 + $0xc] sm:$0xf]
        %v527 = vld [vmem:[#allocation9] sm:$0x1]
        %v529 = vlaneseq
        %v530 = vshrl.u32 %v529, 7
        %v531 = vsub.s32 0, %v530
        %v532 = vrot.slane %v527, %v531
        %v542 = vunpack.c.l.b16 %v514
        %v543 = vunpack.c.l.b16 %v515
        %v544 = vunpack.c.l.b16 %v516
        %v545 = vunpack.c.l.b16 %v517
        %v546 = vunpack.c.l.b16 %v518
        %v547 = vunpack.c.l.b16 %v519
        %v548 = vunpack.c.l.b16 %v520
        %v549 = vunpack.c.l.b16 %v521
        %v550 = vpack.c.b16 %v543, %v542
        %v551 = vpack.c.b16 %v545, %v544
        %v552 = vpack.c.b16 %v547, %v546
        %v553 = vpack.c.b16 %v549, %v548
        %v558 = vunpack.c.l.b16 %v523
        %v559 = vunpack.c.l.b16 %v524
        %v560 = vunpack.c.l.b16 %v525
        %v561 = vunpack.c.l.b16 %v526
        %v562 = vpack.c.b16 %v559, %v558
        %v563 = vpack.c.b16 %v561, %v560
        %vm566 = vcmask 261120
        %v568 = vsel %vm566, %v550, 0
        %v571 = vsel %vm566, %v551, 0
        %v574 = vsel %vm566, %v552, 0
        %v577 = vsel %vm566, %v553, 0
        %579 = vmatprep.subr.bf16.mxu0 0
        %580 = vmatpush1.bf16.msra.mxu0 %v562
        %581 = vmatprep.subr.bf16.mxu0 0
        %582 = vmatpush1.bf16.msra.mxu0 %v563
        %583 = vmatprep.subr.bf16.mxu0 0
        %584 = vmatpush1.bf16.msra.mxu0 0
        %585 = vmatprep.subr.bf16.mxu0 0
        %586 = vmatpush1.bf16.msra.mxu0 0
        %587 = vmatprep.subr.bf16.mxu0 0
        %588 = vmatpush1.bf16.msra.mxu0 0
        %589 = vmatprep.subr.bf16.mxu0 0
        %590 = vmatpush1.bf16.msra.mxu0 0
        %591 = vmatprep.subr.bf16.mxu0 0
        %592 = vmatpush1.bf16.msra.mxu0 0
        %593 = vmatprep.subr.bf16.mxu0 0
        %594 = vmatpush1.bf16.msra.mxu0 0
        %595 = vmatprep.subr.bf16.mxu0 0
        %596 = vmatpush1.bf16.msra.mxu0 0
        %597 = vmatprep.subr.bf16.mxu0 0
        %598 = vmatpush1.bf16.msra.mxu0 0
        %599 = vmatprep.subr.bf16.mxu0 0
        %600 = vmatpush1.bf16.msra.mxu0 0
        %601 = vmatprep.subr.bf16.mxu0 0
        %602 = vmatpush1.bf16.msra.mxu0 0
        %603 = vmatprep.subr.bf16.mxu0 0
        %604 = vmatpush1.bf16.msra.mxu0 0
        %605 = vmatprep.subr.bf16.mxu0 0
        %606 = vmatpush1.bf16.msra.mxu0 0
        %607 = vmatprep.subr.bf16.mxu0 0
        %608 = vmatpush1.bf16.msra.mxu0 0
        %609 = vmatprep.subr.bf16.mxu0 0
        %610 = vmatpush1.bf16.msra.mxu0 0
        %611 = vmatprep.mubr.bf16.mxu0 0
        %612 = vmatmul.mubr.bf16.gmra.mrb[0].mxu0 %v568
        %v613 = vpop.f32.mrb[0].mxu0
        %v614 = vadd.f32 %v532, %v613
        %v615 = vpop.f32.mrb[0].mxu0
        %v616 = vpop.f32.mrb[0].mxu0
        %v617 = vadd.f32 %v532, %v616
        %v618 = vpop.f32.mrb[0].mxu0
        %619 = vmatprep.mubr.bf16.mxu0 0
        %620 = vmatmul.mubr.bf16.gmra.mrb[0].mxu0 %v571
        %v621 = vpop.f32.mrb[0].mxu0
        %v622 = vadd.f32 %v532, %v621
        %v623 = vpop.f32.mrb[0].mxu0
        %v624 = vpop.f32.mrb[0].mxu0
        %v625 = vadd.f32 %v532, %v624
        %v626 = vpop.f32.mrb[0].mxu0
        %627 = vmatprep.mubr.bf16.mxu0 0
        %628 = vmatmul.mubr.bf16.gmra.mrb[0].mxu0 %v574
        %v629 = vpop.f32.mrb[0].mxu0
        %v630 = vadd.f32 %v532, %v629
        %v631 = vpop.f32.mrb[0].mxu0
        %v632 = vpop.f32.mrb[0].mxu0
        %v633 = vadd.f32 %v532, %v632
        %v634 = vpop.f32.mrb[0].mxu0
        %635 = vmatprep.mubr.bf16.mxu0 0
        %636 = vmatmul.mubr.bf16.gmra.mrb[0].mxu0 %v577
        %v637 = vpop.f32.mrb[0].mxu0
        %v638 = vadd.f32 %v532, %v637
        %v639 = vpop.f32.mrb[0].mxu0
        %v640 = vpop.f32.mrb[0].mxu0
        %v641 = vadd.f32 %v532, %v640
        %v642 = vpop.f32.mrb[0].mxu0
        %643 = vdwg.mxu0
        %v644 = vunpack.c.l.bf16 %v514
        %v645 = vunpack.c.l.bf16 %v515
        %v646 = vunpack.c.l.bf16 %v516
        %v647 = vunpack.c.l.bf16 %v517
        %v648 = vunpack.c.l.bf16 %v518
        %v649 = vunpack.c.l.bf16 %v519
        %v650 = vunpack.c.l.bf16 %v520
        %v651 = vunpack.c.l.bf16 %v521
        %v652 = vmul.f32 %v644, %v614
        %v653 = vmul.f32 %v645, %v617
        %v654 = vmul.f32 %v646, %v622
        %v655 = vmul.f32 %v647, %v625
        %v656 = vmul.f32 %v648, %v630
        %v657 = vmul.f32 %v649, %v633
        %v658 = vmul.f32 %v650, %v638
        %v659 = vmul.f32 %v651, %v641
        %v660 = vsel %vm566, %v652, 0.0
        %661 = vadd.xlane.f32.xlu0 %v660
        %v662 = vpop.xlane.xlu0 %661
        %v663 = vsel %vm566, %v653, 0.0
        %664 = vadd.xlane.f32.xlu0 %v663
        %v665 = vpop.xlane.xlu0 %664
        %v666 = vsel %vm566, %v654, 0.0
        %667 = vadd.xlane.f32.xlu0 %v666
        %v668 = vpop.xlane.xlu0 %667
        %v669 = vsel %vm566, %v655, 0.0
        %670 = vadd.xlane.f32.xlu0 %v669
        %v671 = vpop.xlane.xlu0 %670
        %v672 = vsel %vm566, %v656, 0.0
        %673 = vadd.xlane.f32.xlu0 %v672
        %v674 = vpop.xlane.xlu0 %673
        %v675 = vsel %vm566, %v657, 0.0
        %676 = vadd.xlane.f32.xlu0 %v675
        %v677 = vpop.xlane.xlu0 %676
        %v678 = vsel %vm566, %v658, 0.0
        %679 = vadd.xlane.f32.xlu0 %v678
        %v680 = vpop.xlane.xlu0 %679
        %v681 = vsel %vm566, %v659, 0.0
        %682 = vadd.xlane.f32.xlu0 %v681
        %v683 = vpop.xlane.xlu0 %682
        %v684 = vtanh.pop %v662
        %v685 = vtanh.pop %v665
        %v686 = vtanh.pop %v668
        %v687 = vtanh.pop %v671
        %v688 = vtanh.pop %v674
        %v689 = vtanh.pop %v677
        %v690 = vtanh.pop %v680
        %v691 = vtanh.pop %v683
        %v693 = vlaneseq
        %v694 = vshrl.u32 %v693, 7
        %v695 = vsub.s32 0, %v694
        %v696 = vrot.slane %v522, %v695
        %698 = vbcast.lane.b32.xlu0 %v696, 256
        %v699 = vpop.permute.xlu0 %698
        %v700 = vlaneseq
        %v701 = vshrl.u32 %v700, 7
        %v702 = vsub.s32 1, %v701
        %v703 = vrot.slane %v522, %v702
        %705 = vbcast.lane.b32.xlu0 %v703, 256
        %v706 = vpop.permute.xlu0 %705
        %v707 = vlaneseq
        %v708 = vshrl.u32 %v707, 7
        %v709 = vsub.s32 2, %v708
        %v710 = vrot.slane %v522, %v709
        %712 = vbcast.lane.b32.xlu0 %v710, 256
        %v713 = vpop.permute.xlu0 %712
        %v714 = vlaneseq
        %v715 = vshrl.u32 %v714, 7
        %v716 = vsub.s32 3, %v715
        %v717 = vrot.slane %v522, %v716
        %719 = vbcast.lane.b32.xlu0 %v717, 256
        %v720 = vpop.permute.xlu0 %719
        %v721 = vlaneseq
        %v722 = vshrl.u32 %v721, 7
        %v723 = vsub.s32 4, %v722
        %v724 = vrot.slane %v522, %v723
        %726 = vbcast.lane.b32.xlu0 %v724, 256
        %v727 = vpop.permute.xlu0 %726
        %v728 = vlaneseq
        %v729 = vshrl.u32 %v728, 7
        %v730 = vsub.s32 5, %v729
        %v731 = vrot.slane %v522, %v730
        %733 = vbcast.lane.b32.xlu0 %v731, 256
        %v734 = vpop.permute.xlu0 %733
        %v735 = vlaneseq
        %v736 = vshrl.u32 %v735, 7
        %v737 = vsub.s32 6, %v736
        %v738 = vrot.slane %v522, %v737
        %740 = vbcast.lane.b32.xlu0 %v738, 256
        %v741 = vpop.permute.xlu0 %740
        %v742 = vlaneseq
        %v743 = vshrl.u32 %v742, 7
        %v744 = vsub.s32 7, %v743
        %v745 = vrot.slane %v522, %v744
        %747 = vbcast.lane.b32.xlu0 %v745, 256
        %v748 = vpop.permute.xlu0 %747
        %v757 = vmul.f32 %v684, %v699
        %v758 = vmul.f32 %v685, %v706
        %v759 = vmul.f32 %v686, %v713
        %v760 = vmul.f32 %v687, %v720
        %v761 = vmul.f32 %v688, %v727
        %v762 = vmul.f32 %v689, %v734
        %v763 = vmul.f32 %v690, %v741
        %v764 = vmul.f32 %v691, %v748
        %v765 = vsub.f32 1.0, %v522
        %v766 = vmul.f32 %v765, -10000.0
        %v768 = vlaneseq
        %v769 = vshrl.u32 %v768, 7
        %v770 = vsub.s32 0, %v769
        %v771 = vrot.slane %v766, %v770
        %773 = vbcast.lane.b32.xlu0 %v771, 256
        %v774 = vpop.permute.xlu0 %773
        %v775 = vlaneseq
        %v776 = vshrl.u32 %v775, 7
        %v777 = vsub.s32 1, %v776
        %v778 = vrot.slane %v766, %v777
        %780 = vbcast.lane.b32.xlu0 %v778, 256
        %v781 = vpop.permute.xlu0 %780
        %v782 = vlaneseq
        %v783 = vshrl.u32 %v782, 7
        %v784 = vsub.s32 2, %v783
        %v785 = vrot.slane %v766, %v784
        %787 = vbcast.lane.b32.xlu0 %v785, 256
        %v788 = vpop.permute.xlu0 %787
        %v789 = vlaneseq
        %v790 = vshrl.u32 %v789, 7
        %v791 = vsub.s32 3, %v790
        %v792 = vrot.slane %v766, %v791
        %794 = vbcast.lane.b32.xlu0 %v792, 256
        %v795 = vpop.permute.xlu0 %794
        %v796 = vlaneseq
        %v797 = vshrl.u32 %v796, 7
        %v798 = vsub.s32 4, %v797
        %v799 = vrot.slane %v766, %v798
        %801 = vbcast.lane.b32.xlu0 %v799, 256
        %v802 = vpop.permute.xlu0 %801
        %v803 = vlaneseq
        %v804 = vshrl.u32 %v803, 7
        %v805 = vsub.s32 5, %v804
        %v806 = vrot.slane %v766, %v805
        %808 = vbcast.lane.b32.xlu0 %v806, 256
        %v809 = vpop.permute.xlu0 %808
        %v810 = vlaneseq
        %v811 = vshrl.u32 %v810, 7
        %v812 = vsub.s32 6, %v811
        %v813 = vrot.slane %v766, %v812
        %815 = vbcast.lane.b32.xlu0 %v813, 256
        %v816 = vpop.permute.xlu0 %815
        %v817 = vlaneseq
        %v818 = vshrl.u32 %v817, 7
        %v819 = vsub.s32 7, %v818
        %v820 = vrot.slane %v766, %v819
        %822 = vbcast.lane.b32.xlu0 %v820, 256
        %v823 = vpop.permute.xlu0 %822
        %v832 = vadd.f32 %v757, %v774
        %v833 = vadd.f32 %v758, %v781
        %v834 = vadd.f32 %v759, %v788
        %v835 = vadd.f32 %v760, %v795
        %v836 = vadd.f32 %v761, %v802
        %v837 = vadd.f32 %v762, %v809
        %v838 = vadd.f32 %v763, %v816
        %v839 = vadd.f32 %v764, %v823
        %848 = vset.pattern.permute.xlu0 0
        %849 = vperm.xlu0 %848, %v832
        %v850 = vpop.permute.xlu0 %849
        %851 = vset.pattern.permute.xlu0 0
        %852 = vperm.xlu0 %851, %v833
        %v853 = vpop.permute.xlu0 %852
        %854 = vset.pattern.permute.xlu0 0
        %855 = vperm.xlu0 %854, %v834
        %v856 = vpop.permute.xlu0 %855
        %857 = vset.pattern.permute.xlu0 0
        %858 = vperm.xlu0 %857, %v835
        %v859 = vpop.permute.xlu0 %858
        %860 = vset.pattern.permute.xlu0 0
        %861 = vperm.xlu0 %860, %v836
        %v862 = vpop.permute.xlu0 %861
        %863 = vset.pattern.permute.xlu0 0
        %864 = vperm.xlu0 %863, %v837
        %v865 = vpop.permute.xlu0 %864
        %866 = vset.pattern.permute.xlu0 0
        %867 = vperm.xlu0 %866, %v838
        %v868 = vpop.permute.xlu0 %867
        %869 = vset.pattern.permute.xlu0 0
        %870 = vperm.xlu0 %869, %v839
        %v871 = vpop.permute.xlu0 %870
        %v872 = vlaneseq
        %v873 = vand.u32 %v872, 127
        %v874 = vlaneseq
        %v875 = vshrl.u32 %v874, 7
        %v876 = vsub.s32 %v873, %v875
        %v877 = vrot.slane %v850, %v876
        %v878 = vlaneseq
        %v879 = vshrl.u32 %v878, 7
        %v880 = vsub.s32 %v873, %v879
        %v881 = vrot.slane %v853, %v880
        %v882 = vlaneseq
        %v883 = vshrl.u32 %v882, 7
        %v884 = vsub.s32 %v873, %v883
        %v885 = vrot.slane %v856, %v884
        %v886 = vlaneseq
        %v887 = vshrl.u32 %v886, 7
        %v888 = vsub.s32 %v873, %v887
        %v889 = vrot.slane %v859, %v888
        %v890 = vlaneseq
        %v891 = vshrl.u32 %v890, 7
        %v892 = vsub.s32 %v873, %v891
        %v893 = vrot.slane %v862, %v892
        %v894 = vlaneseq
        %v895 = vshrl.u32 %v894, 7
        %v896 = vsub.s32 %v873, %v895
        %v897 = vrot.slane %v865, %v896
        %v898 = vlaneseq
        %v899 = vshrl.u32 %v898, 7
        %v900 = vsub.s32 %v873, %v899
        %v901 = vrot.slane %v868, %v900
        %v902 = vlaneseq
        %v903 = vshrl.u32 %v902, 7
        %v904 = vsub.s32 %v873, %v903
        %v905 = vrot.slane %v871, %v904
        %vm906 = vcmask 1041409
        %v907 = vsel %vm906, %v881, %v877
        %vm908 = vcmask 1042434
        %v909 = vsel %vm908, %v885, %v907
        %vm910 = vcmask 1043459
        %v911 = vsel %vm910, %v889, %v909
        %vm912 = vcmask 1044484
        %v913 = vsel %vm912, %v893, %v911
        %vm914 = vcmask 1045509
        %v915 = vsel %vm914, %v897, %v913
        %vm916 = vcmask 1046534
        %v917 = vsel %vm916, %v901, %v915
        %vm918 = vcmask 1047559
        %v919 = vsel %vm918, %v905, %v917
        %vm921 = vcmask 64512
        %v922 = vsel %vm921, %v919, -inf
        %923 = vmax.xlane.f32.xlu0 %v922
        %v924 = vpop.xlane.xlu0 %923
        %v926 = vlaneseq
        %v927 = vshrl.u32 %v926, 7
        %v928 = vsub.s32 0, %v927
        %v929 = vrot.slane %v924, %v928
        %v930 = vlaneseq
        %v931 = vshrl.u32 %v930, 7
        %v932 = vsub.s32 1, %v931
        %v933 = vrot.slane %v924, %v932
        %v934 = vlaneseq
        %v935 = vshrl.u32 %v934, 7
        %v936 = vsub.s32 2, %v935
        %v937 = vrot.slane %v924, %v936
        %v938 = vlaneseq
        %v939 = vshrl.u32 %v938, 7
        %v940 = vsub.s32 3, %v939
        %v941 = vrot.slane %v924, %v940
        %v942 = vlaneseq
        %v943 = vshrl.u32 %v942, 7
        %v944 = vsub.s32 4, %v943
        %v945 = vrot.slane %v924, %v944
        %v946 = vlaneseq
        %v947 = vshrl.u32 %v946, 7
        %v948 = vsub.s32 5, %v947
        %v949 = vrot.slane %v924, %v948
        %v950 = vlaneseq
        %v951 = vshrl.u32 %v950, 7
        %v952 = vsub.s32 6, %v951
        %v953 = vrot.slane %v924, %v952
        %v954 = vlaneseq
        %v955 = vshrl.u32 %v954, 7
        %v956 = vsub.s32 7, %v955
        %v957 = vrot.slane %v924, %v956
        %v966 = vsub.f32 %v832, %v929
        %v967 = vsub.f32 %v833, %v933
        %v968 = vsub.f32 %v834, %v937
        %v969 = vsub.f32 %v835, %v941
        %v970 = vsub.f32 %v836, %v945
        %v971 = vsub.f32 %v837, %v949
        %v972 = vsub.f32 %v838, %v953
        %v973 = vsub.f32 %v839, %v957
        %v974 = vmul.f32 %v966, 1.442695
        %v975 = vpow.pop %v974
        %v976 = vmul.f32 %v967, 1.442695
        %v977 = vpow.pop %v976
        %v978 = vmul.f32 %v968, 1.442695
        %v979 = vpow.pop %v978
        %v980 = vmul.f32 %v969, 1.442695
        %v981 = vpow.pop %v980
        %v982 = vmul.f32 %v970, 1.442695
        %v983 = vpow.pop %v982
        %v984 = vmul.f32 %v971, 1.442695
        %v985 = vpow.pop %v984
        %v986 = vmul.f32 %v972, 1.442695
        %v987 = vpow.pop %v986
        %v988 = vmul.f32 %v973, 1.442695
        %v989 = vpow.pop %v988
        %998 = vset.pattern.permute.xlu0 0
        %999 = vperm.xlu0 %998, %v975
        %v1000 = vpop.permute.xlu0 %999
        %1001 = vset.pattern.permute.xlu0 0
        %1002 = vperm.xlu0 %1001, %v977
        %v1003 = vpop.permute.xlu0 %1002
        %1004 = vset.pattern.permute.xlu0 0
        %1005 = vperm.xlu0 %1004, %v979
        %v1006 = vpop.permute.xlu0 %1005
        %1007 = vset.pattern.permute.xlu0 0
        %1008 = vperm.xlu0 %1007, %v981
        %v1009 = vpop.permute.xlu0 %1008
        %1010 = vset.pattern.permute.xlu0 0
        %1011 = vperm.xlu0 %1010, %v983
        %v1012 = vpop.permute.xlu0 %1011
        %1013 = vset.pattern.permute.xlu0 0
        %1014 = vperm.xlu0 %1013, %v985
        %v1015 = vpop.permute.xlu0 %1014
        %1016 = vset.pattern.permute.xlu0 0
        %1017 = vperm.xlu0 %1016, %v987
        %v1018 = vpop.permute.xlu0 %1017
        %1019 = vset.pattern.permute.xlu0 0
        %1020 = vperm.xlu0 %1019, %v989
        %v1021 = vpop.permute.xlu0 %1020
        %v1022 = vlaneseq
        %v1023 = vshrl.u32 %v1022, 7
        %v1024 = vsub.s32 %v873, %v1023
        %v1025 = vrot.slane %v1000, %v1024
        %v1026 = vlaneseq
        %v1027 = vshrl.u32 %v1026, 7
        %v1028 = vsub.s32 %v873, %v1027
        %v1029 = vrot.slane %v1003, %v1028
        %v1030 = vlaneseq
        %v1031 = vshrl.u32 %v1030, 7
        %v1032 = vsub.s32 %v873, %v1031
        %v1033 = vrot.slane %v1006, %v1032
        %v1034 = vlaneseq
        %v1035 = vshrl.u32 %v1034, 7
        %v1036 = vsub.s32 %v873, %v1035
        %v1037 = vrot.slane %v1009, %v1036
        %v1038 = vlaneseq
        %v1039 = vshrl.u32 %v1038, 7
        %v1040 = vsub.s32 %v873, %v1039
        %v1041 = vrot.slane %v1012, %v1040
        %v1042 = vlaneseq
        %v1043 = vshrl.u32 %v1042, 7
        %v1044 = vsub.s32 %v873, %v1043
        %v1045 = vrot.slane %v1015, %v1044
        %v1046 = vlaneseq
        %v1047 = vshrl.u32 %v1046, 7
        %v1048 = vsub.s32 %v873, %v1047
        %v1049 = vrot.slane %v1018, %v1048
        %v1050 = vlaneseq
        %v1051 = vshrl.u32 %v1050, 7
        %v1052 = vsub.s32 %v873, %v1051
        %v1053 = vrot.slane %v1021, %v1052
        %v1054 = vsel %vm906, %v1029, %v1025
        %v1055 = vsel %vm908, %v1033, %v1054
        %v1056 = vsel %vm910, %v1037, %v1055
        %v1057 = vsel %vm912, %v1041, %v1056
        %v1058 = vsel %vm914, %v1045, %v1057
        %v1059 = vsel %vm916, %v1049, %v1058
        %v1060 = vsel %vm918, %v1053, %v1059
        %v1062 = vsel %vm921, %v1060, 0.0
        %1063 = vadd.xlane.f32.xlu0 %v1062
        %v1064 = vpop.xlane.xlu0 %1063
        %v1065 = vrcp.pop %v1064
        %v1067 = vlaneseq
        %v1068 = vshrl.u32 %v1067, 7
        %v1069 = vsub.s32 0, %v1068
        %v1070 = vrot.slane %v1065, %v1069
        %v1071 = vlaneseq
        %v1072 = vshrl.u32 %v1071, 7
        %v1073 = vsub.s32 1, %v1072
        %v1074 = vrot.slane %v1065, %v1073
        %v1075 = vlaneseq
        %v1076 = vshrl.u32 %v1075, 7
        %v1077 = vsub.s32 2, %v1076
        %v1078 = vrot.slane %v1065, %v1077
        %v1079 = vlaneseq
        %v1080 = vshrl.u32 %v1079, 7
        %v1081 = vsub.s32 3, %v1080
        %v1082 = vrot.slane %v1065, %v1081
        %v1083 = vlaneseq
        %v1084 = vshrl.u32 %v1083, 7
        %v1085 = vsub.s32 4, %v1084
        %v1086 = vrot.slane %v1065, %v1085
        %v1087 = vlaneseq
        %v1088 = vshrl.u32 %v1087, 7
        %v1089 = vsub.s32 5, %v1088
        %v1090 = vrot.slane %v1065, %v1089
        %v1091 = vlaneseq
        %v1092 = vshrl.u32 %v1091, 7
        %v1093 = vsub.s32 6, %v1092
        %v1094 = vrot.slane %v1065, %v1093
        %v1095 = vlaneseq
        %v1096 = vshrl.u32 %v1095, 7
        %v1097 = vsub.s32 7, %v1096
        %v1098 = vrot.slane %v1065, %v1097
        %v1107 = vmul.f32 %v975, %v1070
        %v1108 = vmul.f32 %v977, %v1074
        %v1109 = vmul.f32 %v979, %v1078
        %v1110 = vmul.f32 %v981, %v1082
        %v1111 = vmul.f32 %v983, %v1086
        %v1112 = vmul.f32 %v985, %v1090
        %v1113 = vmul.f32 %v987, %v1094
        %v1114 = vmul.f32 %v989, %v1098
        %1115 = vrot.lane.b32.xlu0 %v562, 96
        %v1116 = vpop.permute.xlu0 %1115
        %1117 = vrot.lane.b32.xlu0 %v563, 96
        %v1118 = vpop.permute.xlu0 %1117
        %1121 = vrot.lane.b32.xlu0 %v532, 96
        %v1122 = vpop.permute.xlu0 %1121
        %1124 = vmatprep.subr.bf16.mxu0 0
        %1125 = vmatpush1.bf16.msra.mxu0 %v1116
        %1126 = vmatprep.subr.bf16.mxu0 0
        %1127 = vmatpush1.bf16.msra.mxu0 %v1118
        %1128 = vmatprep.subr.bf16.mxu0 0
        %1129 = vmatpush1.bf16.msra.mxu0 0
        %1130 = vmatprep.subr.bf16.mxu0 0
        %1131 = vmatpush1.bf16.msra.mxu0 0
        %1132 = vmatprep.subr.bf16.mxu0 0
        %1133 = vmatpush1.bf16.msra.mxu0 0
        %1134 = vmatprep.subr.bf16.mxu0 0
        %1135 = vmatpush1.bf16.msra.mxu0 0
        %1136 = vmatprep.subr.bf16.mxu0 0
        %1137 = vmatpush1.bf16.msra.mxu0 0
        %1138 = vmatprep.subr.bf16.mxu0 0
        %1139 = vmatpush1.bf16.msra.mxu0 0
        %1140 = vmatprep.subr.bf16.mxu0 0
        %1141 = vmatpush1.bf16.msra.mxu0 0
        %1142 = vmatprep.subr.bf16.mxu0 0
        %1143 = vmatpush1.bf16.msra.mxu0 0
        %1144 = vmatprep.subr.bf16.mxu0 0
        %1145 = vmatpush1.bf16.msra.mxu0 0
        %1146 = vmatprep.subr.bf16.mxu0 0
        %1147 = vmatpush1.bf16.msra.mxu0 0
        %1148 = vmatprep.subr.bf16.mxu0 0
        %1149 = vmatpush1.bf16.msra.mxu0 0
        %1150 = vmatprep.subr.bf16.mxu0 0
        %1151 = vmatpush1.bf16.msra.mxu0 0
        %1152 = vmatprep.subr.bf16.mxu0 0
        %1153 = vmatpush1.bf16.msra.mxu0 0
        %1154 = vmatprep.subr.bf16.mxu0 0
        %1155 = vmatpush1.bf16.msra.mxu0 0
        %1156 = vmatprep.mubr.bf16.mxu0 0
        %1157 = vmatmul.mubr.bf16.gmra.mrb[0].mxu0 %v568
        %v1158 = vpop.f32.mrb[0].mxu0
        %v1159 = vadd.f32 %v1122, %v1158
        %v1160 = vpop.f32.mrb[0].mxu0
        %v1161 = vpop.f32.mrb[0].mxu0
        %v1162 = vadd.f32 %v1122, %v1161
        %v1163 = vpop.f32.mrb[0].mxu0
        %1164 = vmatprep.mubr.bf16.mxu0 0
        %1165 = vmatmul.mubr.bf16.gmra.mrb[0].mxu0 %v571
        %v1166 = vpop.f32.mrb[0].mxu0
        %v1167 = vadd.f32 %v1122, %v1166
        %v1168 = vpop.f32.mrb[0].mxu0
        %v1169 = vpop.f32.mrb[0].mxu0
        %v1170 = vadd.f32 %v1122, %v1169
        %v1171 = vpop.f32.mrb[0].mxu0
        %1172 = vmatprep.mubr.bf16.mxu0 0
        %1173 = vmatmul.mubr.bf16.gmra.mrb[0].mxu0 %v574
        %v1174 = vpop.f32.mrb[0].mxu0
        %v1175 = vadd.f32 %v1122, %v1174
        %v1176 = vpop.f32.mrb[0].mxu0
        %v1177 = vpop.f32.mrb[0].mxu0
        %v1178 = vadd.f32 %v1122, %v1177
        %v1179 = vpop.f32.mrb[0].mxu0
        %1180 = vmatprep.mubr.bf16.mxu0 0
        %1181 = vmatmul.mubr.bf16.gmra.mrb[0].mxu0 %v577
        %v1182 = vpop.f32.mrb[0].mxu0
        %v1183 = vadd.f32 %v1122, %v1182
        %v1184 = vpop.f32.mrb[0].mxu0
        %v1185 = vpop.f32.mrb[0].mxu0
        %v1186 = vadd.f32 %v1122, %v1185
        %v1187 = vpop.f32.mrb[0].mxu0
        %1188 = vdwg.mxu0
        %v1189 = vmul.f32 %v644, %v1159
        %v1190 = vmul.f32 %v645, %v1162
        %v1191 = vmul.f32 %v646, %v1167
        %v1192 = vmul.f32 %v647, %v1170
        %v1193 = vmul.f32 %v648, %v1175
        %v1194 = vmul.f32 %v649, %v1178
        %v1195 = vmul.f32 %v650, %v1183
        %v1196 = vmul.f32 %v651, %v1186
        %v1197 = vsel %vm566, %v1189, 0.0
        %1198 = vadd.xlane.f32.xlu0 %v1197
        %v1199 = vpop.xlane.xlu0 %1198
        %v1200 = vsel %vm566, %v1190, 0.0
        %1201 = vadd.xlane.f32.xlu0 %v1200
        %v1202 = vpop.xlane.xlu0 %1201
        %v1203 = vsel %vm566, %v1191, 0.0
        %1204 = vadd.xlane.f32.xlu0 %v1203
        %v1205 = vpop.xlane.xlu0 %1204
        %v1206 = vsel %vm566, %v1192, 0.0
        %1207 = vadd.xlane.f32.xlu0 %v1206
        %v1208 = vpop.xlane.xlu0 %1207
        %v1209 = vsel %vm566, %v1193, 0.0
        %1210 = vadd.xlane.f32.xlu0 %v1209
        %v1211 = vpop.xlane.xlu0 %1210
        %v1212 = vsel %vm566, %v1194, 0.0
        %1213 = vadd.xlane.f32.xlu0 %v1212
        %v1214 = vpop.xlane.xlu0 %1213
        %v1215 = vsel %vm566, %v1195, 0.0
        %1216 = vadd.xlane.f32.xlu0 %v1215
        %v1217 = vpop.xlane.xlu0 %1216
        %v1218 = vsel %vm566, %v1196, 0.0
        %1219 = vadd.xlane.f32.xlu0 %v1218
        %v1220 = vpop.xlane.xlu0 %1219
        %v1221 = vtanh.pop %v1199
        %v1222 = vtanh.pop %v1202
        %v1223 = vtanh.pop %v1205
        %v1224 = vtanh.pop %v1208
        %v1225 = vtanh.pop %v1211
        %v1226 = vtanh.pop %v1214
        %v1227 = vtanh.pop %v1217
        %v1228 = vtanh.pop %v1220
        %v1229 = vmul.f32 %v1221, %v699
        %v1230 = vmul.f32 %v1222, %v706
        %v1231 = vmul.f32 %v1223, %v713
        %v1232 = vmul.f32 %v1224, %v720
        %v1233 = vmul.f32 %v1225, %v727
        %v1234 = vmul.f32 %v1226, %v734
        %v1235 = vmul.f32 %v1227, %v741
        %v1236 = vmul.f32 %v1228, %v748
        %v1237 = vadd.f32 %v1229, %v774
        %v1238 = vadd.f32 %v1230, %v781
        %v1239 = vadd.f32 %v1231, %v788
        %v1240 = vadd.f32 %v1232, %v795
        %v1241 = vadd.f32 %v1233, %v802
        %v1242 = vadd.f32 %v1234, %v809
        %v1243 = vadd.f32 %v1235, %v816
        %v1244 = vadd.f32 %v1236, %v823
        %1253 = vset.pattern.permute.xlu0 0
        %1254 = vperm.xlu0 %1253, %v1237
        %v1255 = vpop.permute.xlu0 %1254
        %1256 = vset.pattern.permute.xlu0 0
        %1257 = vperm.xlu0 %1256, %v1238
        %v1258 = vpop.permute.xlu0 %1257
        %1259 = vset.pattern.permute.xlu0 0
        %1260 = vperm.xlu0 %1259, %v1239
        %v1261 = vpop.permute.xlu0 %1260
        %1262 = vset.pattern.permute.xlu0 0
        %1263 = vperm.xlu0 %1262, %v1240
        %v1264 = vpop.permute.xlu0 %1263
        %1265 = vset.pattern.permute.xlu0 0
        %1266 = vperm.xlu0 %1265, %v1241
        %v1267 = vpop.permute.xlu0 %1266
        %1268 = vset.pattern.permute.xlu0 0
        %1269 = vperm.xlu0 %1268, %v1242
        %v1270 = vpop.permute.xlu0 %1269
        %1271 = vset.pattern.permute.xlu0 0
        %1272 = vperm.xlu0 %1271, %v1243
        %v1273 = vpop.permute.xlu0 %1272
        %1274 = vset.pattern.permute.xlu0 0
        %1275 = vperm.xlu0 %1274, %v1244
        %v1276 = vpop.permute.xlu0 %1275
        %v1277 = vlaneseq
        %v1278 = vshrl.u32 %v1277, 7
        %v1279 = vsub.s32 %v873, %v1278
        %v1280 = vrot.slane %v1255, %v1279
        %v1281 = vlaneseq
        %v1282 = vshrl.u32 %v1281, 7
        %v1283 = vsub.s32 %v873, %v1282
        %v1284 = vrot.slane %v1258, %v1283
        %v1285 = vlaneseq
        %v1286 = vshrl.u32 %v1285, 7
        %v1287 = vsub.s32 %v873, %v1286
        %v1288 = vrot.slane %v1261, %v1287
        %v1289 = vlaneseq
        %v1290 = vshrl.u32 %v1289, 7
        %v1291 = vsub.s32 %v873, %v1290
        %v1292 = vrot.slane %v1264, %v1291
        %v1293 = vlaneseq
        %v1294 = vshrl.u32 %v1293, 7
        %v1295 = vsub.s32 %v873, %v1294
        %v1296 = vrot.slane %v1267, %v1295
        %v1297 = vlaneseq
        %v1298 = vshrl.u32 %v1297, 7
        %v1299 = vsub.s32 %v873, %v1298
        %v1300 = vrot.slane %v1270, %v1299
        %v1301 = vlaneseq
        %v1302 = vshrl.u32 %v1301, 7
        %v1303 = vsub.s32 %v873, %v1302
        %v1304 = vrot.slane %v1273, %v1303
        %v1305 = vlaneseq
        %v1306 = vshrl.u32 %v1305, 7
        %v1307 = vsub.s32 %v873, %v1306
        %v1308 = vrot.slane %v1276, %v1307
        %v1309 = vsel %vm906, %v1284, %v1280
        %v1310 = vsel %vm908, %v1288, %v1309
        %v1311 = vsel %vm910, %v1292, %v1310
        %v1312 = vsel %vm912, %v1296, %v1311
        %v1313 = vsel %vm914, %v1300, %v1312
        %v1314 = vsel %vm916, %v1304, %v1313
        %v1315 = vsel %vm918, %v1308, %v1314
        %v1317 = vsel %vm921, %v1315, -inf
        %1318 = vmax.xlane.f32.xlu0 %v1317
        %v1319 = vpop.xlane.xlu0 %1318
        %v1321 = vlaneseq
        %v1322 = vshrl.u32 %v1321, 7
        %v1323 = vsub.s32 0, %v1322
        %v1324 = vrot.slane %v1319, %v1323
        %v1325 = vlaneseq
        %v1326 = vshrl.u32 %v1325, 7
        %v1327 = vsub.s32 1, %v1326
        %v1328 = vrot.slane %v1319, %v1327
        %v1329 = vlaneseq
        %v1330 = vshrl.u32 %v1329, 7
        %v1331 = vsub.s32 2, %v1330
        %v1332 = vrot.slane %v1319, %v1331
        %v1333 = vlaneseq
        %v1334 = vshrl.u32 %v1333, 7
        %v1335 = vsub.s32 3, %v1334
        %v1336 = vrot.slane %v1319, %v1335
        %v1337 = vlaneseq
        %v1338 = vshrl.u32 %v1337, 7
        %v1339 = vsub.s32 4, %v1338
        %v1340 = vrot.slane %v1319, %v1339
        %v1341 = vlaneseq
        %v1342 = vshrl.u32 %v1341, 7
        %v1343 = vsub.s32 5, %v1342
        %v1344 = vrot.slane %v1319, %v1343
        %v1345 = vlaneseq
        %v1346 = vshrl.u32 %v1345, 7
        %v1347 = vsub.s32 6, %v1346
        %v1348 = vrot.slane %v1319, %v1347
        %v1349 = vlaneseq
        %v1350 = vshrl.u32 %v1349, 7
        %v1351 = vsub.s32 7, %v1350
        %v1352 = vrot.slane %v1319, %v1351
        %v1361 = vsub.f32 %v1237, %v1324
        %v1362 = vsub.f32 %v1238, %v1328
        %v1363 = vsub.f32 %v1239, %v1332
        %v1364 = vsub.f32 %v1240, %v1336
        %v1365 = vsub.f32 %v1241, %v1340
        %v1366 = vsub.f32 %v1242, %v1344
        %v1367 = vsub.f32 %v1243, %v1348
        %v1368 = vsub.f32 %v1244, %v1352
        %v1369 = vmul.f32 %v1361, 1.442695
        %v1370 = vpow.pop %v1369
        %v1371 = vmul.f32 %v1362, 1.442695
        %v1372 = vpow.pop %v1371
        %v1373 = vmul.f32 %v1363, 1.442695
        %v1374 = vpow.pop %v1373
        %v1375 = vmul.f32 %v1364, 1.442695
        %v1376 = vpow.pop %v1375
        %v1377 = vmul.f32 %v1365, 1.442695
        %v1378 = vpow.pop %v1377
        %v1379 = vmul.f32 %v1366, 1.442695
        %v1380 = vpow.pop %v1379
        %v1381 = vmul.f32 %v1367, 1.442695
        %v1382 = vpow.pop %v1381
        %v1383 = vmul.f32 %v1368, 1.442695
        %v1384 = vpow.pop %v1383
        %1393 = vset.pattern.permute.xlu0 0
        %1394 = vperm.xlu0 %1393, %v1370
        %v1395 = vpop.permute.xlu0 %1394
        %1396 = vset.pattern.permute.xlu0 0
        %1397 = vperm.xlu0 %1396, %v1372
        %v1398 = vpop.permute.xlu0 %1397
        %1399 = vset.pattern.permute.xlu0 0
        %1400 = vperm.xlu0 %1399, %v1374
        %v1401 = vpop.permute.xlu0 %1400
        %1402 = vset.pattern.permute.xlu0 0
        %1403 = vperm.xlu0 %1402, %v1376
        %v1404 = vpop.permute.xlu0 %1403
        %1405 = vset.pattern.permute.xlu0 0
        %1406 = vperm.xlu0 %1405, %v1378
        %v1407 = vpop.permute.xlu0 %1406
        %1408 = vset.pattern.permute.xlu0 0
        %1409 = vperm.xlu0 %1408, %v1380
        %v1410 = vpop.permute.xlu0 %1409
        %1411 = vset.pattern.permute.xlu0 0
        %1412 = vperm.xlu0 %1411, %v1382
        %v1413 = vpop.permute.xlu0 %1412
        %1414 = vset.pattern.permute.xlu0 0
        %1415 = vperm.xlu0 %1414, %v1384
        %v1416 = vpop.permute.xlu0 %1415
        %v1417 = vlaneseq
        %v1418 = vshrl.u32 %v1417, 7
        %v1419 = vsub.s32 %v873, %v1418
        %v1420 = vrot.slane %v1395, %v1419
        %v1421 = vlaneseq
        %v1422 = vshrl.u32 %v1421, 7
        %v1423 = vsub.s32 %v873, %v1422
        %v1424 = vrot.slane %v1398, %v1423
        %v1425 = vlaneseq
        %v1426 = vshrl.u32 %v1425, 7
        %v1427 = vsub.s32 %v873, %v1426
        %v1428 = vrot.slane %v1401, %v1427
        %v1429 = vlaneseq
        %v1430 = vshrl.u32 %v1429, 7
        %v1431 = vsub.s32 %v873, %v1430
        %v1432 = vrot.slane %v1404, %v1431
        %v1433 = vlaneseq
        %v1434 = vshrl.u32 %v1433, 7
        %v1435 = vsub.s32 %v873, %v1434
        %v1436 = vrot.slane %v1407, %v1435
        %v1437 = vlaneseq
        %v1438 = vshrl.u32 %v1437, 7
        %v1439 = vsub.s32 %v873, %v1438
        %v1440 = vrot.slane %v1410, %v1439
        %v1441 = vlaneseq
        %v1442 = vshrl.u32 %v1441, 7
        %v1443 = vsub.s32 %v873, %v1442
        %v1444 = vrot.slane %v1413, %v1443
        %v1445 = vlaneseq
        %v1446 = vshrl.u32 %v1445, 7
        %v1447 = vsub.s32 %v873, %v1446
        %v1448 = vrot.slane %v1416, %v1447
        %v1449 = vsel %vm906, %v1424, %v1420
        %v1450 = vsel %vm908, %v1428, %v1449
        %v1451 = vsel %vm910, %v1432, %v1450
        %v1452 = vsel %vm912, %v1436, %v1451
        %v1453 = vsel %vm914, %v1440, %v1452
        %v1454 = vsel %vm916, %v1444, %v1453
        %v1455 = vsel %vm918, %v1448, %v1454
        %v1457 = vsel %vm921, %v1455, 0.0
        %1458 = vadd.xlane.f32.xlu0 %v1457
        %v1459 = vpop.xlane.xlu0 %1458
        %v1460 = vrcp.pop %v1459
        %v1462 = vlaneseq
        %v1463 = vshrl.u32 %v1462, 7
        %v1464 = vsub.s32 0, %v1463
        %v1465 = vrot.slane %v1460, %v1464
        %v1466 = vlaneseq
        %v1467 = vshrl.u32 %v1466, 7
        %v1468 = vsub.s32 1, %v1467
        %v1469 = vrot.slane %v1460, %v1468
        %v1470 = vlaneseq
        %v1471 = vshrl.u32 %v1470, 7
        %v1472 = vsub.s32 2, %v1471
        %v1473 = vrot.slane %v1460, %v1472
        %v1474 = vlaneseq
        %v1475 = vshrl.u32 %v1474, 7
        %v1476 = vsub.s32 3, %v1475
        %v1477 = vrot.slane %v1460, %v1476
        %v1478 = vlaneseq
        %v1479 = vshrl.u32 %v1478, 7
        %v1480 = vsub.s32 4, %v1479
        %v1481 = vrot.slane %v1460, %v1480
        %v1482 = vlaneseq
        %v1483 = vshrl.u32 %v1482, 7
        %v1484 = vsub.s32 5, %v1483
        %v1485 = vrot.slane %v1460, %v1484
        %v1486 = vlaneseq
        %v1487 = vshrl.u32 %v1486, 7
        %v1488 = vsub.s32 6, %v1487
        %v1489 = vrot.slane %v1460, %v1488
        %v1490 = vlaneseq
        %v1491 = vshrl.u32 %v1490, 7
        %v1492 = vsub.s32 7, %v1491
        %v1493 = vrot.slane %v1460, %v1492
        %v1502 = vmul.f32 %v1370, %v1465
        %v1503 = vmul.f32 %v1372, %v1469
        %v1504 = vmul.f32 %v1374, %v1473
        %v1505 = vmul.f32 %v1376, %v1477
        %v1506 = vmul.f32 %v1378, %v1481
        %v1507 = vmul.f32 %v1380, %v1485
        %v1508 = vmul.f32 %v1382, %v1489
        %v1509 = vmul.f32 %v1384, %v1493
        %1510 = vrot.lane.b32.xlu0 %v562, 64
        %v1511 = vpop.permute.xlu0 %1510
        %1512 = vrot.lane.b32.xlu0 %v563, 64
        %v1513 = vpop.permute.xlu0 %1512
        %1516 = vrot.lane.b32.xlu0 %v532, 64
        %v1517 = vpop.permute.xlu0 %1516
        %1519 = vmatprep.subr.bf16.mxu0 0
        %1520 = vmatpush1.bf16.msra.mxu0 %v1511
        %1521 = vmatprep.subr.bf16.mxu0 0
        %1522 = vmatpush1.bf16.msra.mxu0 %v1513
        %1523 = vmatprep.subr.bf16.mxu0 0
        %1524 = vmatpush1.bf16.msra.mxu0 0
        %1525 = vmatprep.subr.bf16.mxu0 0
        %1526 = vmatpush1.bf16.msra.mxu0 0
        %1527 = vmatprep.subr.bf16.mxu0 0
        %1528 = vmatpush1.bf16.msra.mxu0 0
        %1529 = vmatprep.subr.bf16.mxu0 0
        %1530 = vmatpush1.bf16.msra.mxu0 0
        %1531 = vmatprep.subr.bf16.mxu0 0
        %1532 = vmatpush1.bf16.msra.mxu0 0
        %1533 = vmatprep.subr.bf16.mxu0 0
        %1534 = vmatpush1.bf16.msra.mxu0 0
        %1535 = vmatprep.subr.bf16.mxu0 0
        %1536 = vmatpush1.bf16.msra.mxu0 0
        %1537 = vmatprep.subr.bf16.mxu0 0
        %1538 = vmatpush1.bf16.msra.mxu0 0
        %1539 = vmatprep.subr.bf16.mxu0 0
        %1540 = vmatpush1.bf16.msra.mxu0 0
        %1541 = vmatprep.subr.bf16.mxu0 0
        %1542 = vmatpush1.bf16.msra.mxu0 0
        %1543 = vmatprep.subr.bf16.mxu0 0
        %1544 = vmatpush1.bf16.msra.mxu0 0
        %1545 = vmatprep.subr.bf16.mxu0 0
        %1546 = vmatpush1.bf16.msra.mxu0 0
        %1547 = vmatprep.subr.bf16.mxu0 0
        %1548 = vmatpush1.bf16.msra.mxu0 0
        %1549 = vmatprep.subr.bf16.mxu0 0
        %1550 = vmatpush1.bf16.msra.mxu0 0
        %1551 = vmatprep.mubr.bf16.mxu0 0
        %1552 = vmatmul.mubr.bf16.gmra.mrb[0].mxu0 %v568
        %v1553 = vpop.f32.mrb[0].mxu0
        %v1554 = vadd.f32 %v1517, %v1553
        %v1555 = vpop.f32.mrb[0].mxu0
        %v1556 = vpop.f32.mrb[0].mxu0
        %v1557 = vadd.f32 %v1517, %v1556
        %v1558 = vpop.f32.mrb[0].mxu0
        %1559 = vmatprep.mubr.bf16.mxu0 0
        %1560 = vmatmul.mubr.bf16.gmra.mrb[0].mxu0 %v571
        %v1561 = vpop.f32.mrb[0].mxu0
        %v1562 = vadd.f32 %v1517, %v1561
        %v1563 = vpop.f32.mrb[0].mxu0
        %v1564 = vpop.f32.mrb[0].mxu0
        %v1565 = vadd.f32 %v1517, %v1564
        %v1566 = vpop.f32.mrb[0].mxu0
        %1567 = vmatprep.mubr.bf16.mxu0 0
        %1568 = vmatmul.mubr.bf16.gmra.mrb[0].mxu0 %v574
        %v1569 = vpop.f32.mrb[0].mxu0
        %v1570 = vadd.f32 %v1517, %v1569
        %v1571 = vpop.f32.mrb[0].mxu0
        %v1572 = vpop.f32.mrb[0].mxu0
        %v1573 = vadd.f32 %v1517, %v1572
        %v1574 = vpop.f32.mrb[0].mxu0
        %1575 = vmatprep.mubr.bf16.mxu0 0
        %1576 = vmatmul.mubr.bf16.gmra.mrb[0].mxu0 %v577
        %v1577 = vpop.f32.mrb[0].mxu0
        %v1578 = vadd.f32 %v1517, %v1577
        %v1579 = vpop.f32.mrb[0].mxu0
        %v1580 = vpop.f32.mrb[0].mxu0
        %v1581 = vadd.f32 %v1517, %v1580
        %v1582 = vpop.f32.mrb[0].mxu0
        %1583 = vdwg.mxu0
        %v1584 = vmul.f32 %v644, %v1554
        %v1585 = vmul.f32 %v645, %v1557
        %v1586 = vmul.f32 %v646, %v1562
        %v1587 = vmul.f32 %v647, %v1565
        %v1588 = vmul.f32 %v648, %v1570
        %v1589 = vmul.f32 %v649, %v1573
        %v1590 = vmul.f32 %v650, %v1578
        %v1591 = vmul.f32 %v651, %v1581
        %v1592 = vsel %vm566, %v1584, 0.0
        %1593 = vadd.xlane.f32.xlu0 %v1592
        %v1594 = vpop.xlane.xlu0 %1593
        %v1595 = vsel %vm566, %v1585, 0.0
        %1596 = vadd.xlane.f32.xlu0 %v1595
        %v1597 = vpop.xlane.xlu0 %1596
        %v1598 = vsel %vm566, %v1586, 0.0
        %1599 = vadd.xlane.f32.xlu0 %v1598
        %v1600 = vpop.xlane.xlu0 %1599
        %v1601 = vsel %vm566, %v1587, 0.0
        %1602 = vadd.xlane.f32.xlu0 %v1601
        %v1603 = vpop.xlane.xlu0 %1602
        %v1604 = vsel %vm566, %v1588, 0.0
        %1605 = vadd.xlane.f32.xlu0 %v1604
        %v1606 = vpop.xlane.xlu0 %1605
        %v1607 = vsel %vm566, %v1589, 0.0
        %1608 = vadd.xlane.f32.xlu0 %v1607
        %v1609 = vpop.xlane.xlu0 %1608
        %v1610 = vsel %vm566, %v1590, 0.0
        %1611 = vadd.xlane.f32.xlu0 %v1610
        %v1612 = vpop.xlane.xlu0 %1611
        %v1613 = vsel %vm566, %v1591, 0.0
        %1614 = vadd.xlane.f32.xlu0 %v1613
        %v1615 = vpop.xlane.xlu0 %1614
        %v1616 = vtanh.pop %v1594
        %v1617 = vtanh.pop %v1597
        %v1618 = vtanh.pop %v1600
        %v1619 = vtanh.pop %v1603
        %v1620 = vtanh.pop %v1606
        %v1621 = vtanh.pop %v1609
        %v1622 = vtanh.pop %v1612
        %v1623 = vtanh.pop %v1615
        %v1624 = vmul.f32 %v1616, %v699
        %v1625 = vmul.f32 %v1617, %v706
        %v1626 = vmul.f32 %v1618, %v713
        %v1627 = vmul.f32 %v1619, %v720
        %v1628 = vmul.f32 %v1620, %v727
        %v1629 = vmul.f32 %v1621, %v734
        %v1630 = vmul.f32 %v1622, %v741
        %v1631 = vmul.f32 %v1623, %v748
        %v1632 = vadd.f32 %v1624, %v774
        %v1633 = vadd.f32 %v1625, %v781
        %v1634 = vadd.f32 %v1626, %v788
        %v1635 = vadd.f32 %v1627, %v795
        %v1636 = vadd.f32 %v1628, %v802
        %v1637 = vadd.f32 %v1629, %v809
        %v1638 = vadd.f32 %v1630, %v816
        %v1639 = vadd.f32 %v1631, %v823
        %1648 = vset.pattern.permute.xlu0 0
        %1649 = vperm.xlu0 %1648, %v1632
        %v1650 = vpop.permute.xlu0 %1649
        %1651 = vset.pattern.permute.xlu0 0
        %1652 = vperm.xlu0 %1651, %v1633
        %v1653 = vpop.permute.xlu0 %1652
        %1654 = vset.pattern.permute.xlu0 0
        %1655 = vperm.xlu0 %1654, %v1634
        %v1656 = vpop.permute.xlu0 %1655
        %1657 = vset.pattern.permute.xlu0 0
        %1658 = vperm.xlu0 %1657, %v1635
        %v1659 = vpop.permute.xlu0 %1658
        %1660 = vset.pattern.permute.xlu0 0
        %1661 = vperm.xlu0 %1660, %v1636
        %v1662 = vpop.permute.xlu0 %1661
        %1663 = vset.pattern.permute.xlu0 0
        %1664 = vperm.xlu0 %1663, %v1637
        %v1665 = vpop.permute.xlu0 %1664
        %1666 = vset.pattern.permute.xlu0 0
        %1667 = vperm.xlu0 %1666, %v1638
        %v1668 = vpop.permute.xlu0 %1667
        %1669 = vset.pattern.permute.xlu0 0
        %1670 = vperm.xlu0 %1669, %v1639
        %v1671 = vpop.permute.xlu0 %1670
        %v1672 = vlaneseq
        %v1673 = vshrl.u32 %v1672, 7
        %v1674 = vsub.s32 %v873, %v1673
        %v1675 = vrot.slane %v1650, %v1674
        %v1676 = vlaneseq
        %v1677 = vshrl.u32 %v1676, 7
        %v1678 = vsub.s32 %v873, %v1677
        %v1679 = vrot.slane %v1653, %v1678
        %v1680 = vlaneseq
        %v1681 = vshrl.u32 %v1680, 7
        %v1682 = vsub.s32 %v873, %v1681
        %v1683 = vrot.slane %v1656, %v1682
        %v1684 = vlaneseq
        %v1685 = vshrl.u32 %v1684, 7
        %v1686 = vsub.s32 %v873, %v1685
        %v1687 = vrot.slane %v1659, %v1686
        %v1688 = vlaneseq
        %v1689 = vshrl.u32 %v1688, 7
        %v1690 = vsub.s32 %v873, %v1689
        %v1691 = vrot.slane %v1662, %v1690
        %v1692 = vlaneseq
        %v1693 = vshrl.u32 %v1692, 7
        %v1694 = vsub.s32 %v873, %v1693
        %v1695 = vrot.slane %v1665, %v1694
        %v1696 = vlaneseq
        %v1697 = vshrl.u32 %v1696, 7
        %v1698 = vsub.s32 %v873, %v1697
        %v1699 = vrot.slane %v1668, %v1698
        %v1700 = vlaneseq
        %v1701 = vshrl.u32 %v1700, 7
        %v1702 = vsub.s32 %v873, %v1701
        %v1703 = vrot.slane %v1671, %v1702
        %v1704 = vsel %vm906, %v1679, %v1675
        %v1705 = vsel %vm908, %v1683, %v1704
        %v1706 = vsel %vm910, %v1687, %v1705
        %v1707 = vsel %vm912, %v1691, %v1706
        %v1708 = vsel %vm914, %v1695, %v1707
        %v1709 = vsel %vm916, %v1699, %v1708
        %v1710 = vsel %vm918, %v1703, %v1709
        %v1712 = vsel %vm921, %v1710, -inf
        %1713 = vmax.xlane.f32.xlu0 %v1712
        %v1714 = vpop.xlane.xlu0 %1713
        %v1716 = vlaneseq
        %v1717 = vshrl.u32 %v1716, 7
        %v1718 = vsub.s32 0, %v1717
        %v1719 = vrot.slane %v1714, %v1718
        %v1720 = vlaneseq
        %v1721 = vshrl.u32 %v1720, 7
        %v1722 = vsub.s32 1, %v1721
        %v1723 = vrot.slane %v1714, %v1722
        %v1724 = vlaneseq
        %v1725 = vshrl.u32 %v1724, 7
        %v1726 = vsub.s32 2, %v1725
        %v1727 = vrot.slane %v1714, %v1726
        %v1728 = vlaneseq
        %v1729 = vshrl.u32 %v1728, 7
        %v1730 = vsub.s32 3, %v1729
        %v1731 = vrot.slane %v1714, %v1730
        %v1732 = vlaneseq
        %v1733 = vshrl.u32 %v1732, 7
        %v1734 = vsub.s32 4, %v1733
        %v1735 = vrot.slane %v1714, %v1734
        %v1736 = vlaneseq
        %v1737 = vshrl.u32 %v1736, 7
        %v1738 = vsub.s32 5, %v1737
        %v1739 = vrot.slane %v1714, %v1738
        %v1740 = vlaneseq
        %v1741 = vshrl.u32 %v1740, 7
        %v1742 = vsub.s32 6, %v1741
        %v1743 = vrot.slane %v1714, %v1742
        %v1744 = vlaneseq
        %v1745 = vshrl.u32 %v1744, 7
        %v1746 = vsub.s32 7, %v1745
        %v1747 = vrot.slane %v1714, %v1746
        %v1756 = vsub.f32 %v1632, %v1719
        %v1757 = vsub.f32 %v1633, %v1723
        %v1758 = vsub.f32 %v1634, %v1727
        %v1759 = vsub.f32 %v1635, %v1731
        %v1760 = vsub.f32 %v1636, %v1735
        %v1761 = vsub.f32 %v1637, %v1739
        %v1762 = vsub.f32 %v1638, %v1743
        %v1763 = vsub.f32 %v1639, %v1747
        %v1764 = vmul.f32 %v1756, 1.442695
        %v1765 = vpow.pop %v1764
        %v1766 = vmul.f32 %v1757, 1.442695
        %v1767 = vpow.pop %v1766
        %v1768 = vmul.f32 %v1758, 1.442695
        %v1769 = vpow.pop %v1768
        %v1770 = vmul.f32 %v1759, 1.442695
        %v1771 = vpow.pop %v1770
        %v1772 = vmul.f32 %v1760, 1.442695
        %v1773 = vpow.pop %v1772
        %v1774 = vmul.f32 %v1761, 1.442695
        %v1775 = vpow.pop %v1774
        %v1776 = vmul.f32 %v1762, 1.442695
        %v1777 = vpow.pop %v1776
        %v1778 = vmul.f32 %v1763, 1.442695
        %v1779 = vpow.pop %v1778
        %1788 = vset.pattern.permute.xlu0 0
        %1789 = vperm.xlu0 %1788, %v1765
        %v1790 = vpop.permute.xlu0 %1789
        %1791 = vset.pattern.permute.xlu0 0
        %1792 = vperm.xlu0 %1791, %v1767
        %v1793 = vpop.permute.xlu0 %1792
        %1794 = vset.pattern.permute.xlu0 0
        %1795 = vperm.xlu0 %1794, %v1769
        %v1796 = vpop.permute.xlu0 %1795
        %1797 = vset.pattern.permute.xlu0 0
        %1798 = vperm.xlu0 %1797, %v1771
        %v1799 = vpop.permute.xlu0 %1798
        %1800 = vset.pattern.permute.xlu0 0
        %1801 = vperm.xlu0 %1800, %v1773
        %v1802 = vpop.permute.xlu0 %1801
        %1803 = vset.pattern.permute.xlu0 0
        %1804 = vperm.xlu0 %1803, %v1775
        %v1805 = vpop.permute.xlu0 %1804
        %1806 = vset.pattern.permute.xlu0 0
        %1807 = vperm.xlu0 %1806, %v1777
        %v1808 = vpop.permute.xlu0 %1807
        %1809 = vset.pattern.permute.xlu0 0
        %1810 = vperm.xlu0 %1809, %v1779
        %v1811 = vpop.permute.xlu0 %1810
        %v1812 = vlaneseq
        %v1813 = vshrl.u32 %v1812, 7
        %v1814 = vsub.s32 %v873, %v1813
        %v1815 = vrot.slane %v1790, %v1814
        %v1816 = vlaneseq
        %v1817 = vshrl.u32 %v1816, 7
        %v1818 = vsub.s32 %v873, %v1817
        %v1819 = vrot.slane %v1793, %v1818
        %v1820 = vlaneseq
        %v1821 = vshrl.u32 %v1820, 7
        %v1822 = vsub.s32 %v873, %v1821
        %v1823 = vrot.slane %v1796, %v1822
        %v1824 = vlaneseq
        %v1825 = vshrl.u32 %v1824, 7
        %v1826 = vsub.s32 %v873, %v1825
        %v1827 = vrot.slane %v1799, %v1826
        %v1828 = vlaneseq
        %v1829 = vshrl.u32 %v1828, 7
        %v1830 = vsub.s32 %v873, %v1829
        %v1831 = vrot.slane %v1802, %v1830
        %v1832 = vlaneseq
        %v1833 = vshrl.u32 %v1832, 7
        %v1834 = vsub.s32 %v873, %v1833
        %v1835 = vrot.slane %v1805, %v1834
        %v1836 = vlaneseq
        %v1837 = vshrl.u32 %v1836, 7
        %v1838 = vsub.s32 %v873, %v1837
        %v1839 = vrot.slane %v1808, %v1838
        %v1840 = vlaneseq
        %v1841 = vshrl.u32 %v1840, 7
        %v1842 = vsub.s32 %v873, %v1841
        %v1843 = vrot.slane %v1811, %v1842
        %v1844 = vsel %vm906, %v1819, %v1815
        %v1845 = vsel %vm908, %v1823, %v1844
        %v1846 = vsel %vm910, %v1827, %v1845
        %v1847 = vsel %vm912, %v1831, %v1846
        %v1848 = vsel %vm914, %v1835, %v1847
        %v1849 = vsel %vm916, %v1839, %v1848
        %v1850 = vsel %vm918, %v1843, %v1849
        %v1852 = vsel %vm921, %v1850, 0.0
        %1853 = vadd.xlane.f32.xlu0 %v1852
        %v1854 = vpop.xlane.xlu0 %1853
        %v1855 = vrcp.pop %v1854
        %v1857 = vlaneseq
        %v1858 = vshrl.u32 %v1857, 7
        %v1859 = vsub.s32 0, %v1858
        %v1860 = vrot.slane %v1855, %v1859
        %v1861 = vlaneseq
        %v1862 = vshrl.u32 %v1861, 7
        %v1863 = vsub.s32 1, %v1862
        %v1864 = vrot.slane %v1855, %v1863
        %v1865 = vlaneseq
        %v1866 = vshrl.u32 %v1865, 7
        %v1867 = vsub.s32 2, %v1866
        %v1868 = vrot.slane %v1855, %v1867
        %v1869 = vlaneseq
        %v1870 = vshrl.u32 %v1869, 7
        %v1871 = vsub.s32 3, %v1870
        %v1872 = vrot.slane %v1855, %v1871
        %v1873 = vlaneseq
        %v1874 = vshrl.u32 %v1873, 7
        %v1875 = vsub.s32 4, %v1874
        %v1876 = vrot.slane %v1855, %v1875
        %v1877 = vlaneseq
        %v1878 = vshrl.u32 %v1877, 7
        %v1879 = vsub.s32 5, %v1878
        %v1880 = vrot.slane %v1855, %v1879
        %v1881 = vlaneseq
        %v1882 = vshrl.u32 %v1881, 7
        %v1883 = vsub.s32 6, %v1882
        %v1884 = vrot.slane %v1855, %v1883
        %v1885 = vlaneseq
        %v1886 = vshrl.u32 %v1885, 7
        %v1887 = vsub.s32 7, %v1886
        %v1888 = vrot.slane %v1855, %v1887
        %v1897 = vmul.f32 %v1765, %v1860
        %v1898 = vmul.f32 %v1767, %v1864
        %v1899 = vmul.f32 %v1769, %v1868
        %v1900 = vmul.f32 %v1771, %v1872
        %v1901 = vmul.f32 %v1773, %v1876
        %v1902 = vmul.f32 %v1775, %v1880
        %v1903 = vmul.f32 %v1777, %v1884
        %v1904 = vmul.f32 %v1779, %v1888
        %1905 = vrot.lane.b32.xlu0 %v562, 32
        %v1906 = vpop.permute.xlu0 %1905
        %1907 = vrot.lane.b32.xlu0 %v563, 32
        %v1908 = vpop.permute.xlu0 %1907
        %1911 = vrot.lane.b32.xlu0 %v532, 32
        %v1912 = vpop.permute.xlu0 %1911
        %1914 = vmatprep.subr.bf16.mxu0 0
        %1915 = vmatpush1.bf16.msra.mxu0 %v1906
        %1916 = vmatprep.subr.bf16.mxu0 0
        %1917 = vmatpush1.bf16.msra.mxu0 %v1908
        %1918 = vmatprep.subr.bf16.mxu0 0
        %1919 = vmatpush1.bf16.msra.mxu0 0
        %1920 = vmatprep.subr.bf16.mxu0 0
        %1921 = vmatpush1.bf16.msra.mxu0 0
        %1922 = vmatprep.subr.bf16.mxu0 0
        %1923 = vmatpush1.bf16.msra.mxu0 0
        %1924 = vmatprep.subr.bf16.mxu0 0
        %1925 = vmatpush1.bf16.msra.mxu0 0
        %1926 = vmatprep.subr.bf16.mxu0 0
        %1927 = vmatpush1.bf16.msra.mxu0 0
        %1928 = vmatprep.subr.bf16.mxu0 0
        %1929 = vmatpush1.bf16.msra.mxu0 0
        %1930 = vmatprep.subr.bf16.mxu0 0
        %1931 = vmatpush1.bf16.msra.mxu0 0
        %1932 = vmatprep.subr.bf16.mxu0 0
        %1933 = vmatpush1.bf16.msra.mxu0 0
        %1934 = vmatprep.subr.bf16.mxu0 0
        %1935 = vmatpush1.bf16.msra.mxu0 0
        %1936 = vmatprep.subr.bf16.mxu0 0
        %1937 = vmatpush1.bf16.msra.mxu0 0
        %1938 = vmatprep.subr.bf16.mxu0 0
        %1939 = vmatpush1.bf16.msra.mxu0 0
        %1940 = vmatprep.subr.bf16.mxu0 0
        %1941 = vmatpush1.bf16.msra.mxu0 0
        %1942 = vmatprep.subr.bf16.mxu0 0
        %1943 = vmatpush1.bf16.msra.mxu0 0
        %1944 = vmatprep.subr.bf16.mxu0 0
        %1945 = vmatpush1.bf16.msra.mxu0 0
        %1946 = vmatprep.mubr.bf16.mxu0 0
        %1947 = vmatmul.mubr.bf16.gmra.mrb[0].mxu0 %v568
        %v1948 = vpop.f32.mrb[0].mxu0
        %v1949 = vadd.f32 %v1912, %v1948
        %v1950 = vpop.f32.mrb[0].mxu0
        %v1951 = vpop.f32.mrb[0].mxu0
        %v1952 = vadd.f32 %v1912, %v1951
        %v1953 = vpop.f32.mrb[0].mxu0
        %1954 = vmatprep.mubr.bf16.mxu0 0
        %1955 = vmatmul.mubr.bf16.gmra.mrb[0].mxu0 %v571
        %v1956 = vpop.f32.mrb[0].mxu0
        %v1957 = vadd.f32 %v1912, %v1956
        %v1958 = vpop.f32.mrb[0].mxu0
        %v1959 = vpop.f32.mrb[0].mxu0
        %v1960 = vadd.f32 %v1912, %v1959
        %v1961 = vpop.f32.mrb[0].mxu0
        %1962 = vmatprep.mubr.bf16.mxu0 0
        %1963 = vmatmul.mubr.bf16.gmra.mrb[0].mxu0 %v574
        %v1964 = vpop.f32.mrb[0].mxu0
        %v1965 = vadd.f32 %v1912, %v1964
        %v1966 = vpop.f32.mrb[0].mxu0
        %v1967 = vpop.f32.mrb[0].mxu0
        %v1968 = vadd.f32 %v1912, %v1967
        %v1969 = vpop.f32.mrb[0].mxu0
        %1970 = vmatprep.mubr.bf16.mxu0 0
        %1971 = vmatmul.mubr.bf16.gmra.mrb[0].mxu0 %v577
        %v1972 = vpop.f32.mrb[0].mxu0
        %v1973 = vadd.f32 %v1912, %v1972
        %v1974 = vpop.f32.mrb[0].mxu0
        %v1975 = vpop.f32.mrb[0].mxu0
        %v1976 = vadd.f32 %v1912, %v1975
        %v1977 = vpop.f32.mrb[0].mxu0
        %1978 = vdwg.mxu0
        %v1979 = vmul.f32 %v644, %v1949
        %v1980 = vmul.f32 %v645, %v1952
        %v1981 = vmul.f32 %v646, %v1957
        %v1982 = vmul.f32 %v647, %v1960
        %v1983 = vmul.f32 %v648, %v1965
        %v1984 = vmul.f32 %v649, %v1968
        %v1985 = vmul.f32 %v650, %v1973
        %v1986 = vmul.f32 %v651, %v1976
        %v1987 = vsel %vm566, %v1979, 0.0
        %1988 = vadd.xlane.f32.xlu0 %v1987
        %v1989 = vpop.xlane.xlu0 %1988
        %v1990 = vsel %vm566, %v1980, 0.0
        %1991 = vadd.xlane.f32.xlu0 %v1990
        %v1992 = vpop.xlane.xlu0 %1991
        %v1993 = vsel %vm566, %v1981, 0.0
        %1994 = vadd.xlane.f32.xlu0 %v1993
        %v1995 = vpop.xlane.xlu0 %1994
        %v1996 = vsel %vm566, %v1982, 0.0
        %1997 = vadd.xlane.f32.xlu0 %v1996
        %v1998 = vpop.xlane.xlu0 %1997
        %v1999 = vsel %vm566, %v1983, 0.0
        %2000 = vadd.xlane.f32.xlu0 %v1999
        %v2001 = vpop.xlane.xlu0 %2000
        %v2002 = vsel %vm566, %v1984, 0.0
        %2003 = vadd.xlane.f32.xlu0 %v2002
        %v2004 = vpop.xlane.xlu0 %2003
        %v2005 = vsel %vm566, %v1985, 0.0
        %2006 = vadd.xlane.f32.xlu0 %v2005
        %v2007 = vpop.xlane.xlu0 %2006
        %v2008 = vsel %vm566, %v1986, 0.0
        %2009 = vadd.xlane.f32.xlu0 %v2008
        %v2010 = vpop.xlane.xlu0 %2009
        %v2011 = vtanh.pop %v1989
        %v2012 = vtanh.pop %v1992
        %v2013 = vtanh.pop %v1995
        %v2014 = vtanh.pop %v1998
        %v2015 = vtanh.pop %v2001
        %v2016 = vtanh.pop %v2004
        %v2017 = vtanh.pop %v2007
        %v2018 = vtanh.pop %v2010
        %v2019 = vmul.f32 %v2011, %v699
        %v2020 = vmul.f32 %v2012, %v706
        %v2021 = vmul.f32 %v2013, %v713
        %v2022 = vmul.f32 %v2014, %v720
        %v2023 = vmul.f32 %v2015, %v727
        %v2024 = vmul.f32 %v2016, %v734
        %v2025 = vmul.f32 %v2017, %v741
        %v2026 = vmul.f32 %v2018, %v748
        %v2027 = vadd.f32 %v2019, %v774
        %v2028 = vadd.f32 %v2020, %v781
        %v2029 = vadd.f32 %v2021, %v788
        %v2030 = vadd.f32 %v2022, %v795
        %v2031 = vadd.f32 %v2023, %v802
        %v2032 = vadd.f32 %v2024, %v809
        %v2033 = vadd.f32 %v2025, %v816
        %v2034 = vadd.f32 %v2026, %v823
        %2043 = vset.pattern.permute.xlu0 0
        %2044 = vperm.xlu0 %2043, %v2027
        %v2045 = vpop.permute.xlu0 %2044
        %2046 = vset.pattern.permute.xlu0 0
        %2047 = vperm.xlu0 %2046, %v2028
        %v2048 = vpop.permute.xlu0 %2047
        %2049 = vset.pattern.permute.xlu0 0
        %2050 = vperm.xlu0 %2049, %v2029
        %v2051 = vpop.permute.xlu0 %2050
        %2052 = vset.pattern.permute.xlu0 0
        %2053 = vperm.xlu0 %2052, %v2030
        %v2054 = vpop.permute.xlu0 %2053
        %2055 = vset.pattern.permute.xlu0 0
        %2056 = vperm.xlu0 %2055, %v2031
        %v2057 = vpop.permute.xlu0 %2056
        %2058 = vset.pattern.permute.xlu0 0
        %2059 = vperm.xlu0 %2058, %v2032
        %v2060 = vpop.permute.xlu0 %2059
        %2061 = vset.pattern.permute.xlu0 0
        %2062 = vperm.xlu0 %2061, %v2033
        %v2063 = vpop.permute.xlu0 %2062
        %2064 = vset.pattern.permute.xlu0 0
        %2065 = vperm.xlu0 %2064, %v2034
        %v2066 = vpop.permute.xlu0 %2065
        %v2067 = vlaneseq
        %v2068 = vshrl.u32 %v2067, 7
        %v2069 = vsub.s32 %v873, %v2068
        %v2070 = vrot.slane %v2045, %v2069
        %v2071 = vlaneseq
        %v2072 = vshrl.u32 %v2071, 7
        %v2073 = vsub.s32 %v873, %v2072
        %v2074 = vrot.slane %v2048, %v2073
        %v2075 = vlaneseq
        %v2076 = vshrl.u32 %v2075, 7
        %v2077 = vsub.s32 %v873, %v2076
        %v2078 = vrot.slane %v2051, %v2077
        %v2079 = vlaneseq
        %v2080 = vshrl.u32 %v2079, 7
        %v2081 = vsub.s32 %v873, %v2080
        %v2082 = vrot.slane %v2054, %v2081
        %v2083 = vlaneseq
        %v2084 = vshrl.u32 %v2083, 7
        %v2085 = vsub.s32 %v873, %v2084
        %v2086 = vrot.slane %v2057, %v2085
        %v2087 = vlaneseq
        %v2088 = vshrl.u32 %v2087, 7
        %v2089 = vsub.s32 %v873, %v2088
        %v2090 = vrot.slane %v2060, %v2089
        %v2091 = vlaneseq
        %v2092 = vshrl.u32 %v2091, 7
        %v2093 = vsub.s32 %v873, %v2092
        %v2094 = vrot.slane %v2063, %v2093
        %v2095 = vlaneseq
        %v2096 = vshrl.u32 %v2095, 7
        %v2097 = vsub.s32 %v873, %v2096
        %v2098 = vrot.slane %v2066, %v2097
        %v2099 = vsel %vm906, %v2074, %v2070
        %v2100 = vsel %vm908, %v2078, %v2099
        %v2101 = vsel %vm910, %v2082, %v2100
        %v2102 = vsel %vm912, %v2086, %v2101
        %v2103 = vsel %vm914, %v2090, %v2102
        %v2104 = vsel %vm916, %v2094, %v2103
        %v2105 = vsel %vm918, %v2098, %v2104
        %v2107 = vsel %vm921, %v2105, -inf
        %2108 = vmax.xlane.f32.xlu0 %v2107
        %v2109 = vpop.xlane.xlu0 %2108
        %v2111 = vlaneseq
        %v2112 = vshrl.u32 %v2111, 7
        %v2113 = vsub.s32 0, %v2112
        %v2114 = vrot.slane %v2109, %v2113
        %v2115 = vlaneseq
        %v2116 = vshrl.u32 %v2115, 7
        %v2117 = vsub.s32 1, %v2116
        %v2118 = vrot.slane %v2109, %v2117
        %v2119 = vlaneseq
        %v2120 = vshrl.u32 %v2119, 7
        %v2121 = vsub.s32 2, %v2120
        %v2122 = vrot.slane %v2109, %v2121
        %v2123 = vlaneseq
        %v2124 = vshrl.u32 %v2123, 7
        %v2125 = vsub.s32 3, %v2124
        %v2126 = vrot.slane %v2109, %v2125
        %v2127 = vlaneseq
        %v2128 = vshrl.u32 %v2127, 7
        %v2129 = vsub.s32 4, %v2128
        %v2130 = vrot.slane %v2109, %v2129
        %v2131 = vlaneseq
        %v2132 = vshrl.u32 %v2131, 7
        %v2133 = vsub.s32 5, %v2132
        %v2134 = vrot.slane %v2109, %v2133
        %v2135 = vlaneseq
        %v2136 = vshrl.u32 %v2135, 7
        %v2137 = vsub.s32 6, %v2136
        %v2138 = vrot.slane %v2109, %v2137
        %v2139 = vlaneseq
        %v2140 = vshrl.u32 %v2139, 7
        %v2141 = vsub.s32 7, %v2140
        %v2142 = vrot.slane %v2109, %v2141
        %v2151 = vsub.f32 %v2027, %v2114
        %v2152 = vsub.f32 %v2028, %v2118
        %v2153 = vsub.f32 %v2029, %v2122
        %v2154 = vsub.f32 %v2030, %v2126
        %v2155 = vsub.f32 %v2031, %v2130
        %v2156 = vsub.f32 %v2032, %v2134
        %v2157 = vsub.f32 %v2033, %v2138
        %v2158 = vsub.f32 %v2034, %v2142
        %v2159 = vmul.f32 %v2151, 1.442695
        %v2160 = vpow.pop %v2159
        %v2161 = vmul.f32 %v2152, 1.442695
        %v2162 = vpow.pop %v2161
        %v2163 = vmul.f32 %v2153, 1.442695
        %v2164 = vpow.pop %v2163
        %v2165 = vmul.f32 %v2154, 1.442695
        %v2166 = vpow.pop %v2165
        %v2167 = vmul.f32 %v2155, 1.442695
        %v2168 = vpow.pop %v2167
        %v2169 = vmul.f32 %v2156, 1.442695
        %v2170 = vpow.pop %v2169
        %v2171 = vmul.f32 %v2157, 1.442695
        %v2172 = vpow.pop %v2171
        %v2173 = vmul.f32 %v2158, 1.442695
        %v2174 = vpow.pop %v2173
        %2183 = vset.pattern.permute.xlu0 0
        %2184 = vperm.xlu0 %2183, %v2160
        %v2185 = vpop.permute.xlu0 %2184
        %2186 = vset.pattern.permute.xlu0 0
        %2187 = vperm.xlu0 %2186, %v2162
        %v2188 = vpop.permute.xlu0 %2187
        %2189 = vset.pattern.permute.xlu0 0
        %2190 = vperm.xlu0 %2189, %v2164
        %v2191 = vpop.permute.xlu0 %2190
        %2192 = vset.pattern.permute.xlu0 0
        %2193 = vperm.xlu0 %2192, %v2166
        %v2194 = vpop.permute.xlu0 %2193
        %2195 = vset.pattern.permute.xlu0 0
        %2196 = vperm.xlu0 %2195, %v2168
        %v2197 = vpop.permute.xlu0 %2196
        %2198 = vset.pattern.permute.xlu0 0
        %2199 = vperm.xlu0 %2198, %v2170
        %v2200 = vpop.permute.xlu0 %2199
        %2201 = vset.pattern.permute.xlu0 0
        %2202 = vperm.xlu0 %2201, %v2172
        %v2203 = vpop.permute.xlu0 %2202
        %2204 = vset.pattern.permute.xlu0 0
        %2205 = vperm.xlu0 %2204, %v2174
        %v2206 = vpop.permute.xlu0 %2205
        %v2207 = vlaneseq
        %v2208 = vshrl.u32 %v2207, 7
        %v2209 = vsub.s32 %v873, %v2208
        %v2210 = vrot.slane %v2185, %v2209
        %v2211 = vlaneseq
        %v2212 = vshrl.u32 %v2211, 7
        %v2213 = vsub.s32 %v873, %v2212
        %v2214 = vrot.slane %v2188, %v2213
        %v2215 = vlaneseq
        %v2216 = vshrl.u32 %v2215, 7
        %v2217 = vsub.s32 %v873, %v2216
        %v2218 = vrot.slane %v2191, %v2217
        %v2219 = vlaneseq
        %v2220 = vshrl.u32 %v2219, 7
        %v2221 = vsub.s32 %v873, %v2220
        %v2222 = vrot.slane %v2194, %v2221
        %v2223 = vlaneseq
        %v2224 = vshrl.u32 %v2223, 7
        %v2225 = vsub.s32 %v873, %v2224
        %v2226 = vrot.slane %v2197, %v2225
        %v2227 = vlaneseq
        %v2228 = vshrl.u32 %v2227, 7
        %v2229 = vsub.s32 %v873, %v2228
        %v2230 = vrot.slane %v2200, %v2229
        %v2231 = vlaneseq
        %v2232 = vshrl.u32 %v2231, 7
        %v2233 = vsub.s32 %v873, %v2232
        %v2234 = vrot.slane %v2203, %v2233
        %v2235 = vlaneseq
        %v2236 = vshrl.u32 %v2235, 7
        %v2237 = vsub.s32 %v873, %v2236
        %v2238 = vrot.slane %v2206, %v2237
        %v2239 = vsel %vm906, %v2214, %v2210
        %v2240 = vsel %vm908, %v2218, %v2239
        %v2241 = vsel %vm910, %v2222, %v2240
        %v2242 = vsel %vm912, %v2226, %v2241
        %v2243 = vsel %vm914, %v2230, %v2242
        %v2244 = vsel %vm916, %v2234, %v2243
        %v2245 = vsel %vm918, %v2238, %v2244
        %v2247 = vsel %vm921, %v2245, 0.0
        %2248 = vadd.xlane.f32.xlu0 %v2247
        %v2249 = vpop.xlane.xlu0 %2248
        %v2250 = vrcp.pop %v2249
        %v2252 = vlaneseq
        %v2253 = vshrl.u32 %v2252, 7
        %v2254 = vsub.s32 0, %v2253
        %v2255 = vrot.slane %v2250, %v2254
        %v2256 = vlaneseq
        %v2257 = vshrl.u32 %v2256, 7
        %v2258 = vsub.s32 1, %v2257
        %v2259 = vrot.slane %v2250, %v2258
        %v2260 = vlaneseq
        %v2261 = vshrl.u32 %v2260, 7
        %v2262 = vsub.s32 2, %v2261
        %v2263 = vrot.slane %v2250, %v2262
        %v2264 = vlaneseq
        %v2265 = vshrl.u32 %v2264, 7
        %v2266 = vsub.s32 3, %v2265
        %v2267 = vrot.slane %v2250, %v2266
        %v2268 = vlaneseq
        %v2269 = vshrl.u32 %v2268, 7
        %v2270 = vsub.s32 4, %v2269
        %v2271 = vrot.slane %v2250, %v2270
        %v2272 = vlaneseq
        %v2273 = vshrl.u32 %v2272, 7
        %v2274 = vsub.s32 5, %v2273
        %v2275 = vrot.slane %v2250, %v2274
        %v2276 = vlaneseq
        %v2277 = vshrl.u32 %v2276, 7
        %v2278 = vsub.s32 6, %v2277
        %v2279 = vrot.slane %v2250, %v2278
        %v2280 = vlaneseq
        %v2281 = vshrl.u32 %v2280, 7
        %v2282 = vsub.s32 7, %v2281
        %v2283 = vrot.slane %v2250, %v2282
        %v2292 = vmul.f32 %v2160, %v2255
        %v2293 = vmul.f32 %v2162, %v2259
        %v2294 = vmul.f32 %v2164, %v2263
        %v2295 = vmul.f32 %v2166, %v2267
        %v2296 = vmul.f32 %v2168, %v2271
        %v2297 = vmul.f32 %v2170, %v2275
        %v2298 = vmul.f32 %v2172, %v2279
        %v2299 = vmul.f32 %v2174, %v2283
        %2308 = vset.pattern.permute.xlu0 0
        %2309 = vperm.xlu0 %2308, %v1107
        %v2310 = vpop.permute.xlu0 %2309
        %2311 = vset.pattern.permute.xlu0 0
        %2312 = vperm.xlu0 %2311, %v1108
        %v2313 = vpop.permute.xlu0 %2312
        %2314 = vset.pattern.permute.xlu0 0
        %2315 = vperm.xlu0 %2314, %v1109
        %v2316 = vpop.permute.xlu0 %2315
        %2317 = vset.pattern.permute.xlu0 0
        %2318 = vperm.xlu0 %2317, %v1110
        %v2319 = vpop.permute.xlu0 %2318
        %2320 = vset.pattern.permute.xlu0 0
        %2321 = vperm.xlu0 %2320, %v1111
        %v2322 = vpop.permute.xlu0 %2321
        %2323 = vset.pattern.permute.xlu0 0
        %2324 = vperm.xlu0 %2323, %v1112
        %v2325 = vpop.permute.xlu0 %2324
        %2326 = vset.pattern.permute.xlu0 0
        %2327 = vperm.xlu0 %2326, %v1113
        %v2328 = vpop.permute.xlu0 %2327
        %2329 = vset.pattern.permute.xlu0 0
        %2330 = vperm.xlu0 %2329, %v1114
        %v2331 = vpop.permute.xlu0 %2330
        %v2332 = vlaneseq
        %v2333 = vshrl.u32 %v2332, 7
        %v2334 = vsub.s32 %v873, %v2333
        %v2335 = vrot.slane %v2310, %v2334
        %v2336 = vlaneseq
        %v2337 = vshrl.u32 %v2336, 7
        %v2338 = vsub.s32 %v873, %v2337
        %v2339 = vrot.slane %v2313, %v2338
        %v2340 = vlaneseq
        %v2341 = vshrl.u32 %v2340, 7
        %v2342 = vsub.s32 %v873, %v2341
        %v2343 = vrot.slane %v2316, %v2342
        %v2344 = vlaneseq
        %v2345 = vshrl.u32 %v2344, 7
        %v2346 = vsub.s32 %v873, %v2345
        %v2347 = vrot.slane %v2319, %v2346
        %v2348 = vlaneseq
        %v2349 = vshrl.u32 %v2348, 7
        %v2350 = vsub.s32 %v873, %v2349
        %v2351 = vrot.slane %v2322, %v2350
        %v2352 = vlaneseq
        %v2353 = vshrl.u32 %v2352, 7
        %v2354 = vsub.s32 %v873, %v2353
        %v2355 = vrot.slane %v2325, %v2354
        %v2356 = vlaneseq
        %v2357 = vshrl.u32 %v2356, 7
        %v2358 = vsub.s32 %v873, %v2357
        %v2359 = vrot.slane %v2328, %v2358
        %v2360 = vlaneseq
        %v2361 = vshrl.u32 %v2360, 7
        %v2362 = vsub.s32 %v873, %v2361
        %v2363 = vrot.slane %v2331, %v2362
        %2380 = vset.pattern.permute.xlu0 0
        %2381 = vperm.xlu0 %2380, %v1502
        %v2382 = vpop.permute.xlu0 %2381
        %2383 = vset.pattern.permute.xlu0 0
        %2384 = vperm.xlu0 %2383, %v1503
        %v2385 = vpop.permute.xlu0 %2384
        %2386 = vset.pattern.permute.xlu0 0
        %2387 = vperm.xlu0 %2386, %v1504
        %v2388 = vpop.permute.xlu0 %2387
        %2389 = vset.pattern.permute.xlu0 0
        %2390 = vperm.xlu0 %2389, %v1505
        %v2391 = vpop.permute.xlu0 %2390
        %2392 = vset.pattern.permute.xlu0 0
        %2393 = vperm.xlu0 %2392, %v1506
        %v2394 = vpop.permute.xlu0 %2393
        %2395 = vset.pattern.permute.xlu0 0
        %2396 = vperm.xlu0 %2395, %v1507
        %v2397 = vpop.permute.xlu0 %2396
        %2398 = vset.pattern.permute.xlu0 0
        %2399 = vperm.xlu0 %2398, %v1508
        %v2400 = vpop.permute.xlu0 %2399
        %2401 = vset.pattern.permute.xlu0 0
        %2402 = vperm.xlu0 %2401, %v1509
        %v2403 = vpop.permute.xlu0 %2402
        %v2404 = vlaneseq
        %v2405 = vshrl.u32 %v2404, 7
        %v2406 = vsub.s32 %v873, %v2405
        %v2407 = vrot.slane %v2382, %v2406
        %v2408 = vlaneseq
        %v2409 = vshrl.u32 %v2408, 7
        %v2410 = vsub.s32 %v873, %v2409
        %v2411 = vrot.slane %v2385, %v2410
        %v2412 = vlaneseq
        %v2413 = vshrl.u32 %v2412, 7
        %v2414 = vsub.s32 %v873, %v2413
        %v2415 = vrot.slane %v2388, %v2414
        %v2416 = vlaneseq
        %v2417 = vshrl.u32 %v2416, 7
        %v2418 = vsub.s32 %v873, %v2417
        %v2419 = vrot.slane %v2391, %v2418
        %v2420 = vlaneseq
        %v2421 = vshrl.u32 %v2420, 7
        %v2422 = vsub.s32 %v873, %v2421
        %v2423 = vrot.slane %v2394, %v2422
        %v2424 = vlaneseq
        %v2425 = vshrl.u32 %v2424, 7
        %v2426 = vsub.s32 %v873, %v2425
        %v2427 = vrot.slane %v2397, %v2426
        %v2428 = vlaneseq
        %v2429 = vshrl.u32 %v2428, 7
        %v2430 = vsub.s32 %v873, %v2429
        %v2431 = vrot.slane %v2400, %v2430
        %v2432 = vlaneseq
        %v2433 = vshrl.u32 %v2432, 7
        %v2434 = vsub.s32 %v873, %v2433
        %v2435 = vrot.slane %v2403, %v2434
        %2452 = vset.pattern.permute.xlu0 0
        %2453 = vperm.xlu0 %2452, %v1897
        %v2454 = vpop.permute.xlu0 %2453
        %2455 = vset.pattern.permute.xlu0 0
        %2456 = vperm.xlu0 %2455, %v1898
        %v2457 = vpop.permute.xlu0 %2456
        %2458 = vset.pattern.permute.xlu0 0
        %2459 = vperm.xlu0 %2458, %v1899
        %v2460 = vpop.permute.xlu0 %2459
        %2461 = vset.pattern.permute.xlu0 0
        %2462 = vperm.xlu0 %2461, %v1900
        %v2463 = vpop.permute.xlu0 %2462
        %2464 = vset.pattern.permute.xlu0 0
        %2465 = vperm.xlu0 %2464, %v1901
        %v2466 = vpop.permute.xlu0 %2465
        %2467 = vset.pattern.permute.xlu0 0
        %2468 = vperm.xlu0 %2467, %v1902
        %v2469 = vpop.permute.xlu0 %2468
        %2470 = vset.pattern.permute.xlu0 0
        %2471 = vperm.xlu0 %2470, %v1903
        %v2472 = vpop.permute.xlu0 %2471
        %2473 = vset.pattern.permute.xlu0 0
        %2474 = vperm.xlu0 %2473, %v1904
        %v2475 = vpop.permute.xlu0 %2474
        %v2476 = vlaneseq
        %v2477 = vshrl.u32 %v2476, 7
        %v2478 = vsub.s32 %v873, %v2477
        %v2479 = vrot.slane %v2454, %v2478
        %v2480 = vlaneseq
        %v2481 = vshrl.u32 %v2480, 7
        %v2482 = vsub.s32 %v873, %v2481
        %v2483 = vrot.slane %v2457, %v2482
        %v2484 = vlaneseq
        %v2485 = vshrl.u32 %v2484, 7
        %v2486 = vsub.s32 %v873, %v2485
        %v2487 = vrot.slane %v2460, %v2486
        %v2488 = vlaneseq
        %v2489 = vshrl.u32 %v2488, 7
        %v2490 = vsub.s32 %v873, %v2489
        %v2491 = vrot.slane %v2463, %v2490
        %v2492 = vlaneseq
        %v2493 = vshrl.u32 %v2492, 7
        %v2494 = vsub.s32 %v873, %v2493
        %v2495 = vrot.slane %v2466, %v2494
        %v2496 = vlaneseq
        %v2497 = vshrl.u32 %v2496, 7
        %v2498 = vsub.s32 %v873, %v2497
        %v2499 = vrot.slane %v2469, %v2498
        %v2500 = vlaneseq
        %v2501 = vshrl.u32 %v2500, 7
        %v2502 = vsub.s32 %v873, %v2501
        %v2503 = vrot.slane %v2472, %v2502
        %v2504 = vlaneseq
        %v2505 = vshrl.u32 %v2504, 7
        %v2506 = vsub.s32 %v873, %v2505
        %v2507 = vrot.slane %v2475, %v2506
        %2524 = vset.pattern.permute.xlu0 0
        %2525 = vperm.xlu0 %2524, %v2292
        %v2526 = vpop.permute.xlu0 %2525
        %2527 = vset.pattern.permute.xlu0 0
        %2528 = vperm.xlu0 %2527, %v2293
        %v2529 = vpop.permute.xlu0 %2528
        %2530 = vset.pattern.permute.xlu0 0
        %2531 = vperm.xlu0 %2530, %v2294
        %v2532 = vpop.permute.xlu0 %2531
        %2533 = vset.pattern.permute.xlu0 0
        %2534 = vperm.xlu0 %2533, %v2295
        %v2535 = vpop.permute.xlu0 %2534
        %2536 = vset.pattern.permute.xlu0 0
        %2537 = vperm.xlu0 %2536, %v2296
        %v2538 = vpop.permute.xlu0 %2537
        %2539 = vset.pattern.permute.xlu0 0
        %2540 = vperm.xlu0 %2539, %v2297
        %v2541 = vpop.permute.xlu0 %2540
        %2542 = vset.pattern.permute.xlu0 0
        %2543 = vperm.xlu0 %2542, %v2298
        %v2544 = vpop.permute.xlu0 %2543
        %2545 = vset.pattern.permute.xlu0 0
        %2546 = vperm.xlu0 %2545, %v2299
        %v2547 = vpop.permute.xlu0 %2546
        %v2548 = vlaneseq
        %v2549 = vshrl.u32 %v2548, 7
        %v2550 = vsub.s32 %v873, %v2549
        %v2551 = vrot.slane %v2526, %v2550
        %v2552 = vlaneseq
        %v2553 = vshrl.u32 %v2552, 7
        %v2554 = vsub.s32 %v873, %v2553
        %v2555 = vrot.slane %v2529, %v2554
        %v2556 = vlaneseq
        %v2557 = vshrl.u32 %v2556, 7
        %v2558 = vsub.s32 %v873, %v2557
        %v2559 = vrot.slane %v2532, %v2558
        %v2560 = vlaneseq
        %v2561 = vshrl.u32 %v2560, 7
        %v2562 = vsub.s32 %v873, %v2561
        %v2563 = vrot.slane %v2535, %v2562
        %v2564 = vlaneseq
        %v2565 = vshrl.u32 %v2564, 7
        %v2566 = vsub.s32 %v873, %v2565
        %v2567 = vrot.slane %v2538, %v2566
        %v2568 = vlaneseq
        %v2569 = vshrl.u32 %v2568, 7
        %v2570 = vsub.s32 %v873, %v2569
        %v2571 = vrot.slane %v2541, %v2570
        %v2572 = vlaneseq
        %v2573 = vshrl.u32 %v2572, 7
        %v2574 = vsub.s32 %v873, %v2573
        %v2575 = vrot.slane %v2544, %v2574
        %v2576 = vlaneseq
        %v2577 = vshrl.u32 %v2576, 7
        %v2578 = vsub.s32 %v873, %v2577
        %v2579 = vrot.slane %v2547, %v2578
        %vm2588 = vcmask 1040384
        %v2589 = vsel %vm2588, %v2335, %v2407
        %v2590 = vsel %vm2588, %v2339, %v2411
        %v2591 = vsel %vm2588, %v2343, %v2415
        %v2592 = vsel %vm2588, %v2347, %v2419
        %v2593 = vsel %vm2588, %v2351, %v2423
        %v2594 = vsel %vm2588, %v2355, %v2427
        %v2595 = vsel %vm2588, %v2359, %v2431
        %v2596 = vsel %vm2588, %v2363, %v2435
        %vm2597 = vcmask 1041408
        %v2598 = vsel %vm2597, %v2589, %v2479
        %v2599 = vsel %vm2597, %v2590, %v2483
        %v2600 = vsel %vm2597, %v2591, %v2487
        %v2601 = vsel %vm2597, %v2592, %v2491
        %v2602 = vsel %vm2597, %v2593, %v2495
        %v2603 = vsel %vm2597, %v2594, %v2499
        %v2604 = vsel %vm2597, %v2595, %v2503
        %v2605 = vsel %vm2597, %v2596, %v2507
        %vm2606 = vcmask 1042432
        %v2607 = vsel %vm2606, %v2598, %v2551
        %v2608 = vsel %vm2606, %v2599, %v2555
        %v2609 = vsel %vm2606, %v2600, %v2559
        %v2610 = vsel %vm2606, %v2601, %v2563
        %v2611 = vsel %vm2606, %v2602, %v2567
        %v2612 = vsel %vm2606, %v2603, %v2571
        %v2613 = vsel %vm2606, %v2604, %v2575
        %v2614 = vsel %vm2606, %v2605, %v2579
        %v2615 = vpack.c.bf16 %v2607, %v2607
        %v2616 = vpack.c.bf16 %v2608, %v2608
        %v2617 = vpack.c.bf16 %v2609, %v2609
        %v2618 = vpack.c.bf16 %v2610, %v2610
        %v2619 = vpack.c.bf16 %v2611, %v2611
        %v2620 = vpack.c.bf16 %v2612, %v2612
        %v2621 = vpack.c.bf16 %v2613, %v2613
        %v2622 = vpack.c.bf16 %v2614, %v2614
        %v2624 = vsel %vm921, %v2615, 0
        %vm2626 = vcmask 1043456
        %v2628 = vsel %vm2626, %v514, 0
        %2630 = vmatprep.subr.bf16.mxu0 0
        %2631 = vmatpush1.bf16.msra.mxu0 %v2628
        %2632 = vmatprep.subr.bf16.mxu0 0
        %2633 = vmatpush1.bf16.msra.mxu0 0
        %2634 = vmatprep.subr.bf16.mxu0 0
        %2635 = vmatpush1.bf16.msra.mxu0 0
        %2636 = vmatprep.subr.bf16.mxu0 0
        %2637 = vmatpush1.bf16.msra.mxu0 0
        %2638 = vmatprep.subr.bf16.mxu0 0
        %2639 = vmatpush1.bf16.msra.mxu0 0
        %2640 = vmatprep.subr.bf16.mxu0 0
        %2641 = vmatpush1.bf16.msra.mxu0 0
        %2642 = vmatprep.subr.bf16.mxu0 0
        %2643 = vmatpush1.bf16.msra.mxu0 0
        %2644 = vmatprep.subr.bf16.mxu0 0
        %2645 = vmatpush1.bf16.msra.mxu0 0
        %2646 = vmatprep.subr.bf16.mxu0 0
        %2647 = vmatpush1.bf16.msra.mxu0 0
        %2648 = vmatprep.subr.bf16.mxu0 0
        %2649 = vmatpush1.bf16.msra.mxu0 0
        %2650 = vmatprep.subr.bf16.mxu0 0
        %2651 = vmatpush1.bf16.msra.mxu0 0
        %2652 = vmatprep.subr.bf16.mxu0 0
        %2653 = vmatpush1.bf16.msra.mxu0 0
        %2654 = vmatprep.subr.bf16.mxu0 0
        %2655 = vmatpush1.bf16.msra.mxu0 0
        %2656 = vmatprep.subr.bf16.mxu0 0
        %2657 = vmatpush1.bf16.msra.mxu0 0
        %2658 = vmatprep.subr.bf16.mxu0 0
        %2659 = vmatpush1.bf16.msra.mxu0 0
        %2660 = vmatprep.subr.bf16.mxu0 0
        %2661 = vmatpush1.bf16.msra.mxu0 0
        %2662 = vmatprep.mubr.bf16.mxu0 0
        %2663 = vmatmul.mubr.bf16.gmra.mrb[0].mxu0 %v2624
        %v2664 = vpop.f32.mrb[0].mxu0
        %v2665 = vadd.f32 0.0, %v2664
        %v2666 = vpop.f32.mrb[0].mxu0
        %v2667 = vpop.f32.mrb[0].mxu0
        %v2668 = vpop.f32.mrb[0].mxu0
        %2669 = vdwg.mxu0
        %v2671 = vsel %vm921, %v2616, 0
        %v2674 = vsel %vm2626, %v515, 0
        %2676 = vmatprep.subr.bf16.mxu0 0
        %2677 = vmatpush1.bf16.msra.mxu0 %v2674
        %2678 = vmatprep.subr.bf16.mxu0 0
        %2679 = vmatpush1.bf16.msra.mxu0 0
        %2680 = vmatprep.subr.bf16.mxu0 0
        %2681 = vmatpush1.bf16.msra.mxu0 0
        %2682 = vmatprep.subr.bf16.mxu0 0
        %2683 = vmatpush1.bf16.msra.mxu0 0
        %2684 = vmatprep.subr.bf16.mxu0 0
        %2685 = vmatpush1.bf16.msra.mxu0 0
        %2686 = vmatprep.subr.bf16.mxu0 0
        %2687 = vmatpush1.bf16.msra.mxu0 0
        %2688 = vmatprep.subr.bf16.mxu0 0
        %2689 = vmatpush1.bf16.msra.mxu0 0
        %2690 = vmatprep.subr.bf16.mxu0 0
        %2691 = vmatpush1.bf16.msra.mxu0 0
        %2692 = vmatprep.subr.bf16.mxu0 0
        %2693 = vmatpush1.bf16.msra.mxu0 0
        %2694 = vmatprep.subr.bf16.mxu0 0
        %2695 = vmatpush1.bf16.msra.mxu0 0
        %2696 = vmatprep.subr.bf16.mxu0 0
        %2697 = vmatpush1.bf16.msra.mxu0 0
        %2698 = vmatprep.subr.bf16.mxu0 0
        %2699 = vmatpush1.bf16.msra.mxu0 0
        %2700 = vmatprep.subr.bf16.mxu0 0
        %2701 = vmatpush1.bf16.msra.mxu0 0
        %2702 = vmatprep.subr.bf16.mxu0 0
        %2703 = vmatpush1.bf16.msra.mxu0 0
        %2704 = vmatprep.subr.bf16.mxu0 0
        %2705 = vmatpush1.bf16.msra.mxu0 0
        %2706 = vmatprep.subr.bf16.mxu0 0
        %2707 = vmatpush1.bf16.msra.mxu0 0
        %2708 = vmatprep.mubr.bf16.mxu0 0
        %2709 = vmatmul.mubr.bf16.gmra.mrb[0].mxu0 %v2671
        %v2710 = vpop.f32.mrb[0].mxu0
        %v2711 = vadd.f32 0.0, %v2710
        %v2712 = vpop.f32.mrb[0].mxu0
        %v2713 = vpop.f32.mrb[0].mxu0
        %v2714 = vpop.f32.mrb[0].mxu0
        %2715 = vdwg.mxu0
        %v2717 = vsel %vm921, %v2617, 0
        %v2720 = vsel %vm2626, %v516, 0
        %2722 = vmatprep.subr.bf16.mxu0 0
        %2723 = vmatpush1.bf16.msra.mxu0 %v2720
        %2724 = vmatprep.subr.bf16.mxu0 0
        %2725 = vmatpush1.bf16.msra.mxu0 0
        %2726 = vmatprep.subr.bf16.mxu0 0
        %2727 = vmatpush1.bf16.msra.mxu0 0
        %2728 = vmatprep.subr.bf16.mxu0 0
        %2729 = vmatpush1.bf16.msra.mxu0 0
        %2730 = vmatprep.subr.bf16.mxu0 0
        %2731 = vmatpush1.bf16.msra.mxu0 0
        %2732 = vmatprep.subr.bf16.mxu0 0
        %2733 = vmatpush1.bf16.msra.mxu0 0
        %2734 = vmatprep.subr.bf16.mxu0 0
        %2735 = vmatpush1.bf16.msra.mxu0 0
        %2736 = vmatprep.subr.bf16.mxu0 0
        %2737 = vmatpush1.bf16.msra.mxu0 0
        %2738 = vmatprep.subr.bf16.mxu0 0
        %2739 = vmatpush1.bf16.msra.mxu0 0
        %2740 = vmatprep.subr.bf16.mxu0 0
        %2741 = vmatpush1.bf16.msra.mxu0 0
        %2742 = vmatprep.subr.bf16.mxu0 0
        %2743 = vmatpush1.bf16.msra.mxu0 0
        %2744 = vmatprep.subr.bf16.mxu0 0
        %2745 = vmatpush1.bf16.msra.mxu0 0
        %2746 = vmatprep.subr.bf16.mxu0 0
        %2747 = vmatpush1.bf16.msra.mxu0 0
        %2748 = vmatprep.subr.bf16.mxu0 0
        %2749 = vmatpush1.bf16.msra.mxu0 0
        %2750 = vmatprep.subr.bf16.mxu0 0
        %2751 = vmatpush1.bf16.msra.mxu0 0
        %2752 = vmatprep.subr.bf16.mxu0 0
        %2753 = vmatpush1.bf16.msra.mxu0 0
        %2754 = vmatprep.mubr.bf16.mxu0 0
        %2755 = vmatmul.mubr.bf16.gmra.mrb[0].mxu0 %v2717
        %v2756 = vpop.f32.mrb[0].mxu0
        %v2757 = vadd.f32 0.0, %v2756
        %v2758 = vpop.f32.mrb[0].mxu0
        %v2759 = vpop.f32.mrb[0].mxu0
        %v2760 = vpop.f32.mrb[0].mxu0
        %2761 = vdwg.mxu0
        %v2763 = vsel %vm921, %v2618, 0
        %v2766 = vsel %vm2626, %v517, 0
        %2768 = vmatprep.subr.bf16.mxu0 0
        %2769 = vmatpush1.bf16.msra.mxu0 %v2766
        %2770 = vmatprep.subr.bf16.mxu0 0
        %2771 = vmatpush1.bf16.msra.mxu0 0
        %2772 = vmatprep.subr.bf16.mxu0 0
        %2773 = vmatpush1.bf16.msra.mxu0 0
        %2774 = vmatprep.subr.bf16.mxu0 0
        %2775 = vmatpush1.bf16.msra.mxu0 0
        %2776 = vmatprep.subr.bf16.mxu0 0
        %2777 = vmatpush1.bf16.msra.mxu0 0
        %2778 = vmatprep.subr.bf16.mxu0 0
        %2779 = vmatpush1.bf16.msra.mxu0 0
        %2780 = vmatprep.subr.bf16.mxu0 0
        %2781 = vmatpush1.bf16.msra.mxu0 0
        %2782 = vmatprep.subr.bf16.mxu0 0
        %2783 = vmatpush1.bf16.msra.mxu0 0
        %2784 = vmatprep.subr.bf16.mxu0 0
        %2785 = vmatpush1.bf16.msra.mxu0 0
        %2786 = vmatprep.subr.bf16.mxu0 0
        %2787 = vmatpush1.bf16.msra.mxu0 0
        %2788 = vmatprep.subr.bf16.mxu0 0
        %2789 = vmatpush1.bf16.msra.mxu0 0
        %2790 = vmatprep.subr.bf16.mxu0 0
        %2791 = vmatpush1.bf16.msra.mxu0 0
        %2792 = vmatprep.subr.bf16.mxu0 0
        %2793 = vmatpush1.bf16.msra.mxu0 0
        %2794 = vmatprep.subr.bf16.mxu0 0
        %2795 = vmatpush1.bf16.msra.mxu0 0
        %2796 = vmatprep.subr.bf16.mxu0 0
        %2797 = vmatpush1.bf16.msra.mxu0 0
        %2798 = vmatprep.subr.bf16.mxu0 0
        %2799 = vmatpush1.bf16.msra.mxu0 0
        %2800 = vmatprep.mubr.bf16.mxu0 0
        %2801 = vmatmul.mubr.bf16.gmra.mrb[0].mxu0 %v2763
        %v2802 = vpop.f32.mrb[0].mxu0
        %v2803 = vadd.f32 0.0, %v2802
        %v2804 = vpop.f32.mrb[0].mxu0
        %v2805 = vpop.f32.mrb[0].mxu0
        %v2806 = vpop.f32.mrb[0].mxu0
        %2807 = vdwg.mxu0
        %v2809 = vsel %vm921, %v2619, 0
        %v2812 = vsel %vm2626, %v518, 0
        %2814 = vmatprep.subr.bf16.mxu0 0
        %2815 = vmatpush1.bf16.msra.mxu0 %v2812
        %2816 = vmatprep.subr.bf16.mxu0 0
        %2817 = vmatpush1.bf16.msra.mxu0 0
        %2818 = vmatprep.subr.bf16.mxu0 0
        %2819 = vmatpush1.bf16.msra.mxu0 0
        %2820 = vmatprep.subr.bf16.mxu0 0
        %2821 = vmatpush1.bf16.msra.mxu0 0
        %2822 = vmatprep.subr.bf16.mxu0 0
        %2823 = vmatpush1.bf16.msra.mxu0 0
        %2824 = vmatprep.subr.bf16.mxu0 0
        %2825 = vmatpush1.bf16.msra.mxu0 0
        %2826 = vmatprep.subr.bf16.mxu0 0
        %2827 = vmatpush1.bf16.msra.mxu0 0
        %2828 = vmatprep.subr.bf16.mxu0 0
        %2829 = vmatpush1.bf16.msra.mxu0 0
        %2830 = vmatprep.subr.bf16.mxu0 0
        %2831 = vmatpush1.bf16.msra.mxu0 0
        %2832 = vmatprep.subr.bf16.mxu0 0
        %2833 = vmatpush1.bf16.msra.mxu0 0
        %2834 = vmatprep.subr.bf16.mxu0 0
        %2835 = vmatpush1.bf16.msra.mxu0 0
        %2836 = vmatprep.subr.bf16.mxu0 0
        %2837 = vmatpush1.bf16.msra.mxu0 0
        %2838 = vmatprep.subr.bf16.mxu0 0
        %2839 = vmatpush1.bf16.msra.mxu0 0
        %2840 = vmatprep.subr.bf16.mxu0 0
        %2841 = vmatpush1.bf16.msra.mxu0 0
        %2842 = vmatprep.subr.bf16.mxu0 0
        %2843 = vmatpush1.bf16.msra.mxu0 0
        %2844 = vmatprep.subr.bf16.mxu0 0
        %2845 = vmatpush1.bf16.msra.mxu0 0
        %2846 = vmatprep.mubr.bf16.mxu0 0
        %2847 = vmatmul.mubr.bf16.gmra.mrb[0].mxu0 %v2809
        %v2848 = vpop.f32.mrb[0].mxu0
        %v2849 = vadd.f32 0.0, %v2848
        %v2850 = vpop.f32.mrb[0].mxu0
        %v2851 = vpop.f32.mrb[0].mxu0
        %v2852 = vpop.f32.mrb[0].mxu0
        %2853 = vdwg.mxu0
        %v2855 = vsel %vm921, %v2620, 0
        %v2858 = vsel %vm2626, %v519, 0
        %2860 = vmatprep.subr.bf16.mxu0 0
        %2861 = vmatpush1.bf16.msra.mxu0 %v2858
        %2862 = vmatprep.subr.bf16.mxu0 0
        %2863 = vmatpush1.bf16.msra.mxu0 0
        %2864 = vmatprep.subr.bf16.mxu0 0
        %2865 = vmatpush1.bf16.msra.mxu0 0
        %2866 = vmatprep.subr.bf16.mxu0 0
        %2867 = vmatpush1.bf16.msra.mxu0 0
        %2868 = vmatprep.subr.bf16.mxu0 0
        %2869 = vmatpush1.bf16.msra.mxu0 0
        %2870 = vmatprep.subr.bf16.mxu0 0
        %2871 = vmatpush1.bf16.msra.mxu0 0
        %2872 = vmatprep.subr.bf16.mxu0 0
        %2873 = vmatpush1.bf16.msra.mxu0 0
        %2874 = vmatprep.subr.bf16.mxu0 0
        %2875 = vmatpush1.bf16.msra.mxu0 0
        %2876 = vmatprep.subr.bf16.mxu0 0
        %2877 = vmatpush1.bf16.msra.mxu0 0
        %2878 = vmatprep.subr.bf16.mxu0 0
        %2879 = vmatpush1.bf16.msra.mxu0 0
        %2880 = vmatprep.subr.bf16.mxu0 0
        %2881 = vmatpush1.bf16.msra.mxu0 0
        %2882 = vmatprep.subr.bf16.mxu0 0
        %2883 = vmatpush1.bf16.msra.mxu0 0
        %2884 = vmatprep.subr.bf16.mxu0 0
        %2885 = vmatpush1.bf16.msra.mxu0 0
        %2886 = vmatprep.subr.bf16.mxu0 0
        %2887 = vmatpush1.bf16.msra.mxu0 0
        %2888 = vmatprep.subr.bf16.mxu0 0
        %2889 = vmatpush1.bf16.msra.mxu0 0
        %2890 = vmatprep.subr.bf16.mxu0 0
        %2891 = vmatpush1.bf16.msra.mxu0 0
        %2892 = vmatprep.mubr.bf16.mxu0 0
        %2893 = vmatmul.mubr.bf16.gmra.mrb[0].mxu0 %v2855
        %v2894 = vpop.f32.mrb[0].mxu0
        %v2895 = vadd.f32 0.0, %v2894
        %v2896 = vpop.f32.mrb[0].mxu0
        %v2897 = vpop.f32.mrb[0].mxu0
        %v2898 = vpop.f32.mrb[0].mxu0
        %2899 = vdwg.mxu0
        %v2901 = vsel %vm921, %v2621, 0
        %v2904 = vsel %vm2626, %v520, 0
        %2906 = vmatprep.subr.bf16.mxu0 0
        %2907 = vmatpush1.bf16.msra.mxu0 %v2904
        %2908 = vmatprep.subr.bf16.mxu0 0
        %2909 = vmatpush1.bf16.msra.mxu0 0
        %2910 = vmatprep.subr.bf16.mxu0 0
        %2911 = vmatpush1.bf16.msra.mxu0 0
        %2912 = vmatprep.subr.bf16.mxu0 0
        %2913 = vmatpush1.bf16.msra.mxu0 0
        %2914 = vmatprep.subr.bf16.mxu0 0
        %2915 = vmatpush1.bf16.msra.mxu0 0
        %2916 = vmatprep.subr.bf16.mxu0 0
        %2917 = vmatpush1.bf16.msra.mxu0 0
        %2918 = vmatprep.subr.bf16.mxu0 0
        %2919 = vmatpush1.bf16.msra.mxu0 0
        %2920 = vmatprep.subr.bf16.mxu0 0
        %2921 = vmatpush1.bf16.msra.mxu0 0
        %2922 = vmatprep.subr.bf16.mxu0 0
        %2923 = vmatpush1.bf16.msra.mxu0 0
        %2924 = vmatprep.subr.bf16.mxu0 0
        %2925 = vmatpush1.bf16.msra.mxu0 0
        %2926 = vmatprep.subr.bf16.mxu0 0
        %2927 = vmatpush1.bf16.msra.mxu0 0
        %2928 = vmatprep.subr.bf16.mxu0 0
        %2929 = vmatpush1.bf16.msra.mxu0 0
        %2930 = vmatprep.subr.bf16.mxu0 0
        %2931 = vmatpush1.bf16.msra.mxu0 0
        %2932 = vmatprep.subr.bf16.mxu0 0
        %2933 = vmatpush1.bf16.msra.mxu0 0
        %2934 = vmatprep.subr.bf16.mxu0 0
        %2935 = vmatpush1.bf16.msra.mxu0 0
        %2936 = vmatprep.subr.bf16.mxu0 0
        %2937 = vmatpush1.bf16.msra.mxu0 0
        %2938 = vmatprep.mubr.bf16.mxu0 0
        %2939 = vmatmul.mubr.bf16.gmra.mrb[0].mxu0 %v2901
        %v2940 = vpop.f32.mrb[0].mxu0
        %v2941 = vadd.f32 0.0, %v2940
        %v2942 = vpop.f32.mrb[0].mxu0
        %v2943 = vpop.f32.mrb[0].mxu0
        %v2944 = vpop.f32.mrb[0].mxu0
        %2945 = vdwg.mxu0
        %v2947 = vsel %vm921, %v2622, 0
        %v2950 = vsel %vm2626, %v521, 0
        %2952 = vmatprep.subr.bf16.mxu0 0
        %2953 = vmatpush1.bf16.msra.mxu0 %v2950
        %2954 = vmatprep.subr.bf16.mxu0 0
        %2955 = vmatpush1.bf16.msra.mxu0 0
        %2956 = vmatprep.subr.bf16.mxu0 0
        %2957 = vmatpush1.bf16.msra.mxu0 0
        %2958 = vmatprep.subr.bf16.mxu0 0
        %2959 = vmatpush1.bf16.msra.mxu0 0
        %2960 = vmatprep.subr.bf16.mxu0 0
        %2961 = vmatpush1.bf16.msra.mxu0 0
        %2962 = vmatprep.subr.bf16.mxu0 0
        %2963 = vmatpush1.bf16.msra.mxu0 0
        %2964 = vmatprep.subr.bf16.mxu0 0
        %2965 = vmatpush1.bf16.msra.mxu0 0
        %2966 = vmatprep.subr.bf16.mxu0 0
        %2967 = vmatpush1.bf16.msra.mxu0 0
        %2968 = vmatprep.subr.bf16.mxu0 0
        %2969 = vmatpush1.bf16.msra.mxu0 0
        %2970 = vmatprep.subr.bf16.mxu0 0
        %2971 = vmatpush1.bf16.msra.mxu0 0
        %2972 = vmatprep.subr.bf16.mxu0 0
        %2973 = vmatpush1.bf16.msra.mxu0 0
        %2974 = vmatprep.subr.bf16.mxu0 0
        %2975 = vmatpush1.bf16.msra.mxu0 0
        %2976 = vmatprep.subr.bf16.mxu0 0
        %2977 = vmatpush1.bf16.msra.mxu0 0
        %2978 = vmatprep.subr.bf16.mxu0 0
        %2979 = vmatpush1.bf16.msra.mxu0 0
        %2980 = vmatprep.subr.bf16.mxu0 0
        %2981 = vmatpush1.bf16.msra.mxu0 0
        %2982 = vmatprep.subr.bf16.mxu0 0
        %2983 = vmatpush1.bf16.msra.mxu0 0
        %2984 = vmatprep.mubr.bf16.mxu0 0
        %2985 = vmatmul.mubr.bf16.gmra.mrb[0].mxu0 %v2947
        %v2986 = vpop.f32.mrb[0].mxu0
        %v2987 = vadd.f32 0.0, %v2986
        %v2988 = vpop.f32.mrb[0].mxu0
        %v2989 = vpop.f32.mrb[0].mxu0
        %v2990 = vpop.f32.mrb[0].mxu0
        %2991 = vdwg.mxu0
        %v2992 = vpack.c.bf16 %v2665, %v2665
        %v2993 = vpack.c.bf16 %v2711, %v2711
        %v2994 = vpack.c.bf16 %v2757, %v2757
        %v2995 = vpack.c.bf16 %v2803, %v2803
        %v2996 = vpack.c.bf16 %v2849, %v2849
        %v2997 = vpack.c.bf16 %v2895, %v2895
        %v2998 = vpack.c.bf16 %v2941, %v2941
        %v2999 = vpack.c.bf16 %v2987, %v2987
        %v3000 = vld [vmem:[#allocation11] sm:$0xf]
        %v3001 = vld [vmem:[#allocation11 + $0x4] sm:$0xf]
        %v3002 = vld [vmem:[#allocation11 + $0x8] sm:$0xf]
        %v3003 = vld [vmem:[#allocation11 + $0xc] sm:$0xf]
        %v3004 = vld [vmem:[#allocation11 + $0x10] sm:$0xf]
        %v3005 = vld [vmem:[#allocation11 + $0x14] sm:$0xf]
        %v3006 = vld [vmem:[#allocation11 + $0x18] sm:$0xf]
        %v3007 = vld [vmem:[#allocation11 + $0x1c] sm:$0xf]
        %v3016 = vunpack.c.l.b16 %v2992
        %v3017 = vunpack.c.l.b16 %v2993
        %v3018 = vunpack.c.l.b16 %v2994
        %v3019 = vunpack.c.l.b16 %v2995
        %v3020 = vunpack.c.l.b16 %v2996
        %v3021 = vunpack.c.l.b16 %v2997
        %v3022 = vunpack.c.l.b16 %v2998
        %v3023 = vunpack.c.l.b16 %v2999
        %v3024 = vrot.slane %v3016, 1
        %v3025 = vsel %vm906, %v3017, %v3024
        %v3026 = vrot.slane %v3018, 7
        %v3027 = vsel %vm908, %v3026, %v3025
        %v3028 = vrot.slane %v3019, 6
        %v3029 = vsel %vm910, %v3028, %v3027
        %v3030 = vrot.slane %v3020, 5
        %v3031 = vsel %vm912, %v3030, %v3029
        %v3032 = vrot.slane %v3021, 4
        %v3033 = vsel %vm914, %v3032, %v3031
        %v3034 = vrot.slane %v3022, 3
        %v3035 = vsel %vm916, %v3034, %v3033
        %v3036 = vrot.slane %v3023, 2
        %v3037 = vsel %vm918, %v3036, %v3035
        %v3038 = vpack.c.b16 %v3037, %v3037
        %v3043 = vunpack.c.l.b16 %v3004
        %v3044 = vunpack.c.l.b16 %v3005
        %v3045 = vunpack.c.l.b16 %v3006
        %v3046 = vunpack.c.l.b16 %v3007
        %v3047 = vpack.c.b16 %v3044, %v3043
        %v3048 = vpack.c.b16 %v3046, %v3045
        %v3052 = vsel %vm566, %v3038, 0
        %3054 = vmatprep.subr.bf16.mxu0 0
        %3055 = vmatpush1.bf16.msra.mxu0 %v3047
        %3056 = vmatprep.subr.bf16.mxu0 0
        %3057 = vmatpush1.bf16.msra.mxu0 %v3048
        %3058 = vmatprep.subr.bf16.mxu0 0
        %3059 = vmatpush1.bf16.msra.mxu0 0
        %3060 = vmatprep.subr.bf16.mxu0 0
        %3061 = vmatpush1.bf16.msra.mxu0 0
        %3062 = vmatprep.subr.bf16.mxu0 0
        %3063 = vmatpush1.bf16.msra.mxu0 0
        %3064 = vmatprep.subr.bf16.mxu0 0
        %3065 = vmatpush1.bf16.msra.mxu0 0
        %3066 = vmatprep.subr.bf16.mxu0 0
        %3067 = vmatpush1.bf16.msra.mxu0 0
        %3068 = vmatprep.subr.bf16.mxu0 0
        %3069 = vmatpush1.bf16.msra.mxu0 0
        %3070 = vmatprep.subr.bf16.mxu0 0
        %3071 = vmatpush1.bf16.msra.mxu0 0
        %3072 = vmatprep.subr.bf16.mxu0 0
        %3073 = vmatpush1.bf16.msra.mxu0 0
        %3074 = vmatprep.subr.bf16.mxu0 0
        %3075 = vmatpush1.bf16.msra.mxu0 0
        %3076 = vmatprep.subr.bf16.mxu0 0
        %3077 = vmatpush1.bf16.msra.mxu0 0
        %3078 = vmatprep.subr.bf16.mxu0 0
        %3079 = vmatpush1.bf16.msra.mxu0 0
        %3080 = vmatprep.subr.bf16.mxu0 0
        %3081 = vmatpush1.bf16.msra.mxu0 0
        %3082 = vmatprep.subr.bf16.mxu0 0
        %3083 = vmatpush1.bf16.msra.mxu0 0
        %3084 = vmatprep.subr.bf16.mxu0 0
        %3085 = vmatpush1.bf16.msra.mxu0 0
        %3086 = vmatprep.mubr.bf16.mxu0 0
        %3087 = vmatmul.mubr.bf16.gmra.mrb[0].mxu0 %v3052
        %v3088 = vpop.f32.mrb[0].mxu0
        %v3089 = vadd.f32 0.0, %v3088
        %v3090 = vpop.f32.mrb[0].mxu0
        %v3091 = vpop.f32.mrb[0].mxu0
        %v3092 = vpop.f32.mrb[0].mxu0
        %3093 = vdwg.mxu0
        %v3094 = vrot.slane %v3017, 7
        %v3095 = vsel %vm906, %v3094, %v3016
        %v3096 = vrot.slane %v3018, 6
        %v3097 = vsel %vm908, %v3096, %v3095
        %v3098 = vrot.slane %v3019, 5
        %v3099 = vsel %vm910, %v3098, %v3097
        %v3100 = vrot.slane %v3020, 4
        %v3101 = vsel %vm912, %v3100, %v3099
        %v3102 = vrot.slane %v3021, 3
        %v3103 = vsel %vm914, %v3102, %v3101
        %v3104 = vrot.slane %v3022, 2
        %v3105 = vsel %vm916, %v3104, %v3103
        %v3106 = vrot.slane %v3023, 1
        %v3107 = vsel %vm918, %v3106, %v3105
        %v3108 = vpack.c.b16 %v3107, %v3107
        %v3113 = vunpack.c.l.b16 %v3000
        %v3114 = vunpack.c.l.b16 %v3001
        %v3115 = vunpack.c.l.b16 %v3002
        %v3116 = vunpack.c.l.b16 %v3003
        %v3117 = vpack.c.b16 %v3114, %v3113
        %v3118 = vpack.c.b16 %v3116, %v3115
        %v3122 = vsel %vm566, %v3108, 0
        %3124 = vmatprep.subr.bf16.mxu0 0
        %3125 = vmatpush1.bf16.msra.mxu0 %v3117
        %3126 = vmatprep.subr.bf16.mxu0 0
        %3127 = vmatpush1.bf16.msra.mxu0 %v3118
        %3128 = vmatprep.subr.bf16.mxu0 0
        %3129 = vmatpush1.bf16.msra.mxu0 0
        %3130 = vmatprep.subr.bf16.mxu0 0
        %3131 = vmatpush1.bf16.msra.mxu0 0
        %3132 = vmatprep.subr.bf16.mxu0 0
        %3133 = vmatpush1.bf16.msra.mxu0 0
        %3134 = vmatprep.subr.bf16.mxu0 0
        %3135 = vmatpush1.bf16.msra.mxu0 0
        %3136 = vmatprep.subr.bf16.mxu0 0
        %3137 = vmatpush1.bf16.msra.mxu0 0
        %3138 = vmatprep.subr.bf16.mxu0 0
        %3139 = vmatpush1.bf16.msra.mxu0 0
        %3140 = vmatprep.subr.bf16.mxu0 0
        %3141 = vmatpush1.bf16.msra.mxu0 0
        %3142 = vmatprep.subr.bf16.mxu0 0
        %3143 = vmatpush1.bf16.msra.mxu0 0
        %3144 = vmatprep.subr.bf16.mxu0 0
        %3145 = vmatpush1.bf16.msra.mxu0 0
        %3146 = vmatprep.subr.bf16.mxu0 0
        %3147 = vmatpush1.bf16.msra.mxu0 0
        %3148 = vmatprep.subr.bf16.mxu0 0
        %3149 = vmatpush1.bf16.msra.mxu0 0
        %3150 = vmatprep.subr.bf16.mxu0 0
        %3151 = vmatpush1.bf16.msra.mxu0 0
        %3152 = vmatprep.subr.bf16.mxu0 0
        %3153 = vmatpush1.bf16.msra.mxu0 0
        %3154 = vmatprep.subr.bf16.mxu0 0
        %3155 = vmatpush1.bf16.msra.mxu0 0
        %3156 = vmatprep.mubr.bf16.mxu0 0
        %3157 = vmatmul.mubr.bf16.gmra.mrb[0].mxu0 %v3122
        %v3158 = vpop.f32.mrb[0].mxu0
        %v3159 = vadd.f32 %v3089, %v3158
        %v3160 = vpop.f32.mrb[0].mxu0
        %v3161 = vpop.f32.mrb[0].mxu0
        %v3162 = vpop.f32.mrb[0].mxu0
        %3163 = vdwg.mxu0
        %v3164 = vld [vmem:[#allocation11 + $0x20] sm:$0xf]
        %v3165 = vld [vmem:[#allocation11 + $0x24] sm:$0xf]
        %v3166 = vld [vmem:[#allocation11 + $0x28] sm:$0xf]
        %v3167 = vld [vmem:[#allocation11 + $0x2c] sm:$0xf]
        %v3168 = vrot.slane %v3016, 2
        %v3169 = vrot.slane %v3017, 1
        %v3170 = vsel %vm906, %v3169, %v3168
        %v3171 = vsel %vm908, %v3018, %v3170
        %v3172 = vrot.slane %v3019, 7
        %v3173 = vsel %vm910, %v3172, %v3171
        %v3174 = vrot.slane %v3020, 6
        %v3175 = vsel %vm912, %v3174, %v3173
        %v3176 = vrot.slane %v3021, 5
        %v3177 = vsel %vm914, %v3176, %v3175
        %v3178 = vrot.slane %v3022, 4
        %v3179 = vsel %vm916, %v3178, %v3177
        %v3180 = vrot.slane %v3023, 3
        %v3181 = vsel %vm918, %v3180, %v3179
        %v3182 = vpack.c.b16 %v3181, %v3181
        %v3187 = vunpack.c.l.b16 %v3164
        %v3188 = vunpack.c.l.b16 %v3165
        %v3189 = vunpack.c.l.b16 %v3166
        %v3190 = vunpack.c.l.b16 %v3167
        %v3191 = vpack.c.b16 %v3188, %v3187
        %v3192 = vpack.c.b16 %v3190, %v3189
        %v3196 = vsel %vm566, %v3182, 0
        %3198 = vmatprep.subr.bf16.mxu0 0
        %3199 = vmatpush1.bf16.msra.mxu0 %v3191
        %3200 = vmatprep.subr.bf16.mxu0 0
        %3201 = vmatpush1.bf16.msra.mxu0 %v3192
        %3202 = vmatprep.subr.bf16.mxu0 0
        %3203 = vmatpush1.bf16.msra.mxu0 0
        %3204 = vmatprep.subr.bf16.mxu0 0
        %3205 = vmatpush1.bf16.msra.mxu0 0
        %3206 = vmatprep.subr.bf16.mxu0 0
        %3207 = vmatpush1.bf16.msra.mxu0 0
        %3208 = vmatprep.subr.bf16.mxu0 0
        %3209 = vmatpush1.bf16.msra.mxu0 0
        %3210 = vmatprep.subr.bf16.mxu0 0
        %3211 = vmatpush1.bf16.msra.mxu0 0
        %3212 = vmatprep.subr.bf16.mxu0 0
        %3213 = vmatpush1.bf16.msra.mxu0 0
        %3214 = vmatprep.subr.bf16.mxu0 0
        %3215 = vmatpush1.bf16.msra.mxu0 0
        %3216 = vmatprep.subr.bf16.mxu0 0
        %3217 = vmatpush1.bf16.msra.mxu0 0
        %3218 = vmatprep.subr.bf16.mxu0 0
        %3219 = vmatpush1.bf16.msra.mxu0 0
        %3220 = vmatprep.subr.bf16.mxu0 0
        %3221 = vmatpush1.bf16.msra.mxu0 0
        %3222 = vmatprep.subr.bf16.mxu0 0
        %3223 = vmatpush1.bf16.msra.mxu0 0
        %3224 = vmatprep.subr.bf16.mxu0 0
        %3225 = vmatpush1.bf16.msra.mxu0 0
        %3226 = vmatprep.subr.bf16.mxu0 0
        %3227 = vmatpush1.bf16.msra.mxu0 0
        %3228 = vmatprep.subr.bf16.mxu0 0
        %3229 = vmatpush1.bf16.msra.mxu0 0
        %3230 = vmatprep.mubr.bf16.mxu0 0
        %3231 = vmatmul.mubr.bf16.gmra.mrb[0].mxu0 %v3196
        %v3232 = vpop.f32.mrb[0].mxu0
        %v3233 = vadd.f32 0.0, %v3232
        %v3234 = vpop.f32.mrb[0].mxu0
        %v3235 = vpop.f32.mrb[0].mxu0
        %v3236 = vpop.f32.mrb[0].mxu0
        %3237 = vdwg.mxu0
        %v3238 = vadd.f32 %v3159, %v3233
        %v3239 = vld [vmem:[#allocation11 + $0x30] sm:$0xf]
        %v3240 = vld [vmem:[#allocation11 + $0x34] sm:$0xf]
        %v3241 = vld [vmem:[#allocation11 + $0x38] sm:$0xf]
        %v3242 = vld [vmem:[#allocation11 + $0x3c] sm:$0xf]
        %v3243 = vrot.slane %v3016, 3
        %v3244 = vrot.slane %v3017, 2
        %v3245 = vsel %vm906, %v3244, %v3243
        %v3246 = vrot.slane %v3018, 1
        %v3247 = vsel %vm908, %v3246, %v3245
        %v3248 = vsel %vm910, %v3019, %v3247
        %v3249 = vrot.slane %v3020, 7
        %v3250 = vsel %vm912, %v3249, %v3248
        %v3251 = vrot.slane %v3021, 6
        %v3252 = vsel %vm914, %v3251, %v3250
        %v3253 = vrot.slane %v3022, 5
        %v3254 = vsel %vm916, %v3253, %v3252
        %v3255 = vrot.slane %v3023, 4
        %v3256 = vsel %vm918, %v3255, %v3254
        %v3257 = vpack.c.b16 %v3256, %v3256
        %v3262 = vunpack.c.l.b16 %v3239
        %v3263 = vunpack.c.l.b16 %v3240
        %v3264 = vunpack.c.l.b16 %v3241
        %v3265 = vunpack.c.l.b16 %v3242
        %v3266 = vpack.c.b16 %v3263, %v3262
        %v3267 = vpack.c.b16 %v3265, %v3264
        %v3271 = vsel %vm566, %v3257, 0
        %3273 = vmatprep.subr.bf16.mxu0 0
        %3274 = vmatpush1.bf16.msra.mxu0 %v3266
        %3275 = vmatprep.subr.bf16.mxu0 0
        %3276 = vmatpush1.bf16.msra.mxu0 %v3267
        %3277 = vmatprep.subr.bf16.mxu0 0
        %3278 = vmatpush1.bf16.msra.mxu0 0
        %3279 = vmatprep.subr.bf16.mxu0 0
        %3280 = vmatpush1.bf16.msra.mxu0 0
        %3281 = vmatprep.subr.bf16.mxu0 0
        %3282 = vmatpush1.bf16.msra.mxu0 0
        %3283 = vmatprep.subr.bf16.mxu0 0
        %3284 = vmatpush1.bf16.msra.mxu0 0
        %3285 = vmatprep.subr.bf16.mxu0 0
        %3286 = vmatpush1.bf16.msra.mxu0 0
        %3287 = vmatprep.subr.bf16.mxu0 0
        %3288 = vmatpush1.bf16.msra.mxu0 0
        %3289 = vmatprep.subr.bf16.mxu0 0
        %3290 = vmatpush1.bf16.msra.mxu0 0
        %3291 = vmatprep.subr.bf16.mxu0 0
        %3292 = vmatpush1.bf16.msra.mxu0 0
        %3293 = vmatprep.subr.bf16.mxu0 0
        %3294 = vmatpush1.bf16.msra.mxu0 0
        %3295 = vmatprep.subr.bf16.mxu0 0
        %3296 = vmatpush1.bf16.msra.mxu0 0
        %3297 = vmatprep.subr.bf16.mxu0 0
        %3298 = vmatpush1.bf16.msra.mxu0 0
        %3299 = vmatprep.subr.bf16.mxu0 0
        %3300 = vmatpush1.bf16.msra.mxu0 0
        %3301 = vmatprep.subr.bf16.mxu0 0
        %3302 = vmatpush1.bf16.msra.mxu0 0
        %3303 = vmatprep.subr.bf16.mxu0 0
        %3304 = vmatpush1.bf16.msra.mxu0 0
        %3305 = vmatprep.mubr.bf16.mxu0 0
        %3306 = vmatmul.mubr.bf16.gmra.mrb[0].mxu0 %v3271
        %v3307 = vpop.f32.mrb[0].mxu0
        %v3308 = vadd.f32 0.0, %v3307
        %v3309 = vpop.f32.mrb[0].mxu0
        %v3310 = vpop.f32.mrb[0].mxu0
        %v3311 = vpop.f32.mrb[0].mxu0
        %3312 = vdwg.mxu0
        %v3313 = vadd.f32 %v3238, %v3308
        %v3314 = vld [vmem:[#allocation12] sm:$0x1]
        %v3316 = vlaneseq
        %v3317 = vshrl.u32 %v3316, 7
        %v3318 = vsub.s32 0, %v3317
        %v3319 = vrot.slane %v3314, %v3318
        %v3321 = vadd.f32 %v3313, %v3319
        %v3322 = vmax.f32 %v3321, 0.0
        %v3323 = vpack.c.bf16 %v3322, %v3322
        %v3324 = vld [vmem:[#allocation14] sm:$0xf]
        %v3325 = vld [vmem:[#allocation14 + $0x4] sm:$0xf]
        %v3326 = vld [vmem:[#allocation14 + $0x8] sm:$0xf]
        %v3327 = vld [vmem:[#allocation14 + $0xc] sm:$0xf]
        %v3328 = vld [vmem:[#allocation14 + $0x10] sm:$0xf]
        %v3329 = vld [vmem:[#allocation14 + $0x14] sm:$0xf]
        %v3330 = vld [vmem:[#allocation14 + $0x18] sm:$0xf]
        %v3331 = vld [vmem:[#allocation14 + $0x1c] sm:$0xf]
        %v3332 = vld [vmem:[#allocation14 + $0x20] sm:$0xf]
        %v3333 = vld [vmem:[#allocation14 + $0x24] sm:$0xf]
        %v3334 = vld [vmem:[#allocation14 + $0x28] sm:$0xf]
        %v3335 = vld [vmem:[#allocation14 + $0x2c] sm:$0xf]
        %v3336 = vld [vmem:[#allocation14 + $0x30] sm:$0xf]
        %v3337 = vld [vmem:[#allocation14 + $0x34] sm:$0xf]
        %v3338 = vld [vmem:[#allocation14 + $0x38] sm:$0xf]
        %v3339 = vld [vmem:[#allocation14 + $0x3c] sm:$0xf]
        %v3340 = vld [vmem:[#allocation15] sm:$0x1]
        %v3342 = vlaneseq
        %v3343 = vshrl.u32 %v3342, 7
        %v3344 = vsub.s32 0, %v3343
        %v3345 = vrot.slane %v3340, %v3344
        %v3363 = vunpack.c.l.b16 %v3324
        %v3364 = vunpack.c.l.b16 %v3325
        %v3365 = vunpack.c.l.b16 %v3326
        %v3366 = vunpack.c.l.b16 %v3327
        %v3367 = vunpack.c.l.b16 %v3328
        %v3368 = vunpack.c.l.b16 %v3329
        %v3369 = vunpack.c.l.b16 %v3330
        %v3370 = vunpack.c.l.b16 %v3331
        %v3371 = vunpack.c.l.b16 %v3332
        %v3372 = vunpack.c.l.b16 %v3333
        %v3373 = vunpack.c.l.b16 %v3334
        %v3374 = vunpack.c.l.b16 %v3335
        %v3375 = vunpack.c.l.b16 %v3336
        %v3376 = vunpack.c.l.b16 %v3337
        %v3377 = vunpack.c.l.b16 %v3338
        %v3378 = vunpack.c.l.b16 %v3339
        %v3379 = vpack.c.b16 %v3364, %v3363
        %v3380 = vpack.c.b16 %v3366, %v3365
        %v3381 = vpack.c.b16 %v3368, %v3367
        %v3382 = vpack.c.b16 %v3370, %v3369
        %v3383 = vpack.c.b16 %v3372, %v3371
        %v3384 = vpack.c.b16 %v3374, %v3373
        %v3385 = vpack.c.b16 %v3376, %v3375
        %v3386 = vpack.c.b16 %v3378, %v3377
        %3395 = vmatprep.subr.bf16.mxu0 0
        %3396 = vmatpush1.bf16.msra.mxu0 %v3379
        %3397 = vmatprep.subr.bf16.mxu0 0
        %3398 = vmatpush1.bf16.msra.mxu0 %v3380
        %3399 = vmatprep.subr.bf16.mxu0 0
        %3400 = vmatpush1.bf16.msra.mxu0 %v3381
        %3401 = vmatprep.subr.bf16.mxu0 0
        %3402 = vmatpush1.bf16.msra.mxu0 %v3382
        %3403 = vmatprep.subr.bf16.mxu0 0
        %3404 = vmatpush1.bf16.msra.mxu0 %v3383
        %3405 = vmatprep.subr.bf16.mxu0 0
        %3406 = vmatpush1.bf16.msra.mxu0 %v3384
        %3407 = vmatprep.subr.bf16.mxu0 0
        %3408 = vmatpush1.bf16.msra.mxu0 %v3385
        %3409 = vmatprep.subr.bf16.mxu0 0
        %3410 = vmatpush1.bf16.msra.mxu0 %v3386
        %3411 = vmatprep.subr.bf16.mxu0 0
        %3412 = vmatpush1.bf16.msra.mxu0 0
        %3413 = vmatprep.subr.bf16.mxu0 0
        %3414 = vmatpush1.bf16.msra.mxu0 0
        %3415 = vmatprep.subr.bf16.mxu0 0
        %3416 = vmatpush1.bf16.msra.mxu0 0
        %3417 = vmatprep.subr.bf16.mxu0 0
        %3418 = vmatpush1.bf16.msra.mxu0 0
        %3419 = vmatprep.subr.bf16.mxu0 0
        %3420 = vmatpush1.bf16.msra.mxu0 0
        %3421 = vmatprep.subr.bf16.mxu0 0
        %3422 = vmatpush1.bf16.msra.mxu0 0
        %3423 = vmatprep.subr.bf16.mxu0 0
        %3424 = vmatpush1.bf16.msra.mxu0 0
        %3425 = vmatprep.subr.bf16.mxu0 0
        %3426 = vmatpush1.bf16.msra.mxu0 0
        %3427 = vmatprep.mubr.bf16.mxu0 0
        %3428 = vmatmul.mubr.bf16.gmra.mrb[0].mxu0 %v3323
        %v3429 = vpop.f32.mrb[0].mxu0
        %v3430 = vadd.f32 %v3345, %v3429
        %v3431 = vpop.f32.mrb[0].mxu0
        %v3432 = vpop.f32.mrb[0].mxu0
        %v3433 = vpop.f32.mrb[0].mxu0
        %3434 = vdwg.mxu0
        %v3435 = vmax.f32 %v3430, 0.0
        %v3436 = vpack.c.bf16 %v3435, %v3435
        %v3437 = vld [vmem:[#allocation17] sm:$0xf]
        %v3438 = vld [vmem:[#allocation17 + $0x4] sm:$0xf]
        %v3439 = vld [vmem:[#allocation17 + $0x8] sm:$0xf]
        %v3440 = vld [vmem:[#allocation17 + $0xc] sm:$0xf]
        %v3441 = vld [vmem:[#allocation17 + $0x10] sm:$0xf]
        %v3442 = vld [vmem:[#allocation17 + $0x14] sm:$0xf]
        %v3443 = vld [vmem:[#allocation17 + $0x18] sm:$0xf]
        %v3444 = vld [vmem:[#allocation17 + $0x1c] sm:$0xf]
        %v3445 = vld [vmem:[#allocation17 + $0x20] sm:$0xf]
        %v3446 = vld [vmem:[#allocation17 + $0x24] sm:$0xf]
        %v3447 = vld [vmem:[#allocation17 + $0x28] sm:$0xf]
        %v3448 = vld [vmem:[#allocation17 + $0x2c] sm:$0xf]
        %v3449 = vld [vmem:[#allocation17 + $0x30] sm:$0xf]
        %v3450 = vld [vmem:[#allocation17 + $0x34] sm:$0xf]
        %v3451 = vld [vmem:[#allocation17 + $0x38] sm:$0xf]
        %v3452 = vld [vmem:[#allocation17 + $0x3c] sm:$0xf]
        %v3453 = vld [vmem:[#allocation2] sm:$0x1]
        %v3455 = vlaneseq
        %v3456 = vshrl.u32 %v3455, 7
        %v3457 = vsub.s32 0, %v3456
        %v3458 = vrot.slane %v3453, %v3457
        %v3476 = vunpack.c.l.b16 %v3437
        %v3477 = vunpack.c.l.b16 %v3438
        %v3478 = vunpack.c.l.b16 %v3439
        %v3479 = vunpack.c.l.b16 %v3440
        %v3480 = vunpack.c.l.b16 %v3441
        %v3481 = vunpack.c.l.b16 %v3442
        %v3482 = vunpack.c.l.b16 %v3443
        %v3483 = vunpack.c.l.b16 %v3444
        %v3484 = vunpack.c.l.b16 %v3445
        %v3485 = vunpack.c.l.b16 %v3446
        %v3486 = vunpack.c.l.b16 %v3447
        %v3487 = vunpack.c.l.b16 %v3448
        %v3488 = vunpack.c.l.b16 %v3449
        %v3489 = vunpack.c.l.b16 %v3450
        %v3490 = vunpack.c.l.b16 %v3451
        %v3491 = vunpack.c.l.b16 %v3452
        %v3492 = vpack.c.b16 %v3477, %v3476
        %v3493 = vpack.c.b16 %v3479, %v3478
        %v3494 = vpack.c.b16 %v3481, %v3480
        %v3495 = vpack.c.b16 %v3483, %v3482
        %v3496 = vpack.c.b16 %v3485, %v3484
        %v3497 = vpack.c.b16 %v3487, %v3486
        %v3498 = vpack.c.b16 %v3489, %v3488
        %v3499 = vpack.c.b16 %v3491, %v3490
        %3508 = vmatprep.subr.bf16.mxu0 0
        %3509 = vmatpush1.bf16.msra.mxu0 %v3492
        %3510 = vmatprep.subr.bf16.mxu0 0
        %3511 = vmatpush1.bf16.msra.mxu0 %v3493
        %3512 = vmatprep.subr.bf16.mxu0 0
        %3513 = vmatpush1.bf16.msra.mxu0 %v3494
        %3514 = vmatprep.subr.bf16.mxu0 0
        %3515 = vmatpush1.bf16.msra.mxu0 %v3495
        %3516 = vmatprep.subr.bf16.mxu0 0
        %3517 = vmatpush1.bf16.msra.mxu0 %v3496
        %3518 = vmatprep.subr.bf16.mxu0 0
        %3519 = vmatpush1.bf16.msra.mxu0 %v3497
        %3520 = vmatprep.subr.bf16.mxu0 0
        %3521 = vmatpush1.bf16.msra.mxu0 %v3498
        %3522 = vmatprep.subr.bf16.mxu0 0
        %3523 = vmatpush1.bf16.msra.mxu0 %v3499
        %3524 = vmatprep.subr.bf16.mxu0 0
        %3525 = vmatpush1.bf16.msra.mxu0 0
        %3526 = vmatprep.subr.bf16.mxu0 0
        %3527 = vmatpush1.bf16.msra.mxu0 0
        %3528 = vmatprep.subr.bf16.mxu0 0
        %3529 = vmatpush1.bf16.msra.mxu0 0
        %3530 = vmatprep.subr.bf16.mxu0 0
        %3531 = vmatpush1.bf16.msra.mxu0 0
        %3532 = vmatprep.subr.bf16.mxu0 0
        %3533 = vmatpush1.bf16.msra.mxu0 0
        %3534 = vmatprep.subr.bf16.mxu0 0
        %3535 = vmatpush1.bf16.msra.mxu0 0
        %3536 = vmatprep.subr.bf16.mxu0 0
        %3537 = vmatpush1.bf16.msra.mxu0 0
        %3538 = vmatprep.subr.bf16.mxu0 0
        %3539 = vmatpush1.bf16.msra.mxu0 0
        %3540 = vmatprep.mubr.bf16.mxu0 0
        %3541 = vmatmul.mubr.bf16.gmra.mrb[0].mxu0 %v3436
        %v3542 = vpop.f32.mrb[0].mxu0
        %v3543 = vadd.f32 %v3458, %v3542
        %v3544 = vpop.f32.mrb[0].mxu0
        %v3545 = vpop.f32.mrb[0].mxu0
        %v3546 = vpop.f32.mrb[0].mxu0
        %3547 = vdwg.mxu0
        %vm3548 = vcmask 7168
        %3549 = vst.msk [vmem:[%s511] sm:$0xff] %vm3548, %v3543
        %s3550 = sand.u32 %s263, 1
        %s3551 = scalar_lea.sflag [#allocation5], %s3550
        %s3552 = sand.u32 %s263, 1
        %s3553 = smul.addr %s3552, 8
        %s3554 = scalar_lea.vmem [#allocation18], %s3553
        // Predicated region
        $region97: #{tpu_custom_call.1} parent=59 // pred_check
          %p3555 = pneg %p273
        $region98: #{tpu_custom_call.1} parent=59 // pred_check_branch
          %3557 = sbr.rel (%p3555) target = $region100
        $region99: #{tpu_custom_call.1} parent=59 // pred_region
          %s3559 = ssub.s32 128, 128
          %3560 = vsyncadd %s3551, %s3559
          %s3561 = smul.addr %s35, 128
          %s3562 = scalar_lea.hbm %s10, %s3561
          %s3564 = sshll.u32 %s3554, 4
          %s3565 = int_to_ptr.vmem [resolvable:$true] %s3564
          %3567 = dma.vmem_to_hbm [thread:$0]  %s3565, 128, %s3562, %s3551
        $region100: #{tpu_custom_call.1} parent=59 // pred_fallthru
          _
      $region60: #{tpu_custom_call.1} parent=5 // pred_fallthru
        _
      %p3568 = scmp.le.s32.totalorder 2, %s30
      // Predicated region
      $region101: #{tpu_custom_call.1} parent=5 // pred_check
        %p3569 = pneg %p3568
      $region102: #{tpu_custom_call.1} parent=5 // pred_check_branch
        %3571 = sbr.rel (%p3569) target = $region104
      $region103: #{tpu_custom_call.1} parent=5 // pred_region
        %s3572 = ssub.s32 %s30, 2
        // Predicated region
        $region105: #{tpu_custom_call.1} parent=103 // pred_check
          %p3573 = pneg %p279
        $region106: #{tpu_custom_call.1} parent=103 // pred_check_branch
          %3575 = sbr.rel (%p3573) target = $region108
        $region107: #{tpu_custom_call.1} parent=103 // pred_region
          %s3576 = sand.u32 %s264, 1
          %s3577 = scalar_lea.sflag [#allocation5], %s3576
          %s3578 = sand.u32 %s264, 1
          %s3579 = smul.addr %s3578, 8
          %s3580 = scalar_lea.vmem [#allocation18], %s3579
          %3581 = dma.done %s3577, 128
        $region108: #{tpu_custom_call.1} parent=103 // pred_fallthru
          _
      $region104: #{tpu_custom_call.1} parent=5 // pred_fallthru
        _
    $region6: #{tpu_custom_call.1} parent=1 // loop_footer
      %s34 = sadd.s32 1, %s30
    $region7: #{tpu_custom_call.1} parent=1 // loop_footer_branch
      %29 = sbr.rel target = $region3
    $region8: #{tpu_custom_call.1} parent=1 // loop_exit
      _
    %3582 = vsyncpa [#allocation4], 1
    %s3583 = scalar_lea.sflag [#allocation4], 1
    %3584 = vsyncpa %s3583, 1
    %3585 = vsyncpa [#allocation7], 1
    %s3586 = scalar_lea.sflag [#allocation7], 1
    %3587 = vsyncpa %s3586, 1
    %3588 = vsyncpa [#allocation10], 1
    %3589 = vsyncpa [#allocation13], 1
    %3590 = vsyncpa [#allocation16], 1
    %3591 = vsyncpa [#allocation5], 1
    %s3592 = scalar_lea.sflag [#allocation5], 1
    %3593 = vsyncpa %s3592, 1

</llo_original>
